<compile_context>
chip_gen: v6e
topology: v6e:2x2x1
jax: 0.10.0
libtpu: 0.0.40
codegen_flags: <defaults>
</compile_context>

<pallas_src>
import functools
import numpy as np

import jax
import jax.numpy as jnp
from jax.experimental import pallas as pl
from jax.experimental.pallas import tpu as pltpu


def _round_up(x, m):
    return ((x + m - 1) // m) * m


# ----------------------------------------------------------------------------
# Pallas kernel 1: Y = relu(X @ W + b)   (conv1 / conv2 via im2col matmul)
#   X: [tile_m, K] bf16, W: [K, 128] bf16 (OC zero-padded), b: [1, 128] f32
# ----------------------------------------------------------------------------
def _matmul_bias_relu_kernel(x_ref, w_ref, b_ref, o_ref):
    acc = jnp.dot(x_ref[...], w_ref[...], preferred_element_type=jnp.float32)
    o_ref[...] = jnp.maximum(acc + b_ref[...], 0.0).astype(o_ref.dtype)


def matmul_bias_relu(x, w, b, *, out_dtype=jnp.bfloat16, max_tile_m=512):
    """x: [M, K], w: [K, Np] with Np % 128 == 0, b: [1, Np] f32 -> [M, Np]."""
    M, K = x.shape
    K2, Np = w.shape
    assert K == K2 and Np % 128 == 0
    x = x.astype(jnp.bfloat16)

    tile_m = min(max_tile_m, _round_up(M, 16))
    m_pad = _round_up(M, tile_m)
    if m_pad != M:
        x = jnp.pad(x, ((0, m_pad - M), (0, 0)))

    out = pl.pallas_call(
        _matmul_bias_relu_kernel,
        out_shape=jax.ShapeDtypeStruct((m_pad, Np), out_dtype),
        grid_spec=pltpu.PrefetchScalarGridSpec(
            num_scalar_prefetch=0,
            grid=(m_pad // tile_m,),
            in_specs=[
                pl.BlockSpec((tile_m, K), lambda i: (i, 0)),   # patch row-tile
                pl.BlockSpec((K, Np), lambda i: (0, 0)),       # full weight (const)
                pl.BlockSpec((1, Np), lambda i: (0, 0)),       # bias (const)
            ],
            out_specs=pl.BlockSpec((tile_m, Np), lambda i: (i, 0)),
        ),
        compiler_params=pltpu.CompilerParams(
            dimension_semantics=("parallel",),
            vmem_limit_bytes=32 << 20,
        ),
    )(x, w, b)
    return out[:M]


# ----------------------------------------------------------------------------
# Pallas kernel 2: fused conv3 + flatten + dueling head.
#
# Inputs (per grid step c over position chunks):
#   p_ref : [PPS, Bp, 576]  conv3 patches, position-major, batch padded to Bp
#   w3_ref: [576, 128]      conv3 weights (64 real out-channels, zero-padded)
#   w1_ref: [PPS, 64, 1024] fc1 weights for this chunk's positions
#                           (columns = [value_512 | advantage_512])
#   w2_ref: [1024, 128] f32 second FC: cols 0..A-1 = advantage weights,
#                           col A = value weights, rest zero  <-- lane layout
#   hacc  : [Bp, 1024] f32  scratch accumulator for the fc1 pre-activation
#
# Per step: for each position p in the chunk
#   y = relu(patch[p] @ W3 + b3)          (conv3 output for that position)
#   hacc += y[:, :64] @ W1[p]             (that position's fc1 contribution)
# Last step: h = relu(hacc + b1); va = h @ W2 + b2 (f32);
#   Q = V + A - mean(A) with an explicit lane mask for the advantage lanes.
# ----------------------------------------------------------------------------
def _conv3_dueling_kernel(p_ref, w3_ref, b3_ref, w1_ref, b1_ref, w2_ref, b2_ref,
                          o_ref, hacc_ref, *, num_actions, pos_per_step):
    c = pl.program_id(0)

    @pl.when(c == 0)
    def _init():
        hacc_ref[...] = jnp.zeros_like(hacc_ref)

    partial = None
    for p in range(pos_per_step):
        xp = p_ref[p]                                             # [Bp, 576] bf16
        y = jnp.dot(xp, w3_ref[...], preferred_element_type=jnp.float32)
        y = jnp.maximum(y + b3_ref[...], 0.0)                     # [Bp, 128]
        contrib = jnp.dot(y[:, :64].astype(jnp.bfloat16), w1_ref[p],
                          preferred_element_type=jnp.float32)     # [Bp, 1024]
        partial = contrib if partial is None else partial + contrib
    hacc_ref[...] += partial

    @pl.when(c == pl.num_programs(0) - 1)
    def _finalize():
        # h stays in f32 and the second matmul runs in f32 (accuracy review item).
        h = jnp.maximum(hacc_ref[...] + b1_ref[...], 0.0)         # [Bp, 1024] f32
        va = jnp.dot(h, w2_ref[...],
                     preferred_element_type=jnp.float32) + b2_ref[...]  # [Bp, 128]
        lane = jax.lax.broadcasted_iota(jnp.int32, va.shape, 1)
        adv_mask = lane < num_actions
        adv = jnp.where(adv_mask, va, 0.0)
        adv_mean = jnp.sum(adv, axis=-1, keepdims=True) * (1.0 / num_actions)
        # Value lives in lane `num_actions` of va (see prepare_params).
        val = jnp.sum(jnp.where(lane == num_actions, va, 0.0),
                      axis=-1, keepdims=True)
        o_ref[...] = (val + adv - adv_mean).astype(o_ref.dtype)


def conv3_dueling_head(patches_pm, w3, b3, w1r, b1, w2, b2, *,
                       num_actions, batch, pos_per_step=7):
    """patches_pm: [P, Bp, 576] bf16 position-major conv3 patches -> Q [batch, A]."""
    P, Bp, K = patches_pm.shape
    assert P % pos_per_step == 0 and w1r.shape == (P, 64, 1024)
    grid = (P // pos_per_step,)

    out = pl.pallas_call(
        functools.partial(_conv3_dueling_kernel, num_actions=num_actions,
                          pos_per_step=pos_per_step),
        out_shape=jax.ShapeDtypeStruct((Bp, 128), jnp.float32),
        grid_spec=pltpu.PrefetchScalarGridSpec(
            num_scalar_prefetch=0,
            grid=grid,
            in_specs=[
                pl.BlockSpec((pos_per_step, Bp, K), lambda c: (c, 0, 0)),   # patches
                pl.BlockSpec((K, 128), lambda c: (0, 0)),                   # W3
                pl.BlockSpec((1, 128), lambda c: (0, 0)),                   # b3
                pl.BlockSpec((pos_per_step, 64, 1024), lambda c: (c, 0, 0)),# W1 chunk
                pl.BlockSpec((1, 1024), lambda c: (0, 0)),                  # b1
                pl.BlockSpec((1024, 128), lambda c: (0, 0)),                # W2 (f32)
                pl.BlockSpec((1, 128), lambda c: (0, 0)),                   # b2
            ],
            out_specs=pl.BlockSpec((Bp, 128), lambda c: (0, 0)),
            scratch_shapes=[pltpu.VMEM((Bp, 1024), jnp.float32)],
        ),
        compiler_params=pltpu.CompilerParams(
            # The chunk axis is a reduction into the hacc scratch -> "arbitrary".
            dimension_semantics=("arbitrary",),
            vmem_limit_bytes=32 << 20,
        ),
    )(patches_pm, w3, b3, w1r, b1, w2, b2)
    return out[:batch, :num_actions]


# ----------------------------------------------------------------------------
# JAX glue: NHWC im2col (pure slicing, no FLOPs, bf16).  Feature order is
# (KH, KW, C), matching the NHWC-flattened conv weights.
# ----------------------------------------------------------------------------
def _im2col_nhwc(x, kh, kw, stride):
    n, h, w, c = x.shape
    oh = (h - kh) // stride + 1
    ow = (w - kw) // stride + 1
    cols = []
    for i in range(kh):
        for j in range(kw):
            cols.append(x[:, i:i + stride * oh:stride, j:j + stride * ow:stride, :])
    patches = jnp.stack(cols, axis=3)                 # [N, OH, OW, KH*KW, C]
    return patches.reshape(n * oh * ow, kh * kw * c), oh, ow


def _im2col_conv3_posmajor(y, batch_pad):
    """y: [N, 9, 9, 64] -> position-major 3x3 patches [49, batch_pad, 576] bf16."""
    n = y.shape[0]
    cols = [y[:, i:i + 7, j:j + 7, :] for i in range(3) for j in range(3)]
    p = jnp.stack(cols, axis=3).reshape(n, 49, 9 * 64)     # [N, 49, 576]
    p = jnp.transpose(p, (1, 0, 2))                        # [49, N, 576]
    if batch_pad != n:
        p = jnp.pad(p, ((0, 0), (0, batch_pad - n), (0, 0)))
    return p.astype(jnp.bfloat16)


# ----------------------------------------------------------------------------
# Parameter init (orthogonal, gain sqrt(2), zero bias — PyTorch layout) and
# one-time host-side conversion to kernel-friendly layouts.
# ----------------------------------------------------------------------------
def _orthogonal(key, shape, gain):
    rows = shape[0]
    cols = int(np.prod(shape[1:]))
    big, small = max(rows, cols), min(rows, cols)
    a = np.asarray(jax.random.normal(key, (big, small), jnp.float32))
    q, r = np.linalg.qr(a)
    q = q * np.sign(np.diag(r))
    if rows < cols:
        q = q.T
    return jnp.asarray((gain * q[:rows, :cols]).reshape(shape), dtype=jnp.float32)


def init_params(key, in_channels, num_actions):
    gain = float(np.sqrt(2.0))
    ks = jax.random.split(key, 7)
    conv_out = 7 * 7 * 64
    return {
        "conv1_w": _orthogonal(ks[0], (32, in_channels, 8, 8), gain),
        "conv1_b": jnp.zeros((32,), jnp.float32),
        "conv2_w": _orthogonal(ks[1], (64, 32, 4, 4), gain),
        "conv2_b": jnp.zeros((64,), jnp.float32),
        "conv3_w": _orthogonal(ks[2], (64, 64, 3, 3), gain),
        "conv3_b": jnp.zeros((64,), jnp.float32),
        "val_fc1_w": _orthogonal(ks[3], (512, conv_out), gain),
        "val_fc1_b": jnp.zeros((512,), jnp.float32),
        "val_fc2_w": _orthogonal(ks[4], (1, 512), gain),
        "val_fc2_b": jnp.zeros((1,), jnp.float32),
        "adv_fc1_w": _orthogonal(ks[5], (512, conv_out), gain),
        "adv_fc1_b": jnp.zeros((512,), jnp.float32),
        "adv_fc2_w": _orthogonal(ks[6], (num_actions, 512), gain),
        "adv_fc2_b": jnp.zeros((num_actions,), jnp.float32),
    }


def _conv_w_mat(w_oihw, pad_to=128):
    w = np.asarray(w_oihw)
    oc, ic, kh, kw = w.shape
    m = w.transpose(2, 3, 1, 0).reshape(kh * kw * ic, oc)   # (KH, KW, C, OC)
    m = np.pad(m, ((0, 0), (0, pad_to - oc)))
    return jnp.asarray(m, dtype=jnp.bfloat16)


def _pad_bias(b, pad_to=128):
    b = np.asarray(b)
    return jnp.asarray(np.pad(b, (0, pad_to - b.shape[0])).reshape(1, pad_to),
                       dtype=jnp.float32)


def prepare_params(params, num_actions):
    assert num_actions < 128  # lane `num_actions` is reserved for the value stream
    # NCHW-flatten parity: PyTorch flattens conv3 output as (C=64, H=7, W=7); the
    # kernel consumes NHWC per-position features, so permute the fc1 input rows
    # ONCE here instead of transposing activations every forward pass.
    perm = np.arange(7 * 7 * 64).reshape(64, 7, 7).transpose(1, 2, 0).reshape(-1)
    w1_val = np.asarray(params["val_fc1_w"]).T[perm, :]                 # [3136, 512]
    w1_adv = np.asarray(params["adv_fc1_w"]).T[perm, :]
    w1 = np.concatenate([w1_val, w1_adv], axis=1)                       # [3136, 1024]
    # Chunk by conv3 spatial position: W1r[p, k, :] pairs with conv3out[b, p, k].
    w1r = jnp.asarray(w1.reshape(49, 64, 1024), dtype=jnp.bfloat16)
    b1 = jnp.asarray(np.concatenate([np.asarray(params["val_fc1_b"]),
                                     np.asarray(params["adv_fc1_b"])]
                                    ).reshape(1, 1024), dtype=jnp.float32)

    # Fused second layer (f32, [1024, 128]):
    #   columns 0..A-1 : advantage weights (driven by h[:, 512:1024])
    #   column  A      : value weights     (driven by h[:, 0:512])
    #   everything else: exactly zero.
    # The kernel's lane mask / value-lane read depends on this layout.
    a = num_actions
    w2 = np.zeros((1024, 128), np.float32)
    w2[512:1024, 0:a] = np.asarray(params["adv_fc2_w"]).T
    w2[0:512, a] = np.asarray(params["val_fc2_w"])[0]
    b2 = np.zeros((1, 128), np.float32)
    b2[0, 0:a] = np.asarray(params["adv_fc2_b"])
    b2[0, a] = float(np.asarray(params["val_fc2_b"])[0])

    return {
        "c1_w": _conv_w_mat(params["conv1_w"]), "c1_b": _pad_bias(params["conv1_b"]),
        "c2_w": _conv_w_mat(params["conv2_w"]), "c2_b": _pad_bias(params["conv2_b"]),
        "c3_w": _conv_w_mat(params["conv3_w"]), "c3_b": _pad_bias(params["conv3_b"]),
        "w1r": w1r, "b1": b1,
        "w2": jnp.asarray(w2), "b2": jnp.asarray(b2),
    }


# ----------------------------------------------------------------------------
# Forward pass (NHWC internally, 3 pallas_calls total).
# ----------------------------------------------------------------------------
def dueling_dqn_forward(prep, x_nchw, *, num_actions):
    n = x_nchw.shape[0]
    x = jnp.transpose(x_nchw, (0, 2, 3, 1)).astype(jnp.bfloat16)   # one NCHW->NHWC

    # conv1: 84x84x4 -> 20x20x32, k=8 s=4.  tile_m=400 gives m_pad==800 exactly and
    # a 2-step "parallel" grid (both v7x TensorCores busy, no padded garbage rows).
    p, oh, ow = _im2col_nhwc(x, 8, 8, 4)                           # [800, 256]
    y = matmul_bias_relu(p, prep["c1_w"], prep["c1_b"],
                         max_tile_m=400)[:, :32].reshape(n, oh, ow, 32)

    # conv2: 20x20x32 -> 9x9x64, k=4 s=2.
    p, oh, ow = _im2col_nhwc(y, 4, 4, 2)                           # [162, 512]
    y = matmul_bias_relu(p, prep["c2_w"], prep["c2_b"])[:, :64].reshape(n, oh, ow, 64)

    # conv3 + flatten + dueling head, fused in one kernel with the fc1 weight
    # pipelined over 7 position-chunks.
    pp = _im2col_conv3_posmajor(y, batch_pad=8)                    # [49, 8, 576]
    return conv3_dueling_head(pp, prep["c3_w"], prep["c3_b"], prep["w1r"],
                              prep["b1"], prep["w2"], prep["b2"],
                              num_actions=num_actions, batch=n)


# Pure-JAX f32 reference (exact PyTorch semantics) for a sanity check.
def reference_forward(params, x, num_actions):
    def conv(x, w, b, s):
        y = jax.lax.conv_general_dilated(
            x, w, (s, s), "VALID", dimension_numbers=("NCHW", "OIHW", "NCHW"))
        return jax.nn.relu(y + b[None, :, None, None])
    x = conv(x, params["conv1_w"], params["conv1_b"], 4)
    x = conv(x, params["conv2_w"], params["conv2_b"], 2)
    x = conv(x, params["conv3_w"], params["conv3_b"], 1)
    x = x.reshape(x.shape[0], -1)
    hv = jax.nn.relu(x @ params["val_fc1_w"].T + params["val_fc1_b"])
    v = hv @ params["val_fc2_w"].T + params["val_fc2_b"]
    ha = jax.nn.relu(x @ params["adv_fc1_w"].T + params["adv_fc1_b"])
    a = ha @ params["adv_fc2_w"].T + params["adv_fc2_b"]
    return v + (a - jnp.mean(a, axis=1, keepdims=True))


if __name__ == "__main__":
    batch, in_channels, hw = 2, 4, 84    # 84x84 is forced by the module's 7*7*64 assert
    num_actions = 6

    key = jax.random.PRNGKey(0)
    k_param, k_input = jax.random.split(key)
    params = init_params(k_param, in_channels, num_actions)
    prep = prepare_params(params, num_actions)
    x = jax.random.normal(k_input, (batch, in_channels, hw, hw), jnp.float32)

    fwd = jax.jit(functools.partial(dueling_dqn_forward, num_actions=num_actions))
    q = jax.block_until_ready(fwd(prep, x))

    assert q.shape == (batch, num_actions)
    assert q.dtype == jnp.float32

    # Loose-tolerance check vs. f32 reference (Pallas path uses bf16 activations /
    # weights on the MXU with f32 accumulation; the FC head runs f32).
    with jax.default_matmul_precision("highest"):
        q_ref = jax.block_until_ready(reference_forward(params, x, num_actions))
    err = float(jnp.max(jnp.abs(q - q_ref)))
    scale = float(jnp.max(jnp.abs(q_ref))) + 1.0
    assert err / scale < 0.12, f"mismatch: err={err}, scale={scale}"

    print("KERNEL_OK")
</pallas_src>

<mosaic_0001>
module attributes {stable_mosaic.version = 11 : i64} {
  func.func @_matmul_bias_relu_kernel(%arg0: i32, %arg1: memref<400x256xbf16, #tpu.memory_space<vmem>>, %arg2: memref<256x128xbf16, #tpu.memory_space<vmem>>, %arg3: memref<1x128xf32, #tpu.memory_space<vmem>>, %arg4: memref<400x128xbf16, #tpu.memory_space<vmem>>) attributes {dimension_semantics = [#tpu.dimension_semantics<parallel>], iteration_bounds = array<i64: 2>, scalar_prefetch = 0 : i64, scratch_operands = 0 : i64, tpu.core_type = #tpu.core_type<tc>, window_params = [{transform_indices = @transform_0, window_bounds = array<i64: 400, 256>}, {pipeline_mode = #tpu.pipeline_mode<synchronous>, transform_indices = @transform_1, window_bounds = array<i64: 256, 128>}, {pipeline_mode = #tpu.pipeline_mode<synchronous>, transform_indices = @transform_2, window_bounds = array<i64: 1, 128>}, {transform_indices = @transform_3, window_bounds = array<i64: 400, 128>}]} {
    %c0 = arith.constant 0 : index
    %c0_0 = arith.constant 0 : index
    %0 = vector.load %arg1[%c0, %c0_0] : memref<400x256xbf16, #tpu.memory_space<vmem>>, vector<400x256xbf16>
    %c0_1 = arith.constant 0 : index
    %c0_2 = arith.constant 0 : index
    %1 = vector.load %arg2[%c0_1, %c0_2] : memref<256x128xbf16, #tpu.memory_space<vmem>>, vector<256x128xbf16>
    %cst = arith.constant dense<0.000000e+00> : vector<400x128xf32>
    %2 = tpu.matmul %0, %1, %cst {dimension_numbers = #tpu.dot_dimension_numbers<[1], [0], [0], [1], [0, 0, 1, 1], [], []>} : vector<400x256xbf16>, vector<256x128xbf16>, vector<400x128xf32> -> vector<400x128xf32>
    %c0_3 = arith.constant 0 : index
    %c0_4 = arith.constant 0 : index
    %3 = vector.load %arg3[%c0_3, %c0_4] : memref<1x128xf32, #tpu.memory_space<vmem>>, vector<1x128xf32>
    %4 = vector.broadcast %3 : vector<1x128xf32> to vector<400x128xf32>
    %5 = arith.addf %2, %4 : vector<400x128xf32>
    %cst_5 = arith.constant 0.000000e+00 : f32
    %6 = vector.broadcast %cst_5 : f32 to vector<400x128xf32>
    %7 = arith.maximumf %5, %6 : vector<400x128xf32>
    %8 = arith.truncf %7 : vector<400x128xf32> to vector<400x128xbf16>
    %c0_6 = arith.constant 0 : index
    %c0_7 = arith.constant 0 : index
    %9 = vector.load %arg4[%c0_6, %c0_7] : memref<400x128xbf16, #tpu.memory_space<vmem>>, vector<400x128xbf16>
    tpu.vector_store %arg4[%c0_6, %c0_7], %8 {strides = array<i32>} : memref<400x128xbf16, #tpu.memory_space<vmem>>, vector<400x128xbf16>,
    return
  }
  func.func @transform_0(%arg0: i32) -> (i32, i32) {
    %c0_i32 = arith.constant 0 : i32
    %c0_i32_0 = arith.constant 0 : i32
    return %arg0, %c0_i32 : i32, i32
  }
  func.func @transform_1(%arg0: i32) -> (i32, i32) {
    %c0_i32 = arith.constant 0 : i32
    %c0_i32_0 = arith.constant 0 : i32
    %c0_i32_1 = arith.constant 0 : i32
    return %c0_i32, %c0_i32_0 : i32, i32
  }
  func.func @transform_2(%arg0: i32) -> (i32, i32) {
    %c0_i32 = arith.constant 0 : i32
    %c0_i32_0 = arith.constant 0 : i32
    %c0_i32_1 = arith.constant 0 : i32
    return %c0_i32, %c0_i32_0 : i32, i32
  }
  func.func @transform_3(%arg0: i32) -> (i32, i32) {
    %c0_i32 = arith.constant 0 : i32
    %c0_i32_0 = arith.constant 0 : i32
    return %arg0, %c0_i32 : i32, i32
  }
}

module attributes {stable_mosaic.version = 11 : i64} {
  func.func @_matmul_bias_relu_kernel(%arg0: i32, %arg1: memref<176x512xbf16, #tpu.memory_space<vmem>>, %arg2: memref<512x128xbf16, #tpu.memory_space<vmem>>, %arg3: memref<1x128xf32, #tpu.memory_space<vmem>>, %arg4: memref<176x128xbf16, #tpu.memory_space<vmem>>) attributes {dimension_semantics = [#tpu.dimension_semantics<parallel>], iteration_bounds = array<i64: 1>, scalar_prefetch = 0 : i64, scratch_operands = 0 : i64, tpu.core_type = #tpu.core_type<tc>, window_params = [{transform_indices = @transform_0, window_bounds = array<i64: 176, 512>}, {pipeline_mode = #tpu.pipeline_mode<synchronous>, transform_indices = @transform_1, window_bounds = array<i64: 512, 128>}, {pipeline_mode = #tpu.pipeline_mode<synchronous>, transform_indices = @transform_2, window_bounds = array<i64: 1, 128>}, {transform_indices = @transform_3, window_bounds = array<i64: 176, 128>}]} {
    %c0 = arith.constant 0 : index
    %c0_0 = arith.constant 0 : index
    %0 = vector.load %arg1[%c0, %c0_0] : memref<176x512xbf16, #tpu.memory_space<vmem>>, vector<176x512xbf16>
    %c0_1 = arith.constant 0 : index
    %c0_2 = arith.constant 0 : index
    %1 = vector.load %arg2[%c0_1, %c0_2] : memref<512x128xbf16, #tpu.memory_space<vmem>>, vector<512x128xbf16>
    %cst = arith.constant dense<0.000000e+00> : vector<176x128xf32>
    %2 = tpu.matmul %0, %1, %cst {dimension_numbers = #tpu.dot_dimension_numbers<[1], [0], [0], [1], [0, 0, 1, 1], [], []>} : vector<176x512xbf16>, vector<512x128xbf16>, vector<176x128xf32> -> vector<176x128xf32>
    %c0_3 = arith.constant 0 : index
    %c0_4 = arith.constant 0 : index
    %3 = vector.load %arg3[%c0_3, %c0_4] : memref<1x128xf32, #tpu.memory_space<vmem>>, vector<1x128xf32>
    %4 = vector.broadcast %3 : vector<1x128xf32> to vector<176x128xf32>
    %5 = arith.addf %2, %4 : vector<176x128xf32>
    %cst_5 = arith.constant 0.000000e+00 : f32
    %6 = vector.broadcast %cst_5 : f32 to vector<176x128xf32>
    %7 = arith.maximumf %5, %6 : vector<176x128xf32>
    %8 = arith.truncf %7 : vector<176x128xf32> to vector<176x128xbf16>
    %c0_6 = arith.constant 0 : index
    %c0_7 = arith.constant 0 : index
    %9 = vector.load %arg4[%c0_6, %c0_7] : memref<176x128xbf16, #tpu.memory_space<vmem>>, vector<176x128xbf16>
    tpu.vector_store %arg4[%c0_6, %c0_7], %8 {strides = array<i32>} : memref<176x128xbf16, #tpu.memory_space<vmem>>, vector<176x128xbf16>,
    return
  }
  func.func @transform_0(%arg0: i32) -> (i32, i32) {
    %c0_i32 = arith.constant 0 : i32
    %c0_i32_0 = arith.constant 0 : i32
    return %arg0, %c0_i32 : i32, i32
  }
  func.func @transform_1(%arg0: i32) -> (i32, i32) {
    %c0_i32 = arith.constant 0 : i32
    %c0_i32_0 = arith.constant 0 : i32
    %c0_i32_1 = arith.constant 0 : i32
    return %c0_i32, %c0_i32_0 : i32, i32
  }
  func.func @transform_2(%arg0: i32) -> (i32, i32) {
    %c0_i32 = arith.constant 0 : i32
    %c0_i32_0 = arith.constant 0 : i32
    %c0_i32_1 = arith.constant 0 : i32
    return %c0_i32, %c0_i32_0 : i32, i32
  }
  func.func @transform_3(%arg0: i32) -> (i32, i32) {
    %c0_i32 = arith.constant 0 : i32
    %c0_i32_0 = arith.constant 0 : i32
    return %arg0, %c0_i32 : i32, i32
  }
}

module attributes {stable_mosaic.version = 11 : i64} {
  func.func @_conv3_dueling_kernel(%arg0: i32, %arg1: memref<7x8x576xbf16, #tpu.memory_space<vmem>>, %arg2: memref<576x128xbf16, #tpu.memory_space<vmem>>, %arg3: memref<1x128xf32, #tpu.memory_space<vmem>>, %arg4: memref<7x64x1024xbf16, #tpu.memory_space<vmem>>, %arg5: memref<1x1024xf32, #tpu.memory_space<vmem>>, %arg6: memref<1024x128xf32, #tpu.memory_space<vmem>>, %arg7: memref<1x128xf32, #tpu.memory_space<vmem>>, %arg8: memref<8x128xf32, #tpu.memory_space<vmem>>, %arg9: memref<8x1024xf32, #tpu.memory_space<vmem>>) attributes {dimension_semantics = [#tpu.dimension_semantics<arbitrary>], iteration_bounds = array<i64: 7>, scalar_prefetch = 0 : i64, scratch_operands = 1 : i64, tpu.core_type = #tpu.core_type<tc>, window_params = [{transform_indices = @transform_0, window_bounds = array<i64: 7, 8, 576>}, {pipeline_mode = #tpu.pipeline_mode<synchronous>, transform_indices = @transform_1, window_bounds = array<i64: 576, 128>}, {pipeline_mode = #tpu.pipeline_mode<synchronous>, transform_indices = @transform_2, window_bounds = array<i64: 1, 128>}, {transform_indices = @transform_3, window_bounds = array<i64: 7, 64, 1024>}, {pipeline_mode = #tpu.pipeline_mode<synchronous>, transform_indices = @transform_4, window_bounds = array<i64: 1, 1024>}, {pipeline_mode = #tpu.pipeline_mode<synchronous>, transform_indices = @transform_5, window_bounds = array<i64: 1024, 128>}, {pipeline_mode = #tpu.pipeline_mode<synchronous>, transform_indices = @transform_6, window_bounds = array<i64: 1, 128>}, {pipeline_mode = #tpu.pipeline_mode<synchronous>, transform_indices = @transform_7, window_bounds = array<i64: 8, 128>}]} {
    %c0_i32 = arith.constant 0 : i32
    %0 = arith.cmpi eq, %arg0, %c0_i32 : i32
    %1 = arith.extui %0 : i1 to i32
    %c0_i32_0 = arith.constant 0 : i32
    %2 = arith.cmpi ne, %1, %c0_i32_0 : i32
    scf.if %2 {
      %cst_89 = arith.constant 0.000000e+00 : f32
      %113 = vector.broadcast %cst_89 : f32 to vector<8x1024xf32>
      %c0_90 = arith.constant 0 : index
      %c0_91 = arith.constant 0 : index
      %114 = vector.load %arg9[%c0_90, %c0_91] : memref<8x1024xf32, #tpu.memory_space<vmem>>, vector<8x1024xf32>
      tpu.vector_store %arg9[%c0_90, %c0_91], %113 {strides = array<i32>} : memref<8x1024xf32, #tpu.memory_space<vmem>>, vector<8x1024xf32>,
    } else {
    }
    %c0 = arith.constant 0 : index
    %c0_1 = arith.constant 0 : index
    %c0_2 = arith.constant 0 : index
    %3 = vector.load %arg1[%c0, %c0_1, %c0_2] : memref<7x8x576xbf16, #tpu.memory_space<vmem>>, vector<1x8x576xbf16>
    %4 = vector.shape_cast %3 : vector<1x8x576xbf16> to vector<8x576xbf16>
    %c0_3 = arith.constant 0 : index
    %c0_4 = arith.constant 0 : index
    %5 = vector.load %arg2[%c0_3, %c0_4] : memref<576x128xbf16, #tpu.memory_space<vmem>>, vector<576x128xbf16>
    %cst = arith.constant dense<0.000000e+00> : vector<8x128xf32>
    %6 = tpu.matmul %4, %5, %cst {dimension_numbers = #tpu.dot_dimension_numbers<[1], [0], [0], [1], [0, 0, 1, 1], [], []>} : vector<8x576xbf16>, vector<576x128xbf16>, vector<8x128xf32> -> vector<8x128xf32>
    %c0_5 = arith.constant 0 : index
    %c0_6 = arith.constant 0 : index
    %7 = vector.load %arg3[%c0_5, %c0_6] : memref<1x128xf32, #tpu.memory_space<vmem>>, vector<1x128xf32>
    %8 = vector.broadcast %7 : vector<1x128xf32> to vector<8x128xf32>
    %9 = arith.addf %6, %8 : vector<8x128xf32>
    %cst_7 = arith.constant 0.000000e+00 : f32
    %10 = vector.broadcast %cst_7 : f32 to vector<8x128xf32>
    %11 = arith.maximumf %9, %10 : vector<8x128xf32>
    %12 = vector.extract_strided_slice %11 {offsets = [0, 0], sizes = [8, 64], strides = [1, 1]} : vector<8x128xf32> to vector<8x64xf32>
    %13 = arith.truncf %12 : vector<8x64xf32> to vector<8x64xbf16>
    %c0_8 = arith.constant 0 : index
    %c0_9 = arith.constant 0 : index
    %c0_10 = arith.constant 0 : index
    %14 = vector.load %arg4[%c0_8, %c0_9, %c0_10] : memref<7x64x1024xbf16, #tpu.memory_space<vmem>>, vector<1x64x1024xbf16>
    %15 = vector.shape_cast %14 : vector<1x64x1024xbf16> to vector<64x1024xbf16>
    %cst_11 = arith.constant dense<0.000000e+00> : vector<8x1024xf32>
    %16 = tpu.matmul %13, %15, %cst_11 {dimension_numbers = #tpu.dot_dimension_numbers<[1], [0], [0], [1], [0, 0, 1, 1], [], []>} : vector<8x64xbf16>, vector<64x1024xbf16>, vector<8x1024xf32> -> vector<8x1024xf32>
    %c1 = arith.constant 1 : index
    %c0_12 = arith.constant 0 : index
    %c0_13 = arith.constant 0 : index
    %17 = vector.load %arg1[%c1, %c0_12, %c0_13] : memref<7x8x576xbf16, #tpu.memory_space<vmem>>, vector<1x8x576xbf16>
    %18 = vector.shape_cast %17 : vector<1x8x576xbf16> to vector<8x576xbf16>
    %c0_14 = arith.constant 0 : index
    %c0_15 = arith.constant 0 : index
    %19 = vector.load %arg2[%c0_14, %c0_15] : memref<576x128xbf16, #tpu.memory_space<vmem>>, vector<576x128xbf16>
    %cst_16 = arith.constant dense<0.000000e+00> : vector<8x128xf32>
    %20 = tpu.matmul %18, %19, %cst_16 {dimension_numbers = #tpu.dot_dimension_numbers<[1], [0], [0], [1], [0, 0, 1, 1], [], []>} : vector<8x576xbf16>, vector<576x128xbf16>, vector<8x128xf32> -> vector<8x128xf32>
    %c0_17 = arith.constant 0 : index
    %c0_18 = arith.constant 0 : index
    %21 = vector.load %arg3[%c0_17, %c0_18] : memref<1x128xf32, #tpu.memory_space<vmem>>, vector<1x128xf32>
    %22 = vector.broadcast %21 : vector<1x128xf32> to vector<8x128xf32>
    %23 = arith.addf %20, %22 : vector<8x128xf32>
    %cst_19 = arith.constant 0.000000e+00 : f32
    %24 = vector.broadcast %cst_19 : f32 to vector<8x128xf32>
    %25 = arith.maximumf %23, %24 : vector<8x128xf32>
    %26 = vector.extract_strided_slice %25 {offsets = [0, 0], sizes = [8, 64], strides = [1, 1]} : vector<8x128xf32> to vector<8x64xf32>
    %27 = arith.truncf %26 : vector<8x64xf32> to vector<8x64xbf16>
    %c1_20 = arith.constant 1 : index
    %c0_21 = arith.constant 0 : index
    %c0_22 = arith.constant 0 : index
    %28 = vector.load %arg4[%c1_20, %c0_21, %c0_22] : memref<7x64x1024xbf16, #tpu.memory_space<vmem>>, vector<1x64x1024xbf16>
    %29 = vector.shape_cast %28 : vector<1x64x1024xbf16> to vector<64x1024xbf16>
    %cst_23 = arith.constant dense<0.000000e+00> : vector<8x1024xf32>
    %30 = tpu.matmul %27, %29, %cst_23 {dimension_numbers = #tpu.dot_dimension_numbers<[1], [0], [0], [1], [0, 0, 1, 1], [], []>} : vector<8x64xbf16>, vector<64x1024xbf16>, vector<8x1024xf32> -> vector<8x1024xf32>
    %31 = arith.addf %16, %30 : vector<8x1024xf32>
    %c2 = arith.constant 2 : index
    %c0_24 = arith.constant 0 : index
    %c0_25 = arith.constant 0 : index
    %32 = vector.load %arg1[%c2, %c0_24, %c0_25] : memref<7x8x576xbf16, #tpu.memory_space<vmem>>, vector<1x8x576xbf16>
    %33 = vector.shape_cast %32 : vector<1x8x576xbf16> to vector<8x576xbf16>
    %c0_26 = arith.constant 0 : index
    %c0_27 = arith.constant 0 : index
    %34 = vector.load %arg2[%c0_26, %c0_27] : memref<576x128xbf16, #tpu.memory_space<vmem>>, vector<576x128xbf16>
    %cst_28 = arith.constant dense<0.000000e+00> : vector<8x128xf32>
    %35 = tpu.matmul %33, %34, %cst_28 {dimension_numbers = #tpu.dot_dimension_numbers<[1], [0], [0], [1], [0, 0, 1, 1], [], []>} : vector<8x576xbf16>, vector<576x128xbf16>, vector<8x128xf32> -> vector<8x128xf32>
    %c0_29 = arith.constant 0 : index
    %c0_30 = arith.constant 0 : index
    %36 = vector.load %arg3[%c0_29, %c0_30] : memref<1x128xf32, #tpu.memory_space<vmem>>, vector<1x128xf32>
    %37 = vector.broadcast %36 : vector<1x128xf32> to vector<8x128xf32>
    %38 = arith.addf %35, %37 : vector<8x128xf32>
    %cst_31 = arith.constant 0.000000e+00 : f32
    %39 = vector.broadcast %cst_31 : f32 to vector<8x128xf32>
    %40 = arith.maximumf %38, %39 : vector<8x128xf32>
    %41 = vector.extract_strided_slice %40 {offsets = [0, 0], sizes = [8, 64], strides = [1, 1]} : vector<8x128xf32> to vector<8x64xf32>
    %42 = arith.truncf %41 : vector<8x64xf32> to vector<8x64xbf16>
    %c2_32 = arith.constant 2 : index
    %c0_33 = arith.constant 0 : index
    %c0_34 = arith.constant 0 : index
    %43 = vector.load %arg4[%c2_32, %c0_33, %c0_34] : memref<7x64x1024xbf16, #tpu.memory_space<vmem>>, vector<1x64x1024xbf16>
    %44 = vector.shape_cast %43 : vector<1x64x1024xbf16> to vector<64x1024xbf16>
    %cst_35 = arith.constant dense<0.000000e+00> : vector<8x1024xf32>
    %45 = tpu.matmul %42, %44, %cst_35 {dimension_numbers = #tpu.dot_dimension_numbers<[1], [0], [0], [1], [0, 0, 1, 1], [], []>} : vector<8x64xbf16>, vector<64x1024xbf16>, vector<8x1024xf32> -> vector<8x1024xf32>
    %46 = arith.addf %31, %45 : vector<8x1024xf32>
    %c3 = arith.constant 3 : index
    %c0_36 = arith.constant 0 : index
    %c0_37 = arith.constant 0 : index
    %47 = vector.load %arg1[%c3, %c0_36, %c0_37] : memref<7x8x576xbf16, #tpu.memory_space<vmem>>, vector<1x8x576xbf16>
    %48 = vector.shape_cast %47 : vector<1x8x576xbf16> to vector<8x576xbf16>
    %c0_38 = arith.constant 0 : index
    %c0_39 = arith.constant 0 : index
    %49 = vector.load %arg2[%c0_38, %c0_39] : memref<576x128xbf16, #tpu.memory_space<vmem>>, vector<576x128xbf16>
    %cst_40 = arith.constant dense<0.000000e+00> : vector<8x128xf32>
    %50 = tpu.matmul %48, %49, %cst_40 {dimension_numbers = #tpu.dot_dimension_numbers<[1], [0], [0], [1], [0, 0, 1, 1], [], []>} : vector<8x576xbf16>, vector<576x128xbf16>, vector<8x128xf32> -> vector<8x128xf32>
    %c0_41 = arith.constant 0 : index
    %c0_42 = arith.constant 0 : index
    %51 = vector.load %arg3[%c0_41, %c0_42] : memref<1x128xf32, #tpu.memory_space<vmem>>, vector<1x128xf32>
    %52 = vector.broadcast %51 : vector<1x128xf32> to vector<8x128xf32>
    %53 = arith.addf %50, %52 : vector<8x128xf32>
    %cst_43 = arith.constant 0.000000e+00 : f32
    %54 = vector.broadcast %cst_43 : f32 to vector<8x128xf32>
    %55 = arith.maximumf %53, %54 : vector<8x128xf32>
    %56 = vector.extract_strided_slice %55 {offsets = [0, 0], sizes = [8, 64], strides = [1, 1]} : vector<8x128xf32> to vector<8x64xf32>
    %57 = arith.truncf %56 : vector<8x64xf32> to vector<8x64xbf16>
    %c3_44 = arith.constant 3 : index
    %c0_45 = arith.constant 0 : index
    %c0_46 = arith.constant 0 : index
    %58 = vector.load %arg4[%c3_44, %c0_45, %c0_46] : memref<7x64x1024xbf16, #tpu.memory_space<vmem>>, vector<1x64x1024xbf16>
    %59 = vector.shape_cast %58 : vector<1x64x1024xbf16> to vector<64x1024xbf16>
    %cst_47 = arith.constant dense<0.000000e+00> : vector<8x1024xf32>
    %60 = tpu.matmul %57, %59, %cst_47 {dimension_numbers = #tpu.dot_dimension_numbers<[1], [0], [0], [1], [0, 0, 1, 1], [], []>} : vector<8x64xbf16>, vector<64x1024xbf16>, vector<8x1024xf32> -> vector<8x1024xf32>
    %61 = arith.addf %46, %60 : vector<8x1024xf32>
    %c4 = arith.constant 4 : index
    %c0_48 = arith.constant 0 : index
    %c0_49 = arith.constant 0 : index
    %62 = vector.load %arg1[%c4, %c0_48, %c0_49] : memref<7x8x576xbf16, #tpu.memory_space<vmem>>, vector<1x8x576xbf16>
    %63 = vector.shape_cast %62 : vector<1x8x576xbf16> to vector<8x576xbf16>
    %c0_50 = arith.constant 0 : index
    %c0_51 = arith.constant 0 : index
    %64 = vector.load %arg2[%c0_50, %c0_51] : memref<576x128xbf16, #tpu.memory_space<vmem>>, vector<576x128xbf16>
    %cst_52 = arith.constant dense<0.000000e+00> : vector<8x128xf32>
    %65 = tpu.matmul %63, %64, %cst_52 {dimension_numbers = #tpu.dot_dimension_numbers<[1], [0], [0], [1], [0, 0, 1, 1], [], []>} : vector<8x576xbf16>, vector<576x128xbf16>, vector<8x128xf32> -> vector<8x128xf32>
    %c0_53 = arith.constant 0 : index
    %c0_54 = arith.constant 0 : index
    %66 = vector.load %arg3[%c0_53, %c0_54] : memref<1x128xf32, #tpu.memory_space<vmem>>, vector<1x128xf32>
    %67 = vector.broadcast %66 : vector<1x128xf32> to vector<8x128xf32>
    %68 = arith.addf %65, %67 : vector<8x128xf32>
    %cst_55 = arith.constant 0.000000e+00 : f32
    %69 = vector.broadcast %cst_55 : f32 to vector<8x128xf32>
    %70 = arith.maximumf %68, %69 : vector<8x128xf32>
    %71 = vector.extract_strided_slice %70 {offsets = [0, 0], sizes = [8, 64], strides = [1, 1]} : vector<8x128xf32> to vector<8x64xf32>
    %72 = arith.truncf %71 : vector<8x64xf32> to vector<8x64xbf16>
    %c4_56 = arith.constant 4 : index
    %c0_57 = arith.constant 0 : index
    %c0_58 = arith.constant 0 : index
    %73 = vector.load %arg4[%c4_56, %c0_57, %c0_58] : memref<7x64x1024xbf16, #tpu.memory_space<vmem>>, vector<1x64x1024xbf16>
    %74 = vector.shape_cast %73 : vector<1x64x1024xbf16> to vector<64x1024xbf16>
    %cst_59 = arith.constant dense<0.000000e+00> : vector<8x1024xf32>
    %75 = tpu.matmul %72, %74, %cst_59 {dimension_numbers = #tpu.dot_dimension_numbers<[1], [0], [0], [1], [0, 0, 1, 1], [], []>} : vector<8x64xbf16>, vector<64x1024xbf16>, vector<8x1024xf32> -> vector<8x1024xf32>
    %76 = arith.addf %61, %75 : vector<8x1024xf32>
    %c5 = arith.constant 5 : index
    %c0_60 = arith.constant 0 : index
    %c0_61 = arith.constant 0 : index
    %77 = vector.load %arg1[%c5, %c0_60, %c0_61] : memref<7x8x576xbf16, #tpu.memory_space<vmem>>, vector<1x8x576xbf16>
    %78 = vector.shape_cast %77 : vector<1x8x576xbf16> to vector<8x576xbf16>
    %c0_62 = arith.constant 0 : index
    %c0_63 = arith.constant 0 : index
    %79 = vector.load %arg2[%c0_62, %c0_63] : memref<576x128xbf16, #tpu.memory_space<vmem>>, vector<576x128xbf16>
    %cst_64 = arith.constant dense<0.000000e+00> : vector<8x128xf32>
    %80 = tpu.matmul %78, %79, %cst_64 {dimension_numbers = #tpu.dot_dimension_numbers<[1], [0], [0], [1], [0, 0, 1, 1], [], []>} : vector<8x576xbf16>, vector<576x128xbf16>, vector<8x128xf32> -> vector<8x128xf32>
    %c0_65 = arith.constant 0 : index
    %c0_66 = arith.constant 0 : index
    %81 = vector.load %arg3[%c0_65, %c0_66] : memref<1x128xf32, #tpu.memory_space<vmem>>, vector<1x128xf32>
    %82 = vector.broadcast %81 : vector<1x128xf32> to vector<8x128xf32>
    %83 = arith.addf %80, %82 : vector<8x128xf32>
    %cst_67 = arith.constant 0.000000e+00 : f32
    %84 = vector.broadcast %cst_67 : f32 to vector<8x128xf32>
    %85 = arith.maximumf %83, %84 : vector<8x128xf32>
    %86 = vector.extract_strided_slice %85 {offsets = [0, 0], sizes = [8, 64], strides = [1, 1]} : vector<8x128xf32> to vector<8x64xf32>
    %87 = arith.truncf %86 : vector<8x64xf32> to vector<8x64xbf16>
    %c5_68 = arith.constant 5 : index
    %c0_69 = arith.constant 0 : index
    %c0_70 = arith.constant 0 : index
    %88 = vector.load %arg4[%c5_68, %c0_69, %c0_70] : memref<7x64x1024xbf16, #tpu.memory_space<vmem>>, vector<1x64x1024xbf16>
    %89 = vector.shape_cast %88 : vector<1x64x1024xbf16> to vector<64x1024xbf16>
    %cst_71 = arith.constant dense<0.000000e+00> : vector<8x1024xf32>
    %90 = tpu.matmul %87, %89, %cst_71 {dimension_numbers = #tpu.dot_dimension_numbers<[1], [0], [0], [1], [0, 0, 1, 1], [], []>} : vector<8x64xbf16>, vector<64x1024xbf16>, vector<8x1024xf32> -> vector<8x1024xf32>
    %91 = arith.addf %76, %90 : vector<8x1024xf32>
    %c6 = arith.constant 6 : index
    %c0_72 = arith.constant 0 : index
    %c0_73 = arith.constant 0 : index
    %92 = vector.load %arg1[%c6, %c0_72, %c0_73] : memref<7x8x576xbf16, #tpu.memory_space<vmem>>, vector<1x8x576xbf16>
    %93 = vector.shape_cast %92 : vector<1x8x576xbf16> to vector<8x576xbf16>
    %c0_74 = arith.constant 0 : index
    %c0_75 = arith.constant 0 : index
    %94 = vector.load %arg2[%c0_74, %c0_75] : memref<576x128xbf16, #tpu.memory_space<vmem>>, vector<576x128xbf16>
    %cst_76 = arith.constant dense<0.000000e+00> : vector<8x128xf32>
    %95 = tpu.matmul %93, %94, %cst_76 {dimension_numbers = #tpu.dot_dimension_numbers<[1], [0], [0], [1], [0, 0, 1, 1], [], []>} : vector<8x576xbf16>, vector<576x128xbf16>, vector<8x128xf32> -> vector<8x128xf32>
    %c0_77 = arith.constant 0 : index
    %c0_78 = arith.constant 0 : index
    %96 = vector.load %arg3[%c0_77, %c0_78] : memref<1x128xf32, #tpu.memory_space<vmem>>, vector<1x128xf32>
    %97 = vector.broadcast %96 : vector<1x128xf32> to vector<8x128xf32>
    %98 = arith.addf %95, %97 : vector<8x128xf32>
    %cst_79 = arith.constant 0.000000e+00 : f32
    %99 = vector.broadcast %cst_79 : f32 to vector<8x128xf32>
    %100 = arith.maximumf %98, %99 : vector<8x128xf32>
    %101 = vector.extract_strided_slice %100 {offsets = [0, 0], sizes = [8, 64], strides = [1, 1]} : vector<8x128xf32> to vector<8x64xf32>
    %102 = arith.truncf %101 : vector<8x64xf32> to vector<8x64xbf16>
    %c6_80 = arith.constant 6 : index
    %c0_81 = arith.constant 0 : index
    %c0_82 = arith.constant 0 : index
    %103 = vector.load %arg4[%c6_80, %c0_81, %c0_82] : memref<7x64x1024xbf16, #tpu.memory_space<vmem>>, vector<1x64x1024xbf16>
    %104 = vector.shape_cast %103 : vector<1x64x1024xbf16> to vector<64x1024xbf16>
    %cst_83 = arith.constant dense<0.000000e+00> : vector<8x1024xf32>
    %105 = tpu.matmul %102, %104, %cst_83 {dimension_numbers = #tpu.dot_dimension_numbers<[1], [0], [0], [1], [0, 0, 1, 1], [], []>} : vector<8x64xbf16>, vector<64x1024xbf16>, vector<8x1024xf32> -> vector<8x1024xf32>
    %106 = arith.addf %91, %105 : vector<8x1024xf32>
    %c0_84 = arith.constant 0 : index
    %c0_85 = arith.constant 0 : index
    %107 = vector.load %arg9[%c0_84, %c0_85] : memref<8x1024xf32, #tpu.memory_space<vmem>>, vector<8x1024xf32>
    %108 = arith.addf %107, %106 : vector<8x1024xf32>
    %c0_86 = arith.constant 0 : index
    %c0_87 = arith.constant 0 : index
    %109 = vector.load %arg9[%c0_86, %c0_87] : memref<8x1024xf32, #tpu.memory_space<vmem>>, vector<8x1024xf32>
    tpu.vector_store %arg9[%c0_86, %c0_87], %108 {strides = array<i32>} : memref<8x1024xf32, #tpu.memory_space<vmem>>, vector<8x1024xf32>,
    %c6_i32 = arith.constant 6 : i32
    %110 = arith.cmpi eq, %arg0, %c6_i32 : i32
    %111 = arith.extui %110 : i1 to i32
    %c0_i32_88 = arith.constant 0 : i32
    %112 = arith.cmpi ne, %111, %c0_i32_88 : i32
    scf.if %112 {
      %c0_89 = arith.constant 0 : index
      %c0_90 = arith.constant 0 : index
      %113 = vector.load %arg9[%c0_89, %c0_90] : memref<8x1024xf32, #tpu.memory_space<vmem>>, vector<8x1024xf32>
      %c0_91 = arith.constant 0 : index
      %c0_92 = arith.constant 0 : index
      %114 = vector.load %arg5[%c0_91, %c0_92] : memref<1x1024xf32, #tpu.memory_space<vmem>>, vector<1x1024xf32>
      %115 = vector.broadcast %114 : vector<1x1024xf32> to vector<8x1024xf32>
      %116 = arith.addf %113, %115 : vector<8x1024xf32>
      %cst_93 = arith.constant 0.000000e+00 : f32
      %117 = vector.broadcast %cst_93 : f32 to vector<8x1024xf32>
      %118 = arith.maximumf %116, %117 : vector<8x1024xf32>
      %c0_94 = arith.constant 0 : index
      %c0_95 = arith.constant 0 : index
      %119 = vector.load %arg6[%c0_94, %c0_95] : memref<1024x128xf32, #tpu.memory_space<vmem>>, vector<1024x128xf32>
      %cst_96 = arith.constant dense<0.000000e+00> : vector<8x128xf32>
      %120 = tpu.matmul %118, %119, %cst_96 {dimension_numbers = #tpu.dot_dimension_numbers<[1], [0], [0], [1], [0, 0, 1, 1], [], []>} : vector<8x1024xf32>, vector<1024x128xf32>, vector<8x128xf32> -> vector<8x128xf32>
      %c0_97 = arith.constant 0 : index
      %c0_98 = arith.constant 0 : index
      %121 = vector.load %arg7[%c0_97, %c0_98] : memref<1x128xf32, #tpu.memory_space<vmem>>, vector<1x128xf32>
      %122 = vector.broadcast %121 : vector<1x128xf32> to vector<8x128xf32>
      %123 = arith.addf %120, %122 : vector<8x128xf32>
      %124 = tpu.iota {dimensions = array<i32: 1>} : vector<8x128xi32>
      %c6_i32_99 = arith.constant 6 : i32
      %125 = vector.broadcast %c6_i32_99 : i32 to vector<8x128xi32>
      %126 = arith.cmpi slt, %124, %125 : vector<8x128xi32>
      %cst_100 = arith.constant 0.000000e+00 : f32
      %127 = vector.broadcast %cst_100 : f32 to vector<8x128xf32>
      %128 = arith.select %126, %123, %127 : vector<8x128xi1>, vector<8x128xf32>
      %cst_101 = arith.constant dense<0.000000e+00> : vector<8xf32>
      %129 = vector.multi_reduction <add>, %128, %cst_101 [1] : vector<8x128xf32> to vector<8xf32>
      %130 = vector.shape_cast %129 : vector<8xf32> to vector<8x1xf32>
      %cst_102 = arith.constant 0.166666672 : f32
      %131 = vector.broadcast %cst_102 : f32 to vector<8x1xf32>
      %132 = arith.mulf %130, %131 : vector<8x1xf32>
      %c6_i32_103 = arith.constant 6 : i32
      %133 = vector.broadcast %c6_i32_103 : i32 to vector<8x128xi32>
      %134 = arith.cmpi eq, %124, %133 : vector<8x128xi32>
      %cst_104 = arith.constant 0.000000e+00 : f32
      %135 = vector.broadcast %cst_104 : f32 to vector<8x128xf32>
      %136 = arith.select %134, %123, %135 : vector<8x128xi1>, vector<8x128xf32>
      %cst_105 = arith.constant dense<0.000000e+00> : vector<8xf32>
      %137 = vector.multi_reduction <add>, %136, %cst_105 [1] : vector<8x128xf32> to vector<8xf32>
      %138 = vector.shape_cast %137 : vector<8xf32> to vector<8x1xf32>
      %139 = vector.broadcast %138 : vector<8x1xf32> to vector<8x128xf32>
      %140 = arith.addf %139, %128 : vector<8x128xf32>
      %141 = vector.broadcast %132 : vector<8x1xf32> to vector<8x128xf32>
      %142 = arith.subf %140, %141 : vector<8x128xf32>
      %c0_106 = arith.constant 0 : index
      %c0_107 = arith.constant 0 : index
      %143 = vector.load %arg8[%c0_106, %c0_107] : memref<8x128xf32, #tpu.memory_space<vmem>>, vector<8x128xf32>
      tpu.vector_store %arg8[%c0_106, %c0_107], %142 {strides = array<i32>} : memref<8x128xf32, #tpu.memory_space<vmem>>, vector<8x128xf32>,
    } else {
    }
    return
  }
  func.func @transform_0(%arg0: i32) -> (i32, i32, i32) {
    %c0_i32 = arith.constant 0 : i32
    %c0_i32_0 = arith.constant 0 : i32
    %c0_i32_1 = arith.constant 0 : i32
    return %arg0, %c0_i32, %c0_i32_0 : i32, i32, i32
  }
  func.func @transform_1(%arg0: i32) -> (i32, i32) {
    %c0_i32 = arith.constant 0 : i32
    %c0_i32_0 = arith.constant 0 : i32
    %c0_i32_1 = arith.constant 0 : i32
    return %c0_i32, %c0_i32_0 : i32, i32
  }
  func.func @transform_2(%arg0: i32) -> (i32, i32) {
    %c0_i32 = arith.constant 0 : i32
    %c0_i32_0 = arith.constant 0 : i32
    %c0_i32_1 = arith.constant 0 : i32
    return %c0_i32, %c0_i32_0 : i32, i32
  }
  func.func @transform_3(%arg0: i32) -> (i32, i32, i32) {
    %c0_i32 = arith.constant 0 : i32
    %c0_i32_0 = arith.constant 0 : i32
    %c0_i32_1 = arith.constant 0 : i32
    return %arg0, %c0_i32, %c0_i32_0 : i32, i32, i32
  }
  func.func @transform_4(%arg0: i32) -> (i32, i32) {
    %c0_i32 = arith.constant 0 : i32
    %c0_i32_0 = arith.constant 0 : i32
    %c0_i32_1 = arith.constant 0 : i32
    return %c0_i32, %c0_i32_0 : i32, i32
  }
  func.func @transform_5(%arg0: i32) -> (i32, i32) {
    %c0_i32 = arith.constant 0 : i32
    %c0_i32_0 = arith.constant 0 : i32
    %c0_i32_1 = arith.constant 0 : i32
    return %c0_i32, %c0_i32_0 : i32, i32
  }
  func.func @transform_6(%arg0: i32) -> (i32, i32) {
    %c0_i32 = arith.constant 0 : i32
    %c0_i32_0 = arith.constant 0 : i32
    %c0_i32_1 = arith.constant 0 : i32
    return %c0_i32, %c0_i32_0 : i32, i32
  }
  func.func @transform_7(%arg0: i32) -> (i32, i32) {
    %c0_i32 = arith.constant 0 : i32
    %c0_i32_0 = arith.constant 0 : i32
    %c0_i32_1 = arith.constant 0 : i32
    return %c0_i32, %c0_i32_0 : i32, i32
  }
}

</mosaic_0001>

<llo_original>
// kernel: dueling_dqn_forward.3
$region0: #{dueling_dqn_forward.3}
  #allocation0 [shape = 'u32[]', space=smem, size = 0x4, offset = 0x4, fixed_abs, tag = 'smem constant byte address 0x4 - core index']
  #allocation1 [shape = 'u32[144,128]{1,0:T(1,128)}', space=vmem, size = 0x12000, scoped, tag = 'internal scratch']
  %s0 = inlined_call_operand.vmem [shape: bf16[800,256], index: 0, kind: input, shape index: {}]
  %s1 = inlined_call_operand.vmem [shape: bf16[256,128], index: 1, kind: input, shape index: {}]
  %s2 = inlined_call_operand.vmem [shape: f32[1,128], index: 2, kind: input, shape index: {}]
  %s3 = inlined_call_operand.vmem [shape: bf16[800,128], index: 3, kind: output, shape index: {}]
  %s4 = sld [smem:[#allocation0]]
  $region45: #{dueling_dqn_forward.3} parent=0
    _
  %s6 = ssub.s32 1, %s4
  %s7 = scalar_select 0, %s6, %s4
  loop: start=0, step=1, limit=4
  $region2: #{dueling_dqn_forward.3} parent=0 // loop_pre_header
    _
  $region3: #{dueling_dqn_forward.3} parent=0 // loop_header
    %s9 = sphi 0, %s13
    %p10 = scmp.ge.s32.totalorder %s9, 4
    %s19 = sphi 0, %s21
    %s22 = sphi 0, %s19
    %s23 = sphi 0, %s22
    %s39 = sphi 0, %s23
    %s43 = sphi 0, %s43
    %s45 = sphi 0, %s43
    %s46 = sphi 0, %s45
    %s60 = sphi 0, %s46
    %s64 = sphi 0, %s64
    %s66 = sphi 0, %s64
    %s67 = sphi 0, %s66
    %s81 = sphi 0, %s67
    %s87 = sphi 0, %s89
    %s90 = sphi 0, %s87
    %s91 = sphi 0, %s90
    %s107 = sphi 0, %s91
  $region4: #{dueling_dqn_forward.3} parent=0 // loop_header_branch
    %12 = sbr.rel (%p10) target = $region8
  $region5: #{dueling_dqn_forward.3} parent=0 // loop_body
    %s14 = ssub.s32 %s9, 1
    %s15 = ssub.s32 %s9, 2
    %s16 = sadd.s32 %s9, 1
    %s17 = ssub.s32 %s9, %s16
    %p18 = scmp.eq.s32.totalorder %s17, 0
    %s20 = sadd.s32 %s19, 1
    %s21 = scalar_select %p18, %s19, %s20
    %p24 = pneg %p18
    %p25 = scmp.eq.s32.totalorder %s9, 1
    %p26 = por %p24, %p25
    %p27 = scmp.ne.s32.totalorder %s19, %s22
    %p28 = scmp.eq.s32.totalorder %s9, 0
    %p29 = por %p27, %p28
    %p30 = scmp.ne.s32.totalorder %s19, %s22
    %p31 = scmp.eq.s32.totalorder %s14, 1
    %p32 = por %p30, %p31
    %p33 = scmp.ne.s32.totalorder %s22, %s23
    %p34 = scmp.eq.s32.totalorder %s14, 0
    %p35 = por %p33, %p34
    %p36 = scmp.ne.s32.totalorder %s22, %s23
    %p37 = scmp.eq.s32.totalorder %s15, 1
    %p38 = por %p36, %p37
    %p40 = scmp.ne.s32.totalorder %s23, %s39
    %p41 = scmp.eq.s32.totalorder %s15, 0
    %p42 = por %p40, %p41
    %s44 = sadd.s32 %s43, 1
    %p47 = scmp.eq.s32.totalorder %s9, 1
    %p48 = scmp.ne.s32.totalorder %s43, %s45
    %p49 = scmp.eq.s32.totalorder %s9, 0
    %p50 = por %p48, %p49
    %p51 = scmp.ne.s32.totalorder %s43, %s45
    %p52 = scmp.eq.s32.totalorder %s14, 1
    %p53 = por %p51, %p52
    %p54 = scmp.ne.s32.totalorder %s45, %s46
    %p55 = scmp.eq.s32.totalorder %s14, 0
    %p56 = por %p54, %p55
    %p57 = scmp.ne.s32.totalorder %s45, %s46
    %p58 = scmp.eq.s32.totalorder %s15, 1
    %p59 = por %p57, %p58
    %p61 = scmp.ne.s32.totalorder %s46, %s60
    %p62 = scmp.eq.s32.totalorder %s15, 0
    %p63 = por %p61, %p62
    %s65 = sadd.s32 %s64, 1
    %p68 = scmp.eq.s32.totalorder %s9, 1
    %p69 = scmp.ne.s32.totalorder %s64, %s66
    %p70 = scmp.eq.s32.totalorder %s9, 0
    %p71 = por %p69, %p70
    %p72 = scmp.ne.s32.totalorder %s64, %s66
    %p73 = scmp.eq.s32.totalorder %s14, 1
    %p74 = por %p72, %p73
    %p75 = scmp.ne.s32.totalorder %s66, %s67
    %p76 = scmp.eq.s32.totalorder %s14, 0
    %p77 = por %p75, %p76
    %p78 = scmp.ne.s32.totalorder %s66, %s67
    %p79 = scmp.eq.s32.totalorder %s15, 1
    %p80 = por %p78, %p79
    %p82 = scmp.ne.s32.totalorder %s67, %s81
    %p83 = scmp.eq.s32.totalorder %s15, 0
    %p84 = por %p82, %p83
    %s85 = ssub.s32 %s9, %s16
    %p86 = scmp.eq.s32.totalorder %s85, 0
    %s88 = sadd.s32 %s87, 1
    %s89 = scalar_select %p86, %s87, %s88
    %p92 = pneg %p86
    %p93 = scmp.eq.s32.totalorder %s9, 1
    %p94 = por %p92, %p93
    %p95 = scmp.ne.s32.totalorder %s87, %s90
    %p96 = scmp.eq.s32.totalorder %s9, 0
    %p97 = por %p95, %p96
    %p98 = scmp.ne.s32.totalorder %s87, %s90
    %p99 = scmp.eq.s32.totalorder %s14, 1
    %p100 = por %p98, %p99
    %p101 = scmp.ne.s32.totalorder %s90, %s91
    %p102 = scmp.eq.s32.totalorder %s14, 0
    %p103 = por %p101, %p102
    %p104 = scmp.ne.s32.totalorder %s90, %s91
    %p105 = scmp.eq.s32.totalorder %s15, 1
    %p106 = por %p104, %p105
    %p108 = scmp.ne.s32.totalorder %s91, %s107
    %p109 = scmp.eq.s32.totalorder %s15, 0
    %p110 = por %p108, %p109
    %p111 = scmp.le.s32.totalorder 1, %s9
    %p112 = scmp.lt.s32.totalorder %s9, 3
    %p113 = pnand %p111, %p112
    %p114 = pneg %p113
    // Predicated region
    $region9: #{dueling_dqn_forward.3} parent=5 // pred_check
      _
    $region10: #{dueling_dqn_forward.3} parent=5 // pred_check_branch
      %116 = sbr.rel (%p113) target = $region12
    $region11: #{dueling_dqn_forward.3} parent=5 // pred_region
      %s117 = ssub.s32 %s9, 1
      // Predicated region
      $region13: #{dueling_dqn_forward.3} parent=11 // pred_check
        %p118 = pneg %p56
      $region14: #{dueling_dqn_forward.3} parent=11 // pred_check_branch
        %120 = sbr.rel (%p118) target = $region16
      $region15: #{dueling_dqn_forward.3} parent=11 // pred_region
        _
      $region16: #{dueling_dqn_forward.3} parent=11 // pred_fallthru
        _
      // Predicated region
      $region17: #{dueling_dqn_forward.3} parent=11 // pred_check
        %p121 = pneg %p77
      $region18: #{dueling_dqn_forward.3} parent=11 // pred_check_branch
        %123 = sbr.rel (%p121) target = $region20
      $region19: #{dueling_dqn_forward.3} parent=11 // pred_region
        _
      $region20: #{dueling_dqn_forward.3} parent=11 // pred_fallthru
        _
    $region12: #{dueling_dqn_forward.3} parent=5 // pred_fallthru
      _
    %p124 = scmp.lt.s32.totalorder %s9, 2
    // Predicated region
    $region21: #{dueling_dqn_forward.3} parent=5 // pred_check
      %p125 = pneg %p124
    $region22: #{dueling_dqn_forward.3} parent=5 // pred_check_branch
      %127 = sbr.rel (%p125) target = $region24
    $region23: #{dueling_dqn_forward.3} parent=5 // pred_region
      // Predicated region
      $region25: #{dueling_dqn_forward.3} parent=23 // pred_check
        %p128 = pneg %p29
      $region26: #{dueling_dqn_forward.3} parent=23 // pred_check_branch
        %130 = sbr.rel (%p128) target = $region28
      $region27: #{dueling_dqn_forward.3} parent=23 // pred_region
        %s131 = smul.u32 50, %s9
        %p132 = scmp.lt.s32.totalorder %s131, 99
        %s133 = scalar_select %p132, %s131, 99
        %s134 = smul.addr %s133, 2
        %s135 = smul.addr %s134, 4
        %s136 = scalar_lea.vmem %s0, %s135
        %s137 = smul.u32 50, %s9
      $region28: #{dueling_dqn_forward.3} parent=23 // pred_fallthru
        _
    $region24: #{dueling_dqn_forward.3} parent=5 // pred_fallthru
      _
    %p138 = scmp.le.s32.totalorder 1, %s9
    %p139 = scmp.lt.s32.totalorder %s9, 3
    %p140 = pnand %p138, %p139
    %p141 = pneg %p140
    // Predicated region
    $region29: #{dueling_dqn_forward.3} parent=5 // pred_check
      _
    $region30: #{dueling_dqn_forward.3} parent=5 // pred_check_branch
      %143 = sbr.rel (%p140) target = $region32
    $region31: #{dueling_dqn_forward.3} parent=5 // pred_region
      %s144 = ssub.s32 %s9, 1
      %s145 = smul.u32 50, %s14
      %p146 = scmp.lt.s32.totalorder %s145, 99
      %s147 = scalar_select %p146, %s145, 99
      %s148 = smul.addr %s147, 2
      %s149 = smul.addr %s148, 4
      %s150 = scalar_lea.vmem %s0, %s149
      %p151 = pneg %p35
      %p152 = pneg %p32
      %p153 = pneg %p56
      %p154 = pneg %p53
      %p155 = pneg %p77
      %p156 = pneg %p74
      %p157 = pneg %p103
      %p158 = pneg %p100
      %s159 = smul.u32 50, %s14
      %p160 = scmp.lt.s32.totalorder %s159, 99
      %s161 = scalar_select %p160, %s159, 99
      %s162 = smul.addr %s161, 4
      %s163 = scalar_lea.vmem %s3, %s162
      %s164 = smul.u32 50, %s14
      %p165 = scmp.lt.s32.totalorder %s164, 99
      %s166 = scalar_select %p165, %s164, 99
      %s167 = smul.addr %s166, 2
      %s168 = smul.addr %s167, 4
      %s169 = scalar_lea.vmem %s0, %s168
      %s170 = smul.u32 50, %s14
      %s171 = smul.u32 50, %s14
      %p172 = scmp.lt.s32.totalorder %s171, 99
      %s173 = scalar_select %p172, %s171, 99
      %s174 = smul.addr %s173, 4
      %s175 = scalar_lea.vmem %s3, %s174
      %s176 = smul.u32 50, %s14
      %v178 = vld [vmem:[%s169] sm:$0xff]
      %v179 = vld [vmem:[%s169 + $0x8] sm:$0xff]
      %v180 = vld [vmem:[%s169 + $0x10] sm:$0xff]
      %v181 = vld [vmem:[%s169 + $0x18] sm:$0xff]
      %v182 = vld [vmem:[%s169 + $0x20] sm:$0xff]
      %v183 = vld [vmem:[%s169 + $0x28] sm:$0xff]
      %v184 = vld [vmem:[%s169 + $0x30] sm:$0xff]
      %v185 = vld [vmem:[%s169 + $0x38] sm:$0xff]
      %v186 = vld [vmem:[%s169 + $0x40] sm:$0xff]
      %v187 = vld [vmem:[%s169 + $0x48] sm:$0xff]
      %v188 = vld [vmem:[%s169 + $0x50] sm:$0xff]
      %v189 = vld [vmem:[%s169 + $0x58] sm:$0xff]
      %v190 = vld [vmem:[%s169 + $0x60] sm:$0xff]
      %v191 = vld [vmem:[%s169 + $0x68] sm:$0xff]
      %v192 = vld [vmem:[%s169 + $0x70] sm:$0xff]
      %v193 = vld [vmem:[%s169 + $0x78] sm:$0xff]
      %v194 = vld [vmem:[%s169 + $0x80] sm:$0xff]
      %v195 = vld [vmem:[%s169 + $0x88] sm:$0xff]
      %v196 = vld [vmem:[%s169 + $0x90] sm:$0xff]
      %v197 = vld [vmem:[%s169 + $0x98] sm:$0xff]
      %v198 = vld [vmem:[%s169 + $0xa0] sm:$0xff]
      %v199 = vld [vmem:[%s169 + $0xa8] sm:$0xff]
      %v200 = vld [vmem:[%s169 + $0xb0] sm:$0xff]
      %v201 = vld [vmem:[%s169 + $0xb8] sm:$0xff]
      %v202 = vld [vmem:[%s169 + $0xc0] sm:$0xff]
      %v203 = vld [vmem:[%s169 + $0xc8] sm:$0xff]
      %v204 = vld [vmem:[%s169 + $0xd0] sm:$0xff]
      %v205 = vld [vmem:[%s169 + $0xd8] sm:$0xff]
      %v206 = vld [vmem:[%s169 + $0xe0] sm:$0xff]
      %v207 = vld [vmem:[%s169 + $0xe8] sm:$0xff]
      %v208 = vld [vmem:[%s169 + $0xf0] sm:$0xff]
      %v209 = vld [vmem:[%s169 + $0xf8] sm:$0xff]
      %v210 = vld [vmem:[%s169 + $0x100] sm:$0xff]
      %v211 = vld [vmem:[%s169 + $0x108] sm:$0xff]
      %v212 = vld [vmem:[%s169 + $0x110] sm:$0xff]
      %v213 = vld [vmem:[%s169 + $0x118] sm:$0xff]
      %v214 = vld [vmem:[%s169 + $0x120] sm:$0xff]
      %v215 = vld [vmem:[%s169 + $0x128] sm:$0xff]
      %v216 = vld [vmem:[%s169 + $0x130] sm:$0xff]
      %v217 = vld [vmem:[%s169 + $0x138] sm:$0xff]
      %v218 = vld [vmem:[%s169 + $0x140] sm:$0xff]
      %v219 = vld [vmem:[%s169 + $0x148] sm:$0xff]
      %v220 = vld [vmem:[%s169 + $0x150] sm:$0xff]
      %v221 = vld [vmem:[%s169 + $0x158] sm:$0xff]
      %v222 = vld [vmem:[%s169 + $0x160] sm:$0xff]
      %v223 = vld [vmem:[%s169 + $0x168] sm:$0xff]
      %v224 = vld [vmem:[%s169 + $0x170] sm:$0xff]
      %v225 = vld [vmem:[%s169 + $0x178] sm:$0xff]
      %v226 = vld [vmem:[%s169 + $0x180] sm:$0xff]
      %v227 = vld [vmem:[%s169 + $0x188] sm:$0xff]
      %v228 = vld [vmem:[%s1] sm:$0xf]
      %v229 = vld [vmem:[%s1 + $0x4] sm:$0xf]
      %v230 = vld [vmem:[%s1 + $0x8] sm:$0xf]
      %v231 = vld [vmem:[%s1 + $0xc] sm:$0xf]
      %v232 = vld [vmem:[%s1 + $0x10] sm:$0xf]
      %v233 = vld [vmem:[%s1 + $0x14] sm:$0xf]
      %v234 = vld [vmem:[%s1 + $0x18] sm:$0xf]
      %v235 = vld [vmem:[%s1 + $0x1c] sm:$0xf]
      %v236 = vld [vmem:[%s1 + $0x20] sm:$0xf]
      %v237 = vld [vmem:[%s1 + $0x24] sm:$0xf]
      %v238 = vld [vmem:[%s1 + $0x28] sm:$0xf]
      %v239 = vld [vmem:[%s1 + $0x2c] sm:$0xf]
      %v240 = vld [vmem:[%s1 + $0x30] sm:$0xf]
      %v241 = vld [vmem:[%s1 + $0x34] sm:$0xf]
      %v242 = vld [vmem:[%s1 + $0x38] sm:$0xf]
      %v243 = vld [vmem:[%s1 + $0x3c] sm:$0xf]
      %v244 = vld [vmem:[%s1 + $0x40] sm:$0xf]
      %v245 = vld [vmem:[%s1 + $0x44] sm:$0xf]
      %v246 = vld [vmem:[%s1 + $0x48] sm:$0xf]
      %v247 = vld [vmem:[%s1 + $0x4c] sm:$0xf]
      %v248 = vld [vmem:[%s1 + $0x50] sm:$0xf]
      %v249 = vld [vmem:[%s1 + $0x54] sm:$0xf]
      %v250 = vld [vmem:[%s1 + $0x58] sm:$0xf]
      %v251 = vld [vmem:[%s1 + $0x5c] sm:$0xf]
      %v252 = vld [vmem:[%s1 + $0x60] sm:$0xf]
      %v253 = vld [vmem:[%s1 + $0x64] sm:$0xf]
      %v254 = vld [vmem:[%s1 + $0x68] sm:$0xf]
      %v255 = vld [vmem:[%s1 + $0x6c] sm:$0xf]
      %v256 = vld [vmem:[%s1 + $0x70] sm:$0xf]
      %v257 = vld [vmem:[%s1 + $0x74] sm:$0xf]
      %v258 = vld [vmem:[%s1 + $0x78] sm:$0xf]
      %v259 = vld [vmem:[%s1 + $0x7c] sm:$0xf]
      %v260 = vld [vmem:[%s2] sm:$0x1]
      %v262 = vlaneseq
      %v263 = vshrl.u32 %v262, 7
      %v264 = vsub.s32 0, %v263
      %v265 = vrot.slane %v260, %v264
      %v317 = vunpack.c.l.b16 %v178
      %v318 = vunpack.c.h.b16 %v178
      %v319 = vunpack.c.l.b16 %v179
      %v320 = vunpack.c.h.b16 %v179
      %v321 = vunpack.c.l.b16 %v180
      %v322 = vunpack.c.h.b16 %v180
      %v323 = vunpack.c.l.b16 %v181
      %v324 = vunpack.c.h.b16 %v181
      %v325 = vunpack.c.l.b16 %v182
      %v326 = vunpack.c.h.b16 %v182
      %v327 = vunpack.c.l.b16 %v183
      %v328 = vunpack.c.h.b16 %v183
      %v329 = vunpack.c.l.b16 %v184
      %v330 = vunpack.c.h.b16 %v184
      %v331 = vunpack.c.l.b16 %v185
      %v332 = vunpack.c.h.b16 %v185
      %v333 = vunpack.c.l.b16 %v186
      %v334 = vunpack.c.h.b16 %v186
      %v335 = vunpack.c.l.b16 %v187
      %v336 = vunpack.c.h.b16 %v187
      %v337 = vunpack.c.l.b16 %v188
      %v338 = vunpack.c.h.b16 %v188
      %v339 = vunpack.c.l.b16 %v189
      %v340 = vunpack.c.h.b16 %v189
      %v341 = vunpack.c.l.b16 %v190
      %v342 = vunpack.c.h.b16 %v190
      %v343 = vunpack.c.l.b16 %v191
      %v344 = vunpack.c.h.b16 %v191
      %v345 = vunpack.c.l.b16 %v192
      %v346 = vunpack.c.h.b16 %v192
      %v347 = vunpack.c.l.b16 %v193
      %v348 = vunpack.c.h.b16 %v193
      %v349 = vunpack.c.l.b16 %v194
      %v350 = vunpack.c.h.b16 %v194
      %v351 = vunpack.c.l.b16 %v195
      %v352 = vunpack.c.h.b16 %v195
      %v353 = vunpack.c.l.b16 %v196
      %v354 = vunpack.c.h.b16 %v196
      %v355 = vunpack.c.l.b16 %v197
      %v356 = vunpack.c.h.b16 %v197
      %v357 = vunpack.c.l.b16 %v198
      %v358 = vunpack.c.h.b16 %v198
      %v359 = vunpack.c.l.b16 %v199
      %v360 = vunpack.c.h.b16 %v199
      %v361 = vunpack.c.l.b16 %v200
      %v362 = vunpack.c.h.b16 %v200
      %v363 = vunpack.c.l.b16 %v201
      %v364 = vunpack.c.h.b16 %v201
      %v365 = vunpack.c.l.b16 %v202
      %v366 = vunpack.c.h.b16 %v202
      %v367 = vunpack.c.l.b16 %v203
      %v368 = vunpack.c.h.b16 %v203
      %v369 = vunpack.c.l.b16 %v204
      %v370 = vunpack.c.h.b16 %v204
      %v371 = vunpack.c.l.b16 %v205
      %v372 = vunpack.c.h.b16 %v205
      %v373 = vunpack.c.l.b16 %v206
      %v374 = vunpack.c.h.b16 %v206
      %v375 = vunpack.c.l.b16 %v207
      %v376 = vunpack.c.h.b16 %v207
      %v377 = vunpack.c.l.b16 %v208
      %v378 = vunpack.c.h.b16 %v208
      %v379 = vunpack.c.l.b16 %v209
      %v380 = vunpack.c.h.b16 %v209
      %v381 = vunpack.c.l.b16 %v210
      %v382 = vunpack.c.h.b16 %v210
      %v383 = vunpack.c.l.b16 %v211
      %v384 = vunpack.c.h.b16 %v211
      %v385 = vunpack.c.l.b16 %v212
      %v386 = vunpack.c.h.b16 %v212
      %v387 = vunpack.c.l.b16 %v213
      %v388 = vunpack.c.h.b16 %v213
      %v389 = vunpack.c.l.b16 %v214
      %v390 = vunpack.c.h.b16 %v214
      %v391 = vunpack.c.l.b16 %v215
      %v392 = vunpack.c.h.b16 %v215
      %v393 = vunpack.c.l.b16 %v216
      %v394 = vunpack.c.h.b16 %v216
      %v395 = vunpack.c.l.b16 %v217
      %v396 = vunpack.c.h.b16 %v217
      %v397 = vunpack.c.l.b16 %v218
      %v398 = vunpack.c.h.b16 %v218
      %v399 = vunpack.c.l.b16 %v219
      %v400 = vunpack.c.h.b16 %v219
      %v401 = vunpack.c.l.b16 %v220
      %v402 = vunpack.c.h.b16 %v220
      %v403 = vunpack.c.l.b16 %v221
      %v404 = vunpack.c.h.b16 %v221
      %v405 = vunpack.c.l.b16 %v222
      %v406 = vunpack.c.h.b16 %v222
      %v407 = vunpack.c.l.b16 %v223
      %v408 = vunpack.c.h.b16 %v223
      %v409 = vunpack.c.l.b16 %v224
      %v410 = vunpack.c.h.b16 %v224
      %v411 = vunpack.c.l.b16 %v225
      %v412 = vunpack.c.h.b16 %v225
      %v413 = vunpack.c.l.b16 %v226
      %v414 = vunpack.c.h.b16 %v226
      %v415 = vunpack.c.l.b16 %v227
      %v416 = vunpack.c.h.b16 %v227
      %v417 = vpack.c.b16 %v319, %v317
      %v418 = vpack.c.b16 %v320, %v318
      %v419 = vpack.c.b16 %v323, %v321
      %v420 = vpack.c.b16 %v324, %v322
      %v421 = vpack.c.b16 %v327, %v325
      %v422 = vpack.c.b16 %v328, %v326
      %v423 = vpack.c.b16 %v331, %v329
      %v424 = vpack.c.b16 %v332, %v330
      %v425 = vpack.c.b16 %v335, %v333
      %v426 = vpack.c.b16 %v336, %v334
      %v427 = vpack.c.b16 %v339, %v337
      %v428 = vpack.c.b16 %v340, %v338
      %v429 = vpack.c.b16 %v343, %v341
      %v430 = vpack.c.b16 %v344, %v342
      %v431 = vpack.c.b16 %v347, %v345
      %v432 = vpack.c.b16 %v348, %v346
      %v433 = vpack.c.b16 %v351, %v349
      %v434 = vpack.c.b16 %v352, %v350
      %v435 = vpack.c.b16 %v355, %v353
      %v436 = vpack.c.b16 %v356, %v354
      %v437 = vpack.c.b16 %v359, %v357
      %v438 = vpack.c.b16 %v360, %v358
      %v439 = vpack.c.b16 %v363, %v361
      %v440 = vpack.c.b16 %v364, %v362
      %v441 = vpack.c.b16 %v367, %v365
      %v442 = vpack.c.b16 %v368, %v366
      %v443 = vpack.c.b16 %v371, %v369
      %v444 = vpack.c.b16 %v372, %v370
      %v445 = vpack.c.b16 %v375, %v373
      %v446 = vpack.c.b16 %v376, %v374
      %v447 = vpack.c.b16 %v379, %v377
      %v448 = vpack.c.b16 %v380, %v378
      %v449 = vpack.c.b16 %v383, %v381
      %v450 = vpack.c.b16 %v384, %v382
      %v451 = vpack.c.b16 %v387, %v385
      %v452 = vpack.c.b16 %v388, %v386
      %v453 = vpack.c.b16 %v391, %v389
      %v454 = vpack.c.b16 %v392, %v390
      %v455 = vpack.c.b16 %v395, %v393
      %v456 = vpack.c.b16 %v396, %v394
      %v457 = vpack.c.b16 %v399, %v397
      %v458 = vpack.c.b16 %v400, %v398
      %v459 = vpack.c.b16 %v403, %v401
      %v460 = vpack.c.b16 %v404, %v402
      %v461 = vpack.c.b16 %v407, %v405
      %v462 = vpack.c.b16 %v408, %v406
      %v463 = vpack.c.b16 %v411, %v409
      %v464 = vpack.c.b16 %v412, %v410
      %v465 = vpack.c.b16 %v415, %v413
      %v466 = vpack.c.b16 %v416, %v414
      %v549 = vunpack.c.l.b16 %v228
      %v550 = vunpack.c.l.b16 %v229
      %v551 = vunpack.c.l.b16 %v230
      %v552 = vunpack.c.l.b16 %v231
      %v553 = vunpack.c.l.b16 %v232
      %v554 = vunpack.c.l.b16 %v233
      %v555 = vunpack.c.l.b16 %v234
      %v556 = vunpack.c.l.b16 %v235
      %v557 = vunpack.c.l.b16 %v236
      %v558 = vunpack.c.l.b16 %v237
      %v559 = vunpack.c.l.b16 %v238
      %v560 = vunpack.c.l.b16 %v239
      %v561 = vunpack.c.l.b16 %v240
      %v562 = vunpack.c.l.b16 %v241
      %v563 = vunpack.c.l.b16 %v242
      %v564 = vunpack.c.l.b16 %v243
      %v565 = vunpack.c.l.b16 %v244
      %v566 = vunpack.c.l.b16 %v245
      %v567 = vunpack.c.l.b16 %v246
      %v568 = vunpack.c.l.b16 %v247
      %v569 = vunpack.c.l.b16 %v248
      %v570 = vunpack.c.l.b16 %v249
      %v571 = vunpack.c.l.b16 %v250
      %v572 = vunpack.c.l.b16 %v251
      %v573 = vunpack.c.l.b16 %v252
      %v574 = vunpack.c.l.b16 %v253
      %v575 = vunpack.c.l.b16 %v254
      %v576 = vunpack.c.l.b16 %v255
      %v577 = vunpack.c.l.b16 %v256
      %v578 = vunpack.c.l.b16 %v257
      %v579 = vunpack.c.l.b16 %v258
      %v580 = vunpack.c.l.b16 %v259
      %v581 = vpack.c.b16 %v550, %v549
      %v582 = vpack.c.b16 %v552, %v551
      %v583 = vpack.c.b16 %v554, %v553
      %v584 = vpack.c.b16 %v556, %v555
      %v585 = vpack.c.b16 %v558, %v557
      %v586 = vpack.c.b16 %v560, %v559
      %v587 = vpack.c.b16 %v562, %v561
      %v588 = vpack.c.b16 %v564, %v563
      %v589 = vpack.c.b16 %v566, %v565
      %v590 = vpack.c.b16 %v568, %v567
      %v591 = vpack.c.b16 %v570, %v569
      %v592 = vpack.c.b16 %v572, %v571
      %v593 = vpack.c.b16 %v574, %v573
      %v594 = vpack.c.b16 %v576, %v575
      %v595 = vpack.c.b16 %v578, %v577
      %v596 = vpack.c.b16 %v580, %v579
      %613 = vmatprep.subr.bf16.mxu0 0
      %614 = vmatpush1.bf16.msra.mxu0 %v588
      %615 = vmatprep.subr.bf16.mxu0 0
      %616 = vmatpush1.bf16.msra.mxu0 %v587
      %617 = vmatprep.subr.bf16.mxu0 0
      %618 = vmatpush1.bf16.msra.mxu0 %v586
      %619 = vmatprep.subr.bf16.mxu0 0
      %620 = vmatpush1.bf16.msra.mxu0 %v585
      %621 = vmatprep.subr.bf16.mxu0 0
      %622 = vmatpush1.bf16.msra.mxu0 %v584
      %623 = vmatprep.subr.bf16.mxu0 0
      %624 = vmatpush1.bf16.msra.mxu0 %v583
      %625 = vmatprep.subr.bf16.mxu0 0
      %626 = vmatpush1.bf16.msra.mxu0 %v582
      %627 = vmatprep.subr.bf16.mxu0 0
      %628 = vmatpush1.bf16.msra.mxu0 %v581
      %629 = vmatprep.subr.bf16.mxu0 0
      %630 = vmatpush2.bf16.msra.mxu0 %v596
      %631 = vmatprep.subr.bf16.mxu0 0
      %632 = vmatpush2.bf16.msra.mxu0 %v595
      %633 = vmatprep.subr.bf16.mxu0 0
      %634 = vmatpush2.bf16.msra.mxu0 %v594
      %635 = vmatprep.subr.bf16.mxu0 0
      %636 = vmatpush2.bf16.msra.mxu0 %v593
      %637 = vmatprep.subr.bf16.mxu0 0
      %638 = vmatpush2.bf16.msra.mxu0 %v592
      %639 = vmatprep.subr.bf16.mxu0 0
      %640 = vmatpush2.bf16.msra.mxu0 %v591
      %641 = vmatprep.subr.bf16.mxu0 0
      %642 = vmatpush2.bf16.msra.mxu0 %v590
      %643 = vmatprep.subr.bf16.mxu0 0
      %644 = vmatpush2.bf16.msra.mxu0 %v589
      %645 = vmatprep.mubr.bf16.mxu0 %v418
      %646 = vmatmul.mubr.bf16.gmra.mxu0 %v417
      %v647 = vpop.f32.mrf.mxu0
      %v648 = vadd.f32 %v265, %v647
      %v649 = vpop.f32.mrf.mxu0
      %v650 = vpop.f32.mrf.mxu0
      %v651 = vadd.f32 %v265, %v650
      %v652 = vpop.f32.mrf.mxu0
      %653 = vmatprep.mubr.bf16.mxu0 %v420
      %654 = vmatmul.mubr.bf16.gmra.mxu0 %v419
      %v655 = vpop.f32.mrf.mxu0
      %v656 = vadd.f32 %v265, %v655
      %v657 = vpop.f32.mrf.mxu0
      %v658 = vpop.f32.mrf.mxu0
      %v659 = vadd.f32 %v265, %v658
      %v660 = vpop.f32.mrf.mxu0
      %661 = vmatprep.mubr.bf16.mxu0 %v422
      %662 = vmatmul.mubr.bf16.gmra.mxu0 %v421
      %v663 = vpop.f32.mrf.mxu0
      %v664 = vadd.f32 %v265, %v663
      %v665 = vpop.f32.mrf.mxu0
      %v666 = vpop.f32.mrf.mxu0
      %v667 = vadd.f32 %v265, %v666
      %v668 = vpop.f32.mrf.mxu0
      %669 = vmatprep.mubr.bf16.mxu0 %v424
      %670 = vmatmul.mubr.bf16.gmra.mxu0 %v423
      %v671 = vpop.f32.mrf.mxu0
      %v672 = vadd.f32 %v265, %v671
      %v673 = vpop.f32.mrf.mxu0
      %v674 = vpop.f32.mrf.mxu0
      %v675 = vadd.f32 %v265, %v674
      %v676 = vpop.f32.mrf.mxu0
      %677 = vmatprep.mubr.bf16.mxu0 %v426
      %678 = vmatmul.mubr.bf16.gmra.mxu0 %v425
      %v679 = vpop.f32.mrf.mxu0
      %v680 = vadd.f32 %v265, %v679
      %v681 = vpop.f32.mrf.mxu0
      %v682 = vpop.f32.mrf.mxu0
      %v683 = vadd.f32 %v265, %v682
      %v684 = vpop.f32.mrf.mxu0
      %685 = vmatprep.mubr.bf16.mxu0 %v428
      %686 = vmatmul.mubr.bf16.gmra.mxu0 %v427
      %v687 = vpop.f32.mrf.mxu0
      %v688 = vadd.f32 %v265, %v687
      %v689 = vpop.f32.mrf.mxu0
      %v690 = vpop.f32.mrf.mxu0
      %v691 = vadd.f32 %v265, %v690
      %v692 = vpop.f32.mrf.mxu0
      %693 = vmatprep.mubr.bf16.mxu0 %v430
      %694 = vmatmul.mubr.bf16.gmra.mxu0 %v429
      %v695 = vpop.f32.mrf.mxu0
      %v696 = vadd.f32 %v265, %v695
      %v697 = vpop.f32.mrf.mxu0
      %v698 = vpop.f32.mrf.mxu0
      %v699 = vadd.f32 %v265, %v698
      %v700 = vpop.f32.mrf.mxu0
      %701 = vmatprep.mubr.bf16.mxu0 %v432
      %702 = vmatmul.mubr.bf16.gmra.mxu0 %v431
      %v703 = vpop.f32.mrf.mxu0
      %v704 = vadd.f32 %v265, %v703
      %v705 = vpop.f32.mrf.mxu0
      %v706 = vpop.f32.mrf.mxu0
      %v707 = vadd.f32 %v265, %v706
      %v708 = vpop.f32.mrf.mxu0
      %709 = vmatprep.mubr.bf16.mxu0 %v434
      %710 = vmatmul.mubr.bf16.gmra.mxu0 %v433
      %v711 = vpop.f32.mrf.mxu0
      %v712 = vadd.f32 %v265, %v711
      %v713 = vpop.f32.mrf.mxu0
      %v714 = vpop.f32.mrf.mxu0
      %v715 = vadd.f32 %v265, %v714
      %v716 = vpop.f32.mrf.mxu0
      %717 = vmatprep.mubr.bf16.mxu0 %v436
      %718 = vmatmul.mubr.bf16.gmra.mxu0 %v435
      %v719 = vpop.f32.mrf.mxu0
      %v720 = vadd.f32 %v265, %v719
      %v721 = vpop.f32.mrf.mxu0
      %v722 = vpop.f32.mrf.mxu0
      %v723 = vadd.f32 %v265, %v722
      %v724 = vpop.f32.mrf.mxu0
      %725 = vmatprep.mubr.bf16.mxu0 %v438
      %726 = vmatmul.mubr.bf16.gmra.mxu0 %v437
      %v727 = vpop.f32.mrf.mxu0
      %v728 = vadd.f32 %v265, %v727
      %v729 = vpop.f32.mrf.mxu0
      %v730 = vpop.f32.mrf.mxu0
      %v731 = vadd.f32 %v265, %v730
      %v732 = vpop.f32.mrf.mxu0
      %733 = vmatprep.mubr.bf16.mxu0 %v440
      %734 = vmatmul.mubr.bf16.gmra.mxu0 %v439
      %v735 = vpop.f32.mrf.mxu0
      %v736 = vadd.f32 %v265, %v735
      %v737 = vpop.f32.mrf.mxu0
      %v738 = vpop.f32.mrf.mxu0
      %v739 = vadd.f32 %v265, %v738
      %v740 = vpop.f32.mrf.mxu0
      %741 = vmatprep.mubr.bf16.mxu0 %v442
      %742 = vmatmul.mubr.bf16.gmra.mxu0 %v441
      %v743 = vpop.f32.mrf.mxu0
      %v744 = vadd.f32 %v265, %v743
      %v745 = vpop.f32.mrf.mxu0
      %v746 = vpop.f32.mrf.mxu0
      %v747 = vadd.f32 %v265, %v746
      %v748 = vpop.f32.mrf.mxu0
      %749 = vmatprep.mubr.bf16.mxu0 %v444
      %750 = vmatmul.mubr.bf16.gmra.mxu0 %v443
      %v751 = vpop.f32.mrf.mxu0
      %v752 = vadd.f32 %v265, %v751
      %v753 = vpop.f32.mrf.mxu0
      %v754 = vpop.f32.mrf.mxu0
      %v755 = vadd.f32 %v265, %v754
      %v756 = vpop.f32.mrf.mxu0
      %757 = vmatprep.mubr.bf16.mxu0 %v446
      %758 = vmatmul.mubr.bf16.gmra.mxu0 %v445
      %v759 = vpop.f32.mrf.mxu0
      %v760 = vadd.f32 %v265, %v759
      %v761 = vpop.f32.mrf.mxu0
      %v762 = vpop.f32.mrf.mxu0
      %v763 = vadd.f32 %v265, %v762
      %v764 = vpop.f32.mrf.mxu0
      %765 = vmatprep.mubr.bf16.mxu0 %v448
      %766 = vmatmul.mubr.bf16.gmra.mxu0 %v447
      %v767 = vpop.f32.mrf.mxu0
      %v768 = vadd.f32 %v265, %v767
      %v769 = vpop.f32.mrf.mxu0
      %v770 = vpop.f32.mrf.mxu0
      %v771 = vadd.f32 %v265, %v770
      %v772 = vpop.f32.mrf.mxu0
      %773 = vmatprep.mubr.bf16.mxu0 %v450
      %774 = vmatmul.mubr.bf16.gmra.mxu0 %v449
      %v775 = vpop.f32.mrf.mxu0
      %v776 = vadd.f32 %v265, %v775
      %v777 = vpop.f32.mrf.mxu0
      %v778 = vpop.f32.mrf.mxu0
      %v779 = vadd.f32 %v265, %v778
      %v780 = vpop.f32.mrf.mxu0
      %781 = vmatprep.mubr.bf16.mxu0 %v452
      %782 = vmatmul.mubr.bf16.gmra.mxu0 %v451
      %v783 = vpop.f32.mrf.mxu0
      %v784 = vadd.f32 %v265, %v783
      %v785 = vpop.f32.mrf.mxu0
      %v786 = vpop.f32.mrf.mxu0
      %v787 = vadd.f32 %v265, %v786
      %v788 = vpop.f32.mrf.mxu0
      %789 = vmatprep.mubr.bf16.mxu0 %v454
      %790 = vmatmul.mubr.bf16.gmra.mxu0 %v453
      %v791 = vpop.f32.mrf.mxu0
      %v792 = vadd.f32 %v265, %v791
      %v793 = vpop.f32.mrf.mxu0
      %v794 = vpop.f32.mrf.mxu0
      %v795 = vadd.f32 %v265, %v794
      %v796 = vpop.f32.mrf.mxu0
      %797 = vmatprep.mubr.bf16.mxu0 %v456
      %798 = vmatmul.mubr.bf16.gmra.mxu0 %v455
      %v799 = vpop.f32.mrf.mxu0
      %v800 = vadd.f32 %v265, %v799
      %v801 = vpop.f32.mrf.mxu0
      %v802 = vpop.f32.mrf.mxu0
      %v803 = vadd.f32 %v265, %v802
      %v804 = vpop.f32.mrf.mxu0
      %805 = vmatprep.mubr.bf16.mxu0 %v458
      %806 = vmatmul.mubr.bf16.gmra.mxu0 %v457
      %v807 = vpop.f32.mrf.mxu0
      %v808 = vadd.f32 %v265, %v807
      %v809 = vpop.f32.mrf.mxu0
      %v810 = vpop.f32.mrf.mxu0
      %v811 = vadd.f32 %v265, %v810
      %v812 = vpop.f32.mrf.mxu0
      %813 = vmatprep.mubr.bf16.mxu0 %v460
      %814 = vmatmul.mubr.bf16.gmra.mxu0 %v459
      %v815 = vpop.f32.mrf.mxu0
      %v816 = vadd.f32 %v265, %v815
      %v817 = vpop.f32.mrf.mxu0
      %v818 = vpop.f32.mrf.mxu0
      %v819 = vadd.f32 %v265, %v818
      %v820 = vpop.f32.mrf.mxu0
      %821 = vmatprep.mubr.bf16.mxu0 %v462
      %822 = vmatmul.mubr.bf16.gmra.mxu0 %v461
      %v823 = vpop.f32.mrf.mxu0
      %v824 = vadd.f32 %v265, %v823
      %v825 = vpop.f32.mrf.mxu0
      %v826 = vpop.f32.mrf.mxu0
      %v827 = vadd.f32 %v265, %v826
      %v828 = vpop.f32.mrf.mxu0
      %829 = vmatprep.mubr.bf16.mxu0 %v464
      %830 = vmatmul.mubr.bf16.gmra.mxu0 %v463
      %v831 = vpop.f32.mrf.mxu0
      %v832 = vadd.f32 %v265, %v831
      %v833 = vpop.f32.mrf.mxu0
      %v834 = vpop.f32.mrf.mxu0
      %v835 = vadd.f32 %v265, %v834
      %v836 = vpop.f32.mrf.mxu0
      %837 = vmatprep.mubr.bf16.mxu0 %v466
      %838 = vmatmul.mubr.bf16.gmra.mxu0 %v465
      %v839 = vpop.f32.mrf.mxu0
      %v840 = vadd.f32 %v265, %v839
      %v841 = vpop.f32.mrf.mxu0
      %v842 = vpop.f32.mrf.mxu0
      %v843 = vadd.f32 %v265, %v842
      %v844 = vpop.f32.mrf.mxu0
      %845 = vdwg.mxu0
      %v846 = vmax.f32 %v648, 0.0
      %v847 = vmax.f32 %v651, 0.0
      %v848 = vmax.f32 %v656, 0.0
      %v849 = vmax.f32 %v659, 0.0
      %v850 = vmax.f32 %v664, 0.0
      %v851 = vmax.f32 %v667, 0.0
      %v852 = vmax.f32 %v672, 0.0
      %v853 = vmax.f32 %v675, 0.0
      %v854 = vmax.f32 %v680, 0.0
      %v855 = vmax.f32 %v683, 0.0
      %v856 = vmax.f32 %v688, 0.0
      %v857 = vmax.f32 %v691, 0.0
      %v858 = vmax.f32 %v696, 0.0
      %v859 = vmax.f32 %v699, 0.0
      %v860 = vmax.f32 %v704, 0.0
      %v861 = vmax.f32 %v707, 0.0
      %v862 = vmax.f32 %v712, 0.0
      %v863 = vmax.f32 %v715, 0.0
      %v864 = vmax.f32 %v720, 0.0
      %v865 = vmax.f32 %v723, 0.0
      %v866 = vmax.f32 %v728, 0.0
      %v867 = vmax.f32 %v731, 0.0
      %v868 = vmax.f32 %v736, 0.0
      %v869 = vmax.f32 %v739, 0.0
      %v870 = vmax.f32 %v744, 0.0
      %v871 = vmax.f32 %v747, 0.0
      %v872 = vmax.f32 %v752, 0.0
      %v873 = vmax.f32 %v755, 0.0
      %v874 = vmax.f32 %v760, 0.0
      %v875 = vmax.f32 %v763, 0.0
      %v876 = vmax.f32 %v768, 0.0
      %v877 = vmax.f32 %v771, 0.0
      %v878 = vmax.f32 %v776, 0.0
      %v879 = vmax.f32 %v779, 0.0
      %v880 = vmax.f32 %v784, 0.0
      %v881 = vmax.f32 %v787, 0.0
      %v882 = vmax.f32 %v792, 0.0
      %v883 = vmax.f32 %v795, 0.0
      %v884 = vmax.f32 %v800, 0.0
      %v885 = vmax.f32 %v803, 0.0
      %v886 = vmax.f32 %v808, 0.0
      %v887 = vmax.f32 %v811, 0.0
      %v888 = vmax.f32 %v816, 0.0
      %v889 = vmax.f32 %v819, 0.0
      %v890 = vmax.f32 %v824, 0.0
      %v891 = vmax.f32 %v827, 0.0
      %v892 = vmax.f32 %v832, 0.0
      %v893 = vmax.f32 %v835, 0.0
      %v894 = vmax.f32 %v840, 0.0
      %v895 = vmax.f32 %v843, 0.0
      %v896 = vpack.c.bf16 %v847, %v846
      %v897 = vpack.c.bf16 %v849, %v848
      %v898 = vpack.c.bf16 %v851, %v850
      %v899 = vpack.c.bf16 %v853, %v852
      %v900 = vpack.c.bf16 %v855, %v854
      %v901 = vpack.c.bf16 %v857, %v856
      %v902 = vpack.c.bf16 %v859, %v858
      %v903 = vpack.c.bf16 %v861, %v860
      %v904 = vpack.c.bf16 %v863, %v862
      %v905 = vpack.c.bf16 %v865, %v864
      %v906 = vpack.c.bf16 %v867, %v866
      %v907 = vpack.c.bf16 %v869, %v868
      %v908 = vpack.c.bf16 %v871, %v870
      %v909 = vpack.c.bf16 %v873, %v872
      %v910 = vpack.c.bf16 %v875, %v874
      %v911 = vpack.c.bf16 %v877, %v876
      %v912 = vpack.c.bf16 %v879, %v878
      %v913 = vpack.c.bf16 %v881, %v880
      %v914 = vpack.c.bf16 %v883, %v882
      %v915 = vpack.c.bf16 %v885, %v884
      %v916 = vpack.c.bf16 %v887, %v886
      %v917 = vpack.c.bf16 %v889, %v888
      %v918 = vpack.c.bf16 %v891, %v890
      %v919 = vpack.c.bf16 %v893, %v892
      %v920 = vpack.c.bf16 %v895, %v894
      %v946 = vunpack.c.l.b16 %v896
      %v947 = vunpack.c.h.b16 %v896
      %v948 = vunpack.c.l.b16 %v897
      %v949 = vunpack.c.h.b16 %v897
      %v950 = vunpack.c.l.b16 %v898
      %v951 = vunpack.c.h.b16 %v898
      %v952 = vunpack.c.l.b16 %v899
      %v953 = vunpack.c.h.b16 %v899
      %v954 = vunpack.c.l.b16 %v900
      %v955 = vunpack.c.h.b16 %v900
      %v956 = vunpack.c.l.b16 %v901
      %v957 = vunpack.c.h.b16 %v901
      %v958 = vunpack.c.l.b16 %v902
      %v959 = vunpack.c.h.b16 %v902
      %v960 = vunpack.c.l.b16 %v903
      %v961 = vunpack.c.h.b16 %v903
      %v962 = vunpack.c.l.b16 %v904
      %v963 = vunpack.c.h.b16 %v904
      %v964 = vunpack.c.l.b16 %v905
      %v965 = vunpack.c.h.b16 %v905
      %v966 = vunpack.c.l.b16 %v906
      %v967 = vunpack.c.h.b16 %v906
      %v968 = vunpack.c.l.b16 %v907
      %v969 = vunpack.c.h.b16 %v907
      %v970 = vunpack.c.l.b16 %v908
      %v971 = vunpack.c.h.b16 %v908
      %v972 = vunpack.c.l.b16 %v909
      %v973 = vunpack.c.h.b16 %v909
      %v974 = vunpack.c.l.b16 %v910
      %v975 = vunpack.c.h.b16 %v910
      %v976 = vunpack.c.l.b16 %v911
      %v977 = vunpack.c.h.b16 %v911
      %v978 = vunpack.c.l.b16 %v912
      %v979 = vunpack.c.h.b16 %v912
      %v980 = vunpack.c.l.b16 %v913
      %v981 = vunpack.c.h.b16 %v913
      %v982 = vunpack.c.l.b16 %v914
      %v983 = vunpack.c.h.b16 %v914
      %v984 = vunpack.c.l.b16 %v915
      %v985 = vunpack.c.h.b16 %v915
      %v986 = vunpack.c.l.b16 %v916
      %v987 = vunpack.c.h.b16 %v916
      %v988 = vunpack.c.l.b16 %v917
      %v989 = vunpack.c.h.b16 %v917
      %v990 = vunpack.c.l.b16 %v918
      %v991 = vunpack.c.h.b16 %v918
      %v992 = vunpack.c.l.b16 %v919
      %v993 = vunpack.c.h.b16 %v919
      %v994 = vunpack.c.l.b16 %v920
      %v995 = vunpack.c.h.b16 %v920
      %v996 = vpack.c.b16 %v946, %v946
      %v997 = vpack.c.b16 %v947, %v947
      %v998 = vpack.c.b16 %v948, %v948
      %v999 = vpack.c.b16 %v949, %v949
      %v1000 = vpack.c.b16 %v950, %v950
      %v1001 = vpack.c.b16 %v951, %v951
      %v1002 = vpack.c.b16 %v952, %v952
      %v1003 = vpack.c.b16 %v953, %v953
      %v1004 = vpack.c.b16 %v954, %v954
      %v1005 = vpack.c.b16 %v955, %v955
      %v1006 = vpack.c.b16 %v956, %v956
      %v1007 = vpack.c.b16 %v957, %v957
      %v1008 = vpack.c.b16 %v958, %v958
      %v1009 = vpack.c.b16 %v959, %v959
      %v1010 = vpack.c.b16 %v960, %v960
      %v1011 = vpack.c.b16 %v961, %v961
      %v1012 = vpack.c.b16 %v962, %v962
      %v1013 = vpack.c.b16 %v963, %v963
      %v1014 = vpack.c.b16 %v964, %v964
      %v1015 = vpack.c.b16 %v965, %v965
      %v1016 = vpack.c.b16 %v966, %v966
      %v1017 = vpack.c.b16 %v967, %v967
      %v1018 = vpack.c.b16 %v968, %v968
      %v1019 = vpack.c.b16 %v969, %v969
      %v1020 = vpack.c.b16 %v970, %v970
      %v1021 = vpack.c.b16 %v971, %v971
      %v1022 = vpack.c.b16 %v972, %v972
      %v1023 = vpack.c.b16 %v973, %v973
      %v1024 = vpack.c.b16 %v974, %v974
      %v1025 = vpack.c.b16 %v975, %v975
      %v1026 = vpack.c.b16 %v976, %v976
      %v1027 = vpack.c.b16 %v977, %v977
      %v1028 = vpack.c.b16 %v978, %v978
      %v1029 = vpack.c.b16 %v979, %v979
      %v1030 = vpack.c.b16 %v980, %v980
      %v1031 = vpack.c.b16 %v981, %v981
      %v1032 = vpack.c.b16 %v982, %v982
      %v1033 = vpack.c.b16 %v983, %v983
      %v1034 = vpack.c.b16 %v984, %v984
      %v1035 = vpack.c.b16 %v985, %v985
      %v1036 = vpack.c.b16 %v986, %v986
      %v1037 = vpack.c.b16 %v987, %v987
      %v1038 = vpack.c.b16 %v988, %v988
      %v1039 = vpack.c.b16 %v989, %v989
      %v1040 = vpack.c.b16 %v990, %v990
      %v1041 = vpack.c.b16 %v991, %v991
      %v1042 = vpack.c.b16 %v992, %v992
      %v1043 = vpack.c.b16 %v993, %v993
      %v1044 = vpack.c.b16 %v994, %v994
      %v1045 = vpack.c.b16 %v995, %v995
      %1096 = vst [vmem:[%s175] sm:$0xf] %v996
      %1097 = vst [vmem:[%s175 + $0x4] sm:$0xf] %v997
      %1098 = vst [vmem:[%s175 + $0x8] sm:$0xf] %v998
      %1099 = vst [vmem:[%s175 + $0xc] sm:$0xf] %v999
      %1100 = vst [vmem:[%s175 + $0x10] sm:$0xf] %v1000
      %1101 = vst [vmem:[%s175 + $0x14] sm:$0xf] %v1001
      %1102 = vst [vmem:[%s175 + $0x18] sm:$0xf] %v1002
      %1103 = vst [vmem:[%s175 + $0x1c] sm:$0xf] %v1003
      %1104 = vst [vmem:[%s175 + $0x20] sm:$0xf] %v1004
      %1105 = vst [vmem:[%s175 + $0x24] sm:$0xf] %v1005
      %1106 = vst [vmem:[%s175 + $0x28] sm:$0xf] %v1006
      %1107 = vst [vmem:[%s175 + $0x2c] sm:$0xf] %v1007
      %1108 = vst [vmem:[%s175 + $0x30] sm:$0xf] %v1008
      %1109 = vst [vmem:[%s175 + $0x34] sm:$0xf] %v1009
      %1110 = vst [vmem:[%s175 + $0x38] sm:$0xf] %v1010
      %1111 = vst [vmem:[%s175 + $0x3c] sm:$0xf] %v1011
      %1112 = vst [vmem:[%s175 + $0x40] sm:$0xf] %v1012
      %1113 = vst [vmem:[%s175 + $0x44] sm:$0xf] %v1013
      %1114 = vst [vmem:[%s175 + $0x48] sm:$0xf] %v1014
      %1115 = vst [vmem:[%s175 + $0x4c] sm:$0xf] %v1015
      %1116 = vst [vmem:[%s175 + $0x50] sm:$0xf] %v1016
      %1117 = vst [vmem:[%s175 + $0x54] sm:$0xf] %v1017
      %1118 = vst [vmem:[%s175 + $0x58] sm:$0xf] %v1018
      %1119 = vst [vmem:[%s175 + $0x5c] sm:$0xf] %v1019
      %1120 = vst [vmem:[%s175 + $0x60] sm:$0xf] %v1020
      %1121 = vst [vmem:[%s175 + $0x64] sm:$0xf] %v1021
      %1122 = vst [vmem:[%s175 + $0x68] sm:$0xf] %v1022
      %1123 = vst [vmem:[%s175 + $0x6c] sm:$0xf] %v1023
      %1124 = vst [vmem:[%s175 + $0x70] sm:$0xf] %v1024
      %1125 = vst [vmem:[%s175 + $0x74] sm:$0xf] %v1025
      %1126 = vst [vmem:[%s175 + $0x78] sm:$0xf] %v1026
      %1127 = vst [vmem:[%s175 + $0x7c] sm:$0xf] %v1027
      %1128 = vst [vmem:[%s175 + $0x80] sm:$0xf] %v1028
      %1129 = vst [vmem:[%s175 + $0x84] sm:$0xf] %v1029
      %1130 = vst [vmem:[%s175 + $0x88] sm:$0xf] %v1030
      %1131 = vst [vmem:[%s175 + $0x8c] sm:$0xf] %v1031
      %1132 = vst [vmem:[%s175 + $0x90] sm:$0xf] %v1032
      %1133 = vst [vmem:[%s175 + $0x94] sm:$0xf] %v1033
      %1134 = vst [vmem:[%s175 + $0x98] sm:$0xf] %v1034
      %1135 = vst [vmem:[%s175 + $0x9c] sm:$0xf] %v1035
      %1136 = vst [vmem:[%s175 + $0xa0] sm:$0xf] %v1036
      %1137 = vst [vmem:[%s175 + $0xa4] sm:$0xf] %v1037
      %1138 = vst [vmem:[%s175 + $0xa8] sm:$0xf] %v1038
      %1139 = vst [vmem:[%s175 + $0xac] sm:$0xf] %v1039
      %1140 = vst [vmem:[%s175 + $0xb0] sm:$0xf] %v1040
      %1141 = vst [vmem:[%s175 + $0xb4] sm:$0xf] %v1041
      %1142 = vst [vmem:[%s175 + $0xb8] sm:$0xf] %v1042
      %1143 = vst [vmem:[%s175 + $0xbc] sm:$0xf] %v1043
      %1144 = vst [vmem:[%s175 + $0xc0] sm:$0xf] %v1044
      %1145 = vst [vmem:[%s175 + $0xc4] sm:$0xf] %v1045
      %s1146 = smul.u32 50, %s14
      %p1147 = scmp.lt.s32.totalorder %s1146, 99
      %s1148 = scalar_select %p1147, %s1146, 99
      %s1149 = smul.addr %s1148, 4
      %s1150 = scalar_lea.vmem %s3, %s1149
      // Predicated region
      $region33: #{dueling_dqn_forward.3} parent=31 // pred_check
        %p1151 = pneg %p100
      $region34: #{dueling_dqn_forward.3} parent=31 // pred_check_branch
        %1153 = sbr.rel (%p1151) target = $region36
      $region35: #{dueling_dqn_forward.3} parent=31 // pred_region
        %s1154 = smul.u32 50, %s14
      $region36: #{dueling_dqn_forward.3} parent=31 // pred_fallthru
        _
    $region32: #{dueling_dqn_forward.3} parent=5 // pred_fallthru
      _
    %p1155 = scmp.le.s32.totalorder 2, %s9
    // Predicated region
    $region37: #{dueling_dqn_forward.3} parent=5 // pred_check
      %p1156 = pneg %p1155
    $region38: #{dueling_dqn_forward.3} parent=5 // pred_check_branch
      %1158 = sbr.rel (%p1156) target = $region40
    $region39: #{dueling_dqn_forward.3} parent=5 // pred_region
      %s1159 = ssub.s32 %s9, 2
      // Predicated region
      $region41: #{dueling_dqn_forward.3} parent=39 // pred_check
        %p1160 = pneg %p106
      $region42: #{dueling_dqn_forward.3} parent=39 // pred_check_branch
        %1162 = sbr.rel (%p1160) target = $region44
      $region43: #{dueling_dqn_forward.3} parent=39 // pred_region
        %s1163 = smul.u32 50, %s15
        %p1164 = scmp.lt.s32.totalorder %s1163, 99
        %s1165 = scalar_select %p1164, %s1163, 99
        %s1166 = smul.addr %s1165, 4
        %s1167 = scalar_lea.vmem %s3, %s1166
      $region44: #{dueling_dqn_forward.3} parent=39 // pred_fallthru
        _
    $region40: #{dueling_dqn_forward.3} parent=5 // pred_fallthru
      _
  $region6: #{dueling_dqn_forward.3} parent=0 // loop_footer
    %s13 = sadd.s32 1, %s9
  $region7: #{dueling_dqn_forward.3} parent=0 // loop_footer_branch
    %8 = sbr.rel target = $region3
  $region8: #{dueling_dqn_forward.3} parent=0 // loop_exit
    _

// kernel: dueling_dqn_forward.4
$region0: #{dueling_dqn_forward.4}
  #allocation0 [shape = 'u32[]', space=smem, size = 0x4, offset = 0x4, fixed_abs, tag = 'smem constant byte address 0x4 - core index']
  #allocation1 [shape = 'u32[144,128]{1,0:T(1,128)}', space=vmem, size = 0x12000, scoped, tag = 'internal scratch']
  %s0 = inlined_call_operand.vmem [shape: bf16[176,512], index: 0, kind: input, shape index: {}]
  %s1 = inlined_call_operand.vmem [shape: bf16[512,128], index: 1, kind: input, shape index: {}]
  %s2 = inlined_call_operand.vmem [shape: f32[1,128], index: 2, kind: input, shape index: {}]
  %s3 = inlined_call_operand.vmem [shape: bf16[176,128], index: 3, kind: output, shape index: {}]
  %s4 = sld [smem:[#allocation0]]
  $region22: #{dueling_dqn_forward.4} parent=0
    _
  %s6 = ssub.s32 1, %s4
  %s7 = scalar_select 0, %s6, %s4
  // Predicated region
  $region2: #{dueling_dqn_forward.4} parent=0 // pred_check
    _
  $region3: #{dueling_dqn_forward.4} parent=0 // pred_check_branch
    %9 = sbr.rel (0) target = $region5
  $region4: #{dueling_dqn_forward.4} parent=0 // pred_region
    _
  $region5: #{dueling_dqn_forward.4} parent=0 // pred_fallthru
    _
  // Predicated region
  $region6: #{dueling_dqn_forward.4} parent=0 // pred_check
    _
  $region7: #{dueling_dqn_forward.4} parent=0 // pred_check_branch
    %11 = sbr.rel (0) target = $region9
  $region8: #{dueling_dqn_forward.4} parent=0 // pred_region
    _
  $region9: #{dueling_dqn_forward.4} parent=0 // pred_fallthru
    _
  // Predicated region
  $region10: #{dueling_dqn_forward.4} parent=0 // pred_check
    _
  $region11: #{dueling_dqn_forward.4} parent=0 // pred_check_branch
    %13 = sbr.rel (0) target = $region13
  $region12: #{dueling_dqn_forward.4} parent=0 // pred_region
    _
  $region13: #{dueling_dqn_forward.4} parent=0 // pred_fallthru
    _
  %v15 = vld [vmem:[%s0] sm:$0xff]
  %v16 = vld [vmem:[%s0 + $0x8] sm:$0xff]
  %v17 = vld [vmem:[%s0 + $0x10] sm:$0xff]
  %v18 = vld [vmem:[%s0 + $0x18] sm:$0xff]
  %v19 = vld [vmem:[%s0 + $0x20] sm:$0xff]
  %v20 = vld [vmem:[%s0 + $0x28] sm:$0xff]
  %v21 = vld [vmem:[%s0 + $0x30] sm:$0xff]
  %v22 = vld [vmem:[%s0 + $0x38] sm:$0xff]
  %v23 = vld [vmem:[%s0 + $0x40] sm:$0xff]
  %v24 = vld [vmem:[%s0 + $0x48] sm:$0xff]
  %v25 = vld [vmem:[%s0 + $0x50] sm:$0xff]
  %v26 = vld [vmem:[%s0 + $0x58] sm:$0xff]
  %v27 = vld [vmem:[%s0 + $0x60] sm:$0xff]
  %v28 = vld [vmem:[%s0 + $0x68] sm:$0xff]
  %v29 = vld [vmem:[%s0 + $0x70] sm:$0xff]
  %v30 = vld [vmem:[%s0 + $0x78] sm:$0xff]
  %v31 = vld [vmem:[%s0 + $0x80] sm:$0xff]
  %v32 = vld [vmem:[%s0 + $0x88] sm:$0xff]
  %v33 = vld [vmem:[%s0 + $0x90] sm:$0xff]
  %v34 = vld [vmem:[%s0 + $0x98] sm:$0xff]
  %v35 = vld [vmem:[%s0 + $0xa0] sm:$0xff]
  %v36 = vld [vmem:[%s0 + $0xa8] sm:$0xff]
  %v37 = vld [vmem:[%s0 + $0xb0] sm:$0xff]
  %v38 = vld [vmem:[%s0 + $0xb8] sm:$0xff]
  %v39 = vld [vmem:[%s0 + $0xc0] sm:$0xff]
  %v40 = vld [vmem:[%s0 + $0xc8] sm:$0xff]
  %v41 = vld [vmem:[%s0 + $0xd0] sm:$0xff]
  %v42 = vld [vmem:[%s0 + $0xd8] sm:$0xff]
  %v43 = vld [vmem:[%s0 + $0xe0] sm:$0xff]
  %v44 = vld [vmem:[%s0 + $0xe8] sm:$0xff]
  %v45 = vld [vmem:[%s0 + $0xf0] sm:$0xff]
  %v46 = vld [vmem:[%s0 + $0xf8] sm:$0xff]
  %v47 = vld [vmem:[%s0 + $0x100] sm:$0xff]
  %v48 = vld [vmem:[%s0 + $0x108] sm:$0xff]
  %v49 = vld [vmem:[%s0 + $0x110] sm:$0xff]
  %v50 = vld [vmem:[%s0 + $0x118] sm:$0xff]
  %v51 = vld [vmem:[%s0 + $0x120] sm:$0xff]
  %v52 = vld [vmem:[%s0 + $0x128] sm:$0xff]
  %v53 = vld [vmem:[%s0 + $0x130] sm:$0xff]
  %v54 = vld [vmem:[%s0 + $0x138] sm:$0xff]
  %v55 = vld [vmem:[%s0 + $0x140] sm:$0xff]
  %v56 = vld [vmem:[%s0 + $0x148] sm:$0xff]
  %v57 = vld [vmem:[%s0 + $0x150] sm:$0xff]
  %v58 = vld [vmem:[%s0 + $0x158] sm:$0xff]
  %v59 = vld [vmem:[%s1] sm:$0xf]
  %v60 = vld [vmem:[%s1 + $0x4] sm:$0xf]
  %v61 = vld [vmem:[%s1 + $0x8] sm:$0xf]
  %v62 = vld [vmem:[%s1 + $0xc] sm:$0xf]
  %v63 = vld [vmem:[%s1 + $0x10] sm:$0xf]
  %v64 = vld [vmem:[%s1 + $0x14] sm:$0xf]
  %v65 = vld [vmem:[%s1 + $0x18] sm:$0xf]
  %v66 = vld [vmem:[%s1 + $0x1c] sm:$0xf]
  %v67 = vld [vmem:[%s1 + $0x20] sm:$0xf]
  %v68 = vld [vmem:[%s1 + $0x24] sm:$0xf]
  %v69 = vld [vmem:[%s1 + $0x28] sm:$0xf]
  %v70 = vld [vmem:[%s1 + $0x2c] sm:$0xf]
  %v71 = vld [vmem:[%s1 + $0x30] sm:$0xf]
  %v72 = vld [vmem:[%s1 + $0x34] sm:$0xf]
  %v73 = vld [vmem:[%s1 + $0x38] sm:$0xf]
  %v74 = vld [vmem:[%s1 + $0x3c] sm:$0xf]
  %v75 = vld [vmem:[%s1 + $0x40] sm:$0xf]
  %v76 = vld [vmem:[%s1 + $0x44] sm:$0xf]
  %v77 = vld [vmem:[%s1 + $0x48] sm:$0xf]
  %v78 = vld [vmem:[%s1 + $0x4c] sm:$0xf]
  %v79 = vld [vmem:[%s1 + $0x50] sm:$0xf]
  %v80 = vld [vmem:[%s1 + $0x54] sm:$0xf]
  %v81 = vld [vmem:[%s1 + $0x58] sm:$0xf]
  %v82 = vld [vmem:[%s1 + $0x5c] sm:$0xf]
  %v83 = vld [vmem:[%s1 + $0x60] sm:$0xf]
  %v84 = vld [vmem:[%s1 + $0x64] sm:$0xf]
  %v85 = vld [vmem:[%s1 + $0x68] sm:$0xf]
  %v86 = vld [vmem:[%s1 + $0x6c] sm:$0xf]
  %v87 = vld [vmem:[%s1 + $0x70] sm:$0xf]
  %v88 = vld [vmem:[%s1 + $0x74] sm:$0xf]
  %v89 = vld [vmem:[%s1 + $0x78] sm:$0xf]
  %v90 = vld [vmem:[%s1 + $0x7c] sm:$0xf]
  %v91 = vld [vmem:[%s1 + $0x80] sm:$0xf]
  %v92 = vld [vmem:[%s1 + $0x84] sm:$0xf]
  %v93 = vld [vmem:[%s1 + $0x88] sm:$0xf]
  %v94 = vld [vmem:[%s1 + $0x8c] sm:$0xf]
  %v95 = vld [vmem:[%s1 + $0x90] sm:$0xf]
  %v96 = vld [vmem:[%s1 + $0x94] sm:$0xf]
  %v97 = vld [vmem:[%s1 + $0x98] sm:$0xf]
  %v98 = vld [vmem:[%s1 + $0x9c] sm:$0xf]
  %v99 = vld [vmem:[%s1 + $0xa0] sm:$0xf]
  %v100 = vld [vmem:[%s1 + $0xa4] sm:$0xf]
  %v101 = vld [vmem:[%s1 + $0xa8] sm:$0xf]
  %v102 = vld [vmem:[%s1 + $0xac] sm:$0xf]
  %v103 = vld [vmem:[%s1 + $0xb0] sm:$0xf]
  %v104 = vld [vmem:[%s1 + $0xb4] sm:$0xf]
  %v105 = vld [vmem:[%s1 + $0xb8] sm:$0xf]
  %v106 = vld [vmem:[%s1 + $0xbc] sm:$0xf]
  %v107 = vld [vmem:[%s1 + $0xc0] sm:$0xf]
  %v108 = vld [vmem:[%s1 + $0xc4] sm:$0xf]
  %v109 = vld [vmem:[%s1 + $0xc8] sm:$0xf]
  %v110 = vld [vmem:[%s1 + $0xcc] sm:$0xf]
  %v111 = vld [vmem:[%s1 + $0xd0] sm:$0xf]
  %v112 = vld [vmem:[%s1 + $0xd4] sm:$0xf]
  %v113 = vld [vmem:[%s1 + $0xd8] sm:$0xf]
  %v114 = vld [vmem:[%s1 + $0xdc] sm:$0xf]
  %v115 = vld [vmem:[%s1 + $0xe0] sm:$0xf]
  %v116 = vld [vmem:[%s1 + $0xe4] sm:$0xf]
  %v117 = vld [vmem:[%s1 + $0xe8] sm:$0xf]
  %v118 = vld [vmem:[%s1 + $0xec] sm:$0xf]
  %v119 = vld [vmem:[%s1 + $0xf0] sm:$0xf]
  %v120 = vld [vmem:[%s1 + $0xf4] sm:$0xf]
  %v121 = vld [vmem:[%s1 + $0xf8] sm:$0xf]
  %v122 = vld [vmem:[%s1 + $0xfc] sm:$0xf]
  %v123 = vld [vmem:[%s2] sm:$0x1]
  %v125 = vlaneseq
  %v126 = vshrl.u32 %v125, 7
  %v127 = vsub.s32 0, %v126
  %v128 = vrot.slane %v123, %v127
  %v174 = vunpack.c.l.b16 %v15
  %v175 = vunpack.c.h.b16 %v15
  %v176 = vunpack.c.l.b16 %v16
  %v177 = vunpack.c.h.b16 %v16
  %v178 = vunpack.c.l.b16 %v17
  %v179 = vunpack.c.h.b16 %v17
  %v180 = vunpack.c.l.b16 %v18
  %v181 = vunpack.c.h.b16 %v18
  %v182 = vunpack.c.l.b16 %v19
  %v183 = vunpack.c.h.b16 %v19
  %v184 = vunpack.c.l.b16 %v20
  %v185 = vunpack.c.h.b16 %v20
  %v186 = vunpack.c.l.b16 %v21
  %v187 = vunpack.c.h.b16 %v21
  %v188 = vunpack.c.l.b16 %v22
  %v189 = vunpack.c.h.b16 %v22
  %v190 = vunpack.c.l.b16 %v23
  %v191 = vunpack.c.h.b16 %v23
  %v192 = vunpack.c.l.b16 %v24
  %v193 = vunpack.c.h.b16 %v24
  %v194 = vunpack.c.l.b16 %v25
  %v195 = vunpack.c.h.b16 %v25
  %v196 = vunpack.c.l.b16 %v26
  %v197 = vunpack.c.h.b16 %v26
  %v198 = vunpack.c.l.b16 %v27
  %v199 = vunpack.c.h.b16 %v27
  %v200 = vunpack.c.l.b16 %v28
  %v201 = vunpack.c.h.b16 %v28
  %v202 = vunpack.c.l.b16 %v29
  %v203 = vunpack.c.h.b16 %v29
  %v204 = vunpack.c.l.b16 %v30
  %v205 = vunpack.c.h.b16 %v30
  %v206 = vunpack.c.l.b16 %v31
  %v207 = vunpack.c.h.b16 %v31
  %v208 = vunpack.c.l.b16 %v32
  %v209 = vunpack.c.h.b16 %v32
  %v210 = vunpack.c.l.b16 %v33
  %v211 = vunpack.c.h.b16 %v33
  %v212 = vunpack.c.l.b16 %v34
  %v213 = vunpack.c.h.b16 %v34
  %v214 = vunpack.c.l.b16 %v35
  %v215 = vunpack.c.h.b16 %v35
  %v216 = vunpack.c.l.b16 %v36
  %v217 = vunpack.c.h.b16 %v36
  %v218 = vunpack.c.l.b16 %v37
  %v219 = vunpack.c.h.b16 %v37
  %v220 = vunpack.c.l.b16 %v38
  %v221 = vunpack.c.h.b16 %v38
  %v222 = vunpack.c.l.b16 %v39
  %v223 = vunpack.c.h.b16 %v39
  %v224 = vunpack.c.l.b16 %v40
  %v225 = vunpack.c.h.b16 %v40
  %v226 = vunpack.c.l.b16 %v41
  %v227 = vunpack.c.h.b16 %v41
  %v228 = vunpack.c.l.b16 %v42
  %v229 = vunpack.c.h.b16 %v42
  %v230 = vunpack.c.l.b16 %v43
  %v231 = vunpack.c.h.b16 %v43
  %v232 = vunpack.c.l.b16 %v44
  %v233 = vunpack.c.h.b16 %v44
  %v234 = vunpack.c.l.b16 %v45
  %v235 = vunpack.c.h.b16 %v45
  %v236 = vunpack.c.l.b16 %v46
  %v237 = vunpack.c.h.b16 %v46
  %v238 = vunpack.c.l.b16 %v47
  %v239 = vunpack.c.h.b16 %v47
  %v240 = vunpack.c.l.b16 %v48
  %v241 = vunpack.c.h.b16 %v48
  %v242 = vunpack.c.l.b16 %v49
  %v243 = vunpack.c.h.b16 %v49
  %v244 = vunpack.c.l.b16 %v50
  %v245 = vunpack.c.h.b16 %v50
  %v246 = vunpack.c.l.b16 %v51
  %v247 = vunpack.c.h.b16 %v51
  %v248 = vunpack.c.l.b16 %v52
  %v249 = vunpack.c.h.b16 %v52
  %v250 = vunpack.c.l.b16 %v53
  %v251 = vunpack.c.h.b16 %v53
  %v252 = vunpack.c.l.b16 %v54
  %v253 = vunpack.c.h.b16 %v54
  %v254 = vunpack.c.l.b16 %v55
  %v255 = vunpack.c.h.b16 %v55
  %v256 = vunpack.c.l.b16 %v56
  %v257 = vunpack.c.h.b16 %v56
  %v258 = vunpack.c.l.b16 %v57
  %v259 = vunpack.c.h.b16 %v57
  %v260 = vunpack.c.l.b16 %v58
  %v261 = vunpack.c.h.b16 %v58
  %v262 = vpack.c.b16 %v178, %v174
  %v263 = vpack.c.b16 %v179, %v175
  %v264 = vpack.c.b16 %v180, %v176
  %v265 = vpack.c.b16 %v181, %v177
  %v266 = vpack.c.b16 %v186, %v182
  %v267 = vpack.c.b16 %v187, %v183
  %v268 = vpack.c.b16 %v188, %v184
  %v269 = vpack.c.b16 %v189, %v185
  %v270 = vpack.c.b16 %v194, %v190
  %v271 = vpack.c.b16 %v195, %v191
  %v272 = vpack.c.b16 %v196, %v192
  %v273 = vpack.c.b16 %v197, %v193
  %v274 = vpack.c.b16 %v202, %v198
  %v275 = vpack.c.b16 %v203, %v199
  %v276 = vpack.c.b16 %v204, %v200
  %v277 = vpack.c.b16 %v205, %v201
  %v278 = vpack.c.b16 %v210, %v206
  %v279 = vpack.c.b16 %v211, %v207
  %v280 = vpack.c.b16 %v212, %v208
  %v281 = vpack.c.b16 %v213, %v209
  %v282 = vpack.c.b16 %v218, %v214
  %v283 = vpack.c.b16 %v219, %v215
  %v284 = vpack.c.b16 %v220, %v216
  %v285 = vpack.c.b16 %v221, %v217
  %v286 = vpack.c.b16 %v226, %v222
  %v287 = vpack.c.b16 %v227, %v223
  %v288 = vpack.c.b16 %v228, %v224
  %v289 = vpack.c.b16 %v229, %v225
  %v290 = vpack.c.b16 %v234, %v230
  %v291 = vpack.c.b16 %v235, %v231
  %v292 = vpack.c.b16 %v236, %v232
  %v293 = vpack.c.b16 %v237, %v233
  %v294 = vpack.c.b16 %v242, %v238
  %v295 = vpack.c.b16 %v243, %v239
  %v296 = vpack.c.b16 %v244, %v240
  %v297 = vpack.c.b16 %v245, %v241
  %v298 = vpack.c.b16 %v250, %v246
  %v299 = vpack.c.b16 %v251, %v247
  %v300 = vpack.c.b16 %v252, %v248
  %v301 = vpack.c.b16 %v253, %v249
  %v302 = vpack.c.b16 %v258, %v254
  %v303 = vpack.c.b16 %v259, %v255
  %v304 = vpack.c.b16 %v260, %v256
  %v305 = vpack.c.b16 %v261, %v257
  %v414 = vunpack.c.l.b16 %v59
  %v415 = vunpack.c.l.b16 %v60
  %v416 = vunpack.c.l.b16 %v61
  %v417 = vunpack.c.l.b16 %v62
  %v418 = vunpack.c.l.b16 %v63
  %v419 = vunpack.c.l.b16 %v64
  %v420 = vunpack.c.l.b16 %v65
  %v421 = vunpack.c.l.b16 %v66
  %v422 = vunpack.c.l.b16 %v67
  %v423 = vunpack.c.l.b16 %v68
  %v424 = vunpack.c.l.b16 %v69
  %v425 = vunpack.c.l.b16 %v70
  %v426 = vunpack.c.l.b16 %v71
  %v427 = vunpack.c.l.b16 %v72
  %v428 = vunpack.c.l.b16 %v73
  %v429 = vunpack.c.l.b16 %v74
  %v430 = vunpack.c.l.b16 %v75
  %v431 = vunpack.c.l.b16 %v76
  %v432 = vunpack.c.l.b16 %v77
  %v433 = vunpack.c.l.b16 %v78
  %v434 = vunpack.c.l.b16 %v79
  %v435 = vunpack.c.l.b16 %v80
  %v436 = vunpack.c.l.b16 %v81
  %v437 = vunpack.c.l.b16 %v82
  %v438 = vunpack.c.l.b16 %v83
  %v439 = vunpack.c.l.b16 %v84
  %v440 = vunpack.c.l.b16 %v85
  %v441 = vunpack.c.l.b16 %v86
  %v442 = vunpack.c.l.b16 %v87
  %v443 = vunpack.c.l.b16 %v88
  %v444 = vunpack.c.l.b16 %v89
  %v445 = vunpack.c.l.b16 %v90
  %v446 = vunpack.c.l.b16 %v91
  %v447 = vunpack.c.l.b16 %v92
  %v448 = vunpack.c.l.b16 %v93
  %v449 = vunpack.c.l.b16 %v94
  %v450 = vunpack.c.l.b16 %v95
  %v451 = vunpack.c.l.b16 %v96
  %v452 = vunpack.c.l.b16 %v97
  %v453 = vunpack.c.l.b16 %v98
  %v454 = vunpack.c.l.b16 %v99
  %v455 = vunpack.c.l.b16 %v100
  %v456 = vunpack.c.l.b16 %v101
  %v457 = vunpack.c.l.b16 %v102
  %v458 = vunpack.c.l.b16 %v103
  %v459 = vunpack.c.l.b16 %v104
  %v460 = vunpack.c.l.b16 %v105
  %v461 = vunpack.c.l.b16 %v106
  %v462 = vunpack.c.l.b16 %v107
  %v463 = vunpack.c.l.b16 %v108
  %v464 = vunpack.c.l.b16 %v109
  %v465 = vunpack.c.l.b16 %v110
  %v466 = vunpack.c.l.b16 %v111
  %v467 = vunpack.c.l.b16 %v112
  %v468 = vunpack.c.l.b16 %v113
  %v469 = vunpack.c.l.b16 %v114
  %v470 = vunpack.c.l.b16 %v115
  %v471 = vunpack.c.l.b16 %v116
  %v472 = vunpack.c.l.b16 %v117
  %v473 = vunpack.c.l.b16 %v118
  %v474 = vunpack.c.l.b16 %v119
  %v475 = vunpack.c.l.b16 %v120
  %v476 = vunpack.c.l.b16 %v121
  %v477 = vunpack.c.l.b16 %v122
  %v478 = vpack.c.b16 %v415, %v414
  %v479 = vpack.c.b16 %v417, %v416
  %v480 = vpack.c.b16 %v419, %v418
  %v481 = vpack.c.b16 %v421, %v420
  %v482 = vpack.c.b16 %v423, %v422
  %v483 = vpack.c.b16 %v425, %v424
  %v484 = vpack.c.b16 %v427, %v426
  %v485 = vpack.c.b16 %v429, %v428
  %v486 = vpack.c.b16 %v431, %v430
  %v487 = vpack.c.b16 %v433, %v432
  %v488 = vpack.c.b16 %v435, %v434
  %v489 = vpack.c.b16 %v437, %v436
  %v490 = vpack.c.b16 %v439, %v438
  %v491 = vpack.c.b16 %v441, %v440
  %v492 = vpack.c.b16 %v443, %v442
  %v493 = vpack.c.b16 %v445, %v444
  %v494 = vpack.c.b16 %v447, %v446
  %v495 = vpack.c.b16 %v449, %v448
  %v496 = vpack.c.b16 %v451, %v450
  %v497 = vpack.c.b16 %v453, %v452
  %v498 = vpack.c.b16 %v455, %v454
  %v499 = vpack.c.b16 %v457, %v456
  %v500 = vpack.c.b16 %v459, %v458
  %v501 = vpack.c.b16 %v461, %v460
  %v502 = vpack.c.b16 %v463, %v462
  %v503 = vpack.c.b16 %v465, %v464
  %v504 = vpack.c.b16 %v467, %v466
  %v505 = vpack.c.b16 %v469, %v468
  %v506 = vpack.c.b16 %v471, %v470
  %v507 = vpack.c.b16 %v473, %v472
  %v508 = vpack.c.b16 %v475, %v474
  %v509 = vpack.c.b16 %v477, %v476
  %542 = vmatprep.subr.bf16.mxu0 0
  %543 = vmatpush1.bf16.msra.mxu0 %v485
  %544 = vmatprep.subr.bf16.mxu0 0
  %545 = vmatpush1.bf16.msra.mxu0 %v484
  %546 = vmatprep.subr.bf16.mxu0 0
  %547 = vmatpush1.bf16.msra.mxu0 %v483
  %548 = vmatprep.subr.bf16.mxu0 0
  %549 = vmatpush1.bf16.msra.mxu0 %v482
  %550 = vmatprep.subr.bf16.mxu0 0
  %551 = vmatpush1.bf16.msra.mxu0 %v481
  %552 = vmatprep.subr.bf16.mxu0 0
  %553 = vmatpush1.bf16.msra.mxu0 %v480
  %554 = vmatprep.subr.bf16.mxu0 0
  %555 = vmatpush1.bf16.msra.mxu0 %v479
  %556 = vmatprep.subr.bf16.mxu0 0
  %557 = vmatpush1.bf16.msra.mxu0 %v478
  %558 = vmatprep.subr.bf16.mxu0 0
  %559 = vmatpush2.bf16.msra.mxu0 %v493
  %560 = vmatprep.subr.bf16.mxu0 0
  %561 = vmatpush2.bf16.msra.mxu0 %v492
  %562 = vmatprep.subr.bf16.mxu0 0
  %563 = vmatpush2.bf16.msra.mxu0 %v491
  %564 = vmatprep.subr.bf16.mxu0 0
  %565 = vmatpush2.bf16.msra.mxu0 %v490
  %566 = vmatprep.subr.bf16.mxu0 0
  %567 = vmatpush2.bf16.msra.mxu0 %v489
  %568 = vmatprep.subr.bf16.mxu0 0
  %569 = vmatpush2.bf16.msra.mxu0 %v488
  %570 = vmatprep.subr.bf16.mxu0 0
  %571 = vmatpush2.bf16.msra.mxu0 %v487
  %572 = vmatprep.subr.bf16.mxu0 0
  %573 = vmatpush2.bf16.msra.mxu0 %v486
  %574 = vmatprep.mubr.bf16.mxu0 %v263
  %575 = vmatmul.mubr.bf16.gmra.mxu0 %v262
  %v576 = vpop.f32.mrf.mxu0
  %v577 = vadd.f32 %v128, %v576
  %v578 = vpop.f32.mrf.mxu0
  %v579 = vpop.f32.mrf.mxu0
  %v580 = vadd.f32 %v128, %v579
  %v581 = vpop.f32.mrf.mxu0
  %582 = vmatprep.mubr.bf16.mxu0 %v267
  %583 = vmatmul.mubr.bf16.gmra.mxu0 %v266
  %v584 = vpop.f32.mrf.mxu0
  %v585 = vadd.f32 %v128, %v584
  %v586 = vpop.f32.mrf.mxu0
  %v587 = vpop.f32.mrf.mxu0
  %v588 = vadd.f32 %v128, %v587
  %v589 = vpop.f32.mrf.mxu0
  %590 = vmatprep.mubr.bf16.mxu0 %v271
  %591 = vmatmul.mubr.bf16.gmra.mxu0 %v270
  %v592 = vpop.f32.mrf.mxu0
  %v593 = vadd.f32 %v128, %v592
  %v594 = vpop.f32.mrf.mxu0
  %v595 = vpop.f32.mrf.mxu0
  %v596 = vadd.f32 %v128, %v595
  %v597 = vpop.f32.mrf.mxu0
  %598 = vmatprep.mubr.bf16.mxu0 %v275
  %599 = vmatmul.mubr.bf16.gmra.mxu0 %v274
  %v600 = vpop.f32.mrf.mxu0
  %v601 = vadd.f32 %v128, %v600
  %v602 = vpop.f32.mrf.mxu0
  %v603 = vpop.f32.mrf.mxu0
  %v604 = vadd.f32 %v128, %v603
  %v605 = vpop.f32.mrf.mxu0
  %606 = vmatprep.mubr.bf16.mxu0 %v279
  %607 = vmatmul.mubr.bf16.gmra.mxu0 %v278
  %v608 = vpop.f32.mrf.mxu0
  %v609 = vadd.f32 %v128, %v608
  %v610 = vpop.f32.mrf.mxu0
  %v611 = vpop.f32.mrf.mxu0
  %v612 = vadd.f32 %v128, %v611
  %v613 = vpop.f32.mrf.mxu0
  %614 = vmatprep.mubr.bf16.mxu0 %v283
  %615 = vmatmul.mubr.bf16.gmra.mxu0 %v282
  %v616 = vpop.f32.mrf.mxu0
  %v617 = vadd.f32 %v128, %v616
  %v618 = vpop.f32.mrf.mxu0
  %v619 = vpop.f32.mrf.mxu0
  %v620 = vadd.f32 %v128, %v619
  %v621 = vpop.f32.mrf.mxu0
  %622 = vmatprep.mubr.bf16.mxu0 %v287
  %623 = vmatmul.mubr.bf16.gmra.mxu0 %v286
  %v624 = vpop.f32.mrf.mxu0
  %v625 = vadd.f32 %v128, %v624
  %v626 = vpop.f32.mrf.mxu0
  %v627 = vpop.f32.mrf.mxu0
  %v628 = vadd.f32 %v128, %v627
  %v629 = vpop.f32.mrf.mxu0
  %630 = vmatprep.mubr.bf16.mxu0 %v291
  %631 = vmatmul.mubr.bf16.gmra.mxu0 %v290
  %v632 = vpop.f32.mrf.mxu0
  %v633 = vadd.f32 %v128, %v632
  %v634 = vpop.f32.mrf.mxu0
  %v635 = vpop.f32.mrf.mxu0
  %v636 = vadd.f32 %v128, %v635
  %v637 = vpop.f32.mrf.mxu0
  %638 = vmatprep.mubr.bf16.mxu0 %v295
  %639 = vmatmul.mubr.bf16.gmra.mxu0 %v294
  %v640 = vpop.f32.mrf.mxu0
  %v641 = vadd.f32 %v128, %v640
  %v642 = vpop.f32.mrf.mxu0
  %v643 = vpop.f32.mrf.mxu0
  %v644 = vadd.f32 %v128, %v643
  %v645 = vpop.f32.mrf.mxu0
  %646 = vmatprep.mubr.bf16.mxu0 %v299
  %647 = vmatmul.mubr.bf16.gmra.mxu0 %v298
  %v648 = vpop.f32.mrf.mxu0
  %v649 = vadd.f32 %v128, %v648
  %v650 = vpop.f32.mrf.mxu0
  %v651 = vpop.f32.mrf.mxu0
  %v652 = vadd.f32 %v128, %v651
  %v653 = vpop.f32.mrf.mxu0
  %654 = vmatprep.mubr.bf16.mxu0 %v303
  %655 = vmatmul.mubr.bf16.gmra.mxu0 %v302
  %v656 = vpop.f32.mrf.mxu0
  %v657 = vadd.f32 %v128, %v656
  %v658 = vpop.f32.mrf.mxu0
  %v659 = vpop.f32.mrf.mxu0
  %v660 = vadd.f32 %v128, %v659
  %v661 = vpop.f32.mrf.mxu0
  %662 = vdwg.mxu0
  %663 = vmatprep.subr.bf16.mxu0 0
  %664 = vmatpush1.bf16.msra.mxu0 %v501
  %665 = vmatprep.subr.bf16.mxu0 0
  %666 = vmatpush1.bf16.msra.mxu0 %v500
  %667 = vmatprep.subr.bf16.mxu0 0
  %668 = vmatpush1.bf16.msra.mxu0 %v499
  %669 = vmatprep.subr.bf16.mxu0 0
  %670 = vmatpush1.bf16.msra.mxu0 %v498
  %671 = vmatprep.subr.bf16.mxu0 0
  %672 = vmatpush1.bf16.msra.mxu0 %v497
  %673 = vmatprep.subr.bf16.mxu0 0
  %674 = vmatpush1.bf16.msra.mxu0 %v496
  %675 = vmatprep.subr.bf16.mxu0 0
  %676 = vmatpush1.bf16.msra.mxu0 %v495
  %677 = vmatprep.subr.bf16.mxu0 0
  %678 = vmatpush1.bf16.msra.mxu0 %v494
  %679 = vmatprep.subr.bf16.mxu0 0
  %680 = vmatpush2.bf16.msra.mxu0 %v509
  %681 = vmatprep.subr.bf16.mxu0 0
  %682 = vmatpush2.bf16.msra.mxu0 %v508
  %683 = vmatprep.subr.bf16.mxu0 0
  %684 = vmatpush2.bf16.msra.mxu0 %v507
  %685 = vmatprep.subr.bf16.mxu0 0
  %686 = vmatpush2.bf16.msra.mxu0 %v506
  %687 = vmatprep.subr.bf16.mxu0 0
  %688 = vmatpush2.bf16.msra.mxu0 %v505
  %689 = vmatprep.subr.bf16.mxu0 0
  %690 = vmatpush2.bf16.msra.mxu0 %v504
  %691 = vmatprep.subr.bf16.mxu0 0
  %692 = vmatpush2.bf16.msra.mxu0 %v503
  %693 = vmatprep.subr.bf16.mxu0 0
  %694 = vmatpush2.bf16.msra.mxu0 %v502
  %695 = vmatprep.mubr.bf16.mxu0 %v265
  %696 = vmatmul.mubr.bf16.gmra.mxu0 %v264
  %v697 = vpop.f32.mrf.mxu0
  %v698 = vadd.f32 %v577, %v697
  %v699 = vpop.f32.mrf.mxu0
  %v700 = vpop.f32.mrf.mxu0
  %v701 = vadd.f32 %v580, %v700
  %v702 = vpop.f32.mrf.mxu0
  %703 = vmatprep.mubr.bf16.mxu0 %v269
  %704 = vmatmul.mubr.bf16.gmra.mxu0 %v268
  %v705 = vpop.f32.mrf.mxu0
  %v706 = vadd.f32 %v585, %v705
  %v707 = vpop.f32.mrf.mxu0
  %v708 = vpop.f32.mrf.mxu0
  %v709 = vadd.f32 %v588, %v708
  %v710 = vpop.f32.mrf.mxu0
  %711 = vmatprep.mubr.bf16.mxu0 %v273
  %712 = vmatmul.mubr.bf16.gmra.mxu0 %v272
  %v713 = vpop.f32.mrf.mxu0
  %v714 = vadd.f32 %v593, %v713
  %v715 = vpop.f32.mrf.mxu0
  %v716 = vpop.f32.mrf.mxu0
  %v717 = vadd.f32 %v596, %v716
  %v718 = vpop.f32.mrf.mxu0
  %719 = vmatprep.mubr.bf16.mxu0 %v277
  %720 = vmatmul.mubr.bf16.gmra.mxu0 %v276
  %v721 = vpop.f32.mrf.mxu0
  %v722 = vadd.f32 %v601, %v721
  %v723 = vpop.f32.mrf.mxu0
  %v724 = vpop.f32.mrf.mxu0
  %v725 = vadd.f32 %v604, %v724
  %v726 = vpop.f32.mrf.mxu0
  %727 = vmatprep.mubr.bf16.mxu0 %v281
  %728 = vmatmul.mubr.bf16.gmra.mxu0 %v280
  %v729 = vpop.f32.mrf.mxu0
  %v730 = vadd.f32 %v609, %v729
  %v731 = vpop.f32.mrf.mxu0
  %v732 = vpop.f32.mrf.mxu0
  %v733 = vadd.f32 %v612, %v732
  %v734 = vpop.f32.mrf.mxu0
  %735 = vmatprep.mubr.bf16.mxu0 %v285
  %736 = vmatmul.mubr.bf16.gmra.mxu0 %v284
  %v737 = vpop.f32.mrf.mxu0
  %v738 = vadd.f32 %v617, %v737
  %v739 = vpop.f32.mrf.mxu0
  %v740 = vpop.f32.mrf.mxu0
  %v741 = vadd.f32 %v620, %v740
  %v742 = vpop.f32.mrf.mxu0
  %743 = vmatprep.mubr.bf16.mxu0 %v289
  %744 = vmatmul.mubr.bf16.gmra.mxu0 %v288
  %v745 = vpop.f32.mrf.mxu0
  %v746 = vadd.f32 %v625, %v745
  %v747 = vpop.f32.mrf.mxu0
  %v748 = vpop.f32.mrf.mxu0
  %v749 = vadd.f32 %v628, %v748
  %v750 = vpop.f32.mrf.mxu0
  %751 = vmatprep.mubr.bf16.mxu0 %v293
  %752 = vmatmul.mubr.bf16.gmra.mxu0 %v292
  %v753 = vpop.f32.mrf.mxu0
  %v754 = vadd.f32 %v633, %v753
  %v755 = vpop.f32.mrf.mxu0
  %v756 = vpop.f32.mrf.mxu0
  %v757 = vadd.f32 %v636, %v756
  %v758 = vpop.f32.mrf.mxu0
  %759 = vmatprep.mubr.bf16.mxu0 %v297
  %760 = vmatmul.mubr.bf16.gmra.mxu0 %v296
  %v761 = vpop.f32.mrf.mxu0
  %v762 = vadd.f32 %v641, %v761
  %v763 = vpop.f32.mrf.mxu0
  %v764 = vpop.f32.mrf.mxu0
  %v765 = vadd.f32 %v644, %v764
  %v766 = vpop.f32.mrf.mxu0
  %767 = vmatprep.mubr.bf16.mxu0 %v301
  %768 = vmatmul.mubr.bf16.gmra.mxu0 %v300
  %v769 = vpop.f32.mrf.mxu0
  %v770 = vadd.f32 %v649, %v769
  %v771 = vpop.f32.mrf.mxu0
  %v772 = vpop.f32.mrf.mxu0
  %v773 = vadd.f32 %v652, %v772
  %v774 = vpop.f32.mrf.mxu0
  %775 = vmatprep.mubr.bf16.mxu0 %v305
  %776 = vmatmul.mubr.bf16.gmra.mxu0 %v304
  %v777 = vpop.f32.mrf.mxu0
  %v778 = vadd.f32 %v657, %v777
  %v779 = vpop.f32.mrf.mxu0
  %v780 = vpop.f32.mrf.mxu0
  %v781 = vadd.f32 %v660, %v780
  %v782 = vpop.f32.mrf.mxu0
  %783 = vdwg.mxu0
  %v784 = vmax.f32 %v698, 0.0
  %v785 = vmax.f32 %v701, 0.0
  %v786 = vmax.f32 %v706, 0.0
  %v787 = vmax.f32 %v709, 0.0
  %v788 = vmax.f32 %v714, 0.0
  %v789 = vmax.f32 %v717, 0.0
  %v790 = vmax.f32 %v722, 0.0
  %v791 = vmax.f32 %v725, 0.0
  %v792 = vmax.f32 %v730, 0.0
  %v793 = vmax.f32 %v733, 0.0
  %v794 = vmax.f32 %v738, 0.0
  %v795 = vmax.f32 %v741, 0.0
  %v796 = vmax.f32 %v746, 0.0
  %v797 = vmax.f32 %v749, 0.0
  %v798 = vmax.f32 %v754, 0.0
  %v799 = vmax.f32 %v757, 0.0
  %v800 = vmax.f32 %v762, 0.0
  %v801 = vmax.f32 %v765, 0.0
  %v802 = vmax.f32 %v770, 0.0
  %v803 = vmax.f32 %v773, 0.0
  %v804 = vmax.f32 %v778, 0.0
  %v805 = vmax.f32 %v781, 0.0
  %v806 = vpack.c.bf16 %v785, %v784
  %v807 = vpack.c.bf16 %v787, %v786
  %v808 = vpack.c.bf16 %v789, %v788
  %v809 = vpack.c.bf16 %v791, %v790
  %v810 = vpack.c.bf16 %v793, %v792
  %v811 = vpack.c.bf16 %v795, %v794
  %v812 = vpack.c.bf16 %v797, %v796
  %v813 = vpack.c.bf16 %v799, %v798
  %v814 = vpack.c.bf16 %v801, %v800
  %v815 = vpack.c.bf16 %v803, %v802
  %v816 = vpack.c.bf16 %v805, %v804
  %v828 = vunpack.c.l.b16 %v806
  %v829 = vunpack.c.h.b16 %v806
  %v830 = vunpack.c.l.b16 %v807
  %v831 = vunpack.c.h.b16 %v807
  %v832 = vunpack.c.l.b16 %v808
  %v833 = vunpack.c.h.b16 %v808
  %v834 = vunpack.c.l.b16 %v809
  %v835 = vunpack.c.h.b16 %v809
  %v836 = vunpack.c.l.b16 %v810
  %v837 = vunpack.c.h.b16 %v810
  %v838 = vunpack.c.l.b16 %v811
  %v839 = vunpack.c.h.b16 %v811
  %v840 = vunpack.c.l.b16 %v812
  %v841 = vunpack.c.h.b16 %v812
  %v842 = vunpack.c.l.b16 %v813
  %v843 = vunpack.c.h.b16 %v813
  %v844 = vunpack.c.l.b16 %v814
  %v845 = vunpack.c.h.b16 %v814
  %v846 = vunpack.c.l.b16 %v815
  %v847 = vunpack.c.h.b16 %v815
  %v848 = vunpack.c.l.b16 %v816
  %v849 = vunpack.c.h.b16 %v816
  %v850 = vpack.c.b16 %v828, %v828
  %v851 = vpack.c.b16 %v829, %v829
  %v852 = vpack.c.b16 %v830, %v830
  %v853 = vpack.c.b16 %v831, %v831
  %v854 = vpack.c.b16 %v832, %v832
  %v855 = vpack.c.b16 %v833, %v833
  %v856 = vpack.c.b16 %v834, %v834
  %v857 = vpack.c.b16 %v835, %v835
  %v858 = vpack.c.b16 %v836, %v836
  %v859 = vpack.c.b16 %v837, %v837
  %v860 = vpack.c.b16 %v838, %v838
  %v861 = vpack.c.b16 %v839, %v839
  %v862 = vpack.c.b16 %v840, %v840
  %v863 = vpack.c.b16 %v841, %v841
  %v864 = vpack.c.b16 %v842, %v842
  %v865 = vpack.c.b16 %v843, %v843
  %v866 = vpack.c.b16 %v844, %v844
  %v867 = vpack.c.b16 %v845, %v845
  %v868 = vpack.c.b16 %v846, %v846
  %v869 = vpack.c.b16 %v847, %v847
  %v870 = vpack.c.b16 %v848, %v848
  %v871 = vpack.c.b16 %v849, %v849
  %894 = vst [vmem:[%s3] sm:$0xf] %v850
  %895 = vst [vmem:[%s3 + $0x4] sm:$0xf] %v851
  %896 = vst [vmem:[%s3 + $0x8] sm:$0xf] %v852
  %897 = vst [vmem:[%s3 + $0xc] sm:$0xf] %v853
  %898 = vst [vmem:[%s3 + $0x10] sm:$0xf] %v854
  %899 = vst [vmem:[%s3 + $0x14] sm:$0xf] %v855
  %900 = vst [vmem:[%s3 + $0x18] sm:$0xf] %v856
  %901 = vst [vmem:[%s3 + $0x1c] sm:$0xf] %v857
  %902 = vst [vmem:[%s3 + $0x20] sm:$0xf] %v858
  %903 = vst [vmem:[%s3 + $0x24] sm:$0xf] %v859
  %904 = vst [vmem:[%s3 + $0x28] sm:$0xf] %v860
  %905 = vst [vmem:[%s3 + $0x2c] sm:$0xf] %v861
  %906 = vst [vmem:[%s3 + $0x30] sm:$0xf] %v862
  %907 = vst [vmem:[%s3 + $0x34] sm:$0xf] %v863
  %908 = vst [vmem:[%s3 + $0x38] sm:$0xf] %v864
  %909 = vst [vmem:[%s3 + $0x3c] sm:$0xf] %v865
  %910 = vst [vmem:[%s3 + $0x40] sm:$0xf] %v866
  %911 = vst [vmem:[%s3 + $0x44] sm:$0xf] %v867
  %912 = vst [vmem:[%s3 + $0x48] sm:$0xf] %v868
  %913 = vst [vmem:[%s3 + $0x4c] sm:$0xf] %v869
  %914 = vst [vmem:[%s3 + $0x50] sm:$0xf] %v870
  %915 = vst [vmem:[%s3 + $0x54] sm:$0xf] %v871
  // Predicated region
  $region14: #{dueling_dqn_forward.4} parent=0 // pred_check
    _
  $region15: #{dueling_dqn_forward.4} parent=0 // pred_check_branch
    %917 = sbr.rel (0) target = $region17
  $region16: #{dueling_dqn_forward.4} parent=0 // pred_region
    _
  $region17: #{dueling_dqn_forward.4} parent=0 // pred_fallthru
    _
  // Predicated region
  $region18: #{dueling_dqn_forward.4} parent=0 // pred_check
    _
  $region19: #{dueling_dqn_forward.4} parent=0 // pred_check_branch
    %919 = sbr.rel (0) target = $region21
  $region20: #{dueling_dqn_forward.4} parent=0 // pred_region
    _
  $region21: #{dueling_dqn_forward.4} parent=0 // pred_fallthru
    _

// kernel: dueling_dqn_forward.5
$region0: #{dueling_dqn_forward.5}
  #allocation0 [shape = 'u32[]', space=smem, size = 0x4, offset = 0x4, fixed_abs, tag = 'smem constant byte address 0x4 - core index']
  #allocation1 [shape = 'u32[144,128]{1,0:T(1,128)}', space=vmem, size = 0x12000, scoped, tag = 'internal scratch']
  #allocation2 [shape = 'f32[8,1024]{1,0:T(8,128)}', space=vmem, size = 0x8000, scoped, tag = 'scratch operand']
  %s0 = inlined_call_operand.vmem [shape: bf16[49,8,576], index: 0, kind: input, shape index: {}]
  %s1 = inlined_call_operand.vmem [shape: bf16[576,128], index: 1, kind: input, shape index: {}]
  %s2 = inlined_call_operand.vmem [shape: f32[1,128], index: 2, kind: input, shape index: {}]
  %s3 = inlined_call_operand.vmem [shape: bf16[49,64,1024], index: 3, kind: input, shape index: {}]
  %s4 = inlined_call_operand.vmem [shape: f32[1,1024], index: 4, kind: input, shape index: {}]
  %s5 = inlined_call_operand.vmem [shape: f32[1024,128], index: 5, kind: input, shape index: {}]
  %s6 = inlined_call_operand.vmem [shape: f32[1,128], index: 6, kind: input, shape index: {}]
  %s7 = inlined_call_operand.vmem [shape: f32[8,128], index: 7, kind: output, shape index: {}]
  %s8 = sld [smem:[#allocation0]]
  $region69: #{dueling_dqn_forward.5} parent=0
    _
  %s10 = ssub.s32 1, %s8
  %s11 = scalar_select 0, %s10, %s8
  loop: start=0, step=1, limit=9
  $region2: #{dueling_dqn_forward.5} parent=0 // loop_pre_header
    _
  $region3: #{dueling_dqn_forward.5} parent=0 // loop_header
    %s13 = sphi 0, %s17
    %p14 = scmp.ge.s32.totalorder %s13, 9
    %s23 = sphi 0, %s25
    %s26 = sphi 0, %s23
    %s27 = sphi 0, %s26
    %s43 = sphi 0, %s27
    %s47 = sphi 0, %s47
    %s49 = sphi 0, %s47
    %s50 = sphi 0, %s49
    %s64 = sphi 0, %s50
    %s68 = sphi 0, %s68
    %s70 = sphi 0, %s68
    %s71 = sphi 0, %s70
    %s85 = sphi 0, %s71
    %s91 = sphi 0, %s93
    %s94 = sphi 0, %s91
    %s95 = sphi 0, %s94
    %s111 = sphi 0, %s95
    %s115 = sphi 0, %s115
    %s117 = sphi 0, %s115
    %s118 = sphi 0, %s117
    %s132 = sphi 0, %s118
    %s136 = sphi 0, %s136
    %s138 = sphi 0, %s136
    %s139 = sphi 0, %s138
    %s153 = sphi 0, %s139
    %s157 = sphi 0, %s157
    %s159 = sphi 0, %s157
    %s160 = sphi 0, %s159
    %s174 = sphi 0, %s160
    %s178 = sphi 0, %s178
    %s180 = sphi 0, %s178
    %s181 = sphi 0, %s180
    %s195 = sphi 0, %s181
  $region4: #{dueling_dqn_forward.5} parent=0 // loop_header_branch
    %16 = sbr.rel (%p14) target = $region8
  $region5: #{dueling_dqn_forward.5} parent=0 // loop_body
    %s18 = ssub.s32 %s13, 1
    %s19 = ssub.s32 %s13, 2
    %s20 = sadd.s32 %s13, 1
    %s21 = ssub.s32 %s13, %s20
    %p22 = scmp.eq.s32.totalorder %s21, 0
    %s24 = sadd.s32 %s23, 1
    %s25 = scalar_select %p22, %s23, %s24
    %p28 = pneg %p22
    %p29 = scmp.eq.s32.totalorder %s13, 6
    %p30 = por %p28, %p29
    %p31 = scmp.ne.s32.totalorder %s23, %s26
    %p32 = scmp.eq.s32.totalorder %s13, 0
    %p33 = por %p31, %p32
    %p34 = scmp.ne.s32.totalorder %s23, %s26
    %p35 = scmp.eq.s32.totalorder %s18, 6
    %p36 = por %p34, %p35
    %p37 = scmp.ne.s32.totalorder %s26, %s27
    %p38 = scmp.eq.s32.totalorder %s18, 0
    %p39 = por %p37, %p38
    %p40 = scmp.ne.s32.totalorder %s26, %s27
    %p41 = scmp.eq.s32.totalorder %s19, 6
    %p42 = por %p40, %p41
    %p44 = scmp.ne.s32.totalorder %s27, %s43
    %p45 = scmp.eq.s32.totalorder %s19, 0
    %p46 = por %p44, %p45
    %s48 = sadd.s32 %s47, 1
    %p51 = scmp.eq.s32.totalorder %s13, 6
    %p52 = scmp.ne.s32.totalorder %s47, %s49
    %p53 = scmp.eq.s32.totalorder %s13, 0
    %p54 = por %p52, %p53
    %p55 = scmp.ne.s32.totalorder %s47, %s49
    %p56 = scmp.eq.s32.totalorder %s18, 6
    %p57 = por %p55, %p56
    %p58 = scmp.ne.s32.totalorder %s49, %s50
    %p59 = scmp.eq.s32.totalorder %s18, 0
    %p60 = por %p58, %p59
    %p61 = scmp.ne.s32.totalorder %s49, %s50
    %p62 = scmp.eq.s32.totalorder %s19, 6
    %p63 = por %p61, %p62
    %p65 = scmp.ne.s32.totalorder %s50, %s64
    %p66 = scmp.eq.s32.totalorder %s19, 0
    %p67 = por %p65, %p66
    %s69 = sadd.s32 %s68, 1
    %p72 = scmp.eq.s32.totalorder %s13, 6
    %p73 = scmp.ne.s32.totalorder %s68, %s70
    %p74 = scmp.eq.s32.totalorder %s13, 0
    %p75 = por %p73, %p74
    %p76 = scmp.ne.s32.totalorder %s68, %s70
    %p77 = scmp.eq.s32.totalorder %s18, 6
    %p78 = por %p76, %p77
    %p79 = scmp.ne.s32.totalorder %s70, %s71
    %p80 = scmp.eq.s32.totalorder %s18, 0
    %p81 = por %p79, %p80
    %p82 = scmp.ne.s32.totalorder %s70, %s71
    %p83 = scmp.eq.s32.totalorder %s19, 6
    %p84 = por %p82, %p83
    %p86 = scmp.ne.s32.totalorder %s71, %s85
    %p87 = scmp.eq.s32.totalorder %s19, 0
    %p88 = por %p86, %p87
    %s89 = ssub.s32 %s13, %s20
    %p90 = scmp.eq.s32.totalorder %s89, 0
    %s92 = sadd.s32 %s91, 1
    %s93 = scalar_select %p90, %s91, %s92
    %p96 = pneg %p90
    %p97 = scmp.eq.s32.totalorder %s13, 6
    %p98 = por %p96, %p97
    %p99 = scmp.ne.s32.totalorder %s91, %s94
    %p100 = scmp.eq.s32.totalorder %s13, 0
    %p101 = por %p99, %p100
    %p102 = scmp.ne.s32.totalorder %s91, %s94
    %p103 = scmp.eq.s32.totalorder %s18, 6
    %p104 = por %p102, %p103
    %p105 = scmp.ne.s32.totalorder %s94, %s95
    %p106 = scmp.eq.s32.totalorder %s18, 0
    %p107 = por %p105, %p106
    %p108 = scmp.ne.s32.totalorder %s94, %s95
    %p109 = scmp.eq.s32.totalorder %s19, 6
    %p110 = por %p108, %p109
    %p112 = scmp.ne.s32.totalorder %s95, %s111
    %p113 = scmp.eq.s32.totalorder %s19, 0
    %p114 = por %p112, %p113
    %s116 = sadd.s32 %s115, 1
    %p119 = scmp.eq.s32.totalorder %s13, 6
    %p120 = scmp.ne.s32.totalorder %s115, %s117
    %p121 = scmp.eq.s32.totalorder %s13, 0
    %p122 = por %p120, %p121
    %p123 = scmp.ne.s32.totalorder %s115, %s117
    %p124 = scmp.eq.s32.totalorder %s18, 6
    %p125 = por %p123, %p124
    %p126 = scmp.ne.s32.totalorder %s117, %s118
    %p127 = scmp.eq.s32.totalorder %s18, 0
    %p128 = por %p126, %p127
    %p129 = scmp.ne.s32.totalorder %s117, %s118
    %p130 = scmp.eq.s32.totalorder %s19, 6
    %p131 = por %p129, %p130
    %p133 = scmp.ne.s32.totalorder %s118, %s132
    %p134 = scmp.eq.s32.totalorder %s19, 0
    %p135 = por %p133, %p134
    %s137 = sadd.s32 %s136, 1
    %p140 = scmp.eq.s32.totalorder %s13, 6
    %p141 = scmp.ne.s32.totalorder %s136, %s138
    %p142 = scmp.eq.s32.totalorder %s13, 0
    %p143 = por %p141, %p142
    %p144 = scmp.ne.s32.totalorder %s136, %s138
    %p145 = scmp.eq.s32.totalorder %s18, 6
    %p146 = por %p144, %p145
    %p147 = scmp.ne.s32.totalorder %s138, %s139
    %p148 = scmp.eq.s32.totalorder %s18, 0
    %p149 = por %p147, %p148
    %p150 = scmp.ne.s32.totalorder %s138, %s139
    %p151 = scmp.eq.s32.totalorder %s19, 6
    %p152 = por %p150, %p151
    %p154 = scmp.ne.s32.totalorder %s139, %s153
    %p155 = scmp.eq.s32.totalorder %s19, 0
    %p156 = por %p154, %p155
    %s158 = sadd.s32 %s157, 1
    %p161 = scmp.eq.s32.totalorder %s13, 6
    %p162 = scmp.ne.s32.totalorder %s157, %s159
    %p163 = scmp.eq.s32.totalorder %s13, 0
    %p164 = por %p162, %p163
    %p165 = scmp.ne.s32.totalorder %s157, %s159
    %p166 = scmp.eq.s32.totalorder %s18, 6
    %p167 = por %p165, %p166
    %p168 = scmp.ne.s32.totalorder %s159, %s160
    %p169 = scmp.eq.s32.totalorder %s18, 0
    %p170 = por %p168, %p169
    %p171 = scmp.ne.s32.totalorder %s159, %s160
    %p172 = scmp.eq.s32.totalorder %s19, 6
    %p173 = por %p171, %p172
    %p175 = scmp.ne.s32.totalorder %s160, %s174
    %p176 = scmp.eq.s32.totalorder %s19, 0
    %p177 = por %p175, %p176
    %s179 = sadd.s32 %s178, 1
    %p182 = scmp.eq.s32.totalorder %s13, 6
    %p183 = scmp.ne.s32.totalorder %s178, %s180
    %p184 = scmp.eq.s32.totalorder %s13, 0
    %p185 = por %p183, %p184
    %p186 = scmp.ne.s32.totalorder %s178, %s180
    %p187 = scmp.eq.s32.totalorder %s18, 6
    %p188 = por %p186, %p187
    %p189 = scmp.ne.s32.totalorder %s180, %s181
    %p190 = scmp.eq.s32.totalorder %s18, 0
    %p191 = por %p189, %p190
    %p192 = scmp.ne.s32.totalorder %s180, %s181
    %p193 = scmp.eq.s32.totalorder %s19, 6
    %p194 = por %p192, %p193
    %p196 = scmp.ne.s32.totalorder %s181, %s195
    %p197 = scmp.eq.s32.totalorder %s19, 0
    %p198 = por %p196, %p197
    %p199 = scmp.le.s32.totalorder 1, %s13
    %p200 = scmp.lt.s32.totalorder %s13, 8
    %p201 = pnand %p199, %p200
    %p202 = pneg %p201
    // Predicated region
    $region9: #{dueling_dqn_forward.5} parent=5 // pred_check
      _
    $region10: #{dueling_dqn_forward.5} parent=5 // pred_check_branch
      %204 = sbr.rel (%p201) target = $region12
    $region11: #{dueling_dqn_forward.5} parent=5 // pred_region
      %s205 = ssub.s32 %s13, 1
      // Predicated region
      $region13: #{dueling_dqn_forward.5} parent=11 // pred_check
        %p206 = pneg %p60
      $region14: #{dueling_dqn_forward.5} parent=11 // pred_check_branch
        %208 = sbr.rel (%p206) target = $region16
      $region15: #{dueling_dqn_forward.5} parent=11 // pred_region
        _
      $region16: #{dueling_dqn_forward.5} parent=11 // pred_fallthru
        _
      // Predicated region
      $region17: #{dueling_dqn_forward.5} parent=11 // pred_check
        %p209 = pneg %p81
      $region18: #{dueling_dqn_forward.5} parent=11 // pred_check_branch
        %211 = sbr.rel (%p209) target = $region20
      $region19: #{dueling_dqn_forward.5} parent=11 // pred_region
        _
      $region20: #{dueling_dqn_forward.5} parent=11 // pred_fallthru
        _
      // Predicated region
      $region21: #{dueling_dqn_forward.5} parent=11 // pred_check
        %p212 = pneg %p128
      $region22: #{dueling_dqn_forward.5} parent=11 // pred_check_branch
        %214 = sbr.rel (%p212) target = $region24
      $region23: #{dueling_dqn_forward.5} parent=11 // pred_region
        _
      $region24: #{dueling_dqn_forward.5} parent=11 // pred_fallthru
        _
      // Predicated region
      $region25: #{dueling_dqn_forward.5} parent=11 // pred_check
        %p215 = pneg %p149
      $region26: #{dueling_dqn_forward.5} parent=11 // pred_check_branch
        %217 = sbr.rel (%p215) target = $region28
      $region27: #{dueling_dqn_forward.5} parent=11 // pred_region
        _
      $region28: #{dueling_dqn_forward.5} parent=11 // pred_fallthru
        _
      // Predicated region
      $region29: #{dueling_dqn_forward.5} parent=11 // pred_check
        %p218 = pneg %p170
      $region30: #{dueling_dqn_forward.5} parent=11 // pred_check_branch
        %220 = sbr.rel (%p218) target = $region32
      $region31: #{dueling_dqn_forward.5} parent=11 // pred_region
        _
      $region32: #{dueling_dqn_forward.5} parent=11 // pred_fallthru
        _
    $region12: #{dueling_dqn_forward.5} parent=5 // pred_fallthru
      _
    %p221 = scmp.lt.s32.totalorder %s13, 7
    // Predicated region
    $region33: #{dueling_dqn_forward.5} parent=5 // pred_check
      %p222 = pneg %p221
    $region34: #{dueling_dqn_forward.5} parent=5 // pred_check_branch
      %224 = sbr.rel (%p222) target = $region36
    $region35: #{dueling_dqn_forward.5} parent=5 // pred_region
      // Predicated region
      $region37: #{dueling_dqn_forward.5} parent=35 // pred_check
        %p225 = pneg %p33
      $region38: #{dueling_dqn_forward.5} parent=35 // pred_check_branch
        %227 = sbr.rel (%p225) target = $region40
      $region39: #{dueling_dqn_forward.5} parent=35 // pred_region
        %s228 = smul.u32 7, %s13
        %p229 = scmp.lt.s32.totalorder %s228, 48
        %s230 = scalar_select %p229, %s228, 48
        %s231 = smul.addr %s230, 5
        %s232 = smul.addr %s231, 4
        %s233 = scalar_lea.vmem %s0, %s232
        %s234 = smul.u32 7, %s13
      $region40: #{dueling_dqn_forward.5} parent=35 // pred_fallthru
        _
      // Predicated region
      $region41: #{dueling_dqn_forward.5} parent=35 // pred_check
        %p235 = pneg %p101
      $region42: #{dueling_dqn_forward.5} parent=35 // pred_check_branch
        %237 = sbr.rel (%p235) target = $region44
      $region43: #{dueling_dqn_forward.5} parent=35 // pred_region
        %s238 = smul.u32 7, %s13
        %p239 = scmp.lt.s32.totalorder %s238, 48
        %s240 = scalar_select %p239, %s238, 48
        %s241 = smul.addr %s240, 64
        %s242 = smul.addr %s241, 4
        %s243 = scalar_lea.vmem %s3, %s242
        %s244 = smul.u32 7, %s13
      $region44: #{dueling_dqn_forward.5} parent=35 // pred_fallthru
        _
    $region36: #{dueling_dqn_forward.5} parent=5 // pred_fallthru
      _
    %p245 = scmp.le.s32.totalorder 1, %s13
    %p246 = scmp.lt.s32.totalorder %s13, 8
    %p247 = pnand %p245, %p246
    %p248 = pneg %p247
    // Predicated region
    $region45: #{dueling_dqn_forward.5} parent=5 // pred_check
      _
    $region46: #{dueling_dqn_forward.5} parent=5 // pred_check_branch
      %250 = sbr.rel (%p247) target = $region48
    $region47: #{dueling_dqn_forward.5} parent=5 // pred_region
      %s251 = ssub.s32 %s13, 1
      %s252 = smul.u32 7, %s18
      %p253 = scmp.lt.s32.totalorder %s252, 48
      %s254 = scalar_select %p253, %s252, 48
      %s255 = smul.addr %s254, 5
      %s256 = smul.addr %s255, 4
      %s257 = scalar_lea.vmem %s0, %s256
      %p258 = pneg %p39
      %p259 = pneg %p36
      %p260 = pneg %p60
      %p261 = pneg %p57
      %p262 = pneg %p81
      %p263 = pneg %p78
      %s264 = smul.u32 7, %s18
      %p265 = scmp.lt.s32.totalorder %s264, 48
      %s266 = scalar_select %p265, %s264, 48
      %s267 = smul.addr %s266, 64
      %s268 = smul.addr %s267, 4
      %s269 = scalar_lea.vmem %s3, %s268
      %p270 = pneg %p107
      %p271 = pneg %p104
      %p272 = pneg %p128
      %p273 = pneg %p125
      %p274 = pneg %p149
      %p275 = pneg %p146
      %p276 = pneg %p170
      %p277 = pneg %p167
      %p278 = pneg %p191
      %p279 = pneg %p188
      %s280 = smul.u32 7, %s18
      %p281 = scmp.lt.s32.totalorder %s280, 48
      %s282 = scalar_select %p281, %s280, 48
      %s283 = smul.addr %s282, 5
      %s284 = smul.addr %s283, 4
      %s285 = scalar_lea.vmem %s0, %s284
      %s286 = smul.u32 7, %s18
      %s287 = smul.u32 7, %s18
      %p288 = scmp.lt.s32.totalorder %s287, 48
      %s289 = scalar_select %p288, %s287, 48
      %s290 = smul.addr %s289, 64
      %s291 = smul.addr %s290, 4
      %s292 = scalar_lea.vmem %s3, %s291
      %s293 = smul.u32 7, %s18
      %p295 = scmp.eq.s32.totalorder %s18, 0
      // Predicated region
      $region49: #{dueling_dqn_forward.5} parent=47 // pred_check
        %p296 = pneg %p295
      $region50: #{dueling_dqn_forward.5} parent=47 // pred_check_branch
        %298 = sbr.rel (%p296) target = $region52
      $region51: #{dueling_dqn_forward.5} parent=47 // pred_region
        %299 = vst [vmem:[#allocation2] sm:$0xff] 0.0
        %300 = vst [vmem:[#allocation2 + $0x8] sm:$0xff] 0.0
        %301 = vst [vmem:[#allocation2 + $0x10] sm:$0xff] 0.0
        %302 = vst [vmem:[#allocation2 + $0x18] sm:$0xff] 0.0
        %303 = vst [vmem:[#allocation2 + $0x20] sm:$0xff] 0.0
        %304 = vst [vmem:[#allocation2 + $0x28] sm:$0xff] 0.0
        %305 = vst [vmem:[#allocation2 + $0x30] sm:$0xff] 0.0
        %306 = vst [vmem:[#allocation2 + $0x38] sm:$0xff] 0.0
      $region52: #{dueling_dqn_forward.5} parent=47 // pred_fallthru
        _
      %v307 = vld [vmem:[%s285] sm:$0xff]
      %v308 = vld [vmem:[%s285 + $0x8] sm:$0xff]
      %v309 = vld [vmem:[%s285 + $0x10] sm:$0xf]
      %v310 = vld [vmem:[%s1] sm:$0xf]
      %v311 = vld [vmem:[%s1 + $0x4] sm:$0xf]
      %v312 = vld [vmem:[%s1 + $0x8] sm:$0xf]
      %v313 = vld [vmem:[%s1 + $0xc] sm:$0xf]
      %v314 = vld [vmem:[%s1 + $0x10] sm:$0xf]
      %v315 = vld [vmem:[%s1 + $0x14] sm:$0xf]
      %v316 = vld [vmem:[%s1 + $0x18] sm:$0xf]
      %v317 = vld [vmem:[%s1 + $0x1c] sm:$0xf]
      %v318 = vld [vmem:[%s1 + $0x20] sm:$0xf]
      %v319 = vld [vmem:[%s1 + $0x24] sm:$0xf]
      %v320 = vld [vmem:[%s1 + $0x28] sm:$0xf]
      %v321 = vld [vmem:[%s1 + $0x2c] sm:$0xf]
      %v322 = vld [vmem:[%s1 + $0x30] sm:$0xf]
      %v323 = vld [vmem:[%s1 + $0x34] sm:$0xf]
      %v324 = vld [vmem:[%s1 + $0x38] sm:$0xf]
      %v325 = vld [vmem:[%s1 + $0x3c] sm:$0xf]
      %v326 = vld [vmem:[%s1 + $0x40] sm:$0xf]
      %v327 = vld [vmem:[%s1 + $0x44] sm:$0xf]
      %v328 = vld [vmem:[%s1 + $0x48] sm:$0xf]
      %v329 = vld [vmem:[%s1 + $0x4c] sm:$0xf]
      %v330 = vld [vmem:[%s1 + $0x50] sm:$0xf]
      %v331 = vld [vmem:[%s1 + $0x54] sm:$0xf]
      %v332 = vld [vmem:[%s1 + $0x58] sm:$0xf]
      %v333 = vld [vmem:[%s1 + $0x5c] sm:$0xf]
      %v334 = vld [vmem:[%s1 + $0x60] sm:$0xf]
      %v335 = vld [vmem:[%s1 + $0x64] sm:$0xf]
      %v336 = vld [vmem:[%s1 + $0x68] sm:$0xf]
      %v337 = vld [vmem:[%s1 + $0x6c] sm:$0xf]
      %v338 = vld [vmem:[%s1 + $0x70] sm:$0xf]
      %v339 = vld [vmem:[%s1 + $0x74] sm:$0xf]
      %v340 = vld [vmem:[%s1 + $0x78] sm:$0xf]
      %v341 = vld [vmem:[%s1 + $0x7c] sm:$0xf]
      %v342 = vld [vmem:[%s1 + $0x80] sm:$0xf]
      %v343 = vld [vmem:[%s1 + $0x84] sm:$0xf]
      %v344 = vld [vmem:[%s1 + $0x88] sm:$0xf]
      %v345 = vld [vmem:[%s1 + $0x8c] sm:$0xf]
      %v346 = vld [vmem:[%s1 + $0x90] sm:$0xf]
      %v347 = vld [vmem:[%s1 + $0x94] sm:$0xf]
      %v348 = vld [vmem:[%s1 + $0x98] sm:$0xf]
      %v349 = vld [vmem:[%s1 + $0x9c] sm:$0xf]
      %v350 = vld [vmem:[%s1 + $0xa0] sm:$0xf]
      %v351 = vld [vmem:[%s1 + $0xa4] sm:$0xf]
      %v352 = vld [vmem:[%s1 + $0xa8] sm:$0xf]
      %v353 = vld [vmem:[%s1 + $0xac] sm:$0xf]
      %v354 = vld [vmem:[%s1 + $0xb0] sm:$0xf]
      %v355 = vld [vmem:[%s1 + $0xb4] sm:$0xf]
      %v356 = vld [vmem:[%s1 + $0xb8] sm:$0xf]
      %v357 = vld [vmem:[%s1 + $0xbc] sm:$0xf]
      %v358 = vld [vmem:[%s1 + $0xc0] sm:$0xf]
      %v359 = vld [vmem:[%s1 + $0xc4] sm:$0xf]
      %v360 = vld [vmem:[%s1 + $0xc8] sm:$0xf]
      %v361 = vld [vmem:[%s1 + $0xcc] sm:$0xf]
      %v362 = vld [vmem:[%s1 + $0xd0] sm:$0xf]
      %v363 = vld [vmem:[%s1 + $0xd4] sm:$0xf]
      %v364 = vld [vmem:[%s1 + $0xd8] sm:$0xf]
      %v365 = vld [vmem:[%s1 + $0xdc] sm:$0xf]
      %v366 = vld [vmem:[%s1 + $0xe0] sm:$0xf]
      %v367 = vld [vmem:[%s1 + $0xe4] sm:$0xf]
      %v368 = vld [vmem:[%s1 + $0xe8] sm:$0xf]
      %v369 = vld [vmem:[%s1 + $0xec] sm:$0xf]
      %v370 = vld [vmem:[%s1 + $0xf0] sm:$0xf]
      %v371 = vld [vmem:[%s1 + $0xf4] sm:$0xf]
      %v372 = vld [vmem:[%s1 + $0xf8] sm:$0xf]
      %v373 = vld [vmem:[%s1 + $0xfc] sm:$0xf]
      %v374 = vld [vmem:[%s1 + $0x100] sm:$0xf]
      %v375 = vld [vmem:[%s1 + $0x104] sm:$0xf]
      %v376 = vld [vmem:[%s1 + $0x108] sm:$0xf]
      %v377 = vld [vmem:[%s1 + $0x10c] sm:$0xf]
      %v378 = vld [vmem:[%s1 + $0x110] sm:$0xf]
      %v379 = vld [vmem:[%s1 + $0x114] sm:$0xf]
      %v380 = vld [vmem:[%s1 + $0x118] sm:$0xf]
      %v381 = vld [vmem:[%s1 + $0x11c] sm:$0xf]
      %v382 = vld [vmem:[%s2] sm:$0x1]
      %v384 = vlaneseq
      %v385 = vshrl.u32 %v384, 7
      %v386 = vsub.s32 0, %v385
      %v387 = vrot.slane %v382, %v386
      %v392 = vunpack.c.l.b16 %v307
      %v393 = vunpack.c.h.b16 %v307
      %v394 = vunpack.c.l.b16 %v308
      %v395 = vunpack.c.h.b16 %v308
      %v396 = vunpack.c.l.b16 %v309
      %v397 = vpack.c.b16 %v392, %v392
      %v398 = vpack.c.b16 %v393, %v393
      %v399 = vpack.c.b16 %v394, %v394
      %v400 = vpack.c.b16 %v395, %v395
      %v401 = vpack.c.b16 %v396, %v396
      %v478 = vunpack.c.l.b16 %v310
      %v479 = vunpack.c.l.b16 %v311
      %v480 = vunpack.c.l.b16 %v312
      %v481 = vunpack.c.l.b16 %v313
      %v482 = vunpack.c.l.b16 %v314
      %v483 = vunpack.c.l.b16 %v315
      %v484 = vunpack.c.l.b16 %v316
      %v485 = vunpack.c.l.b16 %v317
      %v486 = vunpack.c.l.b16 %v318
      %v487 = vunpack.c.l.b16 %v319
      %v488 = vunpack.c.l.b16 %v320
      %v489 = vunpack.c.l.b16 %v321
      %v490 = vunpack.c.l.b16 %v322
      %v491 = vunpack.c.l.b16 %v323
      %v492 = vunpack.c.l.b16 %v324
      %v493 = vunpack.c.l.b16 %v325
      %v494 = vunpack.c.l.b16 %v326
      %v495 = vunpack.c.l.b16 %v327
      %v496 = vunpack.c.l.b16 %v328
      %v497 = vunpack.c.l.b16 %v329
      %v498 = vunpack.c.l.b16 %v330
      %v499 = vunpack.c.l.b16 %v331
      %v500 = vunpack.c.l.b16 %v332
      %v501 = vunpack.c.l.b16 %v333
      %v502 = vunpack.c.l.b16 %v334
      %v503 = vunpack.c.l.b16 %v335
      %v504 = vunpack.c.l.b16 %v336
      %v505 = vunpack.c.l.b16 %v337
      %v506 = vunpack.c.l.b16 %v338
      %v507 = vunpack.c.l.b16 %v339
      %v508 = vunpack.c.l.b16 %v340
      %v509 = vunpack.c.l.b16 %v341
      %v510 = vunpack.c.l.b16 %v342
      %v511 = vunpack.c.l.b16 %v343
      %v512 = vunpack.c.l.b16 %v344
      %v513 = vunpack.c.l.b16 %v345
      %v514 = vunpack.c.l.b16 %v346
      %v515 = vunpack.c.l.b16 %v347
      %v516 = vunpack.c.l.b16 %v348
      %v517 = vunpack.c.l.b16 %v349
      %v518 = vunpack.c.l.b16 %v350
      %v519 = vunpack.c.l.b16 %v351
      %v520 = vunpack.c.l.b16 %v352
      %v521 = vunpack.c.l.b16 %v353
      %v522 = vunpack.c.l.b16 %v354
      %v523 = vunpack.c.l.b16 %v355
      %v524 = vunpack.c.l.b16 %v356
      %v525 = vunpack.c.l.b16 %v357
      %v526 = vunpack.c.l.b16 %v358
      %v527 = vunpack.c.l.b16 %v359
      %v528 = vunpack.c.l.b16 %v360
      %v529 = vunpack.c.l.b16 %v361
      %v530 = vunpack.c.l.b16 %v362
      %v531 = vunpack.c.l.b16 %v363
      %v532 = vunpack.c.l.b16 %v364
      %v533 = vunpack.c.l.b16 %v365
      %v534 = vunpack.c.l.b16 %v366
      %v535 = vunpack.c.l.b16 %v367
      %v536 = vunpack.c.l.b16 %v368
      %v537 = vunpack.c.l.b16 %v369
      %v538 = vunpack.c.l.b16 %v370
      %v539 = vunpack.c.l.b16 %v371
      %v540 = vunpack.c.l.b16 %v372
      %v541 = vunpack.c.l.b16 %v373
      %v542 = vunpack.c.l.b16 %v374
      %v543 = vunpack.c.l.b16 %v375
      %v544 = vunpack.c.l.b16 %v376
      %v545 = vunpack.c.l.b16 %v377
      %v546 = vunpack.c.l.b16 %v378
      %v547 = vunpack.c.l.b16 %v379
      %v548 = vunpack.c.l.b16 %v380
      %v549 = vunpack.c.l.b16 %v381
      %v550 = vpack.c.b16 %v479, %v478
      %v551 = vpack.c.b16 %v481, %v480
      %v552 = vpack.c.b16 %v483, %v482
      %v553 = vpack.c.b16 %v485, %v484
      %v554 = vpack.c.b16 %v487, %v486
      %v555 = vpack.c.b16 %v489, %v488
      %v556 = vpack.c.b16 %v491, %v490
      %v557 = vpack.c.b16 %v493, %v492
      %v558 = vpack.c.b16 %v495, %v494
      %v559 = vpack.c.b16 %v497, %v496
      %v560 = vpack.c.b16 %v499, %v498
      %v561 = vpack.c.b16 %v501, %v500
      %v562 = vpack.c.b16 %v503, %v502
      %v563 = vpack.c.b16 %v505, %v504
      %v564 = vpack.c.b16 %v507, %v506
      %v565 = vpack.c.b16 %v509, %v508
      %v566 = vpack.c.b16 %v511, %v510
      %v567 = vpack.c.b16 %v513, %v512
      %v568 = vpack.c.b16 %v515, %v514
      %v569 = vpack.c.b16 %v517, %v516
      %v570 = vpack.c.b16 %v519, %v518
      %v571 = vpack.c.b16 %v521, %v520
      %v572 = vpack.c.b16 %v523, %v522
      %v573 = vpack.c.b16 %v525, %v524
      %v574 = vpack.c.b16 %v527, %v526
      %v575 = vpack.c.b16 %v529, %v528
      %v576 = vpack.c.b16 %v531, %v530
      %v577 = vpack.c.b16 %v533, %v532
      %v578 = vpack.c.b16 %v535, %v534
      %v579 = vpack.c.b16 %v537, %v536
      %v580 = vpack.c.b16 %v539, %v538
      %v581 = vpack.c.b16 %v541, %v540
      %v582 = vpack.c.b16 %v543, %v542
      %v583 = vpack.c.b16 %v545, %v544
      %v584 = vpack.c.b16 %v547, %v546
      %v585 = vpack.c.b16 %v549, %v548
      %vm622 = vcmask 523264
      %v624 = vsel %vm622, %v401, 0
      %626 = vmatprep.subr.bf16.mxu0 0
      %627 = vmatpush1.bf16.msra.mxu0 %v557
      %628 = vmatprep.subr.bf16.mxu0 0
      %629 = vmatpush1.bf16.msra.mxu0 %v556
      %630 = vmatprep.subr.bf16.mxu0 0
      %631 = vmatpush1.bf16.msra.mxu0 %v555
      %632 = vmatprep.subr.bf16.mxu0 0
      %633 = vmatpush1.bf16.msra.mxu0 %v554
      %634 = vmatprep.subr.bf16.mxu0 0
      %635 = vmatpush1.bf16.msra.mxu0 %v553
      %636 = vmatprep.subr.bf16.mxu0 0
      %637 = vmatpush1.bf16.msra.mxu0 %v552
      %638 = vmatprep.subr.bf16.mxu0 0
      %639 = vmatpush1.bf16.msra.mxu0 %v551
      %640 = vmatprep.subr.bf16.mxu0 0
      %641 = vmatpush1.bf16.msra.mxu0 %v550
      %642 = vmatprep.subr.bf16.mxu0 0
      %643 = vmatpush2.bf16.msra.mxu0 %v565
      %644 = vmatprep.subr.bf16.mxu0 0
      %645 = vmatpush2.bf16.msra.mxu0 %v564
      %646 = vmatprep.subr.bf16.mxu0 0
      %647 = vmatpush2.bf16.msra.mxu0 %v563
      %648 = vmatprep.subr.bf16.mxu0 0
      %649 = vmatpush2.bf16.msra.mxu0 %v562
      %650 = vmatprep.subr.bf16.mxu0 0
      %651 = vmatpush2.bf16.msra.mxu0 %v561
      %652 = vmatprep.subr.bf16.mxu0 0
      %653 = vmatpush2.bf16.msra.mxu0 %v560
      %654 = vmatprep.subr.bf16.mxu0 0
      %655 = vmatpush2.bf16.msra.mxu0 %v559
      %656 = vmatprep.subr.bf16.mxu0 0
      %657 = vmatpush2.bf16.msra.mxu0 %v558
      %658 = vmatprep.mubr.bf16.mxu0 %v398
      %659 = vmatmul.mubr.bf16.gmra.mxu0 %v397
      %v660 = vpop.f32.mrf.mxu0
      %v661 = vadd.f32 %v387, %v660
      %v662 = vpop.f32.mrf.mxu0
      %v663 = vpop.f32.mrf.mxu0
      %v664 = vpop.f32.mrf.mxu0
      %665 = vdwg.mxu0
      %666 = vmatprep.subr.bf16.mxu0 0
      %667 = vmatpush1.bf16.msra.mxu0 %v573
      %668 = vmatprep.subr.bf16.mxu0 0
      %669 = vmatpush1.bf16.msra.mxu0 %v572
      %670 = vmatprep.subr.bf16.mxu0 0
      %671 = vmatpush1.bf16.msra.mxu0 %v571
      %672 = vmatprep.subr.bf16.mxu0 0
      %673 = vmatpush1.bf16.msra.mxu0 %v570
      %674 = vmatprep.subr.bf16.mxu0 0
      %675 = vmatpush1.bf16.msra.mxu0 %v569
      %676 = vmatprep.subr.bf16.mxu0 0
      %677 = vmatpush1.bf16.msra.mxu0 %v568
      %678 = vmatprep.subr.bf16.mxu0 0
      %679 = vmatpush1.bf16.msra.mxu0 %v567
      %680 = vmatprep.subr.bf16.mxu0 0
      %681 = vmatpush1.bf16.msra.mxu0 %v566
      %682 = vmatprep.subr.bf16.mxu0 0
      %683 = vmatpush2.bf16.msra.mxu0 %v581
      %684 = vmatprep.subr.bf16.mxu0 0
      %685 = vmatpush2.bf16.msra.mxu0 %v580
      %686 = vmatprep.subr.bf16.mxu0 0
      %687 = vmatpush2.bf16.msra.mxu0 %v579
      %688 = vmatprep.subr.bf16.mxu0 0
      %689 = vmatpush2.bf16.msra.mxu0 %v578
      %690 = vmatprep.subr.bf16.mxu0 0
      %691 = vmatpush2.bf16.msra.mxu0 %v577
      %692 = vmatprep.subr.bf16.mxu0 0
      %693 = vmatpush2.bf16.msra.mxu0 %v576
      %694 = vmatprep.subr.bf16.mxu0 0
      %695 = vmatpush2.bf16.msra.mxu0 %v575
      %696 = vmatprep.subr.bf16.mxu0 0
      %697 = vmatpush2.bf16.msra.mxu0 %v574
      %698 = vmatprep.mubr.bf16.mxu0 %v400
      %699 = vmatmul.mubr.bf16.gmra.mxu0 %v399
      %v700 = vpop.f32.mrf.mxu0
      %v701 = vadd.f32 %v661, %v700
      %v702 = vpop.f32.mrf.mxu0
      %v703 = vpop.f32.mrf.mxu0
      %v704 = vpop.f32.mrf.mxu0
      %705 = vdwg.mxu0
      %706 = vmatprep.subr.bf16.mxu0 0
      %707 = vmatpush1.bf16.msra.mxu0 0
      %708 = vmatprep.subr.bf16.mxu0 0
      %709 = vmatpush1.bf16.msra.mxu0 0
      %710 = vmatprep.subr.bf16.mxu0 0
      %711 = vmatpush1.bf16.msra.mxu0 0
      %712 = vmatprep.subr.bf16.mxu0 0
      %713 = vmatpush1.bf16.msra.mxu0 0
      %714 = vmatprep.subr.bf16.mxu0 0
      %715 = vmatpush1.bf16.msra.mxu0 %v585
      %716 = vmatprep.subr.bf16.mxu0 0
      %717 = vmatpush1.bf16.msra.mxu0 %v584
      %718 = vmatprep.subr.bf16.mxu0 0
      %719 = vmatpush1.bf16.msra.mxu0 %v583
      %720 = vmatprep.subr.bf16.mxu0 0
      %721 = vmatpush1.bf16.msra.mxu0 %v582
      %722 = vmatprep.subr.bf16.mxu0 0
      %723 = vmatpush2.bf16.msra.mxu0 0
      %724 = vmatprep.subr.bf16.mxu0 0
      %725 = vmatpush2.bf16.msra.mxu0 0
      %726 = vmatprep.subr.bf16.mxu0 0
      %727 = vmatpush2.bf16.msra.mxu0 0
      %728 = vmatprep.subr.bf16.mxu0 0
      %729 = vmatpush2.bf16.msra.mxu0 0
      %730 = vmatprep.subr.bf16.mxu0 0
      %731 = vmatpush2.bf16.msra.mxu0 0
      %732 = vmatprep.subr.bf16.mxu0 0
      %733 = vmatpush2.bf16.msra.mxu0 0
      %734 = vmatprep.subr.bf16.mxu0 0
      %735 = vmatpush2.bf16.msra.mxu0 0
      %736 = vmatprep.subr.bf16.mxu0 0
      %737 = vmatpush2.bf16.msra.mxu0 0
      %738 = vmatprep.mubr.bf16.mxu0 0
      %739 = vmatmul.mubr.bf16.gmra.mxu0 %v624
      %v740 = vpop.f32.mrf.mxu0
      %v741 = vadd.f32 %v701, %v740
      %v742 = vpop.f32.mrf.mxu0
      %v743 = vpop.f32.mrf.mxu0
      %v744 = vpop.f32.mrf.mxu0
      %745 = vdwg.mxu0
      %v746 = vmax.f32 %v741, 0.0
      %v747 = vpack.c.bf16 %v746, %v746
      %v748 = vld [vmem:[%s292] sm:$0xff]
      %v749 = vld [vmem:[%s292 + $0x8] sm:$0xff]
      %v750 = vld [vmem:[%s292 + $0x10] sm:$0xff]
      %v751 = vld [vmem:[%s292 + $0x18] sm:$0xff]
      %v752 = vld [vmem:[%s292 + $0x20] sm:$0xff]
      %v753 = vld [vmem:[%s292 + $0x28] sm:$0xff]
      %v754 = vld [vmem:[%s292 + $0x30] sm:$0xff]
      %v755 = vld [vmem:[%s292 + $0x38] sm:$0xff]
      %v756 = vld [vmem:[%s292 + $0x40] sm:$0xff]
      %v757 = vld [vmem:[%s292 + $0x48] sm:$0xff]
      %v758 = vld [vmem:[%s292 + $0x50] sm:$0xff]
      %v759 = vld [vmem:[%s292 + $0x58] sm:$0xff]
      %v760 = vld [vmem:[%s292 + $0x60] sm:$0xff]
      %v761 = vld [vmem:[%s292 + $0x68] sm:$0xff]
      %v762 = vld [vmem:[%s292 + $0x70] sm:$0xff]
      %v763 = vld [vmem:[%s292 + $0x78] sm:$0xff]
      %v764 = vld [vmem:[%s292 + $0x80] sm:$0xff]
      %v765 = vld [vmem:[%s292 + $0x88] sm:$0xff]
      %v766 = vld [vmem:[%s292 + $0x90] sm:$0xff]
      %v767 = vld [vmem:[%s292 + $0x98] sm:$0xff]
      %v768 = vld [vmem:[%s292 + $0xa0] sm:$0xff]
      %v769 = vld [vmem:[%s292 + $0xa8] sm:$0xff]
      %v770 = vld [vmem:[%s292 + $0xb0] sm:$0xff]
      %v771 = vld [vmem:[%s292 + $0xb8] sm:$0xff]
      %v772 = vld [vmem:[%s292 + $0xc0] sm:$0xff]
      %v773 = vld [vmem:[%s292 + $0xc8] sm:$0xff]
      %v774 = vld [vmem:[%s292 + $0xd0] sm:$0xff]
      %v775 = vld [vmem:[%s292 + $0xd8] sm:$0xff]
      %v776 = vld [vmem:[%s292 + $0xe0] sm:$0xff]
      %v777 = vld [vmem:[%s292 + $0xe8] sm:$0xff]
      %v778 = vld [vmem:[%s292 + $0xf0] sm:$0xff]
      %v779 = vld [vmem:[%s292 + $0xf8] sm:$0xff]
      %s780 = scalar_lea.vmem %s285, 20
      %v781 = vld [vmem:[%s780] sm:$0xff]
      %v782 = vld [vmem:[%s780 + $0x8] sm:$0xff]
      %v783 = vld [vmem:[%s780 + $0x10] sm:$0xf]
      %v787 = vunpack.c.l.b16 %v781
      %v788 = vunpack.c.h.b16 %v781
      %v789 = vunpack.c.l.b16 %v782
      %v790 = vunpack.c.h.b16 %v782
      %v791 = vunpack.c.l.b16 %v783
      %v792 = vpack.c.b16 %v787, %v787
      %v793 = vpack.c.b16 %v788, %v788
      %v794 = vpack.c.b16 %v789, %v789
      %v795 = vpack.c.b16 %v790, %v790
      %v796 = vpack.c.b16 %v791, %v791
      %v802 = vsel %vm622, %v796, 0
      %804 = vmatprep.subr.bf16.mxu0 0
      %805 = vmatpush1.bf16.msra.mxu0 %v557
      %806 = vmatprep.subr.bf16.mxu0 0
      %807 = vmatpush1.bf16.msra.mxu0 %v556
      %808 = vmatprep.subr.bf16.mxu0 0
      %809 = vmatpush1.bf16.msra.mxu0 %v555
      %810 = vmatprep.subr.bf16.mxu0 0
      %811 = vmatpush1.bf16.msra.mxu0 %v554
      %812 = vmatprep.subr.bf16.mxu0 0
      %813 = vmatpush1.bf16.msra.mxu0 %v553
      %814 = vmatprep.subr.bf16.mxu0 0
      %815 = vmatpush1.bf16.msra.mxu0 %v552
      %816 = vmatprep.subr.bf16.mxu0 0
      %817 = vmatpush1.bf16.msra.mxu0 %v551
      %818 = vmatprep.subr.bf16.mxu0 0
      %819 = vmatpush1.bf16.msra.mxu0 %v550
      %820 = vmatprep.subr.bf16.mxu0 0
      %821 = vmatpush2.bf16.msra.mxu0 %v565
      %822 = vmatprep.subr.bf16.mxu0 0
      %823 = vmatpush2.bf16.msra.mxu0 %v564
      %824 = vmatprep.subr.bf16.mxu0 0
      %825 = vmatpush2.bf16.msra.mxu0 %v563
      %826 = vmatprep.subr.bf16.mxu0 0
      %827 = vmatpush2.bf16.msra.mxu0 %v562
      %828 = vmatprep.subr.bf16.mxu0 0
      %829 = vmatpush2.bf16.msra.mxu0 %v561
      %830 = vmatprep.subr.bf16.mxu0 0
      %831 = vmatpush2.bf16.msra.mxu0 %v560
      %832 = vmatprep.subr.bf16.mxu0 0
      %833 = vmatpush2.bf16.msra.mxu0 %v559
      %834 = vmatprep.subr.bf16.mxu0 0
      %835 = vmatpush2.bf16.msra.mxu0 %v558
      %836 = vmatprep.mubr.bf16.mxu0 %v793
      %837 = vmatmul.mubr.bf16.gmra.mxu0 %v792
      %v838 = vpop.f32.mrf.mxu0
      %v839 = vadd.f32 %v387, %v838
      %v840 = vpop.f32.mrf.mxu0
      %v841 = vpop.f32.mrf.mxu0
      %v842 = vpop.f32.mrf.mxu0
      %843 = vdwg.mxu0
      %844 = vmatprep.subr.bf16.mxu0 0
      %845 = vmatpush1.bf16.msra.mxu0 %v573
      %846 = vmatprep.subr.bf16.mxu0 0
      %847 = vmatpush1.bf16.msra.mxu0 %v572
      %848 = vmatprep.subr.bf16.mxu0 0
      %849 = vmatpush1.bf16.msra.mxu0 %v571
      %850 = vmatprep.subr.bf16.mxu0 0
      %851 = vmatpush1.bf16.msra.mxu0 %v570
      %852 = vmatprep.subr.bf16.mxu0 0
      %853 = vmatpush1.bf16.msra.mxu0 %v569
      %854 = vmatprep.subr.bf16.mxu0 0
      %855 = vmatpush1.bf16.msra.mxu0 %v568
      %856 = vmatprep.subr.bf16.mxu0 0
      %857 = vmatpush1.bf16.msra.mxu0 %v567
      %858 = vmatprep.subr.bf16.mxu0 0
      %859 = vmatpush1.bf16.msra.mxu0 %v566
      %860 = vmatprep.subr.bf16.mxu0 0
      %861 = vmatpush2.bf16.msra.mxu0 %v581
      %862 = vmatprep.subr.bf16.mxu0 0
      %863 = vmatpush2.bf16.msra.mxu0 %v580
      %864 = vmatprep.subr.bf16.mxu0 0
      %865 = vmatpush2.bf16.msra.mxu0 %v579
      %866 = vmatprep.subr.bf16.mxu0 0
      %867 = vmatpush2.bf16.msra.mxu0 %v578
      %868 = vmatprep.subr.bf16.mxu0 0
      %869 = vmatpush2.bf16.msra.mxu0 %v577
      %870 = vmatprep.subr.bf16.mxu0 0
      %871 = vmatpush2.bf16.msra.mxu0 %v576
      %872 = vmatprep.subr.bf16.mxu0 0
      %873 = vmatpush2.bf16.msra.mxu0 %v575
      %874 = vmatprep.subr.bf16.mxu0 0
      %875 = vmatpush2.bf16.msra.mxu0 %v574
      %876 = vmatprep.mubr.bf16.mxu0 %v795
      %877 = vmatmul.mubr.bf16.gmra.mxu0 %v794
      %v878 = vpop.f32.mrf.mxu0
      %v879 = vadd.f32 %v839, %v878
      %v880 = vpop.f32.mrf.mxu0
      %v881 = vpop.f32.mrf.mxu0
      %v882 = vpop.f32.mrf.mxu0
      %883 = vdwg.mxu0
      %884 = vmatprep.subr.bf16.mxu0 0
      %885 = vmatpush1.bf16.msra.mxu0 0
      %886 = vmatprep.subr.bf16.mxu0 0
      %887 = vmatpush1.bf16.msra.mxu0 0
      %888 = vmatprep.subr.bf16.mxu0 0
      %889 = vmatpush1.bf16.msra.mxu0 0
      %890 = vmatprep.subr.bf16.mxu0 0
      %891 = vmatpush1.bf16.msra.mxu0 0
      %892 = vmatprep.subr.bf16.mxu0 0
      %893 = vmatpush1.bf16.msra.mxu0 %v585
      %894 = vmatprep.subr.bf16.mxu0 0
      %895 = vmatpush1.bf16.msra.mxu0 %v584
      %896 = vmatprep.subr.bf16.mxu0 0
      %897 = vmatpush1.bf16.msra.mxu0 %v583
      %898 = vmatprep.subr.bf16.mxu0 0
      %899 = vmatpush1.bf16.msra.mxu0 %v582
      %900 = vmatprep.subr.bf16.mxu0 0
      %901 = vmatpush2.bf16.msra.mxu0 0
      %902 = vmatprep.subr.bf16.mxu0 0
      %903 = vmatpush2.bf16.msra.mxu0 0
      %904 = vmatprep.subr.bf16.mxu0 0
      %905 = vmatpush2.bf16.msra.mxu0 0
      %906 = vmatprep.subr.bf16.mxu0 0
      %907 = vmatpush2.bf16.msra.mxu0 0
      %908 = vmatprep.subr.bf16.mxu0 0
      %909 = vmatpush2.bf16.msra.mxu0 0
      %910 = vmatprep.subr.bf16.mxu0 0
      %911 = vmatpush2.bf16.msra.mxu0 0
      %912 = vmatprep.subr.bf16.mxu0 0
      %913 = vmatpush2.bf16.msra.mxu0 0
      %914 = vmatprep.subr.bf16.mxu0 0
      %915 = vmatpush2.bf16.msra.mxu0 0
      %916 = vmatprep.mubr.bf16.mxu0 0
      %917 = vmatmul.mubr.bf16.gmra.mxu0 %v802
      %v918 = vpop.f32.mrf.mxu0
      %v919 = vadd.f32 %v879, %v918
      %v920 = vpop.f32.mrf.mxu0
      %v921 = vpop.f32.mrf.mxu0
      %v922 = vpop.f32.mrf.mxu0
      %923 = vdwg.mxu0
      %v924 = vmax.f32 %v919, 0.0
      %v925 = vpack.c.bf16 %v924, %v924
      %s926 = scalar_lea.vmem %s292, 256
      %v927 = vld [vmem:[%s926] sm:$0xff]
      %v928 = vld [vmem:[%s926 + $0x8] sm:$0xff]
      %v929 = vld [vmem:[%s926 + $0x10] sm:$0xff]
      %v930 = vld [vmem:[%s926 + $0x18] sm:$0xff]
      %v931 = vld [vmem:[%s926 + $0x20] sm:$0xff]
      %v932 = vld [vmem:[%s926 + $0x28] sm:$0xff]
      %v933 = vld [vmem:[%s926 + $0x30] sm:$0xff]
      %v934 = vld [vmem:[%s926 + $0x38] sm:$0xff]
      %v935 = vld [vmem:[%s926 + $0x40] sm:$0xff]
      %v936 = vld [vmem:[%s926 + $0x48] sm:$0xff]
      %v937 = vld [vmem:[%s926 + $0x50] sm:$0xff]
      %v938 = vld [vmem:[%s926 + $0x58] sm:$0xff]
      %v939 = vld [vmem:[%s926 + $0x60] sm:$0xff]
      %v940 = vld [vmem:[%s926 + $0x68] sm:$0xff]
      %v941 = vld [vmem:[%s926 + $0x70] sm:$0xff]
      %v942 = vld [vmem:[%s926 + $0x78] sm:$0xff]
      %v943 = vld [vmem:[%s926 + $0x80] sm:$0xff]
      %v944 = vld [vmem:[%s926 + $0x88] sm:$0xff]
      %v945 = vld [vmem:[%s926 + $0x90] sm:$0xff]
      %v946 = vld [vmem:[%s926 + $0x98] sm:$0xff]
      %v947 = vld [vmem:[%s926 + $0xa0] sm:$0xff]
      %v948 = vld [vmem:[%s926 + $0xa8] sm:$0xff]
      %v949 = vld [vmem:[%s926 + $0xb0] sm:$0xff]
      %v950 = vld [vmem:[%s926 + $0xb8] sm:$0xff]
      %v951 = vld [vmem:[%s926 + $0xc0] sm:$0xff]
      %v952 = vld [vmem:[%s926 + $0xc8] sm:$0xff]
      %v953 = vld [vmem:[%s926 + $0xd0] sm:$0xff]
      %v954 = vld [vmem:[%s926 + $0xd8] sm:$0xff]
      %v955 = vld [vmem:[%s926 + $0xe0] sm:$0xff]
      %v956 = vld [vmem:[%s926 + $0xe8] sm:$0xff]
      %v957 = vld [vmem:[%s926 + $0xf0] sm:$0xff]
      %v958 = vld [vmem:[%s926 + $0xf8] sm:$0xff]
      %v991 = vunpack.c.l.b16 %v927
      %v992 = vunpack.c.h.b16 %v927
      %v993 = vunpack.c.l.b16 %v928
      %v994 = vunpack.c.h.b16 %v928
      %v995 = vunpack.c.l.b16 %v929
      %v996 = vunpack.c.h.b16 %v929
      %v997 = vunpack.c.l.b16 %v930
      %v998 = vunpack.c.h.b16 %v930
      %v999 = vunpack.c.l.b16 %v931
      %v1000 = vunpack.c.h.b16 %v931
      %v1001 = vunpack.c.l.b16 %v932
      %v1002 = vunpack.c.h.b16 %v932
      %v1003 = vunpack.c.l.b16 %v933
      %v1004 = vunpack.c.h.b16 %v933
      %v1005 = vunpack.c.l.b16 %v934
      %v1006 = vunpack.c.h.b16 %v934
      %v1007 = vunpack.c.l.b16 %v935
      %v1008 = vunpack.c.h.b16 %v935
      %v1009 = vunpack.c.l.b16 %v936
      %v1010 = vunpack.c.h.b16 %v936
      %v1011 = vunpack.c.l.b16 %v937
      %v1012 = vunpack.c.h.b16 %v937
      %v1013 = vunpack.c.l.b16 %v938
      %v1014 = vunpack.c.h.b16 %v938
      %v1015 = vunpack.c.l.b16 %v939
      %v1016 = vunpack.c.h.b16 %v939
      %v1017 = vunpack.c.l.b16 %v940
      %v1018 = vunpack.c.h.b16 %v940
      %v1019 = vunpack.c.l.b16 %v941
      %v1020 = vunpack.c.h.b16 %v941
      %v1021 = vunpack.c.l.b16 %v942
      %v1022 = vunpack.c.h.b16 %v942
      %v1023 = vunpack.c.l.b16 %v943
      %v1024 = vunpack.c.h.b16 %v943
      %v1025 = vunpack.c.l.b16 %v944
      %v1026 = vunpack.c.h.b16 %v944
      %v1027 = vunpack.c.l.b16 %v945
      %v1028 = vunpack.c.h.b16 %v945
      %v1029 = vunpack.c.l.b16 %v946
      %v1030 = vunpack.c.h.b16 %v946
      %v1031 = vunpack.c.l.b16 %v947
      %v1032 = vunpack.c.h.b16 %v947
      %v1033 = vunpack.c.l.b16 %v948
      %v1034 = vunpack.c.h.b16 %v948
      %v1035 = vunpack.c.l.b16 %v949
      %v1036 = vunpack.c.h.b16 %v949
      %v1037 = vunpack.c.l.b16 %v950
      %v1038 = vunpack.c.h.b16 %v950
      %v1039 = vunpack.c.l.b16 %v951
      %v1040 = vunpack.c.h.b16 %v951
      %v1041 = vunpack.c.l.b16 %v952
      %v1042 = vunpack.c.h.b16 %v952
      %v1043 = vunpack.c.l.b16 %v953
      %v1044 = vunpack.c.h.b16 %v953
      %v1045 = vunpack.c.l.b16 %v954
      %v1046 = vunpack.c.h.b16 %v954
      %v1047 = vunpack.c.l.b16 %v955
      %v1048 = vunpack.c.h.b16 %v955
      %v1049 = vunpack.c.l.b16 %v956
      %v1050 = vunpack.c.h.b16 %v956
      %v1051 = vunpack.c.l.b16 %v957
      %v1052 = vunpack.c.h.b16 %v957
      %v1053 = vunpack.c.l.b16 %v958
      %v1054 = vunpack.c.h.b16 %v958
      %v1055 = vpack.c.b16 %v999, %v991
      %v1056 = vpack.c.b16 %v1000, %v992
      %v1057 = vpack.c.b16 %v1001, %v993
      %v1058 = vpack.c.b16 %v1002, %v994
      %v1059 = vpack.c.b16 %v1003, %v995
      %v1060 = vpack.c.b16 %v1004, %v996
      %v1061 = vpack.c.b16 %v1005, %v997
      %v1062 = vpack.c.b16 %v1006, %v998
      %v1063 = vpack.c.b16 %v1015, %v1007
      %v1064 = vpack.c.b16 %v1016, %v1008
      %v1065 = vpack.c.b16 %v1017, %v1009
      %v1066 = vpack.c.b16 %v1018, %v1010
      %v1067 = vpack.c.b16 %v1019, %v1011
      %v1068 = vpack.c.b16 %v1020, %v1012
      %v1069 = vpack.c.b16 %v1021, %v1013
      %v1070 = vpack.c.b16 %v1022, %v1014
      %v1071 = vpack.c.b16 %v1031, %v1023
      %v1072 = vpack.c.b16 %v1032, %v1024
      %v1073 = vpack.c.b16 %v1033, %v1025
      %v1074 = vpack.c.b16 %v1034, %v1026
      %v1075 = vpack.c.b16 %v1035, %v1027
      %v1076 = vpack.c.b16 %v1036, %v1028
      %v1077 = vpack.c.b16 %v1037, %v1029
      %v1078 = vpack.c.b16 %v1038, %v1030
      %v1079 = vpack.c.b16 %v1047, %v1039
      %v1080 = vpack.c.b16 %v1048, %v1040
      %v1081 = vpack.c.b16 %v1049, %v1041
      %v1082 = vpack.c.b16 %v1050, %v1042
      %v1083 = vpack.c.b16 %v1051, %v1043
      %v1084 = vpack.c.b16 %v1052, %v1044
      %v1085 = vpack.c.b16 %v1053, %v1045
      %v1086 = vpack.c.b16 %v1054, %v1046
      %v1120 = vsel %vm622, %v925, 0
      %1122 = vmatprep.subr.bf16.mxu0 0
      %1123 = vmatpush1.bf16.msra.mxu0 0
      %1124 = vmatprep.subr.bf16.mxu0 0
      %1125 = vmatpush1.bf16.msra.mxu0 0
      %1126 = vmatprep.subr.bf16.mxu0 0
      %1127 = vmatpush1.bf16.msra.mxu0 0
      %1128 = vmatprep.subr.bf16.mxu0 0
      %1129 = vmatpush1.bf16.msra.mxu0 0
      %1130 = vmatprep.subr.bf16.mxu0 %v1080
      %1131 = vmatpush1.bf16.msra.mxu0 %v1079
      %1132 = vmatprep.subr.bf16.mxu0 %v1072
      %1133 = vmatpush1.bf16.msra.mxu0 %v1071
      %1134 = vmatprep.subr.bf16.mxu0 %v1064
      %1135 = vmatpush1.bf16.msra.mxu0 %v1063
      %1136 = vmatprep.subr.bf16.mxu0 %v1056
      %1137 = vmatpush1.bf16.msra.mxu0 %v1055
      %1138 = vmatprep.subr.bf16.mxu0 0
      %1139 = vmatpush2.bf16.msra.mxu0 0
      %1140 = vmatprep.subr.bf16.mxu0 0
      %1141 = vmatpush2.bf16.msra.mxu0 0
      %1142 = vmatprep.subr.bf16.mxu0 0
      %1143 = vmatpush2.bf16.msra.mxu0 0
      %1144 = vmatprep.subr.bf16.mxu0 0
      %1145 = vmatpush2.bf16.msra.mxu0 0
      %1146 = vmatprep.subr.bf16.mxu0 0
      %1147 = vmatpush2.bf16.msra.mxu0 0
      %1148 = vmatprep.subr.bf16.mxu0 0
      %1149 = vmatpush2.bf16.msra.mxu0 0
      %1150 = vmatprep.subr.bf16.mxu0 0
      %1151 = vmatpush2.bf16.msra.mxu0 0
      %1152 = vmatprep.subr.bf16.mxu0 0
      %1153 = vmatpush2.bf16.msra.mxu0 0
      %1154 = vmatprep.mubr.bf16.mxu0 0
      %1155 = vmatmul.mubr.bf16.gmra.mxu0 %v1120
      %v1156 = vpop.f32.mrf.mxu0
      %v1157 = vadd.f32 0.0, %v1156
      %v1158 = vpop.f32.mrf.mxu0
      %v1159 = vadd.f32 0.0, %v1158
      %v1160 = vpop.f32.mrf.mxu0
      %v1161 = vpop.f32.mrf.mxu0
      %1162 = vdwg.mxu0
      %1163 = vmatprep.subr.bf16.mxu0 0
      %1164 = vmatpush1.bf16.msra.mxu0 0
      %1165 = vmatprep.subr.bf16.mxu0 0
      %1166 = vmatpush1.bf16.msra.mxu0 0
      %1167 = vmatprep.subr.bf16.mxu0 0
      %1168 = vmatpush1.bf16.msra.mxu0 0
      %1169 = vmatprep.subr.bf16.mxu0 0
      %1170 = vmatpush1.bf16.msra.mxu0 0
      %1171 = vmatprep.subr.bf16.mxu0 %v1082
      %1172 = vmatpush1.bf16.msra.mxu0 %v1081
      %1173 = vmatprep.subr.bf16.mxu0 %v1074
      %1174 = vmatpush1.bf16.msra.mxu0 %v1073
      %1175 = vmatprep.subr.bf16.mxu0 %v1066
      %1176 = vmatpush1.bf16.msra.mxu0 %v1065
      %1177 = vmatprep.subr.bf16.mxu0 %v1058
      %1178 = vmatpush1.bf16.msra.mxu0 %v1057
      %1179 = vmatprep.subr.bf16.mxu0 0
      %1180 = vmatpush2.bf16.msra.mxu0 0
      %1181 = vmatprep.subr.bf16.mxu0 0
      %1182 = vmatpush2.bf16.msra.mxu0 0
      %1183 = vmatprep.subr.bf16.mxu0 0
      %1184 = vmatpush2.bf16.msra.mxu0 0
      %1185 = vmatprep.subr.bf16.mxu0 0
      %1186 = vmatpush2.bf16.msra.mxu0 0
      %1187 = vmatprep.subr.bf16.mxu0 0
      %1188 = vmatpush2.bf16.msra.mxu0 0
      %1189 = vmatprep.subr.bf16.mxu0 0
      %1190 = vmatpush2.bf16.msra.mxu0 0
      %1191 = vmatprep.subr.bf16.mxu0 0
      %1192 = vmatpush2.bf16.msra.mxu0 0
      %1193 = vmatprep.subr.bf16.mxu0 0
      %1194 = vmatpush2.bf16.msra.mxu0 0
      %1195 = vmatprep.mubr.bf16.mxu0 0
      %1196 = vmatmul.mubr.bf16.gmra.mxu0 %v1120
      %v1197 = vpop.f32.mrf.mxu0
      %v1198 = vadd.f32 0.0, %v1197
      %v1199 = vpop.f32.mrf.mxu0
      %v1200 = vadd.f32 0.0, %v1199
      %v1201 = vpop.f32.mrf.mxu0
      %v1202 = vpop.f32.mrf.mxu0
      %1203 = vdwg.mxu0
      %1204 = vmatprep.subr.bf16.mxu0 0
      %1205 = vmatpush1.bf16.msra.mxu0 0
      %1206 = vmatprep.subr.bf16.mxu0 0
      %1207 = vmatpush1.bf16.msra.mxu0 0
      %1208 = vmatprep.subr.bf16.mxu0 0
      %1209 = vmatpush1.bf16.msra.mxu0 0
      %1210 = vmatprep.subr.bf16.mxu0 0
      %1211 = vmatpush1.bf16.msra.mxu0 0
      %1212 = vmatprep.subr.bf16.mxu0 %v1084
      %1213 = vmatpush1.bf16.msra.mxu0 %v1083
      %1214 = vmatprep.subr.bf16.mxu0 %v1076
      %1215 = vmatpush1.bf16.msra.mxu0 %v1075
      %1216 = vmatprep.subr.bf16.mxu0 %v1068
      %1217 = vmatpush1.bf16.msra.mxu0 %v1067
      %1218 = vmatprep.subr.bf16.mxu0 %v1060
      %1219 = vmatpush1.bf16.msra.mxu0 %v1059
      %1220 = vmatprep.subr.bf16.mxu0 0
      %1221 = vmatpush2.bf16.msra.mxu0 0
      %1222 = vmatprep.subr.bf16.mxu0 0
      %1223 = vmatpush2.bf16.msra.mxu0 0
      %1224 = vmatprep.subr.bf16.mxu0 0
      %1225 = vmatpush2.bf16.msra.mxu0 0
      %1226 = vmatprep.subr.bf16.mxu0 0
      %1227 = vmatpush2.bf16.msra.mxu0 0
      %1228 = vmatprep.subr.bf16.mxu0 0
      %1229 = vmatpush2.bf16.msra.mxu0 0
      %1230 = vmatprep.subr.bf16.mxu0 0
      %1231 = vmatpush2.bf16.msra.mxu0 0
      %1232 = vmatprep.subr.bf16.mxu0 0
      %1233 = vmatpush2.bf16.msra.mxu0 0
      %1234 = vmatprep.subr.bf16.mxu0 0
      %1235 = vmatpush2.bf16.msra.mxu0 0
      %1236 = vmatprep.mubr.bf16.mxu0 0
      %1237 = vmatmul.mubr.bf16.gmra.mxu0 %v1120
      %v1238 = vpop.f32.mrf.mxu0
      %v1239 = vadd.f32 0.0, %v1238
      %v1240 = vpop.f32.mrf.mxu0
      %v1241 = vadd.f32 0.0, %v1240
      %v1242 = vpop.f32.mrf.mxu0
      %v1243 = vpop.f32.mrf.mxu0
      %1244 = vdwg.mxu0
      %1245 = vmatprep.subr.bf16.mxu0 0
      %1246 = vmatpush1.bf16.msra.mxu0 0
      %1247 = vmatprep.subr.bf16.mxu0 0
      %1248 = vmatpush1.bf16.msra.mxu0 0
      %1249 = vmatprep.subr.bf16.mxu0 0
      %1250 = vmatpush1.bf16.msra.mxu0 0
      %1251 = vmatprep.subr.bf16.mxu0 0
      %1252 = vmatpush1.bf16.msra.mxu0 0
      %1253 = vmatprep.subr.bf16.mxu0 %v1086
      %1254 = vmatpush1.bf16.msra.mxu0 %v1085
      %1255 = vmatprep.subr.bf16.mxu0 %v1078
      %1256 = vmatpush1.bf16.msra.mxu0 %v1077
      %1257 = vmatprep.subr.bf16.mxu0 %v1070
      %1258 = vmatpush1.bf16.msra.mxu0 %v1069
      %1259 = vmatprep.subr.bf16.mxu0 %v1062
      %1260 = vmatpush1.bf16.msra.mxu0 %v1061
      %1261 = vmatprep.subr.bf16.mxu0 0
      %1262 = vmatpush2.bf16.msra.mxu0 0
      %1263 = vmatprep.subr.bf16.mxu0 0
      %1264 = vmatpush2.bf16.msra.mxu0 0
      %1265 = vmatprep.subr.bf16.mxu0 0
      %1266 = vmatpush2.bf16.msra.mxu0 0
      %1267 = vmatprep.subr.bf16.mxu0 0
      %1268 = vmatpush2.bf16.msra.mxu0 0
      %1269 = vmatprep.subr.bf16.mxu0 0
      %1270 = vmatpush2.bf16.msra.mxu0 0
      %1271 = vmatprep.subr.bf16.mxu0 0
      %1272 = vmatpush2.bf16.msra.mxu0 0
      %1273 = vmatprep.subr.bf16.mxu0 0
      %1274 = vmatpush2.bf16.msra.mxu0 0
      %1275 = vmatprep.subr.bf16.mxu0 0
      %1276 = vmatpush2.bf16.msra.mxu0 0
      %1277 = vmatprep.mubr.bf16.mxu0 0
      %1278 = vmatmul.mubr.bf16.gmra.mxu0 %v1120
      %v1279 = vpop.f32.mrf.mxu0
      %v1280 = vadd.f32 0.0, %v1279
      %v1281 = vpop.f32.mrf.mxu0
      %v1282 = vadd.f32 0.0, %v1281
      %v1283 = vpop.f32.mrf.mxu0
      %v1284 = vpop.f32.mrf.mxu0
      %1285 = vdwg.mxu0
      %v1318 = vunpack.c.l.b16 %v748
      %v1319 = vunpack.c.h.b16 %v748
      %v1320 = vunpack.c.l.b16 %v749
      %v1321 = vunpack.c.h.b16 %v749
      %v1322 = vunpack.c.l.b16 %v750
      %v1323 = vunpack.c.h.b16 %v750
      %v1324 = vunpack.c.l.b16 %v751
      %v1325 = vunpack.c.h.b16 %v751
      %v1326 = vunpack.c.l.b16 %v752
      %v1327 = vunpack.c.h.b16 %v752
      %v1328 = vunpack.c.l.b16 %v753
      %v1329 = vunpack.c.h.b16 %v753
      %v1330 = vunpack.c.l.b16 %v754
      %v1331 = vunpack.c.h.b16 %v754
      %v1332 = vunpack.c.l.b16 %v755
      %v1333 = vunpack.c.h.b16 %v755
      %v1334 = vunpack.c.l.b16 %v756
      %v1335 = vunpack.c.h.b16 %v756
      %v1336 = vunpack.c.l.b16 %v757
      %v1337 = vunpack.c.h.b16 %v757
      %v1338 = vunpack.c.l.b16 %v758
      %v1339 = vunpack.c.h.b16 %v758
      %v1340 = vunpack.c.l.b16 %v759
      %v1341 = vunpack.c.h.b16 %v759
      %v1342 = vunpack.c.l.b16 %v760
      %v1343 = vunpack.c.h.b16 %v760
      %v1344 = vunpack.c.l.b16 %v761
      %v1345 = vunpack.c.h.b16 %v761
      %v1346 = vunpack.c.l.b16 %v762
      %v1347 = vunpack.c.h.b16 %v762
      %v1348 = vunpack.c.l.b16 %v763
      %v1349 = vunpack.c.h.b16 %v763
      %v1350 = vunpack.c.l.b16 %v764
      %v1351 = vunpack.c.h.b16 %v764
      %v1352 = vunpack.c.l.b16 %v765
      %v1353 = vunpack.c.h.b16 %v765
      %v1354 = vunpack.c.l.b16 %v766
      %v1355 = vunpack.c.h.b16 %v766
      %v1356 = vunpack.c.l.b16 %v767
      %v1357 = vunpack.c.h.b16 %v767
      %v1358 = vunpack.c.l.b16 %v768
      %v1359 = vunpack.c.h.b16 %v768
      %v1360 = vunpack.c.l.b16 %v769
      %v1361 = vunpack.c.h.b16 %v769
      %v1362 = vunpack.c.l.b16 %v770
      %v1363 = vunpack.c.h.b16 %v770
      %v1364 = vunpack.c.l.b16 %v771
      %v1365 = vunpack.c.h.b16 %v771
      %v1366 = vunpack.c.l.b16 %v772
      %v1367 = vunpack.c.h.b16 %v772
      %v1368 = vunpack.c.l.b16 %v773
      %v1369 = vunpack.c.h.b16 %v773
      %v1370 = vunpack.c.l.b16 %v774
      %v1371 = vunpack.c.h.b16 %v774
      %v1372 = vunpack.c.l.b16 %v775
      %v1373 = vunpack.c.h.b16 %v775
      %v1374 = vunpack.c.l.b16 %v776
      %v1375 = vunpack.c.h.b16 %v776
      %v1376 = vunpack.c.l.b16 %v777
      %v1377 = vunpack.c.h.b16 %v777
      %v1378 = vunpack.c.l.b16 %v778
      %v1379 = vunpack.c.h.b16 %v778
      %v1380 = vunpack.c.l.b16 %v779
      %v1381 = vunpack.c.h.b16 %v779
      %v1382 = vpack.c.b16 %v1326, %v1318
      %v1383 = vpack.c.b16 %v1327, %v1319
      %v1384 = vpack.c.b16 %v1328, %v1320
      %v1385 = vpack.c.b16 %v1329, %v1321
      %v1386 = vpack.c.b16 %v1330, %v1322
      %v1387 = vpack.c.b16 %v1331, %v1323
      %v1388 = vpack.c.b16 %v1332, %v1324
      %v1389 = vpack.c.b16 %v1333, %v1325
      %v1390 = vpack.c.b16 %v1342, %v1334
      %v1391 = vpack.c.b16 %v1343, %v1335
      %v1392 = vpack.c.b16 %v1344, %v1336
      %v1393 = vpack.c.b16 %v1345, %v1337
      %v1394 = vpack.c.b16 %v1346, %v1338
      %v1395 = vpack.c.b16 %v1347, %v1339
      %v1396 = vpack.c.b16 %v1348, %v1340
      %v1397 = vpack.c.b16 %v1349, %v1341
      %v1398 = vpack.c.b16 %v1358, %v1350
      %v1399 = vpack.c.b16 %v1359, %v1351
      %v1400 = vpack.c.b16 %v1360, %v1352
      %v1401 = vpack.c.b16 %v1361, %v1353
      %v1402 = vpack.c.b16 %v1362, %v1354
      %v1403 = vpack.c.b16 %v1363, %v1355
      %v1404 = vpack.c.b16 %v1364, %v1356
      %v1405 = vpack.c.b16 %v1365, %v1357
      %v1406 = vpack.c.b16 %v1374, %v1366
      %v1407 = vpack.c.b16 %v1375, %v1367
      %v1408 = vpack.c.b16 %v1376, %v1368
      %v1409 = vpack.c.b16 %v1377, %v1369
      %v1410 = vpack.c.b16 %v1378, %v1370
      %v1411 = vpack.c.b16 %v1379, %v1371
      %v1412 = vpack.c.b16 %v1380, %v1372
      %v1413 = vpack.c.b16 %v1381, %v1373
      %v1447 = vsel %vm622, %v747, 0
      %1449 = vmatprep.subr.bf16.mxu0 0
      %1450 = vmatpush1.bf16.msra.mxu0 0
      %1451 = vmatprep.subr.bf16.mxu0 0
      %1452 = vmatpush1.bf16.msra.mxu0 0
      %1453 = vmatprep.subr.bf16.mxu0 0
      %1454 = vmatpush1.bf16.msra.mxu0 0
      %1455 = vmatprep.subr.bf16.mxu0 0
      %1456 = vmatpush1.bf16.msra.mxu0 0
      %1457 = vmatprep.subr.bf16.mxu0 %v1407
      %1458 = vmatpush1.bf16.msra.mxu0 %v1406
      %1459 = vmatprep.subr.bf16.mxu0 %v1399
      %1460 = vmatpush1.bf16.msra.mxu0 %v1398
      %1461 = vmatprep.subr.bf16.mxu0 %v1391
      %1462 = vmatpush1.bf16.msra.mxu0 %v1390
      %1463 = vmatprep.subr.bf16.mxu0 %v1383
      %1464 = vmatpush1.bf16.msra.mxu0 %v1382
      %1465 = vmatprep.subr.bf16.mxu0 0
      %1466 = vmatpush2.bf16.msra.mxu0 0
      %1467 = vmatprep.subr.bf16.mxu0 0
      %1468 = vmatpush2.bf16.msra.mxu0 0
      %1469 = vmatprep.subr.bf16.mxu0 0
      %1470 = vmatpush2.bf16.msra.mxu0 0
      %1471 = vmatprep.subr.bf16.mxu0 0
      %1472 = vmatpush2.bf16.msra.mxu0 0
      %1473 = vmatprep.subr.bf16.mxu0 0
      %1474 = vmatpush2.bf16.msra.mxu0 0
      %1475 = vmatprep.subr.bf16.mxu0 0
      %1476 = vmatpush2.bf16.msra.mxu0 0
      %1477 = vmatprep.subr.bf16.mxu0 0
      %1478 = vmatpush2.bf16.msra.mxu0 0
      %1479 = vmatprep.subr.bf16.mxu0 0
      %1480 = vmatpush2.bf16.msra.mxu0 0
      %1481 = vmatprep.mubr.bf16.mxu0 0
      %1482 = vmatmul.mubr.bf16.gmra.mxu0 %v1447
      %v1483 = vpop.f32.mrf.mxu0
      %v1484 = vadd.f32 %v1157, %v1483
      %v1485 = vpop.f32.mrf.mxu0
      %v1486 = vadd.f32 %v1159, %v1485
      %v1487 = vpop.f32.mrf.mxu0
      %v1488 = vpop.f32.mrf.mxu0
      %1489 = vdwg.mxu0
      %1490 = vmatprep.subr.bf16.mxu0 0
      %1491 = vmatpush1.bf16.msra.mxu0 0
      %1492 = vmatprep.subr.bf16.mxu0 0
      %1493 = vmatpush1.bf16.msra.mxu0 0
      %1494 = vmatprep.subr.bf16.mxu0 0
      %1495 = vmatpush1.bf16.msra.mxu0 0
      %1496 = vmatprep.subr.bf16.mxu0 0
      %1497 = vmatpush1.bf16.msra.mxu0 0
      %1498 = vmatprep.subr.bf16.mxu0 %v1409
      %1499 = vmatpush1.bf16.msra.mxu0 %v1408
      %1500 = vmatprep.subr.bf16.mxu0 %v1401
      %1501 = vmatpush1.bf16.msra.mxu0 %v1400
      %1502 = vmatprep.subr.bf16.mxu0 %v1393
      %1503 = vmatpush1.bf16.msra.mxu0 %v1392
      %1504 = vmatprep.subr.bf16.mxu0 %v1385
      %1505 = vmatpush1.bf16.msra.mxu0 %v1384
      %1506 = vmatprep.subr.bf16.mxu0 0
      %1507 = vmatpush2.bf16.msra.mxu0 0
      %1508 = vmatprep.subr.bf16.mxu0 0
      %1509 = vmatpush2.bf16.msra.mxu0 0
      %1510 = vmatprep.subr.bf16.mxu0 0
      %1511 = vmatpush2.bf16.msra.mxu0 0
      %1512 = vmatprep.subr.bf16.mxu0 0
      %1513 = vmatpush2.bf16.msra.mxu0 0
      %1514 = vmatprep.subr.bf16.mxu0 0
      %1515 = vmatpush2.bf16.msra.mxu0 0
      %1516 = vmatprep.subr.bf16.mxu0 0
      %1517 = vmatpush2.bf16.msra.mxu0 0
      %1518 = vmatprep.subr.bf16.mxu0 0
      %1519 = vmatpush2.bf16.msra.mxu0 0
      %1520 = vmatprep.subr.bf16.mxu0 0
      %1521 = vmatpush2.bf16.msra.mxu0 0
      %1522 = vmatprep.mubr.bf16.mxu0 0
      %1523 = vmatmul.mubr.bf16.gmra.mxu0 %v1447
      %v1524 = vpop.f32.mrf.mxu0
      %v1525 = vadd.f32 %v1198, %v1524
      %v1526 = vpop.f32.mrf.mxu0
      %v1527 = vadd.f32 %v1200, %v1526
      %v1528 = vpop.f32.mrf.mxu0
      %v1529 = vpop.f32.mrf.mxu0
      %1530 = vdwg.mxu0
      %1531 = vmatprep.subr.bf16.mxu0 0
      %1532 = vmatpush1.bf16.msra.mxu0 0
      %1533 = vmatprep.subr.bf16.mxu0 0
      %1534 = vmatpush1.bf16.msra.mxu0 0
      %1535 = vmatprep.subr.bf16.mxu0 0
      %1536 = vmatpush1.bf16.msra.mxu0 0
      %1537 = vmatprep.subr.bf16.mxu0 0
      %1538 = vmatpush1.bf16.msra.mxu0 0
      %1539 = vmatprep.subr.bf16.mxu0 %v1411
      %1540 = vmatpush1.bf16.msra.mxu0 %v1410
      %1541 = vmatprep.subr.bf16.mxu0 %v1403
      %1542 = vmatpush1.bf16.msra.mxu0 %v1402
      %1543 = vmatprep.subr.bf16.mxu0 %v1395
      %1544 = vmatpush1.bf16.msra.mxu0 %v1394
      %1545 = vmatprep.subr.bf16.mxu0 %v1387
      %1546 = vmatpush1.bf16.msra.mxu0 %v1386
      %1547 = vmatprep.subr.bf16.mxu0 0
      %1548 = vmatpush2.bf16.msra.mxu0 0
      %1549 = vmatprep.subr.bf16.mxu0 0
      %1550 = vmatpush2.bf16.msra.mxu0 0
      %1551 = vmatprep.subr.bf16.mxu0 0
      %1552 = vmatpush2.bf16.msra.mxu0 0
      %1553 = vmatprep.subr.bf16.mxu0 0
      %1554 = vmatpush2.bf16.msra.mxu0 0
      %1555 = vmatprep.subr.bf16.mxu0 0
      %1556 = vmatpush2.bf16.msra.mxu0 0
      %1557 = vmatprep.subr.bf16.mxu0 0
      %1558 = vmatpush2.bf16.msra.mxu0 0
      %1559 = vmatprep.subr.bf16.mxu0 0
      %1560 = vmatpush2.bf16.msra.mxu0 0
      %1561 = vmatprep.subr.bf16.mxu0 0
      %1562 = vmatpush2.bf16.msra.mxu0 0
      %1563 = vmatprep.mubr.bf16.mxu0 0
      %1564 = vmatmul.mubr.bf16.gmra.mxu0 %v1447
      %v1565 = vpop.f32.mrf.mxu0
      %v1566 = vadd.f32 %v1239, %v1565
      %v1567 = vpop.f32.mrf.mxu0
      %v1568 = vadd.f32 %v1241, %v1567
      %v1569 = vpop.f32.mrf.mxu0
      %v1570 = vpop.f32.mrf.mxu0
      %1571 = vdwg.mxu0
      %1572 = vmatprep.subr.bf16.mxu0 0
      %1573 = vmatpush1.bf16.msra.mxu0 0
      %1574 = vmatprep.subr.bf16.mxu0 0
      %1575 = vmatpush1.bf16.msra.mxu0 0
      %1576 = vmatprep.subr.bf16.mxu0 0
      %1577 = vmatpush1.bf16.msra.mxu0 0
      %1578 = vmatprep.subr.bf16.mxu0 0
      %1579 = vmatpush1.bf16.msra.mxu0 0
      %1580 = vmatprep.subr.bf16.mxu0 %v1413
      %1581 = vmatpush1.bf16.msra.mxu0 %v1412
      %1582 = vmatprep.subr.bf16.mxu0 %v1405
      %1583 = vmatpush1.bf16.msra.mxu0 %v1404
      %1584 = vmatprep.subr.bf16.mxu0 %v1397
      %1585 = vmatpush1.bf16.msra.mxu0 %v1396
      %1586 = vmatprep.subr.bf16.mxu0 %v1389
      %1587 = vmatpush1.bf16.msra.mxu0 %v1388
      %1588 = vmatprep.subr.bf16.mxu0 0
      %1589 = vmatpush2.bf16.msra.mxu0 0
      %1590 = vmatprep.subr.bf16.mxu0 0
      %1591 = vmatpush2.bf16.msra.mxu0 0
      %1592 = vmatprep.subr.bf16.mxu0 0
      %1593 = vmatpush2.bf16.msra.mxu0 0
      %1594 = vmatprep.subr.bf16.mxu0 0
      %1595 = vmatpush2.bf16.msra.mxu0 0
      %1596 = vmatprep.subr.bf16.mxu0 0
      %1597 = vmatpush2.bf16.msra.mxu0 0
      %1598 = vmatprep.subr.bf16.mxu0 0
      %1599 = vmatpush2.bf16.msra.mxu0 0
      %1600 = vmatprep.subr.bf16.mxu0 0
      %1601 = vmatpush2.bf16.msra.mxu0 0
      %1602 = vmatprep.subr.bf16.mxu0 0
      %1603 = vmatpush2.bf16.msra.mxu0 0
      %1604 = vmatprep.mubr.bf16.mxu0 0
      %1605 = vmatmul.mubr.bf16.gmra.mxu0 %v1447
      %v1606 = vpop.f32.mrf.mxu0
      %v1607 = vadd.f32 %v1280, %v1606
      %v1608 = vpop.f32.mrf.mxu0
      %v1609 = vadd.f32 %v1282, %v1608
      %v1610 = vpop.f32.mrf.mxu0
      %v1611 = vpop.f32.mrf.mxu0
      %1612 = vdwg.mxu0
      %s1613 = scalar_lea.vmem %s285, 40
      %v1614 = vld [vmem:[%s1613] sm:$0xff]
      %v1615 = vld [vmem:[%s1613 + $0x8] sm:$0xff]
      %v1616 = vld [vmem:[%s1613 + $0x10] sm:$0xf]
      %v1620 = vunpack.c.l.b16 %v1614
      %v1621 = vunpack.c.h.b16 %v1614
      %v1622 = vunpack.c.l.b16 %v1615
      %v1623 = vunpack.c.h.b16 %v1615
      %v1624 = vunpack.c.l.b16 %v1616
      %v1625 = vpack.c.b16 %v1620, %v1620
      %v1626 = vpack.c.b16 %v1621, %v1621
      %v1627 = vpack.c.b16 %v1622, %v1622
      %v1628 = vpack.c.b16 %v1623, %v1623
      %v1629 = vpack.c.b16 %v1624, %v1624
      %v1635 = vsel %vm622, %v1629, 0
      %1637 = vmatprep.subr.bf16.mxu0 0
      %1638 = vmatpush1.bf16.msra.mxu0 %v557
      %1639 = vmatprep.subr.bf16.mxu0 0
      %1640 = vmatpush1.bf16.msra.mxu0 %v556
      %1641 = vmatprep.subr.bf16.mxu0 0
      %1642 = vmatpush1.bf16.msra.mxu0 %v555
      %1643 = vmatprep.subr.bf16.mxu0 0
      %1644 = vmatpush1.bf16.msra.mxu0 %v554
      %1645 = vmatprep.subr.bf16.mxu0 0
      %1646 = vmatpush1.bf16.msra.mxu0 %v553
      %1647 = vmatprep.subr.bf16.mxu0 0
      %1648 = vmatpush1.bf16.msra.mxu0 %v552
      %1649 = vmatprep.subr.bf16.mxu0 0
      %1650 = vmatpush1.bf16.msra.mxu0 %v551
      %1651 = vmatprep.subr.bf16.mxu0 0
      %1652 = vmatpush1.bf16.msra.mxu0 %v550
      %1653 = vmatprep.subr.bf16.mxu0 0
      %1654 = vmatpush2.bf16.msra.mxu0 %v565
      %1655 = vmatprep.subr.bf16.mxu0 0
      %1656 = vmatpush2.bf16.msra.mxu0 %v564
      %1657 = vmatprep.subr.bf16.mxu0 0
      %1658 = vmatpush2.bf16.msra.mxu0 %v563
      %1659 = vmatprep.subr.bf16.mxu0 0
      %1660 = vmatpush2.bf16.msra.mxu0 %v562
      %1661 = vmatprep.subr.bf16.mxu0 0
      %1662 = vmatpush2.bf16.msra.mxu0 %v561
      %1663 = vmatprep.subr.bf16.mxu0 0
      %1664 = vmatpush2.bf16.msra.mxu0 %v560
      %1665 = vmatprep.subr.bf16.mxu0 0
      %1666 = vmatpush2.bf16.msra.mxu0 %v559
      %1667 = vmatprep.subr.bf16.mxu0 0
      %1668 = vmatpush2.bf16.msra.mxu0 %v558
      %1669 = vmatprep.mubr.bf16.mxu0 %v1626
      %1670 = vmatmul.mubr.bf16.gmra.mxu0 %v1625
      %v1671 = vpop.f32.mrf.mxu0
      %v1672 = vadd.f32 %v387, %v1671
      %v1673 = vpop.f32.mrf.mxu0
      %v1674 = vpop.f32.mrf.mxu0
      %v1675 = vpop.f32.mrf.mxu0
      %1676 = vdwg.mxu0
      %1677 = vmatprep.subr.bf16.mxu0 0
      %1678 = vmatpush1.bf16.msra.mxu0 %v573
      %1679 = vmatprep.subr.bf16.mxu0 0
      %1680 = vmatpush1.bf16.msra.mxu0 %v572
      %1681 = vmatprep.subr.bf16.mxu0 0
      %1682 = vmatpush1.bf16.msra.mxu0 %v571
      %1683 = vmatprep.subr.bf16.mxu0 0
      %1684 = vmatpush1.bf16.msra.mxu0 %v570
      %1685 = vmatprep.subr.bf16.mxu0 0
      %1686 = vmatpush1.bf16.msra.mxu0 %v569
      %1687 = vmatprep.subr.bf16.mxu0 0
      %1688 = vmatpush1.bf16.msra.mxu0 %v568
      %1689 = vmatprep.subr.bf16.mxu0 0
      %1690 = vmatpush1.bf16.msra.mxu0 %v567
      %1691 = vmatprep.subr.bf16.mxu0 0
      %1692 = vmatpush1.bf16.msra.mxu0 %v566
      %1693 = vmatprep.subr.bf16.mxu0 0
      %1694 = vmatpush2.bf16.msra.mxu0 %v581
      %1695 = vmatprep.subr.bf16.mxu0 0
      %1696 = vmatpush2.bf16.msra.mxu0 %v580
      %1697 = vmatprep.subr.bf16.mxu0 0
      %1698 = vmatpush2.bf16.msra.mxu0 %v579
      %1699 = vmatprep.subr.bf16.mxu0 0
      %1700 = vmatpush2.bf16.msra.mxu0 %v578
      %1701 = vmatprep.subr.bf16.mxu0 0
      %1702 = vmatpush2.bf16.msra.mxu0 %v577
      %1703 = vmatprep.subr.bf16.mxu0 0
      %1704 = vmatpush2.bf16.msra.mxu0 %v576
      %1705 = vmatprep.subr.bf16.mxu0 0
      %1706 = vmatpush2.bf16.msra.mxu0 %v575
      %1707 = vmatprep.subr.bf16.mxu0 0
      %1708 = vmatpush2.bf16.msra.mxu0 %v574
      %1709 = vmatprep.mubr.bf16.mxu0 %v1628
      %1710 = vmatmul.mubr.bf16.gmra.mxu0 %v1627
      %v1711 = vpop.f32.mrf.mxu0
      %v1712 = vadd.f32 %v1672, %v1711
      %v1713 = vpop.f32.mrf.mxu0
      %v1714 = vpop.f32.mrf.mxu0
      %v1715 = vpop.f32.mrf.mxu0
      %1716 = vdwg.mxu0
      %1717 = vmatprep.subr.bf16.mxu0 0
      %1718 = vmatpush1.bf16.msra.mxu0 0
      %1719 = vmatprep.subr.bf16.mxu0 0
      %1720 = vmatpush1.bf16.msra.mxu0 0
      %1721 = vmatprep.subr.bf16.mxu0 0
      %1722 = vmatpush1.bf16.msra.mxu0 0
      %1723 = vmatprep.subr.bf16.mxu0 0
      %1724 = vmatpush1.bf16.msra.mxu0 0
      %1725 = vmatprep.subr.bf16.mxu0 0
      %1726 = vmatpush1.bf16.msra.mxu0 %v585
      %1727 = vmatprep.subr.bf16.mxu0 0
      %1728 = vmatpush1.bf16.msra.mxu0 %v584
      %1729 = vmatprep.subr.bf16.mxu0 0
      %1730 = vmatpush1.bf16.msra.mxu0 %v583
      %1731 = vmatprep.subr.bf16.mxu0 0
      %1732 = vmatpush1.bf16.msra.mxu0 %v582
      %1733 = vmatprep.subr.bf16.mxu0 0
      %1734 = vmatpush2.bf16.msra.mxu0 0
      %1735 = vmatprep.subr.bf16.mxu0 0
      %1736 = vmatpush2.bf16.msra.mxu0 0
      %1737 = vmatprep.subr.bf16.mxu0 0
      %1738 = vmatpush2.bf16.msra.mxu0 0
      %1739 = vmatprep.subr.bf16.mxu0 0
      %1740 = vmatpush2.bf16.msra.mxu0 0
      %1741 = vmatprep.subr.bf16.mxu0 0
      %1742 = vmatpush2.bf16.msra.mxu0 0
      %1743 = vmatprep.subr.bf16.mxu0 0
      %1744 = vmatpush2.bf16.msra.mxu0 0
      %1745 = vmatprep.subr.bf16.mxu0 0
      %1746 = vmatpush2.bf16.msra.mxu0 0
      %1747 = vmatprep.subr.bf16.mxu0 0
      %1748 = vmatpush2.bf16.msra.mxu0 0
      %1749 = vmatprep.mubr.bf16.mxu0 0
      %1750 = vmatmul.mubr.bf16.gmra.mxu0 %v1635
      %v1751 = vpop.f32.mrf.mxu0
      %v1752 = vadd.f32 %v1712, %v1751
      %v1753 = vpop.f32.mrf.mxu0
      %v1754 = vpop.f32.mrf.mxu0
      %v1755 = vpop.f32.mrf.mxu0
      %1756 = vdwg.mxu0
      %v1757 = vmax.f32 %v1752, 0.0
      %v1758 = vpack.c.bf16 %v1757, %v1757
      %s1759 = scalar_lea.vmem %s292, 512
      %v1760 = vld [vmem:[%s1759] sm:$0xff]
      %v1761 = vld [vmem:[%s1759 + $0x8] sm:$0xff]
      %v1762 = vld [vmem:[%s1759 + $0x10] sm:$0xff]
      %v1763 = vld [vmem:[%s1759 + $0x18] sm:$0xff]
      %v1764 = vld [vmem:[%s1759 + $0x20] sm:$0xff]
      %v1765 = vld [vmem:[%s1759 + $0x28] sm:$0xff]
      %v1766 = vld [vmem:[%s1759 + $0x30] sm:$0xff]
      %v1767 = vld [vmem:[%s1759 + $0x38] sm:$0xff]
      %v1768 = vld [vmem:[%s1759 + $0x40] sm:$0xff]
      %v1769 = vld [vmem:[%s1759 + $0x48] sm:$0xff]
      %v1770 = vld [vmem:[%s1759 + $0x50] sm:$0xff]
      %v1771 = vld [vmem:[%s1759 + $0x58] sm:$0xff]
      %v1772 = vld [vmem:[%s1759 + $0x60] sm:$0xff]
      %v1773 = vld [vmem:[%s1759 + $0x68] sm:$0xff]
      %v1774 = vld [vmem:[%s1759 + $0x70] sm:$0xff]
      %v1775 = vld [vmem:[%s1759 + $0x78] sm:$0xff]
      %v1776 = vld [vmem:[%s1759 + $0x80] sm:$0xff]
      %v1777 = vld [vmem:[%s1759 + $0x88] sm:$0xff]
      %v1778 = vld [vmem:[%s1759 + $0x90] sm:$0xff]
      %v1779 = vld [vmem:[%s1759 + $0x98] sm:$0xff]
      %v1780 = vld [vmem:[%s1759 + $0xa0] sm:$0xff]
      %v1781 = vld [vmem:[%s1759 + $0xa8] sm:$0xff]
      %v1782 = vld [vmem:[%s1759 + $0xb0] sm:$0xff]
      %v1783 = vld [vmem:[%s1759 + $0xb8] sm:$0xff]
      %v1784 = vld [vmem:[%s1759 + $0xc0] sm:$0xff]
      %v1785 = vld [vmem:[%s1759 + $0xc8] sm:$0xff]
      %v1786 = vld [vmem:[%s1759 + $0xd0] sm:$0xff]
      %v1787 = vld [vmem:[%s1759 + $0xd8] sm:$0xff]
      %v1788 = vld [vmem:[%s1759 + $0xe0] sm:$0xff]
      %v1789 = vld [vmem:[%s1759 + $0xe8] sm:$0xff]
      %v1790 = vld [vmem:[%s1759 + $0xf0] sm:$0xff]
      %v1791 = vld [vmem:[%s1759 + $0xf8] sm:$0xff]
      %v1824 = vunpack.c.l.b16 %v1760
      %v1825 = vunpack.c.h.b16 %v1760
      %v1826 = vunpack.c.l.b16 %v1761
      %v1827 = vunpack.c.h.b16 %v1761
      %v1828 = vunpack.c.l.b16 %v1762
      %v1829 = vunpack.c.h.b16 %v1762
      %v1830 = vunpack.c.l.b16 %v1763
      %v1831 = vunpack.c.h.b16 %v1763
      %v1832 = vunpack.c.l.b16 %v1764
      %v1833 = vunpack.c.h.b16 %v1764
      %v1834 = vunpack.c.l.b16 %v1765
      %v1835 = vunpack.c.h.b16 %v1765
      %v1836 = vunpack.c.l.b16 %v1766
      %v1837 = vunpack.c.h.b16 %v1766
      %v1838 = vunpack.c.l.b16 %v1767
      %v1839 = vunpack.c.h.b16 %v1767
      %v1840 = vunpack.c.l.b16 %v1768
      %v1841 = vunpack.c.h.b16 %v1768
      %v1842 = vunpack.c.l.b16 %v1769
      %v1843 = vunpack.c.h.b16 %v1769
      %v1844 = vunpack.c.l.b16 %v1770
      %v1845 = vunpack.c.h.b16 %v1770
      %v1846 = vunpack.c.l.b16 %v1771
      %v1847 = vunpack.c.h.b16 %v1771
      %v1848 = vunpack.c.l.b16 %v1772
      %v1849 = vunpack.c.h.b16 %v1772
      %v1850 = vunpack.c.l.b16 %v1773
      %v1851 = vunpack.c.h.b16 %v1773
      %v1852 = vunpack.c.l.b16 %v1774
      %v1853 = vunpack.c.h.b16 %v1774
      %v1854 = vunpack.c.l.b16 %v1775
      %v1855 = vunpack.c.h.b16 %v1775
      %v1856 = vunpack.c.l.b16 %v1776
      %v1857 = vunpack.c.h.b16 %v1776
      %v1858 = vunpack.c.l.b16 %v1777
      %v1859 = vunpack.c.h.b16 %v1777
      %v1860 = vunpack.c.l.b16 %v1778
      %v1861 = vunpack.c.h.b16 %v1778
      %v1862 = vunpack.c.l.b16 %v1779
      %v1863 = vunpack.c.h.b16 %v1779
      %v1864 = vunpack.c.l.b16 %v1780
      %v1865 = vunpack.c.h.b16 %v1780
      %v1866 = vunpack.c.l.b16 %v1781
      %v1867 = vunpack.c.h.b16 %v1781
      %v1868 = vunpack.c.l.b16 %v1782
      %v1869 = vunpack.c.h.b16 %v1782
      %v1870 = vunpack.c.l.b16 %v1783
      %v1871 = vunpack.c.h.b16 %v1783
      %v1872 = vunpack.c.l.b16 %v1784
      %v1873 = vunpack.c.h.b16 %v1784
      %v1874 = vunpack.c.l.b16 %v1785
      %v1875 = vunpack.c.h.b16 %v1785
      %v1876 = vunpack.c.l.b16 %v1786
      %v1877 = vunpack.c.h.b16 %v1786
      %v1878 = vunpack.c.l.b16 %v1787
      %v1879 = vunpack.c.h.b16 %v1787
      %v1880 = vunpack.c.l.b16 %v1788
      %v1881 = vunpack.c.h.b16 %v1788
      %v1882 = vunpack.c.l.b16 %v1789
      %v1883 = vunpack.c.h.b16 %v1789
      %v1884 = vunpack.c.l.b16 %v1790
      %v1885 = vunpack.c.h.b16 %v1790
      %v1886 = vunpack.c.l.b16 %v1791
      %v1887 = vunpack.c.h.b16 %v1791
      %v1888 = vpack.c.b16 %v1832, %v1824
      %v1889 = vpack.c.b16 %v1833, %v1825
      %v1890 = vpack.c.b16 %v1834, %v1826
      %v1891 = vpack.c.b16 %v1835, %v1827
      %v1892 = vpack.c.b16 %v1836, %v1828
      %v1893 = vpack.c.b16 %v1837, %v1829
      %v1894 = vpack.c.b16 %v1838, %v1830
      %v1895 = vpack.c.b16 %v1839, %v1831
      %v1896 = vpack.c.b16 %v1848, %v1840
      %v1897 = vpack.c.b16 %v1849, %v1841
      %v1898 = vpack.c.b16 %v1850, %v1842
      %v1899 = vpack.c.b16 %v1851, %v1843
      %v1900 = vpack.c.b16 %v1852, %v1844
      %v1901 = vpack.c.b16 %v1853, %v1845
      %v1902 = vpack.c.b16 %v1854, %v1846
      %v1903 = vpack.c.b16 %v1855, %v1847
      %v1904 = vpack.c.b16 %v1864, %v1856
      %v1905 = vpack.c.b16 %v1865, %v1857
      %v1906 = vpack.c.b16 %v1866, %v1858
      %v1907 = vpack.c.b16 %v1867, %v1859
      %v1908 = vpack.c.b16 %v1868, %v1860
      %v1909 = vpack.c.b16 %v1869, %v1861
      %v1910 = vpack.c.b16 %v1870, %v1862
      %v1911 = vpack.c.b16 %v1871, %v1863
      %v1912 = vpack.c.b16 %v1880, %v1872
      %v1913 = vpack.c.b16 %v1881, %v1873
      %v1914 = vpack.c.b16 %v1882, %v1874
      %v1915 = vpack.c.b16 %v1883, %v1875
      %v1916 = vpack.c.b16 %v1884, %v1876
      %v1917 = vpack.c.b16 %v1885, %v1877
      %v1918 = vpack.c.b16 %v1886, %v1878
      %v1919 = vpack.c.b16 %v1887, %v1879
      %v1953 = vsel %vm622, %v1758, 0
      %1955 = vmatprep.subr.bf16.mxu0 0
      %1956 = vmatpush1.bf16.msra.mxu0 0
      %1957 = vmatprep.subr.bf16.mxu0 0
      %1958 = vmatpush1.bf16.msra.mxu0 0
      %1959 = vmatprep.subr.bf16.mxu0 0
      %1960 = vmatpush1.bf16.msra.mxu0 0
      %1961 = vmatprep.subr.bf16.mxu0 0
      %1962 = vmatpush1.bf16.msra.mxu0 0
      %1963 = vmatprep.subr.bf16.mxu0 %v1913
      %1964 = vmatpush1.bf16.msra.mxu0 %v1912
      %1965 = vmatprep.subr.bf16.mxu0 %v1905
      %1966 = vmatpush1.bf16.msra.mxu0 %v1904
      %1967 = vmatprep.subr.bf16.mxu0 %v1897
      %1968 = vmatpush1.bf16.msra.mxu0 %v1896
      %1969 = vmatprep.subr.bf16.mxu0 %v1889
      %1970 = vmatpush1.bf16.msra.mxu0 %v1888
      %1971 = vmatprep.subr.bf16.mxu0 0
      %1972 = vmatpush2.bf16.msra.mxu0 0
      %1973 = vmatprep.subr.bf16.mxu0 0
      %1974 = vmatpush2.bf16.msra.mxu0 0
      %1975 = vmatprep.subr.bf16.mxu0 0
      %1976 = vmatpush2.bf16.msra.mxu0 0
      %1977 = vmatprep.subr.bf16.mxu0 0
      %1978 = vmatpush2.bf16.msra.mxu0 0
      %1979 = vmatprep.subr.bf16.mxu0 0
      %1980 = vmatpush2.bf16.msra.mxu0 0
      %1981 = vmatprep.subr.bf16.mxu0 0
      %1982 = vmatpush2.bf16.msra.mxu0 0
      %1983 = vmatprep.subr.bf16.mxu0 0
      %1984 = vmatpush2.bf16.msra.mxu0 0
      %1985 = vmatprep.subr.bf16.mxu0 0
      %1986 = vmatpush2.bf16.msra.mxu0 0
      %1987 = vmatprep.mubr.bf16.mxu0 0
      %1988 = vmatmul.mubr.bf16.gmra.mxu0 %v1953
      %v1989 = vpop.f32.mrf.mxu0
      %v1990 = vadd.f32 0.0, %v1989
      %v1991 = vpop.f32.mrf.mxu0
      %v1992 = vadd.f32 0.0, %v1991
      %v1993 = vpop.f32.mrf.mxu0
      %v1994 = vpop.f32.mrf.mxu0
      %1995 = vdwg.mxu0
      %1996 = vmatprep.subr.bf16.mxu0 0
      %1997 = vmatpush1.bf16.msra.mxu0 0
      %1998 = vmatprep.subr.bf16.mxu0 0
      %1999 = vmatpush1.bf16.msra.mxu0 0
      %2000 = vmatprep.subr.bf16.mxu0 0
      %2001 = vmatpush1.bf16.msra.mxu0 0
      %2002 = vmatprep.subr.bf16.mxu0 0
      %2003 = vmatpush1.bf16.msra.mxu0 0
      %2004 = vmatprep.subr.bf16.mxu0 %v1915
      %2005 = vmatpush1.bf16.msra.mxu0 %v1914
      %2006 = vmatprep.subr.bf16.mxu0 %v1907
      %2007 = vmatpush1.bf16.msra.mxu0 %v1906
      %2008 = vmatprep.subr.bf16.mxu0 %v1899
      %2009 = vmatpush1.bf16.msra.mxu0 %v1898
      %2010 = vmatprep.subr.bf16.mxu0 %v1891
      %2011 = vmatpush1.bf16.msra.mxu0 %v1890
      %2012 = vmatprep.subr.bf16.mxu0 0
      %2013 = vmatpush2.bf16.msra.mxu0 0
      %2014 = vmatprep.subr.bf16.mxu0 0
      %2015 = vmatpush2.bf16.msra.mxu0 0
      %2016 = vmatprep.subr.bf16.mxu0 0
      %2017 = vmatpush2.bf16.msra.mxu0 0
      %2018 = vmatprep.subr.bf16.mxu0 0
      %2019 = vmatpush2.bf16.msra.mxu0 0
      %2020 = vmatprep.subr.bf16.mxu0 0
      %2021 = vmatpush2.bf16.msra.mxu0 0
      %2022 = vmatprep.subr.bf16.mxu0 0
      %2023 = vmatpush2.bf16.msra.mxu0 0
      %2024 = vmatprep.subr.bf16.mxu0 0
      %2025 = vmatpush2.bf16.msra.mxu0 0
      %2026 = vmatprep.subr.bf16.mxu0 0
      %2027 = vmatpush2.bf16.msra.mxu0 0
      %2028 = vmatprep.mubr.bf16.mxu0 0
      %2029 = vmatmul.mubr.bf16.gmra.mxu0 %v1953
      %v2030 = vpop.f32.mrf.mxu0
      %v2031 = vadd.f32 0.0, %v2030
      %v2032 = vpop.f32.mrf.mxu0
      %v2033 = vadd.f32 0.0, %v2032
      %v2034 = vpop.f32.mrf.mxu0
      %v2035 = vpop.f32.mrf.mxu0
      %2036 = vdwg.mxu0
      %2037 = vmatprep.subr.bf16.mxu0 0
      %2038 = vmatpush1.bf16.msra.mxu0 0
      %2039 = vmatprep.subr.bf16.mxu0 0
      %2040 = vmatpush1.bf16.msra.mxu0 0
      %2041 = vmatprep.subr.bf16.mxu0 0
      %2042 = vmatpush1.bf16.msra.mxu0 0
      %2043 = vmatprep.subr.bf16.mxu0 0
      %2044 = vmatpush1.bf16.msra.mxu0 0
      %2045 = vmatprep.subr.bf16.mxu0 %v1917
      %2046 = vmatpush1.bf16.msra.mxu0 %v1916
      %2047 = vmatprep.subr.bf16.mxu0 %v1909
      %2048 = vmatpush1.bf16.msra.mxu0 %v1908
      %2049 = vmatprep.subr.bf16.mxu0 %v1901
      %2050 = vmatpush1.bf16.msra.mxu0 %v1900
      %2051 = vmatprep.subr.bf16.mxu0 %v1893
      %2052 = vmatpush1.bf16.msra.mxu0 %v1892
      %2053 = vmatprep.subr.bf16.mxu0 0
      %2054 = vmatpush2.bf16.msra.mxu0 0
      %2055 = vmatprep.subr.bf16.mxu0 0
      %2056 = vmatpush2.bf16.msra.mxu0 0
      %2057 = vmatprep.subr.bf16.mxu0 0
      %2058 = vmatpush2.bf16.msra.mxu0 0
      %2059 = vmatprep.subr.bf16.mxu0 0
      %2060 = vmatpush2.bf16.msra.mxu0 0
      %2061 = vmatprep.subr.bf16.mxu0 0
      %2062 = vmatpush2.bf16.msra.mxu0 0
      %2063 = vmatprep.subr.bf16.mxu0 0
      %2064 = vmatpush2.bf16.msra.mxu0 0
      %2065 = vmatprep.subr.bf16.mxu0 0
      %2066 = vmatpush2.bf16.msra.mxu0 0
      %2067 = vmatprep.subr.bf16.mxu0 0
      %2068 = vmatpush2.bf16.msra.mxu0 0
      %2069 = vmatprep.mubr.bf16.mxu0 0
      %2070 = vmatmul.mubr.bf16.gmra.mxu0 %v1953
      %v2071 = vpop.f32.mrf.mxu0
      %v2072 = vadd.f32 0.0, %v2071
      %v2073 = vpop.f32.mrf.mxu0
      %v2074 = vadd.f32 0.0, %v2073
      %v2075 = vpop.f32.mrf.mxu0
      %v2076 = vpop.f32.mrf.mxu0
      %2077 = vdwg.mxu0
      %2078 = vmatprep.subr.bf16.mxu0 0
      %2079 = vmatpush1.bf16.msra.mxu0 0
      %2080 = vmatprep.subr.bf16.mxu0 0
      %2081 = vmatpush1.bf16.msra.mxu0 0
      %2082 = vmatprep.subr.bf16.mxu0 0
      %2083 = vmatpush1.bf16.msra.mxu0 0
      %2084 = vmatprep.subr.bf16.mxu0 0
      %2085 = vmatpush1.bf16.msra.mxu0 0
      %2086 = vmatprep.subr.bf16.mxu0 %v1919
      %2087 = vmatpush1.bf16.msra.mxu0 %v1918
      %2088 = vmatprep.subr.bf16.mxu0 %v1911
      %2089 = vmatpush1.bf16.msra.mxu0 %v1910
      %2090 = vmatprep.subr.bf16.mxu0 %v1903
      %2091 = vmatpush1.bf16.msra.mxu0 %v1902
      %2092 = vmatprep.subr.bf16.mxu0 %v1895
      %2093 = vmatpush1.bf16.msra.mxu0 %v1894
      %2094 = vmatprep.subr.bf16.mxu0 0
      %2095 = vmatpush2.bf16.msra.mxu0 0
      %2096 = vmatprep.subr.bf16.mxu0 0
      %2097 = vmatpush2.bf16.msra.mxu0 0
      %2098 = vmatprep.subr.bf16.mxu0 0
      %2099 = vmatpush2.bf16.msra.mxu0 0
      %2100 = vmatprep.subr.bf16.mxu0 0
      %2101 = vmatpush2.bf16.msra.mxu0 0
      %2102 = vmatprep.subr.bf16.mxu0 0
      %2103 = vmatpush2.bf16.msra.mxu0 0
      %2104 = vmatprep.subr.bf16.mxu0 0
      %2105 = vmatpush2.bf16.msra.mxu0 0
      %2106 = vmatprep.subr.bf16.mxu0 0
      %2107 = vmatpush2.bf16.msra.mxu0 0
      %2108 = vmatprep.subr.bf16.mxu0 0
      %2109 = vmatpush2.bf16.msra.mxu0 0
      %2110 = vmatprep.mubr.bf16.mxu0 0
      %2111 = vmatmul.mubr.bf16.gmra.mxu0 %v1953
      %v2112 = vpop.f32.mrf.mxu0
      %v2113 = vadd.f32 0.0, %v2112
      %v2114 = vpop.f32.mrf.mxu0
      %v2115 = vadd.f32 0.0, %v2114
      %v2116 = vpop.f32.mrf.mxu0
      %v2117 = vpop.f32.mrf.mxu0
      %2118 = vdwg.mxu0
      %v2119 = vadd.f32 %v1484, %v1990
      %v2120 = vadd.f32 %v1486, %v1992
      %v2121 = vadd.f32 %v1525, %v2031
      %v2122 = vadd.f32 %v1527, %v2033
      %v2123 = vadd.f32 %v1566, %v2072
      %v2124 = vadd.f32 %v1568, %v2074
      %v2125 = vadd.f32 %v1607, %v2113
      %v2126 = vadd.f32 %v1609, %v2115
      %s2127 = scalar_lea.vmem %s285, 60
      %v2128 = vld [vmem:[%s2127] sm:$0xff]
      %v2129 = vld [vmem:[%s2127 + $0x8] sm:$0xff]
      %v2130 = vld [vmem:[%s2127 + $0x10] sm:$0xf]
      %v2134 = vunpack.c.l.b16 %v2128
      %v2135 = vunpack.c.h.b16 %v2128
      %v2136 = vunpack.c.l.b16 %v2129
      %v2137 = vunpack.c.h.b16 %v2129
      %v2138 = vunpack.c.l.b16 %v2130
      %v2139 = vpack.c.b16 %v2134, %v2134
      %v2140 = vpack.c.b16 %v2135, %v2135
      %v2141 = vpack.c.b16 %v2136, %v2136
      %v2142 = vpack.c.b16 %v2137, %v2137
      %v2143 = vpack.c.b16 %v2138, %v2138
      %v2149 = vsel %vm622, %v2143, 0
      %2151 = vmatprep.subr.bf16.mxu0 0
      %2152 = vmatpush1.bf16.msra.mxu0 %v557
      %2153 = vmatprep.subr.bf16.mxu0 0
      %2154 = vmatpush1.bf16.msra.mxu0 %v556
      %2155 = vmatprep.subr.bf16.mxu0 0
      %2156 = vmatpush1.bf16.msra.mxu0 %v555
      %2157 = vmatprep.subr.bf16.mxu0 0
      %2158 = vmatpush1.bf16.msra.mxu0 %v554
      %2159 = vmatprep.subr.bf16.mxu0 0
      %2160 = vmatpush1.bf16.msra.mxu0 %v553
      %2161 = vmatprep.subr.bf16.mxu0 0
      %2162 = vmatpush1.bf16.msra.mxu0 %v552
      %2163 = vmatprep.subr.bf16.mxu0 0
      %2164 = vmatpush1.bf16.msra.mxu0 %v551
      %2165 = vmatprep.subr.bf16.mxu0 0
      %2166 = vmatpush1.bf16.msra.mxu0 %v550
      %2167 = vmatprep.subr.bf16.mxu0 0
      %2168 = vmatpush2.bf16.msra.mxu0 %v565
      %2169 = vmatprep.subr.bf16.mxu0 0
      %2170 = vmatpush2.bf16.msra.mxu0 %v564
      %2171 = vmatprep.subr.bf16.mxu0 0
      %2172 = vmatpush2.bf16.msra.mxu0 %v563
      %2173 = vmatprep.subr.bf16.mxu0 0
      %2174 = vmatpush2.bf16.msra.mxu0 %v562
      %2175 = vmatprep.subr.bf16.mxu0 0
      %2176 = vmatpush2.bf16.msra.mxu0 %v561
      %2177 = vmatprep.subr.bf16.mxu0 0
      %2178 = vmatpush2.bf16.msra.mxu0 %v560
      %2179 = vmatprep.subr.bf16.mxu0 0
      %2180 = vmatpush2.bf16.msra.mxu0 %v559
      %2181 = vmatprep.subr.bf16.mxu0 0
      %2182 = vmatpush2.bf16.msra.mxu0 %v558
      %2183 = vmatprep.mubr.bf16.mxu0 %v2140
      %2184 = vmatmul.mubr.bf16.gmra.mxu0 %v2139
      %v2185 = vpop.f32.mrf.mxu0
      %v2186 = vadd.f32 %v387, %v2185
      %v2187 = vpop.f32.mrf.mxu0
      %v2188 = vpop.f32.mrf.mxu0
      %v2189 = vpop.f32.mrf.mxu0
      %2190 = vdwg.mxu0
      %2191 = vmatprep.subr.bf16.mxu0 0
      %2192 = vmatpush1.bf16.msra.mxu0 %v573
      %2193 = vmatprep.subr.bf16.mxu0 0
      %2194 = vmatpush1.bf16.msra.mxu0 %v572
      %2195 = vmatprep.subr.bf16.mxu0 0
      %2196 = vmatpush1.bf16.msra.mxu0 %v571
      %2197 = vmatprep.subr.bf16.mxu0 0
      %2198 = vmatpush1.bf16.msra.mxu0 %v570
      %2199 = vmatprep.subr.bf16.mxu0 0
      %2200 = vmatpush1.bf16.msra.mxu0 %v569
      %2201 = vmatprep.subr.bf16.mxu0 0
      %2202 = vmatpush1.bf16.msra.mxu0 %v568
      %2203 = vmatprep.subr.bf16.mxu0 0
      %2204 = vmatpush1.bf16.msra.mxu0 %v567
      %2205 = vmatprep.subr.bf16.mxu0 0
      %2206 = vmatpush1.bf16.msra.mxu0 %v566
      %2207 = vmatprep.subr.bf16.mxu0 0
      %2208 = vmatpush2.bf16.msra.mxu0 %v581
      %2209 = vmatprep.subr.bf16.mxu0 0
      %2210 = vmatpush2.bf16.msra.mxu0 %v580
      %2211 = vmatprep.subr.bf16.mxu0 0
      %2212 = vmatpush2.bf16.msra.mxu0 %v579
      %2213 = vmatprep.subr.bf16.mxu0 0
      %2214 = vmatpush2.bf16.msra.mxu0 %v578
      %2215 = vmatprep.subr.bf16.mxu0 0
      %2216 = vmatpush2.bf16.msra.mxu0 %v577
      %2217 = vmatprep.subr.bf16.mxu0 0
      %2218 = vmatpush2.bf16.msra.mxu0 %v576
      %2219 = vmatprep.subr.bf16.mxu0 0
      %2220 = vmatpush2.bf16.msra.mxu0 %v575
      %2221 = vmatprep.subr.bf16.mxu0 0
      %2222 = vmatpush2.bf16.msra.mxu0 %v574
      %2223 = vmatprep.mubr.bf16.mxu0 %v2142
      %2224 = vmatmul.mubr.bf16.gmra.mxu0 %v2141
      %v2225 = vpop.f32.mrf.mxu0
      %v2226 = vadd.f32 %v2186, %v2225
      %v2227 = vpop.f32.mrf.mxu0
      %v2228 = vpop.f32.mrf.mxu0
      %v2229 = vpop.f32.mrf.mxu0
      %2230 = vdwg.mxu0
      %2231 = vmatprep.subr.bf16.mxu0 0
      %2232 = vmatpush1.bf16.msra.mxu0 0
      %2233 = vmatprep.subr.bf16.mxu0 0
      %2234 = vmatpush1.bf16.msra.mxu0 0
      %2235 = vmatprep.subr.bf16.mxu0 0
      %2236 = vmatpush1.bf16.msra.mxu0 0
      %2237 = vmatprep.subr.bf16.mxu0 0
      %2238 = vmatpush1.bf16.msra.mxu0 0
      %2239 = vmatprep.subr.bf16.mxu0 0
      %2240 = vmatpush1.bf16.msra.mxu0 %v585
      %2241 = vmatprep.subr.bf16.mxu0 0
      %2242 = vmatpush1.bf16.msra.mxu0 %v584
      %2243 = vmatprep.subr.bf16.mxu0 0
      %2244 = vmatpush1.bf16.msra.mxu0 %v583
      %2245 = vmatprep.subr.bf16.mxu0 0
      %2246 = vmatpush1.bf16.msra.mxu0 %v582
      %2247 = vmatprep.subr.bf16.mxu0 0
      %2248 = vmatpush2.bf16.msra.mxu0 0
      %2249 = vmatprep.subr.bf16.mxu0 0
      %2250 = vmatpush2.bf16.msra.mxu0 0
      %2251 = vmatprep.subr.bf16.mxu0 0
      %2252 = vmatpush2.bf16.msra.mxu0 0
      %2253 = vmatprep.subr.bf16.mxu0 0
      %2254 = vmatpush2.bf16.msra.mxu0 0
      %2255 = vmatprep.subr.bf16.mxu0 0
      %2256 = vmatpush2.bf16.msra.mxu0 0
      %2257 = vmatprep.subr.bf16.mxu0 0
      %2258 = vmatpush2.bf16.msra.mxu0 0
      %2259 = vmatprep.subr.bf16.mxu0 0
      %2260 = vmatpush2.bf16.msra.mxu0 0
      %2261 = vmatprep.subr.bf16.mxu0 0
      %2262 = vmatpush2.bf16.msra.mxu0 0
      %2263 = vmatprep.mubr.bf16.mxu0 0
      %2264 = vmatmul.mubr.bf16.gmra.mxu0 %v2149
      %v2265 = vpop.f32.mrf.mxu0
      %v2266 = vadd.f32 %v2226, %v2265
      %v2267 = vpop.f32.mrf.mxu0
      %v2268 = vpop.f32.mrf.mxu0
      %v2269 = vpop.f32.mrf.mxu0
      %2270 = vdwg.mxu0
      %v2271 = vmax.f32 %v2266, 0.0
      %v2272 = vpack.c.bf16 %v2271, %v2271
      %s2273 = scalar_lea.vmem %s292, 768
      %v2274 = vld [vmem:[%s2273] sm:$0xff]
      %v2275 = vld [vmem:[%s2273 + $0x8] sm:$0xff]
      %v2276 = vld [vmem:[%s2273 + $0x10] sm:$0xff]
      %v2277 = vld [vmem:[%s2273 + $0x18] sm:$0xff]
      %v2278 = vld [vmem:[%s2273 + $0x20] sm:$0xff]
      %v2279 = vld [vmem:[%s2273 + $0x28] sm:$0xff]
      %v2280 = vld [vmem:[%s2273 + $0x30] sm:$0xff]
      %v2281 = vld [vmem:[%s2273 + $0x38] sm:$0xff]
      %v2282 = vld [vmem:[%s2273 + $0x40] sm:$0xff]
      %v2283 = vld [vmem:[%s2273 + $0x48] sm:$0xff]
      %v2284 = vld [vmem:[%s2273 + $0x50] sm:$0xff]
      %v2285 = vld [vmem:[%s2273 + $0x58] sm:$0xff]
      %v2286 = vld [vmem:[%s2273 + $0x60] sm:$0xff]
      %v2287 = vld [vmem:[%s2273 + $0x68] sm:$0xff]
      %v2288 = vld [vmem:[%s2273 + $0x70] sm:$0xff]
      %v2289 = vld [vmem:[%s2273 + $0x78] sm:$0xff]
      %v2290 = vld [vmem:[%s2273 + $0x80] sm:$0xff]
      %v2291 = vld [vmem:[%s2273 + $0x88] sm:$0xff]
      %v2292 = vld [vmem:[%s2273 + $0x90] sm:$0xff]
      %v2293 = vld [vmem:[%s2273 + $0x98] sm:$0xff]
      %v2294 = vld [vmem:[%s2273 + $0xa0] sm:$0xff]
      %v2295 = vld [vmem:[%s2273 + $0xa8] sm:$0xff]
      %v2296 = vld [vmem:[%s2273 + $0xb0] sm:$0xff]
      %v2297 = vld [vmem:[%s2273 + $0xb8] sm:$0xff]
      %v2298 = vld [vmem:[%s2273 + $0xc0] sm:$0xff]
      %v2299 = vld [vmem:[%s2273 + $0xc8] sm:$0xff]
      %v2300 = vld [vmem:[%s2273 + $0xd0] sm:$0xff]
      %v2301 = vld [vmem:[%s2273 + $0xd8] sm:$0xff]
      %v2302 = vld [vmem:[%s2273 + $0xe0] sm:$0xff]
      %v2303 = vld [vmem:[%s2273 + $0xe8] sm:$0xff]
      %v2304 = vld [vmem:[%s2273 + $0xf0] sm:$0xff]
      %v2305 = vld [vmem:[%s2273 + $0xf8] sm:$0xff]
      %v2338 = vunpack.c.l.b16 %v2274
      %v2339 = vunpack.c.h.b16 %v2274
      %v2340 = vunpack.c.l.b16 %v2275
      %v2341 = vunpack.c.h.b16 %v2275
      %v2342 = vunpack.c.l.b16 %v2276
      %v2343 = vunpack.c.h.b16 %v2276
      %v2344 = vunpack.c.l.b16 %v2277
      %v2345 = vunpack.c.h.b16 %v2277
      %v2346 = vunpack.c.l.b16 %v2278
      %v2347 = vunpack.c.h.b16 %v2278
      %v2348 = vunpack.c.l.b16 %v2279
      %v2349 = vunpack.c.h.b16 %v2279
      %v2350 = vunpack.c.l.b16 %v2280
      %v2351 = vunpack.c.h.b16 %v2280
      %v2352 = vunpack.c.l.b16 %v2281
      %v2353 = vunpack.c.h.b16 %v2281
      %v2354 = vunpack.c.l.b16 %v2282
      %v2355 = vunpack.c.h.b16 %v2282
      %v2356 = vunpack.c.l.b16 %v2283
      %v2357 = vunpack.c.h.b16 %v2283
      %v2358 = vunpack.c.l.b16 %v2284
      %v2359 = vunpack.c.h.b16 %v2284
      %v2360 = vunpack.c.l.b16 %v2285
      %v2361 = vunpack.c.h.b16 %v2285
      %v2362 = vunpack.c.l.b16 %v2286
      %v2363 = vunpack.c.h.b16 %v2286
      %v2364 = vunpack.c.l.b16 %v2287
      %v2365 = vunpack.c.h.b16 %v2287
      %v2366 = vunpack.c.l.b16 %v2288
      %v2367 = vunpack.c.h.b16 %v2288
      %v2368 = vunpack.c.l.b16 %v2289
      %v2369 = vunpack.c.h.b16 %v2289
      %v2370 = vunpack.c.l.b16 %v2290
      %v2371 = vunpack.c.h.b16 %v2290
      %v2372 = vunpack.c.l.b16 %v2291
      %v2373 = vunpack.c.h.b16 %v2291
      %v2374 = vunpack.c.l.b16 %v2292
      %v2375 = vunpack.c.h.b16 %v2292
      %v2376 = vunpack.c.l.b16 %v2293
      %v2377 = vunpack.c.h.b16 %v2293
      %v2378 = vunpack.c.l.b16 %v2294
      %v2379 = vunpack.c.h.b16 %v2294
      %v2380 = vunpack.c.l.b16 %v2295
      %v2381 = vunpack.c.h.b16 %v2295
      %v2382 = vunpack.c.l.b16 %v2296
      %v2383 = vunpack.c.h.b16 %v2296
      %v2384 = vunpack.c.l.b16 %v2297
      %v2385 = vunpack.c.h.b16 %v2297
      %v2386 = vunpack.c.l.b16 %v2298
      %v2387 = vunpack.c.h.b16 %v2298
      %v2388 = vunpack.c.l.b16 %v2299
      %v2389 = vunpack.c.h.b16 %v2299
      %v2390 = vunpack.c.l.b16 %v2300
      %v2391 = vunpack.c.h.b16 %v2300
      %v2392 = vunpack.c.l.b16 %v2301
      %v2393 = vunpack.c.h.b16 %v2301
      %v2394 = vunpack.c.l.b16 %v2302
      %v2395 = vunpack.c.h.b16 %v2302
      %v2396 = vunpack.c.l.b16 %v2303
      %v2397 = vunpack.c.h.b16 %v2303
      %v2398 = vunpack.c.l.b16 %v2304
      %v2399 = vunpack.c.h.b16 %v2304
      %v2400 = vunpack.c.l.b16 %v2305
      %v2401 = vunpack.c.h.b16 %v2305
      %v2402 = vpack.c.b16 %v2346, %v2338
      %v2403 = vpack.c.b16 %v2347, %v2339
      %v2404 = vpack.c.b16 %v2348, %v2340
      %v2405 = vpack.c.b16 %v2349, %v2341
      %v2406 = vpack.c.b16 %v2350, %v2342
      %v2407 = vpack.c.b16 %v2351, %v2343
      %v2408 = vpack.c.b16 %v2352, %v2344
      %v2409 = vpack.c.b16 %v2353, %v2345
      %v2410 = vpack.c.b16 %v2362, %v2354
      %v2411 = vpack.c.b16 %v2363, %v2355
      %v2412 = vpack.c.b16 %v2364, %v2356
      %v2413 = vpack.c.b16 %v2365, %v2357
      %v2414 = vpack.c.b16 %v2366, %v2358
      %v2415 = vpack.c.b16 %v2367, %v2359
      %v2416 = vpack.c.b16 %v2368, %v2360
      %v2417 = vpack.c.b16 %v2369, %v2361
      %v2418 = vpack.c.b16 %v2378, %v2370
      %v2419 = vpack.c.b16 %v2379, %v2371
      %v2420 = vpack.c.b16 %v2380, %v2372
      %v2421 = vpack.c.b16 %v2381, %v2373
      %v2422 = vpack.c.b16 %v2382, %v2374
      %v2423 = vpack.c.b16 %v2383, %v2375
      %v2424 = vpack.c.b16 %v2384, %v2376
      %v2425 = vpack.c.b16 %v2385, %v2377
      %v2426 = vpack.c.b16 %v2394, %v2386
      %v2427 = vpack.c.b16 %v2395, %v2387
      %v2428 = vpack.c.b16 %v2396, %v2388
      %v2429 = vpack.c.b16 %v2397, %v2389
      %v2430 = vpack.c.b16 %v2398, %v2390
      %v2431 = vpack.c.b16 %v2399, %v2391
      %v2432 = vpack.c.b16 %v2400, %v2392
      %v2433 = vpack.c.b16 %v2401, %v2393
      %v2467 = vsel %vm622, %v2272, 0
      %2469 = vmatprep.subr.bf16.mxu0 0
      %2470 = vmatpush1.bf16.msra.mxu0 0
      %2471 = vmatprep.subr.bf16.mxu0 0
      %2472 = vmatpush1.bf16.msra.mxu0 0
      %2473 = vmatprep.subr.bf16.mxu0 0
      %2474 = vmatpush1.bf16.msra.mxu0 0
      %2475 = vmatprep.subr.bf16.mxu0 0
      %2476 = vmatpush1.bf16.msra.mxu0 0
      %2477 = vmatprep.subr.bf16.mxu0 %v2427
      %2478 = vmatpush1.bf16.msra.mxu0 %v2426
      %2479 = vmatprep.subr.bf16.mxu0 %v2419
      %2480 = vmatpush1.bf16.msra.mxu0 %v2418
      %2481 = vmatprep.subr.bf16.mxu0 %v2411
      %2482 = vmatpush1.bf16.msra.mxu0 %v2410
      %2483 = vmatprep.subr.bf16.mxu0 %v2403
      %2484 = vmatpush1.bf16.msra.mxu0 %v2402
      %2485 = vmatprep.subr.bf16.mxu0 0
      %2486 = vmatpush2.bf16.msra.mxu0 0
      %2487 = vmatprep.subr.bf16.mxu0 0
      %2488 = vmatpush2.bf16.msra.mxu0 0
      %2489 = vmatprep.subr.bf16.mxu0 0
      %2490 = vmatpush2.bf16.msra.mxu0 0
      %2491 = vmatprep.subr.bf16.mxu0 0
      %2492 = vmatpush2.bf16.msra.mxu0 0
      %2493 = vmatprep.subr.bf16.mxu0 0
      %2494 = vmatpush2.bf16.msra.mxu0 0
      %2495 = vmatprep.subr.bf16.mxu0 0
      %2496 = vmatpush2.bf16.msra.mxu0 0
      %2497 = vmatprep.subr.bf16.mxu0 0
      %2498 = vmatpush2.bf16.msra.mxu0 0
      %2499 = vmatprep.subr.bf16.mxu0 0
      %2500 = vmatpush2.bf16.msra.mxu0 0
      %2501 = vmatprep.mubr.bf16.mxu0 0
      %2502 = vmatmul.mubr.bf16.gmra.mxu0 %v2467
      %v2503 = vpop.f32.mrf.mxu0
      %v2504 = vadd.f32 0.0, %v2503
      %v2505 = vpop.f32.mrf.mxu0
      %v2506 = vadd.f32 0.0, %v2505
      %v2507 = vpop.f32.mrf.mxu0
      %v2508 = vpop.f32.mrf.mxu0
      %2509 = vdwg.mxu0
      %2510 = vmatprep.subr.bf16.mxu0 0
      %2511 = vmatpush1.bf16.msra.mxu0 0
      %2512 = vmatprep.subr.bf16.mxu0 0
      %2513 = vmatpush1.bf16.msra.mxu0 0
      %2514 = vmatprep.subr.bf16.mxu0 0
      %2515 = vmatpush1.bf16.msra.mxu0 0
      %2516 = vmatprep.subr.bf16.mxu0 0
      %2517 = vmatpush1.bf16.msra.mxu0 0
      %2518 = vmatprep.subr.bf16.mxu0 %v2429
      %2519 = vmatpush1.bf16.msra.mxu0 %v2428
      %2520 = vmatprep.subr.bf16.mxu0 %v2421
      %2521 = vmatpush1.bf16.msra.mxu0 %v2420
      %2522 = vmatprep.subr.bf16.mxu0 %v2413
      %2523 = vmatpush1.bf16.msra.mxu0 %v2412
      %2524 = vmatprep.subr.bf16.mxu0 %v2405
      %2525 = vmatpush1.bf16.msra.mxu0 %v2404
      %2526 = vmatprep.subr.bf16.mxu0 0
      %2527 = vmatpush2.bf16.msra.mxu0 0
      %2528 = vmatprep.subr.bf16.mxu0 0
      %2529 = vmatpush2.bf16.msra.mxu0 0
      %2530 = vmatprep.subr.bf16.mxu0 0
      %2531 = vmatpush2.bf16.msra.mxu0 0
      %2532 = vmatprep.subr.bf16.mxu0 0
      %2533 = vmatpush2.bf16.msra.mxu0 0
      %2534 = vmatprep.subr.bf16.mxu0 0
      %2535 = vmatpush2.bf16.msra.mxu0 0
      %2536 = vmatprep.subr.bf16.mxu0 0
      %2537 = vmatpush2.bf16.msra.mxu0 0
      %2538 = vmatprep.subr.bf16.mxu0 0
      %2539 = vmatpush2.bf16.msra.mxu0 0
      %2540 = vmatprep.subr.bf16.mxu0 0
      %2541 = vmatpush2.bf16.msra.mxu0 0
      %2542 = vmatprep.mubr.bf16.mxu0 0
      %2543 = vmatmul.mubr.bf16.gmra.mxu0 %v2467
      %v2544 = vpop.f32.mrf.mxu0
      %v2545 = vadd.f32 0.0, %v2544
      %v2546 = vpop.f32.mrf.mxu0
      %v2547 = vadd.f32 0.0, %v2546
      %v2548 = vpop.f32.mrf.mxu0
      %v2549 = vpop.f32.mrf.mxu0
      %2550 = vdwg.mxu0
      %2551 = vmatprep.subr.bf16.mxu0 0
      %2552 = vmatpush1.bf16.msra.mxu0 0
      %2553 = vmatprep.subr.bf16.mxu0 0
      %2554 = vmatpush1.bf16.msra.mxu0 0
      %2555 = vmatprep.subr.bf16.mxu0 0
      %2556 = vmatpush1.bf16.msra.mxu0 0
      %2557 = vmatprep.subr.bf16.mxu0 0
      %2558 = vmatpush1.bf16.msra.mxu0 0
      %2559 = vmatprep.subr.bf16.mxu0 %v2431
      %2560 = vmatpush1.bf16.msra.mxu0 %v2430
      %2561 = vmatprep.subr.bf16.mxu0 %v2423
      %2562 = vmatpush1.bf16.msra.mxu0 %v2422
      %2563 = vmatprep.subr.bf16.mxu0 %v2415
      %2564 = vmatpush1.bf16.msra.mxu0 %v2414
      %2565 = vmatprep.subr.bf16.mxu0 %v2407
      %2566 = vmatpush1.bf16.msra.mxu0 %v2406
      %2567 = vmatprep.subr.bf16.mxu0 0
      %2568 = vmatpush2.bf16.msra.mxu0 0
      %2569 = vmatprep.subr.bf16.mxu0 0
      %2570 = vmatpush2.bf16.msra.mxu0 0
      %2571 = vmatprep.subr.bf16.mxu0 0
      %2572 = vmatpush2.bf16.msra.mxu0 0
      %2573 = vmatprep.subr.bf16.mxu0 0
      %2574 = vmatpush2.bf16.msra.mxu0 0
      %2575 = vmatprep.subr.bf16.mxu0 0
      %2576 = vmatpush2.bf16.msra.mxu0 0
      %2577 = vmatprep.subr.bf16.mxu0 0
      %2578 = vmatpush2.bf16.msra.mxu0 0
      %2579 = vmatprep.subr.bf16.mxu0 0
      %2580 = vmatpush2.bf16.msra.mxu0 0
      %2581 = vmatprep.subr.bf16.mxu0 0
      %2582 = vmatpush2.bf16.msra.mxu0 0
      %2583 = vmatprep.mubr.bf16.mxu0 0
      %2584 = vmatmul.mubr.bf16.gmra.mxu0 %v2467
      %v2585 = vpop.f32.mrf.mxu0
      %v2586 = vadd.f32 0.0, %v2585
      %v2587 = vpop.f32.mrf.mxu0
      %v2588 = vadd.f32 0.0, %v2587
      %v2589 = vpop.f32.mrf.mxu0
      %v2590 = vpop.f32.mrf.mxu0
      %2591 = vdwg.mxu0
      %2592 = vmatprep.subr.bf16.mxu0 0
      %2593 = vmatpush1.bf16.msra.mxu0 0
      %2594 = vmatprep.subr.bf16.mxu0 0
      %2595 = vmatpush1.bf16.msra.mxu0 0
      %2596 = vmatprep.subr.bf16.mxu0 0
      %2597 = vmatpush1.bf16.msra.mxu0 0
      %2598 = vmatprep.subr.bf16.mxu0 0
      %2599 = vmatpush1.bf16.msra.mxu0 0
      %2600 = vmatprep.subr.bf16.mxu0 %v2433
      %2601 = vmatpush1.bf16.msra.mxu0 %v2432
      %2602 = vmatprep.subr.bf16.mxu0 %v2425
      %2603 = vmatpush1.bf16.msra.mxu0 %v2424
      %2604 = vmatprep.subr.bf16.mxu0 %v2417
      %2605 = vmatpush1.bf16.msra.mxu0 %v2416
      %2606 = vmatprep.subr.bf16.mxu0 %v2409
      %2607 = vmatpush1.bf16.msra.mxu0 %v2408
      %2608 = vmatprep.subr.bf16.mxu0 0
      %2609 = vmatpush2.bf16.msra.mxu0 0
      %2610 = vmatprep.subr.bf16.mxu0 0
      %2611 = vmatpush2.bf16.msra.mxu0 0
      %2612 = vmatprep.subr.bf16.mxu0 0
      %2613 = vmatpush2.bf16.msra.mxu0 0
      %2614 = vmatprep.subr.bf16.mxu0 0
      %2615 = vmatpush2.bf16.msra.mxu0 0
      %2616 = vmatprep.subr.bf16.mxu0 0
      %2617 = vmatpush2.bf16.msra.mxu0 0
      %2618 = vmatprep.subr.bf16.mxu0 0
      %2619 = vmatpush2.bf16.msra.mxu0 0
      %2620 = vmatprep.subr.bf16.mxu0 0
      %2621 = vmatpush2.bf16.msra.mxu0 0
      %2622 = vmatprep.subr.bf16.mxu0 0
      %2623 = vmatpush2.bf16.msra.mxu0 0
      %2624 = vmatprep.mubr.bf16.mxu0 0
      %2625 = vmatmul.mubr.bf16.gmra.mxu0 %v2467
      %v2626 = vpop.f32.mrf.mxu0
      %v2627 = vadd.f32 0.0, %v2626
      %v2628 = vpop.f32.mrf.mxu0
      %v2629 = vadd.f32 0.0, %v2628
      %v2630 = vpop.f32.mrf.mxu0
      %v2631 = vpop.f32.mrf.mxu0
      %2632 = vdwg.mxu0
      %v2633 = vadd.f32 %v2119, %v2504
      %v2634 = vadd.f32 %v2120, %v2506
      %v2635 = vadd.f32 %v2121, %v2545
      %v2636 = vadd.f32 %v2122, %v2547
      %v2637 = vadd.f32 %v2123, %v2586
      %v2638 = vadd.f32 %v2124, %v2588
      %v2639 = vadd.f32 %v2125, %v2627
      %v2640 = vadd.f32 %v2126, %v2629
      %s2641 = scalar_lea.vmem %s285, 80
      %v2642 = vld [vmem:[%s2641] sm:$0xff]
      %v2643 = vld [vmem:[%s2641 + $0x8] sm:$0xff]
      %v2644 = vld [vmem:[%s2641 + $0x10] sm:$0xf]
      %v2648 = vunpack.c.l.b16 %v2642
      %v2649 = vunpack.c.h.b16 %v2642
      %v2650 = vunpack.c.l.b16 %v2643
      %v2651 = vunpack.c.h.b16 %v2643
      %v2652 = vunpack.c.l.b16 %v2644
      %v2653 = vpack.c.b16 %v2648, %v2648
      %v2654 = vpack.c.b16 %v2649, %v2649
      %v2655 = vpack.c.b16 %v2650, %v2650
      %v2656 = vpack.c.b16 %v2651, %v2651
      %v2657 = vpack.c.b16 %v2652, %v2652
      %v2663 = vsel %vm622, %v2657, 0
      %2665 = vmatprep.subr.bf16.mxu0 0
      %2666 = vmatpush1.bf16.msra.mxu0 %v557
      %2667 = vmatprep.subr.bf16.mxu0 0
      %2668 = vmatpush1.bf16.msra.mxu0 %v556
      %2669 = vmatprep.subr.bf16.mxu0 0
      %2670 = vmatpush1.bf16.msra.mxu0 %v555
      %2671 = vmatprep.subr.bf16.mxu0 0
      %2672 = vmatpush1.bf16.msra.mxu0 %v554
      %2673 = vmatprep.subr.bf16.mxu0 0
      %2674 = vmatpush1.bf16.msra.mxu0 %v553
      %2675 = vmatprep.subr.bf16.mxu0 0
      %2676 = vmatpush1.bf16.msra.mxu0 %v552
      %2677 = vmatprep.subr.bf16.mxu0 0
      %2678 = vmatpush1.bf16.msra.mxu0 %v551
      %2679 = vmatprep.subr.bf16.mxu0 0
      %2680 = vmatpush1.bf16.msra.mxu0 %v550
      %2681 = vmatprep.subr.bf16.mxu0 0
      %2682 = vmatpush2.bf16.msra.mxu0 %v565
      %2683 = vmatprep.subr.bf16.mxu0 0
      %2684 = vmatpush2.bf16.msra.mxu0 %v564
      %2685 = vmatprep.subr.bf16.mxu0 0
      %2686 = vmatpush2.bf16.msra.mxu0 %v563
      %2687 = vmatprep.subr.bf16.mxu0 0
      %2688 = vmatpush2.bf16.msra.mxu0 %v562
      %2689 = vmatprep.subr.bf16.mxu0 0
      %2690 = vmatpush2.bf16.msra.mxu0 %v561
      %2691 = vmatprep.subr.bf16.mxu0 0
      %2692 = vmatpush2.bf16.msra.mxu0 %v560
      %2693 = vmatprep.subr.bf16.mxu0 0
      %2694 = vmatpush2.bf16.msra.mxu0 %v559
      %2695 = vmatprep.subr.bf16.mxu0 0
      %2696 = vmatpush2.bf16.msra.mxu0 %v558
      %2697 = vmatprep.mubr.bf16.mxu0 %v2654
      %2698 = vmatmul.mubr.bf16.gmra.mxu0 %v2653
      %v2699 = vpop.f32.mrf.mxu0
      %v2700 = vadd.f32 %v387, %v2699
      %v2701 = vpop.f32.mrf.mxu0
      %v2702 = vpop.f32.mrf.mxu0
      %v2703 = vpop.f32.mrf.mxu0
      %2704 = vdwg.mxu0
      %2705 = vmatprep.subr.bf16.mxu0 0
      %2706 = vmatpush1.bf16.msra.mxu0 %v573
      %2707 = vmatprep.subr.bf16.mxu0 0
      %2708 = vmatpush1.bf16.msra.mxu0 %v572
      %2709 = vmatprep.subr.bf16.mxu0 0
      %2710 = vmatpush1.bf16.msra.mxu0 %v571
      %2711 = vmatprep.subr.bf16.mxu0 0
      %2712 = vmatpush1.bf16.msra.mxu0 %v570
      %2713 = vmatprep.subr.bf16.mxu0 0
      %2714 = vmatpush1.bf16.msra.mxu0 %v569
      %2715 = vmatprep.subr.bf16.mxu0 0
      %2716 = vmatpush1.bf16.msra.mxu0 %v568
      %2717 = vmatprep.subr.bf16.mxu0 0
      %2718 = vmatpush1.bf16.msra.mxu0 %v567
      %2719 = vmatprep.subr.bf16.mxu0 0
      %2720 = vmatpush1.bf16.msra.mxu0 %v566
      %2721 = vmatprep.subr.bf16.mxu0 0
      %2722 = vmatpush2.bf16.msra.mxu0 %v581
      %2723 = vmatprep.subr.bf16.mxu0 0
      %2724 = vmatpush2.bf16.msra.mxu0 %v580
      %2725 = vmatprep.subr.bf16.mxu0 0
      %2726 = vmatpush2.bf16.msra.mxu0 %v579
      %2727 = vmatprep.subr.bf16.mxu0 0
      %2728 = vmatpush2.bf16.msra.mxu0 %v578
      %2729 = vmatprep.subr.bf16.mxu0 0
      %2730 = vmatpush2.bf16.msra.mxu0 %v577
      %2731 = vmatprep.subr.bf16.mxu0 0
      %2732 = vmatpush2.bf16.msra.mxu0 %v576
      %2733 = vmatprep.subr.bf16.mxu0 0
      %2734 = vmatpush2.bf16.msra.mxu0 %v575
      %2735 = vmatprep.subr.bf16.mxu0 0
      %2736 = vmatpush2.bf16.msra.mxu0 %v574
      %2737 = vmatprep.mubr.bf16.mxu0 %v2656
      %2738 = vmatmul.mubr.bf16.gmra.mxu0 %v2655
      %v2739 = vpop.f32.mrf.mxu0
      %v2740 = vadd.f32 %v2700, %v2739
      %v2741 = vpop.f32.mrf.mxu0
      %v2742 = vpop.f32.mrf.mxu0
      %v2743 = vpop.f32.mrf.mxu0
      %2744 = vdwg.mxu0
      %2745 = vmatprep.subr.bf16.mxu0 0
      %2746 = vmatpush1.bf16.msra.mxu0 0
      %2747 = vmatprep.subr.bf16.mxu0 0
      %2748 = vmatpush1.bf16.msra.mxu0 0
      %2749 = vmatprep.subr.bf16.mxu0 0
      %2750 = vmatpush1.bf16.msra.mxu0 0
      %2751 = vmatprep.subr.bf16.mxu0 0
      %2752 = vmatpush1.bf16.msra.mxu0 0
      %2753 = vmatprep.subr.bf16.mxu0 0
      %2754 = vmatpush1.bf16.msra.mxu0 %v585
      %2755 = vmatprep.subr.bf16.mxu0 0
      %2756 = vmatpush1.bf16.msra.mxu0 %v584
      %2757 = vmatprep.subr.bf16.mxu0 0
      %2758 = vmatpush1.bf16.msra.mxu0 %v583
      %2759 = vmatprep.subr.bf16.mxu0 0
      %2760 = vmatpush1.bf16.msra.mxu0 %v582
      %2761 = vmatprep.subr.bf16.mxu0 0
      %2762 = vmatpush2.bf16.msra.mxu0 0
      %2763 = vmatprep.subr.bf16.mxu0 0
      %2764 = vmatpush2.bf16.msra.mxu0 0
      %2765 = vmatprep.subr.bf16.mxu0 0
      %2766 = vmatpush2.bf16.msra.mxu0 0
      %2767 = vmatprep.subr.bf16.mxu0 0
      %2768 = vmatpush2.bf16.msra.mxu0 0
      %2769 = vmatprep.subr.bf16.mxu0 0
      %2770 = vmatpush2.bf16.msra.mxu0 0
      %2771 = vmatprep.subr.bf16.mxu0 0
      %2772 = vmatpush2.bf16.msra.mxu0 0
      %2773 = vmatprep.subr.bf16.mxu0 0
      %2774 = vmatpush2.bf16.msra.mxu0 0
      %2775 = vmatprep.subr.bf16.mxu0 0
      %2776 = vmatpush2.bf16.msra.mxu0 0
      %2777 = vmatprep.mubr.bf16.mxu0 0
      %2778 = vmatmul.mubr.bf16.gmra.mxu0 %v2663
      %v2779 = vpop.f32.mrf.mxu0
      %v2780 = vadd.f32 %v2740, %v2779
      %v2781 = vpop.f32.mrf.mxu0
      %v2782 = vpop.f32.mrf.mxu0
      %v2783 = vpop.f32.mrf.mxu0
      %2784 = vdwg.mxu0
      %v2785 = vmax.f32 %v2780, 0.0
      %v2786 = vpack.c.bf16 %v2785, %v2785
      %s2787 = scalar_lea.vmem %s292, 1024
      %v2788 = vld [vmem:[%s2787] sm:$0xff]
      %v2789 = vld [vmem:[%s2787 + $0x8] sm:$0xff]
      %v2790 = vld [vmem:[%s2787 + $0x10] sm:$0xff]
      %v2791 = vld [vmem:[%s2787 + $0x18] sm:$0xff]
      %v2792 = vld [vmem:[%s2787 + $0x20] sm:$0xff]
      %v2793 = vld [vmem:[%s2787 + $0x28] sm:$0xff]
      %v2794 = vld [vmem:[%s2787 + $0x30] sm:$0xff]
      %v2795 = vld [vmem:[%s2787 + $0x38] sm:$0xff]
      %v2796 = vld [vmem:[%s2787 + $0x40] sm:$0xff]
      %v2797 = vld [vmem:[%s2787 + $0x48] sm:$0xff]
      %v2798 = vld [vmem:[%s2787 + $0x50] sm:$0xff]
      %v2799 = vld [vmem:[%s2787 + $0x58] sm:$0xff]
      %v2800 = vld [vmem:[%s2787 + $0x60] sm:$0xff]
      %v2801 = vld [vmem:[%s2787 + $0x68] sm:$0xff]
      %v2802 = vld [vmem:[%s2787 + $0x70] sm:$0xff]
      %v2803 = vld [vmem:[%s2787 + $0x78] sm:$0xff]
      %v2804 = vld [vmem:[%s2787 + $0x80] sm:$0xff]
      %v2805 = vld [vmem:[%s2787 + $0x88] sm:$0xff]
      %v2806 = vld [vmem:[%s2787 + $0x90] sm:$0xff]
      %v2807 = vld [vmem:[%s2787 + $0x98] sm:$0xff]
      %v2808 = vld [vmem:[%s2787 + $0xa0] sm:$0xff]
      %v2809 = vld [vmem:[%s2787 + $0xa8] sm:$0xff]
      %v2810 = vld [vmem:[%s2787 + $0xb0] sm:$0xff]
      %v2811 = vld [vmem:[%s2787 + $0xb8] sm:$0xff]
      %v2812 = vld [vmem:[%s2787 + $0xc0] sm:$0xff]
      %v2813 = vld [vmem:[%s2787 + $0xc8] sm:$0xff]
      %v2814 = vld [vmem:[%s2787 + $0xd0] sm:$0xff]
      %v2815 = vld [vmem:[%s2787 + $0xd8] sm:$0xff]
      %v2816 = vld [vmem:[%s2787 + $0xe0] sm:$0xff]
      %v2817 = vld [vmem:[%s2787 + $0xe8] sm:$0xff]
      %v2818 = vld [vmem:[%s2787 + $0xf0] sm:$0xff]
      %v2819 = vld [vmem:[%s2787 + $0xf8] sm:$0xff]
      %v2852 = vunpack.c.l.b16 %v2788
      %v2853 = vunpack.c.h.b16 %v2788
      %v2854 = vunpack.c.l.b16 %v2789
      %v2855 = vunpack.c.h.b16 %v2789
      %v2856 = vunpack.c.l.b16 %v2790
      %v2857 = vunpack.c.h.b16 %v2790
      %v2858 = vunpack.c.l.b16 %v2791
      %v2859 = vunpack.c.h.b16 %v2791
      %v2860 = vunpack.c.l.b16 %v2792
      %v2861 = vunpack.c.h.b16 %v2792
      %v2862 = vunpack.c.l.b16 %v2793
      %v2863 = vunpack.c.h.b16 %v2793
      %v2864 = vunpack.c.l.b16 %v2794
      %v2865 = vunpack.c.h.b16 %v2794
      %v2866 = vunpack.c.l.b16 %v2795
      %v2867 = vunpack.c.h.b16 %v2795
      %v2868 = vunpack.c.l.b16 %v2796
      %v2869 = vunpack.c.h.b16 %v2796
      %v2870 = vunpack.c.l.b16 %v2797
      %v2871 = vunpack.c.h.b16 %v2797
      %v2872 = vunpack.c.l.b16 %v2798
      %v2873 = vunpack.c.h.b16 %v2798
      %v2874 = vunpack.c.l.b16 %v2799
      %v2875 = vunpack.c.h.b16 %v2799
      %v2876 = vunpack.c.l.b16 %v2800
      %v2877 = vunpack.c.h.b16 %v2800
      %v2878 = vunpack.c.l.b16 %v2801
      %v2879 = vunpack.c.h.b16 %v2801
      %v2880 = vunpack.c.l.b16 %v2802
      %v2881 = vunpack.c.h.b16 %v2802
      %v2882 = vunpack.c.l.b16 %v2803
      %v2883 = vunpack.c.h.b16 %v2803
      %v2884 = vunpack.c.l.b16 %v2804
      %v2885 = vunpack.c.h.b16 %v2804
      %v2886 = vunpack.c.l.b16 %v2805
      %v2887 = vunpack.c.h.b16 %v2805
      %v2888 = vunpack.c.l.b16 %v2806
      %v2889 = vunpack.c.h.b16 %v2806
      %v2890 = vunpack.c.l.b16 %v2807
      %v2891 = vunpack.c.h.b16 %v2807
      %v2892 = vunpack.c.l.b16 %v2808
      %v2893 = vunpack.c.h.b16 %v2808
      %v2894 = vunpack.c.l.b16 %v2809
      %v2895 = vunpack.c.h.b16 %v2809
      %v2896 = vunpack.c.l.b16 %v2810
      %v2897 = vunpack.c.h.b16 %v2810
      %v2898 = vunpack.c.l.b16 %v2811
      %v2899 = vunpack.c.h.b16 %v2811
      %v2900 = vunpack.c.l.b16 %v2812
      %v2901 = vunpack.c.h.b16 %v2812
      %v2902 = vunpack.c.l.b16 %v2813
      %v2903 = vunpack.c.h.b16 %v2813
      %v2904 = vunpack.c.l.b16 %v2814
      %v2905 = vunpack.c.h.b16 %v2814
      %v2906 = vunpack.c.l.b16 %v2815
      %v2907 = vunpack.c.h.b16 %v2815
      %v2908 = vunpack.c.l.b16 %v2816
      %v2909 = vunpack.c.h.b16 %v2816
      %v2910 = vunpack.c.l.b16 %v2817
      %v2911 = vunpack.c.h.b16 %v2817
      %v2912 = vunpack.c.l.b16 %v2818
      %v2913 = vunpack.c.h.b16 %v2818
      %v2914 = vunpack.c.l.b16 %v2819
      %v2915 = vunpack.c.h.b16 %v2819
      %v2916 = vpack.c.b16 %v2860, %v2852
      %v2917 = vpack.c.b16 %v2861, %v2853
      %v2918 = vpack.c.b16 %v2862, %v2854
      %v2919 = vpack.c.b16 %v2863, %v2855
      %v2920 = vpack.c.b16 %v2864, %v2856
      %v2921 = vpack.c.b16 %v2865, %v2857
      %v2922 = vpack.c.b16 %v2866, %v2858
      %v2923 = vpack.c.b16 %v2867, %v2859
      %v2924 = vpack.c.b16 %v2876, %v2868
      %v2925 = vpack.c.b16 %v2877, %v2869
      %v2926 = vpack.c.b16 %v2878, %v2870
      %v2927 = vpack.c.b16 %v2879, %v2871
      %v2928 = vpack.c.b16 %v2880, %v2872
      %v2929 = vpack.c.b16 %v2881, %v2873
      %v2930 = vpack.c.b16 %v2882, %v2874
      %v2931 = vpack.c.b16 %v2883, %v2875
      %v2932 = vpack.c.b16 %v2892, %v2884
      %v2933 = vpack.c.b16 %v2893, %v2885
      %v2934 = vpack.c.b16 %v2894, %v2886
      %v2935 = vpack.c.b16 %v2895, %v2887
      %v2936 = vpack.c.b16 %v2896, %v2888
      %v2937 = vpack.c.b16 %v2897, %v2889
      %v2938 = vpack.c.b16 %v2898, %v2890
      %v2939 = vpack.c.b16 %v2899, %v2891
      %v2940 = vpack.c.b16 %v2908, %v2900
      %v2941 = vpack.c.b16 %v2909, %v2901
      %v2942 = vpack.c.b16 %v2910, %v2902
      %v2943 = vpack.c.b16 %v2911, %v2903
      %v2944 = vpack.c.b16 %v2912, %v2904
      %v2945 = vpack.c.b16 %v2913, %v2905
      %v2946 = vpack.c.b16 %v2914, %v2906
      %v2947 = vpack.c.b16 %v2915, %v2907
      %v2981 = vsel %vm622, %v2786, 0
      %2983 = vmatprep.subr.bf16.mxu0 0
      %2984 = vmatpush1.bf16.msra.mxu0 0
      %2985 = vmatprep.subr.bf16.mxu0 0
      %2986 = vmatpush1.bf16.msra.mxu0 0
      %2987 = vmatprep.subr.bf16.mxu0 0
      %2988 = vmatpush1.bf16.msra.mxu0 0
      %2989 = vmatprep.subr.bf16.mxu0 0
      %2990 = vmatpush1.bf16.msra.mxu0 0
      %2991 = vmatprep.subr.bf16.mxu0 %v2941
      %2992 = vmatpush1.bf16.msra.mxu0 %v2940
      %2993 = vmatprep.subr.bf16.mxu0 %v2933
      %2994 = vmatpush1.bf16.msra.mxu0 %v2932
      %2995 = vmatprep.subr.bf16.mxu0 %v2925
      %2996 = vmatpush1.bf16.msra.mxu0 %v2924
      %2997 = vmatprep.subr.bf16.mxu0 %v2917
      %2998 = vmatpush1.bf16.msra.mxu0 %v2916
      %2999 = vmatprep.subr.bf16.mxu0 0
      %3000 = vmatpush2.bf16.msra.mxu0 0
      %3001 = vmatprep.subr.bf16.mxu0 0
      %3002 = vmatpush2.bf16.msra.mxu0 0
      %3003 = vmatprep.subr.bf16.mxu0 0
      %3004 = vmatpush2.bf16.msra.mxu0 0
      %3005 = vmatprep.subr.bf16.mxu0 0
      %3006 = vmatpush2.bf16.msra.mxu0 0
      %3007 = vmatprep.subr.bf16.mxu0 0
      %3008 = vmatpush2.bf16.msra.mxu0 0
      %3009 = vmatprep.subr.bf16.mxu0 0
      %3010 = vmatpush2.bf16.msra.mxu0 0
      %3011 = vmatprep.subr.bf16.mxu0 0
      %3012 = vmatpush2.bf16.msra.mxu0 0
      %3013 = vmatprep.subr.bf16.mxu0 0
      %3014 = vmatpush2.bf16.msra.mxu0 0
      %3015 = vmatprep.mubr.bf16.mxu0 0
      %3016 = vmatmul.mubr.bf16.gmra.mxu0 %v2981
      %v3017 = vpop.f32.mrf.mxu0
      %v3018 = vadd.f32 0.0, %v3017
      %v3019 = vpop.f32.mrf.mxu0
      %v3020 = vadd.f32 0.0, %v3019
      %v3021 = vpop.f32.mrf.mxu0
      %v3022 = vpop.f32.mrf.mxu0
      %3023 = vdwg.mxu0
      %3024 = vmatprep.subr.bf16.mxu0 0
      %3025 = vmatpush1.bf16.msra.mxu0 0
      %3026 = vmatprep.subr.bf16.mxu0 0
      %3027 = vmatpush1.bf16.msra.mxu0 0
      %3028 = vmatprep.subr.bf16.mxu0 0
      %3029 = vmatpush1.bf16.msra.mxu0 0
      %3030 = vmatprep.subr.bf16.mxu0 0
      %3031 = vmatpush1.bf16.msra.mxu0 0
      %3032 = vmatprep.subr.bf16.mxu0 %v2943
      %3033 = vmatpush1.bf16.msra.mxu0 %v2942
      %3034 = vmatprep.subr.bf16.mxu0 %v2935
      %3035 = vmatpush1.bf16.msra.mxu0 %v2934
      %3036 = vmatprep.subr.bf16.mxu0 %v2927
      %3037 = vmatpush1.bf16.msra.mxu0 %v2926
      %3038 = vmatprep.subr.bf16.mxu0 %v2919
      %3039 = vmatpush1.bf16.msra.mxu0 %v2918
      %3040 = vmatprep.subr.bf16.mxu0 0
      %3041 = vmatpush2.bf16.msra.mxu0 0
      %3042 = vmatprep.subr.bf16.mxu0 0
      %3043 = vmatpush2.bf16.msra.mxu0 0
      %3044 = vmatprep.subr.bf16.mxu0 0
      %3045 = vmatpush2.bf16.msra.mxu0 0
      %3046 = vmatprep.subr.bf16.mxu0 0
      %3047 = vmatpush2.bf16.msra.mxu0 0
      %3048 = vmatprep.subr.bf16.mxu0 0
      %3049 = vmatpush2.bf16.msra.mxu0 0
      %3050 = vmatprep.subr.bf16.mxu0 0
      %3051 = vmatpush2.bf16.msra.mxu0 0
      %3052 = vmatprep.subr.bf16.mxu0 0
      %3053 = vmatpush2.bf16.msra.mxu0 0
      %3054 = vmatprep.subr.bf16.mxu0 0
      %3055 = vmatpush2.bf16.msra.mxu0 0
      %3056 = vmatprep.mubr.bf16.mxu0 0
      %3057 = vmatmul.mubr.bf16.gmra.mxu0 %v2981
      %v3058 = vpop.f32.mrf.mxu0
      %v3059 = vadd.f32 0.0, %v3058
      %v3060 = vpop.f32.mrf.mxu0
      %v3061 = vadd.f32 0.0, %v3060
      %v3062 = vpop.f32.mrf.mxu0
      %v3063 = vpop.f32.mrf.mxu0
      %3064 = vdwg.mxu0
      %3065 = vmatprep.subr.bf16.mxu0 0
      %3066 = vmatpush1.bf16.msra.mxu0 0
      %3067 = vmatprep.subr.bf16.mxu0 0
      %3068 = vmatpush1.bf16.msra.mxu0 0
      %3069 = vmatprep.subr.bf16.mxu0 0
      %3070 = vmatpush1.bf16.msra.mxu0 0
      %3071 = vmatprep.subr.bf16.mxu0 0
      %3072 = vmatpush1.bf16.msra.mxu0 0
      %3073 = vmatprep.subr.bf16.mxu0 %v2945
      %3074 = vmatpush1.bf16.msra.mxu0 %v2944
      %3075 = vmatprep.subr.bf16.mxu0 %v2937
      %3076 = vmatpush1.bf16.msra.mxu0 %v2936
      %3077 = vmatprep.subr.bf16.mxu0 %v2929
      %3078 = vmatpush1.bf16.msra.mxu0 %v2928
      %3079 = vmatprep.subr.bf16.mxu0 %v2921
      %3080 = vmatpush1.bf16.msra.mxu0 %v2920
      %3081 = vmatprep.subr.bf16.mxu0 0
      %3082 = vmatpush2.bf16.msra.mxu0 0
      %3083 = vmatprep.subr.bf16.mxu0 0
      %3084 = vmatpush2.bf16.msra.mxu0 0
      %3085 = vmatprep.subr.bf16.mxu0 0
      %3086 = vmatpush2.bf16.msra.mxu0 0
      %3087 = vmatprep.subr.bf16.mxu0 0
      %3088 = vmatpush2.bf16.msra.mxu0 0
      %3089 = vmatprep.subr.bf16.mxu0 0
      %3090 = vmatpush2.bf16.msra.mxu0 0
      %3091 = vmatprep.subr.bf16.mxu0 0
      %3092 = vmatpush2.bf16.msra.mxu0 0
      %3093 = vmatprep.subr.bf16.mxu0 0
      %3094 = vmatpush2.bf16.msra.mxu0 0
      %3095 = vmatprep.subr.bf16.mxu0 0
      %3096 = vmatpush2.bf16.msra.mxu0 0
      %3097 = vmatprep.mubr.bf16.mxu0 0
      %3098 = vmatmul.mubr.bf16.gmra.mxu0 %v2981
      %v3099 = vpop.f32.mrf.mxu0
      %v3100 = vadd.f32 0.0, %v3099
      %v3101 = vpop.f32.mrf.mxu0
      %v3102 = vadd.f32 0.0, %v3101
      %v3103 = vpop.f32.mrf.mxu0
      %v3104 = vpop.f32.mrf.mxu0
      %3105 = vdwg.mxu0
      %3106 = vmatprep.subr.bf16.mxu0 0
      %3107 = vmatpush1.bf16.msra.mxu0 0
      %3108 = vmatprep.subr.bf16.mxu0 0
      %3109 = vmatpush1.bf16.msra.mxu0 0
      %3110 = vmatprep.subr.bf16.mxu0 0
      %3111 = vmatpush1.bf16.msra.mxu0 0
      %3112 = vmatprep.subr.bf16.mxu0 0
      %3113 = vmatpush1.bf16.msra.mxu0 0
      %3114 = vmatprep.subr.bf16.mxu0 %v2947
      %3115 = vmatpush1.bf16.msra.mxu0 %v2946
      %3116 = vmatprep.subr.bf16.mxu0 %v2939
      %3117 = vmatpush1.bf16.msra.mxu0 %v2938
      %3118 = vmatprep.subr.bf16.mxu0 %v2931
      %3119 = vmatpush1.bf16.msra.mxu0 %v2930
      %3120 = vmatprep.subr.bf16.mxu0 %v2923
      %3121 = vmatpush1.bf16.msra.mxu0 %v2922
      %3122 = vmatprep.subr.bf16.mxu0 0
      %3123 = vmatpush2.bf16.msra.mxu0 0
      %3124 = vmatprep.subr.bf16.mxu0 0
      %3125 = vmatpush2.bf16.msra.mxu0 0
      %3126 = vmatprep.subr.bf16.mxu0 0
      %3127 = vmatpush2.bf16.msra.mxu0 0
      %3128 = vmatprep.subr.bf16.mxu0 0
      %3129 = vmatpush2.bf16.msra.mxu0 0
      %3130 = vmatprep.subr.bf16.mxu0 0
      %3131 = vmatpush2.bf16.msra.mxu0 0
      %3132 = vmatprep.subr.bf16.mxu0 0
      %3133 = vmatpush2.bf16.msra.mxu0 0
      %3134 = vmatprep.subr.bf16.mxu0 0
      %3135 = vmatpush2.bf16.msra.mxu0 0
      %3136 = vmatprep.subr.bf16.mxu0 0
      %3137 = vmatpush2.bf16.msra.mxu0 0
      %3138 = vmatprep.mubr.bf16.mxu0 0
      %3139 = vmatmul.mubr.bf16.gmra.mxu0 %v2981
      %v3140 = vpop.f32.mrf.mxu0
      %v3141 = vadd.f32 0.0, %v3140
      %v3142 = vpop.f32.mrf.mxu0
      %v3143 = vadd.f32 0.0, %v3142
      %v3144 = vpop.f32.mrf.mxu0
      %v3145 = vpop.f32.mrf.mxu0
      %3146 = vdwg.mxu0
      %v3147 = vadd.f32 %v2633, %v3018
      %v3148 = vadd.f32 %v2634, %v3020
      %v3149 = vadd.f32 %v2635, %v3059
      %v3150 = vadd.f32 %v2636, %v3061
      %v3151 = vadd.f32 %v2637, %v3100
      %v3152 = vadd.f32 %v2638, %v3102
      %v3153 = vadd.f32 %v2639, %v3141
      %v3154 = vadd.f32 %v2640, %v3143
      %s3155 = scalar_lea.vmem %s285, 100
      %v3156 = vld [vmem:[%s3155] sm:$0xff]
      %v3157 = vld [vmem:[%s3155 + $0x8] sm:$0xff]
      %v3158 = vld [vmem:[%s3155 + $0x10] sm:$0xf]
      %v3162 = vunpack.c.l.b16 %v3156
      %v3163 = vunpack.c.h.b16 %v3156
      %v3164 = vunpack.c.l.b16 %v3157
      %v3165 = vunpack.c.h.b16 %v3157
      %v3166 = vunpack.c.l.b16 %v3158
      %v3167 = vpack.c.b16 %v3162, %v3162
      %v3168 = vpack.c.b16 %v3163, %v3163
      %v3169 = vpack.c.b16 %v3164, %v3164
      %v3170 = vpack.c.b16 %v3165, %v3165
      %v3171 = vpack.c.b16 %v3166, %v3166
      %v3177 = vsel %vm622, %v3171, 0
      %3179 = vmatprep.subr.bf16.mxu0 0
      %3180 = vmatpush1.bf16.msra.mxu0 %v557
      %3181 = vmatprep.subr.bf16.mxu0 0
      %3182 = vmatpush1.bf16.msra.mxu0 %v556
      %3183 = vmatprep.subr.bf16.mxu0 0
      %3184 = vmatpush1.bf16.msra.mxu0 %v555
      %3185 = vmatprep.subr.bf16.mxu0 0
      %3186 = vmatpush1.bf16.msra.mxu0 %v554
      %3187 = vmatprep.subr.bf16.mxu0 0
      %3188 = vmatpush1.bf16.msra.mxu0 %v553
      %3189 = vmatprep.subr.bf16.mxu0 0
      %3190 = vmatpush1.bf16.msra.mxu0 %v552
      %3191 = vmatprep.subr.bf16.mxu0 0
      %3192 = vmatpush1.bf16.msra.mxu0 %v551
      %3193 = vmatprep.subr.bf16.mxu0 0
      %3194 = vmatpush1.bf16.msra.mxu0 %v550
      %3195 = vmatprep.subr.bf16.mxu0 0
      %3196 = vmatpush2.bf16.msra.mxu0 %v565
      %3197 = vmatprep.subr.bf16.mxu0 0
      %3198 = vmatpush2.bf16.msra.mxu0 %v564
      %3199 = vmatprep.subr.bf16.mxu0 0
      %3200 = vmatpush2.bf16.msra.mxu0 %v563
      %3201 = vmatprep.subr.bf16.mxu0 0
      %3202 = vmatpush2.bf16.msra.mxu0 %v562
      %3203 = vmatprep.subr.bf16.mxu0 0
      %3204 = vmatpush2.bf16.msra.mxu0 %v561
      %3205 = vmatprep.subr.bf16.mxu0 0
      %3206 = vmatpush2.bf16.msra.mxu0 %v560
      %3207 = vmatprep.subr.bf16.mxu0 0
      %3208 = vmatpush2.bf16.msra.mxu0 %v559
      %3209 = vmatprep.subr.bf16.mxu0 0
      %3210 = vmatpush2.bf16.msra.mxu0 %v558
      %3211 = vmatprep.mubr.bf16.mxu0 %v3168
      %3212 = vmatmul.mubr.bf16.gmra.mxu0 %v3167
      %v3213 = vpop.f32.mrf.mxu0
      %v3214 = vadd.f32 %v387, %v3213
      %v3215 = vpop.f32.mrf.mxu0
      %v3216 = vpop.f32.mrf.mxu0
      %v3217 = vpop.f32.mrf.mxu0
      %3218 = vdwg.mxu0
      %3219 = vmatprep.subr.bf16.mxu0 0
      %3220 = vmatpush1.bf16.msra.mxu0 %v573
      %3221 = vmatprep.subr.bf16.mxu0 0
      %3222 = vmatpush1.bf16.msra.mxu0 %v572
      %3223 = vmatprep.subr.bf16.mxu0 0
      %3224 = vmatpush1.bf16.msra.mxu0 %v571
      %3225 = vmatprep.subr.bf16.mxu0 0
      %3226 = vmatpush1.bf16.msra.mxu0 %v570
      %3227 = vmatprep.subr.bf16.mxu0 0
      %3228 = vmatpush1.bf16.msra.mxu0 %v569
      %3229 = vmatprep.subr.bf16.mxu0 0
      %3230 = vmatpush1.bf16.msra.mxu0 %v568
      %3231 = vmatprep.subr.bf16.mxu0 0
      %3232 = vmatpush1.bf16.msra.mxu0 %v567
      %3233 = vmatprep.subr.bf16.mxu0 0
      %3234 = vmatpush1.bf16.msra.mxu0 %v566
      %3235 = vmatprep.subr.bf16.mxu0 0
      %3236 = vmatpush2.bf16.msra.mxu0 %v581
      %3237 = vmatprep.subr.bf16.mxu0 0
      %3238 = vmatpush2.bf16.msra.mxu0 %v580
      %3239 = vmatprep.subr.bf16.mxu0 0
      %3240 = vmatpush2.bf16.msra.mxu0 %v579
      %3241 = vmatprep.subr.bf16.mxu0 0
      %3242 = vmatpush2.bf16.msra.mxu0 %v578
      %3243 = vmatprep.subr.bf16.mxu0 0
      %3244 = vmatpush2.bf16.msra.mxu0 %v577
      %3245 = vmatprep.subr.bf16.mxu0 0
      %3246 = vmatpush2.bf16.msra.mxu0 %v576
      %3247 = vmatprep.subr.bf16.mxu0 0
      %3248 = vmatpush2.bf16.msra.mxu0 %v575
      %3249 = vmatprep.subr.bf16.mxu0 0
      %3250 = vmatpush2.bf16.msra.mxu0 %v574
      %3251 = vmatprep.mubr.bf16.mxu0 %v3170
      %3252 = vmatmul.mubr.bf16.gmra.mxu0 %v3169
      %v3253 = vpop.f32.mrf.mxu0
      %v3254 = vadd.f32 %v3214, %v3253
      %v3255 = vpop.f32.mrf.mxu0
      %v3256 = vpop.f32.mrf.mxu0
      %v3257 = vpop.f32.mrf.mxu0
      %3258 = vdwg.mxu0
      %3259 = vmatprep.subr.bf16.mxu0 0
      %3260 = vmatpush1.bf16.msra.mxu0 0
      %3261 = vmatprep.subr.bf16.mxu0 0
      %3262 = vmatpush1.bf16.msra.mxu0 0
      %3263 = vmatprep.subr.bf16.mxu0 0
      %3264 = vmatpush1.bf16.msra.mxu0 0
      %3265 = vmatprep.subr.bf16.mxu0 0
      %3266 = vmatpush1.bf16.msra.mxu0 0
      %3267 = vmatprep.subr.bf16.mxu0 0
      %3268 = vmatpush1.bf16.msra.mxu0 %v585
      %3269 = vmatprep.subr.bf16.mxu0 0
      %3270 = vmatpush1.bf16.msra.mxu0 %v584
      %3271 = vmatprep.subr.bf16.mxu0 0
      %3272 = vmatpush1.bf16.msra.mxu0 %v583
      %3273 = vmatprep.subr.bf16.mxu0 0
      %3274 = vmatpush1.bf16.msra.mxu0 %v582
      %3275 = vmatprep.subr.bf16.mxu0 0
      %3276 = vmatpush2.bf16.msra.mxu0 0
      %3277 = vmatprep.subr.bf16.mxu0 0
      %3278 = vmatpush2.bf16.msra.mxu0 0
      %3279 = vmatprep.subr.bf16.mxu0 0
      %3280 = vmatpush2.bf16.msra.mxu0 0
      %3281 = vmatprep.subr.bf16.mxu0 0
      %3282 = vmatpush2.bf16.msra.mxu0 0
      %3283 = vmatprep.subr.bf16.mxu0 0
      %3284 = vmatpush2.bf16.msra.mxu0 0
      %3285 = vmatprep.subr.bf16.mxu0 0
      %3286 = vmatpush2.bf16.msra.mxu0 0
      %3287 = vmatprep.subr.bf16.mxu0 0
      %3288 = vmatpush2.bf16.msra.mxu0 0
      %3289 = vmatprep.subr.bf16.mxu0 0
      %3290 = vmatpush2.bf16.msra.mxu0 0
      %3291 = vmatprep.mubr.bf16.mxu0 0
      %3292 = vmatmul.mubr.bf16.gmra.mxu0 %v3177
      %v3293 = vpop.f32.mrf.mxu0
      %v3294 = vadd.f32 %v3254, %v3293
      %v3295 = vpop.f32.mrf.mxu0
      %v3296 = vpop.f32.mrf.mxu0
      %v3297 = vpop.f32.mrf.mxu0
      %3298 = vdwg.mxu0
      %v3299 = vmax.f32 %v3294, 0.0
      %v3300 = vpack.c.bf16 %v3299, %v3299
      %s3301 = scalar_lea.vmem %s292, 1280
      %v3302 = vld [vmem:[%s3301] sm:$0xff]
      %v3303 = vld [vmem:[%s3301 + $0x8] sm:$0xff]
      %v3304 = vld [vmem:[%s3301 + $0x10] sm:$0xff]
      %v3305 = vld [vmem:[%s3301 + $0x18] sm:$0xff]
      %v3306 = vld [vmem:[%s3301 + $0x20] sm:$0xff]
      %v3307 = vld [vmem:[%s3301 + $0x28] sm:$0xff]
      %v3308 = vld [vmem:[%s3301 + $0x30] sm:$0xff]
      %v3309 = vld [vmem:[%s3301 + $0x38] sm:$0xff]
      %v3310 = vld [vmem:[%s3301 + $0x40] sm:$0xff]
      %v3311 = vld [vmem:[%s3301 + $0x48] sm:$0xff]
      %v3312 = vld [vmem:[%s3301 + $0x50] sm:$0xff]
      %v3313 = vld [vmem:[%s3301 + $0x58] sm:$0xff]
      %v3314 = vld [vmem:[%s3301 + $0x60] sm:$0xff]
      %v3315 = vld [vmem:[%s3301 + $0x68] sm:$0xff]
      %v3316 = vld [vmem:[%s3301 + $0x70] sm:$0xff]
      %v3317 = vld [vmem:[%s3301 + $0x78] sm:$0xff]
      %v3318 = vld [vmem:[%s3301 + $0x80] sm:$0xff]
      %v3319 = vld [vmem:[%s3301 + $0x88] sm:$0xff]
      %v3320 = vld [vmem:[%s3301 + $0x90] sm:$0xff]
      %v3321 = vld [vmem:[%s3301 + $0x98] sm:$0xff]
      %v3322 = vld [vmem:[%s3301 + $0xa0] sm:$0xff]
      %v3323 = vld [vmem:[%s3301 + $0xa8] sm:$0xff]
      %v3324 = vld [vmem:[%s3301 + $0xb0] sm:$0xff]
      %v3325 = vld [vmem:[%s3301 + $0xb8] sm:$0xff]
      %v3326 = vld [vmem:[%s3301 + $0xc0] sm:$0xff]
      %v3327 = vld [vmem:[%s3301 + $0xc8] sm:$0xff]
      %v3328 = vld [vmem:[%s3301 + $0xd0] sm:$0xff]
      %v3329 = vld [vmem:[%s3301 + $0xd8] sm:$0xff]
      %v3330 = vld [vmem:[%s3301 + $0xe0] sm:$0xff]
      %v3331 = vld [vmem:[%s3301 + $0xe8] sm:$0xff]
      %v3332 = vld [vmem:[%s3301 + $0xf0] sm:$0xff]
      %v3333 = vld [vmem:[%s3301 + $0xf8] sm:$0xff]
      %v3366 = vunpack.c.l.b16 %v3302
      %v3367 = vunpack.c.h.b16 %v3302
      %v3368 = vunpack.c.l.b16 %v3303
      %v3369 = vunpack.c.h.b16 %v3303
      %v3370 = vunpack.c.l.b16 %v3304
      %v3371 = vunpack.c.h.b16 %v3304
      %v3372 = vunpack.c.l.b16 %v3305
      %v3373 = vunpack.c.h.b16 %v3305
      %v3374 = vunpack.c.l.b16 %v3306
      %v3375 = vunpack.c.h.b16 %v3306
      %v3376 = vunpack.c.l.b16 %v3307
      %v3377 = vunpack.c.h.b16 %v3307
      %v3378 = vunpack.c.l.b16 %v3308
      %v3379 = vunpack.c.h.b16 %v3308
      %v3380 = vunpack.c.l.b16 %v3309
      %v3381 = vunpack.c.h.b16 %v3309
      %v3382 = vunpack.c.l.b16 %v3310
      %v3383 = vunpack.c.h.b16 %v3310
      %v3384 = vunpack.c.l.b16 %v3311
      %v3385 = vunpack.c.h.b16 %v3311
      %v3386 = vunpack.c.l.b16 %v3312
      %v3387 = vunpack.c.h.b16 %v3312
      %v3388 = vunpack.c.l.b16 %v3313
      %v3389 = vunpack.c.h.b16 %v3313
      %v3390 = vunpack.c.l.b16 %v3314
      %v3391 = vunpack.c.h.b16 %v3314
      %v3392 = vunpack.c.l.b16 %v3315
      %v3393 = vunpack.c.h.b16 %v3315
      %v3394 = vunpack.c.l.b16 %v3316
      %v3395 = vunpack.c.h.b16 %v3316
      %v3396 = vunpack.c.l.b16 %v3317
      %v3397 = vunpack.c.h.b16 %v3317
      %v3398 = vunpack.c.l.b16 %v3318
      %v3399 = vunpack.c.h.b16 %v3318
      %v3400 = vunpack.c.l.b16 %v3319
      %v3401 = vunpack.c.h.b16 %v3319
      %v3402 = vunpack.c.l.b16 %v3320
      %v3403 = vunpack.c.h.b16 %v3320
      %v3404 = vunpack.c.l.b16 %v3321
      %v3405 = vunpack.c.h.b16 %v3321
      %v3406 = vunpack.c.l.b16 %v3322
      %v3407 = vunpack.c.h.b16 %v3322
      %v3408 = vunpack.c.l.b16 %v3323
      %v3409 = vunpack.c.h.b16 %v3323
      %v3410 = vunpack.c.l.b16 %v3324
      %v3411 = vunpack.c.h.b16 %v3324
      %v3412 = vunpack.c.l.b16 %v3325
      %v3413 = vunpack.c.h.b16 %v3325
      %v3414 = vunpack.c.l.b16 %v3326
      %v3415 = vunpack.c.h.b16 %v3326
      %v3416 = vunpack.c.l.b16 %v3327
      %v3417 = vunpack.c.h.b16 %v3327
      %v3418 = vunpack.c.l.b16 %v3328
      %v3419 = vunpack.c.h.b16 %v3328
      %v3420 = vunpack.c.l.b16 %v3329
      %v3421 = vunpack.c.h.b16 %v3329
      %v3422 = vunpack.c.l.b16 %v3330
      %v3423 = vunpack.c.h.b16 %v3330
      %v3424 = vunpack.c.l.b16 %v3331
      %v3425 = vunpack.c.h.b16 %v3331
      %v3426 = vunpack.c.l.b16 %v3332
      %v3427 = vunpack.c.h.b16 %v3332
      %v3428 = vunpack.c.l.b16 %v3333
      %v3429 = vunpack.c.h.b16 %v3333
      %v3430 = vpack.c.b16 %v3374, %v3366
      %v3431 = vpack.c.b16 %v3375, %v3367
      %v3432 = vpack.c.b16 %v3376, %v3368
      %v3433 = vpack.c.b16 %v3377, %v3369
      %v3434 = vpack.c.b16 %v3378, %v3370
      %v3435 = vpack.c.b16 %v3379, %v3371
      %v3436 = vpack.c.b16 %v3380, %v3372
      %v3437 = vpack.c.b16 %v3381, %v3373
      %v3438 = vpack.c.b16 %v3390, %v3382
      %v3439 = vpack.c.b16 %v3391, %v3383
      %v3440 = vpack.c.b16 %v3392, %v3384
      %v3441 = vpack.c.b16 %v3393, %v3385
      %v3442 = vpack.c.b16 %v3394, %v3386
      %v3443 = vpack.c.b16 %v3395, %v3387
      %v3444 = vpack.c.b16 %v3396, %v3388
      %v3445 = vpack.c.b16 %v3397, %v3389
      %v3446 = vpack.c.b16 %v3406, %v3398
      %v3447 = vpack.c.b16 %v3407, %v3399
      %v3448 = vpack.c.b16 %v3408, %v3400
      %v3449 = vpack.c.b16 %v3409, %v3401
      %v3450 = vpack.c.b16 %v3410, %v3402
      %v3451 = vpack.c.b16 %v3411, %v3403
      %v3452 = vpack.c.b16 %v3412, %v3404
      %v3453 = vpack.c.b16 %v3413, %v3405
      %v3454 = vpack.c.b16 %v3422, %v3414
      %v3455 = vpack.c.b16 %v3423, %v3415
      %v3456 = vpack.c.b16 %v3424, %v3416
      %v3457 = vpack.c.b16 %v3425, %v3417
      %v3458 = vpack.c.b16 %v3426, %v3418
      %v3459 = vpack.c.b16 %v3427, %v3419
      %v3460 = vpack.c.b16 %v3428, %v3420
      %v3461 = vpack.c.b16 %v3429, %v3421
      %v3495 = vsel %vm622, %v3300, 0
      %3497 = vmatprep.subr.bf16.mxu0 0
      %3498 = vmatpush1.bf16.msra.mxu0 0
      %3499 = vmatprep.subr.bf16.mxu0 0
      %3500 = vmatpush1.bf16.msra.mxu0 0
      %3501 = vmatprep.subr.bf16.mxu0 0
      %3502 = vmatpush1.bf16.msra.mxu0 0
      %3503 = vmatprep.subr.bf16.mxu0 0
      %3504 = vmatpush1.bf16.msra.mxu0 0
      %3505 = vmatprep.subr.bf16.mxu0 %v3455
      %3506 = vmatpush1.bf16.msra.mxu0 %v3454
      %3507 = vmatprep.subr.bf16.mxu0 %v3447
      %3508 = vmatpush1.bf16.msra.mxu0 %v3446
      %3509 = vmatprep.subr.bf16.mxu0 %v3439
      %3510 = vmatpush1.bf16.msra.mxu0 %v3438
      %3511 = vmatprep.subr.bf16.mxu0 %v3431
      %3512 = vmatpush1.bf16.msra.mxu0 %v3430
      %3513 = vmatprep.subr.bf16.mxu0 0
      %3514 = vmatpush2.bf16.msra.mxu0 0
      %3515 = vmatprep.subr.bf16.mxu0 0
      %3516 = vmatpush2.bf16.msra.mxu0 0
      %3517 = vmatprep.subr.bf16.mxu0 0
      %3518 = vmatpush2.bf16.msra.mxu0 0
      %3519 = vmatprep.subr.bf16.mxu0 0
      %3520 = vmatpush2.bf16.msra.mxu0 0
      %3521 = vmatprep.subr.bf16.mxu0 0
      %3522 = vmatpush2.bf16.msra.mxu0 0
      %3523 = vmatprep.subr.bf16.mxu0 0
      %3524 = vmatpush2.bf16.msra.mxu0 0
      %3525 = vmatprep.subr.bf16.mxu0 0
      %3526 = vmatpush2.bf16.msra.mxu0 0
      %3527 = vmatprep.subr.bf16.mxu0 0
      %3528 = vmatpush2.bf16.msra.mxu0 0
      %3529 = vmatprep.mubr.bf16.mxu0 0
      %3530 = vmatmul.mubr.bf16.gmra.mxu0 %v3495
      %v3531 = vpop.f32.mrf.mxu0
      %v3532 = vadd.f32 0.0, %v3531
      %v3533 = vpop.f32.mrf.mxu0
      %v3534 = vadd.f32 0.0, %v3533
      %v3535 = vpop.f32.mrf.mxu0
      %v3536 = vpop.f32.mrf.mxu0
      %3537 = vdwg.mxu0
      %3538 = vmatprep.subr.bf16.mxu0 0
      %3539 = vmatpush1.bf16.msra.mxu0 0
      %3540 = vmatprep.subr.bf16.mxu0 0
      %3541 = vmatpush1.bf16.msra.mxu0 0
      %3542 = vmatprep.subr.bf16.mxu0 0
      %3543 = vmatpush1.bf16.msra.mxu0 0
      %3544 = vmatprep.subr.bf16.mxu0 0
      %3545 = vmatpush1.bf16.msra.mxu0 0
      %3546 = vmatprep.subr.bf16.mxu0 %v3457
      %3547 = vmatpush1.bf16.msra.mxu0 %v3456
      %3548 = vmatprep.subr.bf16.mxu0 %v3449
      %3549 = vmatpush1.bf16.msra.mxu0 %v3448
      %3550 = vmatprep.subr.bf16.mxu0 %v3441
      %3551 = vmatpush1.bf16.msra.mxu0 %v3440
      %3552 = vmatprep.subr.bf16.mxu0 %v3433
      %3553 = vmatpush1.bf16.msra.mxu0 %v3432
      %3554 = vmatprep.subr.bf16.mxu0 0
      %3555 = vmatpush2.bf16.msra.mxu0 0
      %3556 = vmatprep.subr.bf16.mxu0 0
      %3557 = vmatpush2.bf16.msra.mxu0 0
      %3558 = vmatprep.subr.bf16.mxu0 0
      %3559 = vmatpush2.bf16.msra.mxu0 0
      %3560 = vmatprep.subr.bf16.mxu0 0
      %3561 = vmatpush2.bf16.msra.mxu0 0
      %3562 = vmatprep.subr.bf16.mxu0 0
      %3563 = vmatpush2.bf16.msra.mxu0 0
      %3564 = vmatprep.subr.bf16.mxu0 0
      %3565 = vmatpush2.bf16.msra.mxu0 0
      %3566 = vmatprep.subr.bf16.mxu0 0
      %3567 = vmatpush2.bf16.msra.mxu0 0
      %3568 = vmatprep.subr.bf16.mxu0 0
      %3569 = vmatpush2.bf16.msra.mxu0 0
      %3570 = vmatprep.mubr.bf16.mxu0 0
      %3571 = vmatmul.mubr.bf16.gmra.mxu0 %v3495
      %v3572 = vpop.f32.mrf.mxu0
      %v3573 = vadd.f32 0.0, %v3572
      %v3574 = vpop.f32.mrf.mxu0
      %v3575 = vadd.f32 0.0, %v3574
      %v3576 = vpop.f32.mrf.mxu0
      %v3577 = vpop.f32.mrf.mxu0
      %3578 = vdwg.mxu0
      %3579 = vmatprep.subr.bf16.mxu0 0
      %3580 = vmatpush1.bf16.msra.mxu0 0
      %3581 = vmatprep.subr.bf16.mxu0 0
      %3582 = vmatpush1.bf16.msra.mxu0 0
      %3583 = vmatprep.subr.bf16.mxu0 0
      %3584 = vmatpush1.bf16.msra.mxu0 0
      %3585 = vmatprep.subr.bf16.mxu0 0
      %3586 = vmatpush1.bf16.msra.mxu0 0
      %3587 = vmatprep.subr.bf16.mxu0 %v3459
      %3588 = vmatpush1.bf16.msra.mxu0 %v3458
      %3589 = vmatprep.subr.bf16.mxu0 %v3451
      %3590 = vmatpush1.bf16.msra.mxu0 %v3450
      %3591 = vmatprep.subr.bf16.mxu0 %v3443
      %3592 = vmatpush1.bf16.msra.mxu0 %v3442
      %3593 = vmatprep.subr.bf16.mxu0 %v3435
      %3594 = vmatpush1.bf16.msra.mxu0 %v3434
      %3595 = vmatprep.subr.bf16.mxu0 0
      %3596 = vmatpush2.bf16.msra.mxu0 0
      %3597 = vmatprep.subr.bf16.mxu0 0
      %3598 = vmatpush2.bf16.msra.mxu0 0
      %3599 = vmatprep.subr.bf16.mxu0 0
      %3600 = vmatpush2.bf16.msra.mxu0 0
      %3601 = vmatprep.subr.bf16.mxu0 0
      %3602 = vmatpush2.bf16.msra.mxu0 0
      %3603 = vmatprep.subr.bf16.mxu0 0
      %3604 = vmatpush2.bf16.msra.mxu0 0
      %3605 = vmatprep.subr.bf16.mxu0 0
      %3606 = vmatpush2.bf16.msra.mxu0 0
      %3607 = vmatprep.subr.bf16.mxu0 0
      %3608 = vmatpush2.bf16.msra.mxu0 0
      %3609 = vmatprep.subr.bf16.mxu0 0
      %3610 = vmatpush2.bf16.msra.mxu0 0
      %3611 = vmatprep.mubr.bf16.mxu0 0
      %3612 = vmatmul.mubr.bf16.gmra.mxu0 %v3495
      %v3613 = vpop.f32.mrf.mxu0
      %v3614 = vadd.f32 0.0, %v3613
      %v3615 = vpop.f32.mrf.mxu0
      %v3616 = vadd.f32 0.0, %v3615
      %v3617 = vpop.f32.mrf.mxu0
      %v3618 = vpop.f32.mrf.mxu0
      %3619 = vdwg.mxu0
      %3620 = vmatprep.subr.bf16.mxu0 0
      %3621 = vmatpush1.bf16.msra.mxu0 0
      %3622 = vmatprep.subr.bf16.mxu0 0
      %3623 = vmatpush1.bf16.msra.mxu0 0
      %3624 = vmatprep.subr.bf16.mxu0 0
      %3625 = vmatpush1.bf16.msra.mxu0 0
      %3626 = vmatprep.subr.bf16.mxu0 0
      %3627 = vmatpush1.bf16.msra.mxu0 0
      %3628 = vmatprep.subr.bf16.mxu0 %v3461
      %3629 = vmatpush1.bf16.msra.mxu0 %v3460
      %3630 = vmatprep.subr.bf16.mxu0 %v3453
      %3631 = vmatpush1.bf16.msra.mxu0 %v3452
      %3632 = vmatprep.subr.bf16.mxu0 %v3445
      %3633 = vmatpush1.bf16.msra.mxu0 %v3444
      %3634 = vmatprep.subr.bf16.mxu0 %v3437
      %3635 = vmatpush1.bf16.msra.mxu0 %v3436
      %3636 = vmatprep.subr.bf16.mxu0 0
      %3637 = vmatpush2.bf16.msra.mxu0 0
      %3638 = vmatprep.subr.bf16.mxu0 0
      %3639 = vmatpush2.bf16.msra.mxu0 0
      %3640 = vmatprep.subr.bf16.mxu0 0
      %3641 = vmatpush2.bf16.msra.mxu0 0
      %3642 = vmatprep.subr.bf16.mxu0 0
      %3643 = vmatpush2.bf16.msra.mxu0 0
      %3644 = vmatprep.subr.bf16.mxu0 0
      %3645 = vmatpush2.bf16.msra.mxu0 0
      %3646 = vmatprep.subr.bf16.mxu0 0
      %3647 = vmatpush2.bf16.msra.mxu0 0
      %3648 = vmatprep.subr.bf16.mxu0 0
      %3649 = vmatpush2.bf16.msra.mxu0 0
      %3650 = vmatprep.subr.bf16.mxu0 0
      %3651 = vmatpush2.bf16.msra.mxu0 0
      %3652 = vmatprep.mubr.bf16.mxu0 0
      %3653 = vmatmul.mubr.bf16.gmra.mxu0 %v3495
      %v3654 = vpop.f32.mrf.mxu0
      %v3655 = vadd.f32 0.0, %v3654
      %v3656 = vpop.f32.mrf.mxu0
      %v3657 = vadd.f32 0.0, %v3656
      %v3658 = vpop.f32.mrf.mxu0
      %v3659 = vpop.f32.mrf.mxu0
      %3660 = vdwg.mxu0
      %v3661 = vadd.f32 %v3147, %v3532
      %v3662 = vadd.f32 %v3148, %v3534
      %v3663 = vadd.f32 %v3149, %v3573
      %v3664 = vadd.f32 %v3150, %v3575
      %v3665 = vadd.f32 %v3151, %v3614
      %v3666 = vadd.f32 %v3152, %v3616
      %v3667 = vadd.f32 %v3153, %v3655
      %v3668 = vadd.f32 %v3154, %v3657
      %s3669 = scalar_lea.vmem %s285, 120
      %v3670 = vld [vmem:[%s3669] sm:$0xff]
      %v3671 = vld [vmem:[%s3669 + $0x8] sm:$0xff]
      %v3672 = vld [vmem:[%s3669 + $0x10] sm:$0xf]
      %v3676 = vunpack.c.l.b16 %v3670
      %v3677 = vunpack.c.h.b16 %v3670
      %v3678 = vunpack.c.l.b16 %v3671
      %v3679 = vunpack.c.h.b16 %v3671
      %v3680 = vunpack.c.l.b16 %v3672
      %v3681 = vpack.c.b16 %v3676, %v3676
      %v3682 = vpack.c.b16 %v3677, %v3677
      %v3683 = vpack.c.b16 %v3678, %v3678
      %v3684 = vpack.c.b16 %v3679, %v3679
      %v3685 = vpack.c.b16 %v3680, %v3680
      %v3691 = vsel %vm622, %v3685, 0
      %3693 = vmatprep.subr.bf16.mxu0 0
      %3694 = vmatpush1.bf16.msra.mxu0 %v557
      %3695 = vmatprep.subr.bf16.mxu0 0
      %3696 = vmatpush1.bf16.msra.mxu0 %v556
      %3697 = vmatprep.subr.bf16.mxu0 0
      %3698 = vmatpush1.bf16.msra.mxu0 %v555
      %3699 = vmatprep.subr.bf16.mxu0 0
      %3700 = vmatpush1.bf16.msra.mxu0 %v554
      %3701 = vmatprep.subr.bf16.mxu0 0
      %3702 = vmatpush1.bf16.msra.mxu0 %v553
      %3703 = vmatprep.subr.bf16.mxu0 0
      %3704 = vmatpush1.bf16.msra.mxu0 %v552
      %3705 = vmatprep.subr.bf16.mxu0 0
      %3706 = vmatpush1.bf16.msra.mxu0 %v551
      %3707 = vmatprep.subr.bf16.mxu0 0
      %3708 = vmatpush1.bf16.msra.mxu0 %v550
      %3709 = vmatprep.subr.bf16.mxu0 0
      %3710 = vmatpush2.bf16.msra.mxu0 %v565
      %3711 = vmatprep.subr.bf16.mxu0 0
      %3712 = vmatpush2.bf16.msra.mxu0 %v564
      %3713 = vmatprep.subr.bf16.mxu0 0
      %3714 = vmatpush2.bf16.msra.mxu0 %v563
      %3715 = vmatprep.subr.bf16.mxu0 0
      %3716 = vmatpush2.bf16.msra.mxu0 %v562
      %3717 = vmatprep.subr.bf16.mxu0 0
      %3718 = vmatpush2.bf16.msra.mxu0 %v561
      %3719 = vmatprep.subr.bf16.mxu0 0
      %3720 = vmatpush2.bf16.msra.mxu0 %v560
      %3721 = vmatprep.subr.bf16.mxu0 0
      %3722 = vmatpush2.bf16.msra.mxu0 %v559
      %3723 = vmatprep.subr.bf16.mxu0 0
      %3724 = vmatpush2.bf16.msra.mxu0 %v558
      %3725 = vmatprep.mubr.bf16.mxu0 %v3682
      %3726 = vmatmul.mubr.bf16.gmra.mxu0 %v3681
      %v3727 = vpop.f32.mrf.mxu0
      %v3728 = vadd.f32 %v387, %v3727
      %v3729 = vpop.f32.mrf.mxu0
      %v3730 = vpop.f32.mrf.mxu0
      %v3731 = vpop.f32.mrf.mxu0
      %3732 = vdwg.mxu0
      %3733 = vmatprep.subr.bf16.mxu0 0
      %3734 = vmatpush1.bf16.msra.mxu0 %v573
      %3735 = vmatprep.subr.bf16.mxu0 0
      %3736 = vmatpush1.bf16.msra.mxu0 %v572
      %3737 = vmatprep.subr.bf16.mxu0 0
      %3738 = vmatpush1.bf16.msra.mxu0 %v571
      %3739 = vmatprep.subr.bf16.mxu0 0
      %3740 = vmatpush1.bf16.msra.mxu0 %v570
      %3741 = vmatprep.subr.bf16.mxu0 0
      %3742 = vmatpush1.bf16.msra.mxu0 %v569
      %3743 = vmatprep.subr.bf16.mxu0 0
      %3744 = vmatpush1.bf16.msra.mxu0 %v568
      %3745 = vmatprep.subr.bf16.mxu0 0
      %3746 = vmatpush1.bf16.msra.mxu0 %v567
      %3747 = vmatprep.subr.bf16.mxu0 0
      %3748 = vmatpush1.bf16.msra.mxu0 %v566
      %3749 = vmatprep.subr.bf16.mxu0 0
      %3750 = vmatpush2.bf16.msra.mxu0 %v581
      %3751 = vmatprep.subr.bf16.mxu0 0
      %3752 = vmatpush2.bf16.msra.mxu0 %v580
      %3753 = vmatprep.subr.bf16.mxu0 0
      %3754 = vmatpush2.bf16.msra.mxu0 %v579
      %3755 = vmatprep.subr.bf16.mxu0 0
      %3756 = vmatpush2.bf16.msra.mxu0 %v578
      %3757 = vmatprep.subr.bf16.mxu0 0
      %3758 = vmatpush2.bf16.msra.mxu0 %v577
      %3759 = vmatprep.subr.bf16.mxu0 0
      %3760 = vmatpush2.bf16.msra.mxu0 %v576
      %3761 = vmatprep.subr.bf16.mxu0 0
      %3762 = vmatpush2.bf16.msra.mxu0 %v575
      %3763 = vmatprep.subr.bf16.mxu0 0
      %3764 = vmatpush2.bf16.msra.mxu0 %v574
      %3765 = vmatprep.mubr.bf16.mxu0 %v3684
      %3766 = vmatmul.mubr.bf16.gmra.mxu0 %v3683
      %v3767 = vpop.f32.mrf.mxu0
      %v3768 = vadd.f32 %v3728, %v3767
      %v3769 = vpop.f32.mrf.mxu0
      %v3770 = vpop.f32.mrf.mxu0
      %v3771 = vpop.f32.mrf.mxu0
      %3772 = vdwg.mxu0
      %3773 = vmatprep.subr.bf16.mxu0 0
      %3774 = vmatpush1.bf16.msra.mxu0 0
      %3775 = vmatprep.subr.bf16.mxu0 0
      %3776 = vmatpush1.bf16.msra.mxu0 0
      %3777 = vmatprep.subr.bf16.mxu0 0
      %3778 = vmatpush1.bf16.msra.mxu0 0
      %3779 = vmatprep.subr.bf16.mxu0 0
      %3780 = vmatpush1.bf16.msra.mxu0 0
      %3781 = vmatprep.subr.bf16.mxu0 0
      %3782 = vmatpush1.bf16.msra.mxu0 %v585
      %3783 = vmatprep.subr.bf16.mxu0 0
      %3784 = vmatpush1.bf16.msra.mxu0 %v584
      %3785 = vmatprep.subr.bf16.mxu0 0
      %3786 = vmatpush1.bf16.msra.mxu0 %v583
      %3787 = vmatprep.subr.bf16.mxu0 0
      %3788 = vmatpush1.bf16.msra.mxu0 %v582
      %3789 = vmatprep.subr.bf16.mxu0 0
      %3790 = vmatpush2.bf16.msra.mxu0 0
      %3791 = vmatprep.subr.bf16.mxu0 0
      %3792 = vmatpush2.bf16.msra.mxu0 0
      %3793 = vmatprep.subr.bf16.mxu0 0
      %3794 = vmatpush2.bf16.msra.mxu0 0
      %3795 = vmatprep.subr.bf16.mxu0 0
      %3796 = vmatpush2.bf16.msra.mxu0 0
      %3797 = vmatprep.subr.bf16.mxu0 0
      %3798 = vmatpush2.bf16.msra.mxu0 0
      %3799 = vmatprep.subr.bf16.mxu0 0
      %3800 = vmatpush2.bf16.msra.mxu0 0
      %3801 = vmatprep.subr.bf16.mxu0 0
      %3802 = vmatpush2.bf16.msra.mxu0 0
      %3803 = vmatprep.subr.bf16.mxu0 0
      %3804 = vmatpush2.bf16.msra.mxu0 0
      %3805 = vmatprep.mubr.bf16.mxu0 0
      %3806 = vmatmul.mubr.bf16.gmra.mxu0 %v3691
      %v3807 = vpop.f32.mrf.mxu0
      %v3808 = vadd.f32 %v3768, %v3807
      %v3809 = vpop.f32.mrf.mxu0
      %v3810 = vpop.f32.mrf.mxu0
      %v3811 = vpop.f32.mrf.mxu0
      %3812 = vdwg.mxu0
      %v3813 = vmax.f32 %v3808, 0.0
      %v3814 = vpack.c.bf16 %v3813, %v3813
      %s3815 = scalar_lea.vmem %s292, 1536
      %v3816 = vld [vmem:[%s3815] sm:$0xff]
      %v3817 = vld [vmem:[%s3815 + $0x8] sm:$0xff]
      %v3818 = vld [vmem:[%s3815 + $0x10] sm:$0xff]
      %v3819 = vld [vmem:[%s3815 + $0x18] sm:$0xff]
      %v3820 = vld [vmem:[%s3815 + $0x20] sm:$0xff]
      %v3821 = vld [vmem:[%s3815 + $0x28] sm:$0xff]
      %v3822 = vld [vmem:[%s3815 + $0x30] sm:$0xff]
      %v3823 = vld [vmem:[%s3815 + $0x38] sm:$0xff]
      %v3824 = vld [vmem:[%s3815 + $0x40] sm:$0xff]
      %v3825 = vld [vmem:[%s3815 + $0x48] sm:$0xff]
      %v3826 = vld [vmem:[%s3815 + $0x50] sm:$0xff]
      %v3827 = vld [vmem:[%s3815 + $0x58] sm:$0xff]
      %v3828 = vld [vmem:[%s3815 + $0x60] sm:$0xff]
      %v3829 = vld [vmem:[%s3815 + $0x68] sm:$0xff]
      %v3830 = vld [vmem:[%s3815 + $0x70] sm:$0xff]
      %v3831 = vld [vmem:[%s3815 + $0x78] sm:$0xff]
      %v3832 = vld [vmem:[%s3815 + $0x80] sm:$0xff]
      %v3833 = vld [vmem:[%s3815 + $0x88] sm:$0xff]
      %v3834 = vld [vmem:[%s3815 + $0x90] sm:$0xff]
      %v3835 = vld [vmem:[%s3815 + $0x98] sm:$0xff]
      %v3836 = vld [vmem:[%s3815 + $0xa0] sm:$0xff]
      %v3837 = vld [vmem:[%s3815 + $0xa8] sm:$0xff]
      %v3838 = vld [vmem:[%s3815 + $0xb0] sm:$0xff]
      %v3839 = vld [vmem:[%s3815 + $0xb8] sm:$0xff]
      %v3840 = vld [vmem:[%s3815 + $0xc0] sm:$0xff]
      %v3841 = vld [vmem:[%s3815 + $0xc8] sm:$0xff]
      %v3842 = vld [vmem:[%s3815 + $0xd0] sm:$0xff]
      %v3843 = vld [vmem:[%s3815 + $0xd8] sm:$0xff]
      %v3844 = vld [vmem:[%s3815 + $0xe0] sm:$0xff]
      %v3845 = vld [vmem:[%s3815 + $0xe8] sm:$0xff]
      %v3846 = vld [vmem:[%s3815 + $0xf0] sm:$0xff]
      %v3847 = vld [vmem:[%s3815 + $0xf8] sm:$0xff]
      %v3880 = vunpack.c.l.b16 %v3816
      %v3881 = vunpack.c.h.b16 %v3816
      %v3882 = vunpack.c.l.b16 %v3817
      %v3883 = vunpack.c.h.b16 %v3817
      %v3884 = vunpack.c.l.b16 %v3818
      %v3885 = vunpack.c.h.b16 %v3818
      %v3886 = vunpack.c.l.b16 %v3819
      %v3887 = vunpack.c.h.b16 %v3819
      %v3888 = vunpack.c.l.b16 %v3820
      %v3889 = vunpack.c.h.b16 %v3820
      %v3890 = vunpack.c.l.b16 %v3821
      %v3891 = vunpack.c.h.b16 %v3821
      %v3892 = vunpack.c.l.b16 %v3822
      %v3893 = vunpack.c.h.b16 %v3822
      %v3894 = vunpack.c.l.b16 %v3823
      %v3895 = vunpack.c.h.b16 %v3823
      %v3896 = vunpack.c.l.b16 %v3824
      %v3897 = vunpack.c.h.b16 %v3824
      %v3898 = vunpack.c.l.b16 %v3825
      %v3899 = vunpack.c.h.b16 %v3825
      %v3900 = vunpack.c.l.b16 %v3826
      %v3901 = vunpack.c.h.b16 %v3826
      %v3902 = vunpack.c.l.b16 %v3827
      %v3903 = vunpack.c.h.b16 %v3827
      %v3904 = vunpack.c.l.b16 %v3828
      %v3905 = vunpack.c.h.b16 %v3828
      %v3906 = vunpack.c.l.b16 %v3829
      %v3907 = vunpack.c.h.b16 %v3829
      %v3908 = vunpack.c.l.b16 %v3830
      %v3909 = vunpack.c.h.b16 %v3830
      %v3910 = vunpack.c.l.b16 %v3831
      %v3911 = vunpack.c.h.b16 %v3831
      %v3912 = vunpack.c.l.b16 %v3832
      %v3913 = vunpack.c.h.b16 %v3832
      %v3914 = vunpack.c.l.b16 %v3833
      %v3915 = vunpack.c.h.b16 %v3833
      %v3916 = vunpack.c.l.b16 %v3834
      %v3917 = vunpack.c.h.b16 %v3834
      %v3918 = vunpack.c.l.b16 %v3835
      %v3919 = vunpack.c.h.b16 %v3835
      %v3920 = vunpack.c.l.b16 %v3836
      %v3921 = vunpack.c.h.b16 %v3836
      %v3922 = vunpack.c.l.b16 %v3837
      %v3923 = vunpack.c.h.b16 %v3837
      %v3924 = vunpack.c.l.b16 %v3838
      %v3925 = vunpack.c.h.b16 %v3838
      %v3926 = vunpack.c.l.b16 %v3839
      %v3927 = vunpack.c.h.b16 %v3839
      %v3928 = vunpack.c.l.b16 %v3840
      %v3929 = vunpack.c.h.b16 %v3840
      %v3930 = vunpack.c.l.b16 %v3841
      %v3931 = vunpack.c.h.b16 %v3841
      %v3932 = vunpack.c.l.b16 %v3842
      %v3933 = vunpack.c.h.b16 %v3842
      %v3934 = vunpack.c.l.b16 %v3843
      %v3935 = vunpack.c.h.b16 %v3843
      %v3936 = vunpack.c.l.b16 %v3844
      %v3937 = vunpack.c.h.b16 %v3844
      %v3938 = vunpack.c.l.b16 %v3845
      %v3939 = vunpack.c.h.b16 %v3845
      %v3940 = vunpack.c.l.b16 %v3846
      %v3941 = vunpack.c.h.b16 %v3846
      %v3942 = vunpack.c.l.b16 %v3847
      %v3943 = vunpack.c.h.b16 %v3847
      %v3944 = vpack.c.b16 %v3888, %v3880
      %v3945 = vpack.c.b16 %v3889, %v3881
      %v3946 = vpack.c.b16 %v3890, %v3882
      %v3947 = vpack.c.b16 %v3891, %v3883
      %v3948 = vpack.c.b16 %v3892, %v3884
      %v3949 = vpack.c.b16 %v3893, %v3885
      %v3950 = vpack.c.b16 %v3894, %v3886
      %v3951 = vpack.c.b16 %v3895, %v3887
      %v3952 = vpack.c.b16 %v3904, %v3896
      %v3953 = vpack.c.b16 %v3905, %v3897
      %v3954 = vpack.c.b16 %v3906, %v3898
      %v3955 = vpack.c.b16 %v3907, %v3899
      %v3956 = vpack.c.b16 %v3908, %v3900
      %v3957 = vpack.c.b16 %v3909, %v3901
      %v3958 = vpack.c.b16 %v3910, %v3902
      %v3959 = vpack.c.b16 %v3911, %v3903
      %v3960 = vpack.c.b16 %v3920, %v3912
      %v3961 = vpack.c.b16 %v3921, %v3913
      %v3962 = vpack.c.b16 %v3922, %v3914
      %v3963 = vpack.c.b16 %v3923, %v3915
      %v3964 = vpack.c.b16 %v3924, %v3916
      %v3965 = vpack.c.b16 %v3925, %v3917
      %v3966 = vpack.c.b16 %v3926, %v3918
      %v3967 = vpack.c.b16 %v3927, %v3919
      %v3968 = vpack.c.b16 %v3936, %v3928
      %v3969 = vpack.c.b16 %v3937, %v3929
      %v3970 = vpack.c.b16 %v3938, %v3930
      %v3971 = vpack.c.b16 %v3939, %v3931
      %v3972 = vpack.c.b16 %v3940, %v3932
      %v3973 = vpack.c.b16 %v3941, %v3933
      %v3974 = vpack.c.b16 %v3942, %v3934
      %v3975 = vpack.c.b16 %v3943, %v3935
      %v4009 = vsel %vm622, %v3814, 0
      %4011 = vmatprep.subr.bf16.mxu0 0
      %4012 = vmatpush1.bf16.msra.mxu0 0
      %4013 = vmatprep.subr.bf16.mxu0 0
      %4014 = vmatpush1.bf16.msra.mxu0 0
      %4015 = vmatprep.subr.bf16.mxu0 0
      %4016 = vmatpush1.bf16.msra.mxu0 0
      %4017 = vmatprep.subr.bf16.mxu0 0
      %4018 = vmatpush1.bf16.msra.mxu0 0
      %4019 = vmatprep.subr.bf16.mxu0 %v3969
      %4020 = vmatpush1.bf16.msra.mxu0 %v3968
      %4021 = vmatprep.subr.bf16.mxu0 %v3961
      %4022 = vmatpush1.bf16.msra.mxu0 %v3960
      %4023 = vmatprep.subr.bf16.mxu0 %v3953
      %4024 = vmatpush1.bf16.msra.mxu0 %v3952
      %4025 = vmatprep.subr.bf16.mxu0 %v3945
      %4026 = vmatpush1.bf16.msra.mxu0 %v3944
      %4027 = vmatprep.subr.bf16.mxu0 0
      %4028 = vmatpush2.bf16.msra.mxu0 0
      %4029 = vmatprep.subr.bf16.mxu0 0
      %4030 = vmatpush2.bf16.msra.mxu0 0
      %4031 = vmatprep.subr.bf16.mxu0 0
      %4032 = vmatpush2.bf16.msra.mxu0 0
      %4033 = vmatprep.subr.bf16.mxu0 0
      %4034 = vmatpush2.bf16.msra.mxu0 0
      %4035 = vmatprep.subr.bf16.mxu0 0
      %4036 = vmatpush2.bf16.msra.mxu0 0
      %4037 = vmatprep.subr.bf16.mxu0 0
      %4038 = vmatpush2.bf16.msra.mxu0 0
      %4039 = vmatprep.subr.bf16.mxu0 0
      %4040 = vmatpush2.bf16.msra.mxu0 0
      %4041 = vmatprep.subr.bf16.mxu0 0
      %4042 = vmatpush2.bf16.msra.mxu0 0
      %4043 = vmatprep.mubr.bf16.mxu0 0
      %4044 = vmatmul.mubr.bf16.gmra.mxu0 %v4009
      %v4045 = vpop.f32.mrf.mxu0
      %v4046 = vadd.f32 0.0, %v4045
      %v4047 = vpop.f32.mrf.mxu0
      %v4048 = vadd.f32 0.0, %v4047
      %v4049 = vpop.f32.mrf.mxu0
      %v4050 = vpop.f32.mrf.mxu0
      %4051 = vdwg.mxu0
      %4052 = vmatprep.subr.bf16.mxu0 0
      %4053 = vmatpush1.bf16.msra.mxu0 0
      %4054 = vmatprep.subr.bf16.mxu0 0
      %4055 = vmatpush1.bf16.msra.mxu0 0
      %4056 = vmatprep.subr.bf16.mxu0 0
      %4057 = vmatpush1.bf16.msra.mxu0 0
      %4058 = vmatprep.subr.bf16.mxu0 0
      %4059 = vmatpush1.bf16.msra.mxu0 0
      %4060 = vmatprep.subr.bf16.mxu0 %v3971
      %4061 = vmatpush1.bf16.msra.mxu0 %v3970
      %4062 = vmatprep.subr.bf16.mxu0 %v3963
      %4063 = vmatpush1.bf16.msra.mxu0 %v3962
      %4064 = vmatprep.subr.bf16.mxu0 %v3955
      %4065 = vmatpush1.bf16.msra.mxu0 %v3954
      %4066 = vmatprep.subr.bf16.mxu0 %v3947
      %4067 = vmatpush1.bf16.msra.mxu0 %v3946
      %4068 = vmatprep.subr.bf16.mxu0 0
      %4069 = vmatpush2.bf16.msra.mxu0 0
      %4070 = vmatprep.subr.bf16.mxu0 0
      %4071 = vmatpush2.bf16.msra.mxu0 0
      %4072 = vmatprep.subr.bf16.mxu0 0
      %4073 = vmatpush2.bf16.msra.mxu0 0
      %4074 = vmatprep.subr.bf16.mxu0 0
      %4075 = vmatpush2.bf16.msra.mxu0 0
      %4076 = vmatprep.subr.bf16.mxu0 0
      %4077 = vmatpush2.bf16.msra.mxu0 0
      %4078 = vmatprep.subr.bf16.mxu0 0
      %4079 = vmatpush2.bf16.msra.mxu0 0
      %4080 = vmatprep.subr.bf16.mxu0 0
      %4081 = vmatpush2.bf16.msra.mxu0 0
      %4082 = vmatprep.subr.bf16.mxu0 0
      %4083 = vmatpush2.bf16.msra.mxu0 0
      %4084 = vmatprep.mubr.bf16.mxu0 0
      %4085 = vmatmul.mubr.bf16.gmra.mxu0 %v4009
      %v4086 = vpop.f32.mrf.mxu0
      %v4087 = vadd.f32 0.0, %v4086
      %v4088 = vpop.f32.mrf.mxu0
      %v4089 = vadd.f32 0.0, %v4088
      %v4090 = vpop.f32.mrf.mxu0
      %v4091 = vpop.f32.mrf.mxu0
      %4092 = vdwg.mxu0
      %4093 = vmatprep.subr.bf16.mxu0 0
      %4094 = vmatpush1.bf16.msra.mxu0 0
      %4095 = vmatprep.subr.bf16.mxu0 0
      %4096 = vmatpush1.bf16.msra.mxu0 0
      %4097 = vmatprep.subr.bf16.mxu0 0
      %4098 = vmatpush1.bf16.msra.mxu0 0
      %4099 = vmatprep.subr.bf16.mxu0 0
      %4100 = vmatpush1.bf16.msra.mxu0 0
      %4101 = vmatprep.subr.bf16.mxu0 %v3973
      %4102 = vmatpush1.bf16.msra.mxu0 %v3972
      %4103 = vmatprep.subr.bf16.mxu0 %v3965
      %4104 = vmatpush1.bf16.msra.mxu0 %v3964
      %4105 = vmatprep.subr.bf16.mxu0 %v3957
      %4106 = vmatpush1.bf16.msra.mxu0 %v3956
      %4107 = vmatprep.subr.bf16.mxu0 %v3949
      %4108 = vmatpush1.bf16.msra.mxu0 %v3948
      %4109 = vmatprep.subr.bf16.mxu0 0
      %4110 = vmatpush2.bf16.msra.mxu0 0
      %4111 = vmatprep.subr.bf16.mxu0 0
      %4112 = vmatpush2.bf16.msra.mxu0 0
      %4113 = vmatprep.subr.bf16.mxu0 0
      %4114 = vmatpush2.bf16.msra.mxu0 0
      %4115 = vmatprep.subr.bf16.mxu0 0
      %4116 = vmatpush2.bf16.msra.mxu0 0
      %4117 = vmatprep.subr.bf16.mxu0 0
      %4118 = vmatpush2.bf16.msra.mxu0 0
      %4119 = vmatprep.subr.bf16.mxu0 0
      %4120 = vmatpush2.bf16.msra.mxu0 0
      %4121 = vmatprep.subr.bf16.mxu0 0
      %4122 = vmatpush2.bf16.msra.mxu0 0
      %4123 = vmatprep.subr.bf16.mxu0 0
      %4124 = vmatpush2.bf16.msra.mxu0 0
      %4125 = vmatprep.mubr.bf16.mxu0 0
      %4126 = vmatmul.mubr.bf16.gmra.mxu0 %v4009
      %v4127 = vpop.f32.mrf.mxu0
      %v4128 = vadd.f32 0.0, %v4127
      %v4129 = vpop.f32.mrf.mxu0
      %v4130 = vadd.f32 0.0, %v4129
      %v4131 = vpop.f32.mrf.mxu0
      %v4132 = vpop.f32.mrf.mxu0
      %4133 = vdwg.mxu0
      %4134 = vmatprep.subr.bf16.mxu0 0
      %4135 = vmatpush1.bf16.msra.mxu0 0
      %4136 = vmatprep.subr.bf16.mxu0 0
      %4137 = vmatpush1.bf16.msra.mxu0 0
      %4138 = vmatprep.subr.bf16.mxu0 0
      %4139 = vmatpush1.bf16.msra.mxu0 0
      %4140 = vmatprep.subr.bf16.mxu0 0
      %4141 = vmatpush1.bf16.msra.mxu0 0
      %4142 = vmatprep.subr.bf16.mxu0 %v3975
      %4143 = vmatpush1.bf16.msra.mxu0 %v3974
      %4144 = vmatprep.subr.bf16.mxu0 %v3967
      %4145 = vmatpush1.bf16.msra.mxu0 %v3966
      %4146 = vmatprep.subr.bf16.mxu0 %v3959
      %4147 = vmatpush1.bf16.msra.mxu0 %v3958
      %4148 = vmatprep.subr.bf16.mxu0 %v3951
      %4149 = vmatpush1.bf16.msra.mxu0 %v3950
      %4150 = vmatprep.subr.bf16.mxu0 0
      %4151 = vmatpush2.bf16.msra.mxu0 0
      %4152 = vmatprep.subr.bf16.mxu0 0
      %4153 = vmatpush2.bf16.msra.mxu0 0
      %4154 = vmatprep.subr.bf16.mxu0 0
      %4155 = vmatpush2.bf16.msra.mxu0 0
      %4156 = vmatprep.subr.bf16.mxu0 0
      %4157 = vmatpush2.bf16.msra.mxu0 0
      %4158 = vmatprep.subr.bf16.mxu0 0
      %4159 = vmatpush2.bf16.msra.mxu0 0
      %4160 = vmatprep.subr.bf16.mxu0 0
      %4161 = vmatpush2.bf16.msra.mxu0 0
      %4162 = vmatprep.subr.bf16.mxu0 0
      %4163 = vmatpush2.bf16.msra.mxu0 0
      %4164 = vmatprep.subr.bf16.mxu0 0
      %4165 = vmatpush2.bf16.msra.mxu0 0
      %4166 = vmatprep.mubr.bf16.mxu0 0
      %4167 = vmatmul.mubr.bf16.gmra.mxu0 %v4009
      %v4168 = vpop.f32.mrf.mxu0
      %v4169 = vadd.f32 0.0, %v4168
      %v4170 = vpop.f32.mrf.mxu0
      %v4171 = vadd.f32 0.0, %v4170
      %v4172 = vpop.f32.mrf.mxu0
      %v4173 = vpop.f32.mrf.mxu0
      %4174 = vdwg.mxu0
      %v4175 = vadd.f32 %v3661, %v4046
      %v4176 = vadd.f32 %v3662, %v4048
      %v4177 = vadd.f32 %v3663, %v4087
      %v4178 = vadd.f32 %v3664, %v4089
      %v4179 = vadd.f32 %v3665, %v4128
      %v4180 = vadd.f32 %v3666, %v4130
      %v4181 = vadd.f32 %v3667, %v4169
      %v4182 = vadd.f32 %v3668, %v4171
      %v4183 = vld [vmem:[#allocation2] sm:$0xff]
      %v4184 = vld [vmem:[#allocation2 + $0x8] sm:$0xff]
      %v4185 = vld [vmem:[#allocation2 + $0x10] sm:$0xff]
      %v4186 = vld [vmem:[#allocation2 + $0x18] sm:$0xff]
      %v4187 = vld [vmem:[#allocation2 + $0x20] sm:$0xff]
      %v4188 = vld [vmem:[#allocation2 + $0x28] sm:$0xff]
      %v4189 = vld [vmem:[#allocation2 + $0x30] sm:$0xff]
      %v4190 = vld [vmem:[#allocation2 + $0x38] sm:$0xff]
      %v4191 = vadd.f32 %v4183, %v4175
      %v4192 = vadd.f32 %v4184, %v4176
      %v4193 = vadd.f32 %v4185, %v4177
      %v4194 = vadd.f32 %v4186, %v4178
      %v4195 = vadd.f32 %v4187, %v4179
      %v4196 = vadd.f32 %v4188, %v4180
      %v4197 = vadd.f32 %v4189, %v4181
      %v4198 = vadd.f32 %v4190, %v4182
      %4199 = vst [vmem:[#allocation2] sm:$0xff] %v4191
      %4200 = vst [vmem:[#allocation2 + $0x8] sm:$0xff] %v4192
      %4201 = vst [vmem:[#allocation2 + $0x10] sm:$0xff] %v4193
      %4202 = vst [vmem:[#allocation2 + $0x18] sm:$0xff] %v4194
      %4203 = vst [vmem:[#allocation2 + $0x20] sm:$0xff] %v4195
      %4204 = vst [vmem:[#allocation2 + $0x28] sm:$0xff] %v4196
      %4205 = vst [vmem:[#allocation2 + $0x30] sm:$0xff] %v4197
      %4206 = vst [vmem:[#allocation2 + $0x38] sm:$0xff] %v4198
      %p4207 = scmp.eq.s32.totalorder %s18, 6
      // Predicated region
      $region53: #{dueling_dqn_forward.5} parent=47 // pred_check
        %p4208 = pneg %p4207
      $region54: #{dueling_dqn_forward.5} parent=47 // pred_check_branch
        %4210 = sbr.rel (%p4208) target = $region56
      $region55: #{dueling_dqn_forward.5} parent=47 // pred_region
        %v4211 = vld [vmem:[#allocation2] sm:$0xff]
        %v4212 = vld [vmem:[#allocation2 + $0x8] sm:$0xff]
        %v4213 = vld [vmem:[#allocation2 + $0x10] sm:$0xff]
        %v4214 = vld [vmem:[#allocation2 + $0x18] sm:$0xff]
        %v4215 = vld [vmem:[#allocation2 + $0x20] sm:$0xff]
        %v4216 = vld [vmem:[#allocation2 + $0x28] sm:$0xff]
        %v4217 = vld [vmem:[#allocation2 + $0x30] sm:$0xff]
        %v4218 = vld [vmem:[#allocation2 + $0x38] sm:$0xff]
        %v4219 = vld [vmem:[%s4] sm:$0xff]
        %v4221 = vlaneseq
        %v4222 = vshrl.u32 %v4221, 7
        %v4223 = vsub.s32 0, %v4222
        %v4224 = vrot.slane %v4219, %v4223
        %v4225 = vlaneseq
        %v4226 = vshrl.u32 %v4225, 7
        %v4227 = vsub.s32 1, %v4226
        %v4228 = vrot.slane %v4219, %v4227
        %v4229 = vlaneseq
        %v4230 = vshrl.u32 %v4229, 7
        %v4231 = vsub.s32 2, %v4230
        %v4232 = vrot.slane %v4219, %v4231
        %v4233 = vlaneseq
        %v4234 = vshrl.u32 %v4233, 7
        %v4235 = vsub.s32 3, %v4234
        %v4236 = vrot.slane %v4219, %v4235
        %v4237 = vlaneseq
        %v4238 = vshrl.u32 %v4237, 7
        %v4239 = vsub.s32 4, %v4238
        %v4240 = vrot.slane %v4219, %v4239
        %v4241 = vlaneseq
        %v4242 = vshrl.u32 %v4241, 7
        %v4243 = vsub.s32 5, %v4242
        %v4244 = vrot.slane %v4219, %v4243
        %v4245 = vlaneseq
        %v4246 = vshrl.u32 %v4245, 7
        %v4247 = vsub.s32 6, %v4246
        %v4248 = vrot.slane %v4219, %v4247
        %v4249 = vlaneseq
        %v4250 = vshrl.u32 %v4249, 7
        %v4251 = vsub.s32 7, %v4250
        %v4252 = vrot.slane %v4219, %v4251
        %v4261 = vadd.f32 %v4211, %v4224
        %v4262 = vadd.f32 %v4212, %v4228
        %v4263 = vadd.f32 %v4213, %v4232
        %v4264 = vadd.f32 %v4214, %v4236
        %v4265 = vadd.f32 %v4215, %v4240
        %v4266 = vadd.f32 %v4216, %v4244
        %v4267 = vadd.f32 %v4217, %v4248
        %v4268 = vadd.f32 %v4218, %v4252
        %v4269 = vmax.f32 %v4261, 0.0
        %v4270 = vmax.f32 %v4262, 0.0
        %v4271 = vmax.f32 %v4263, 0.0
        %v4272 = vmax.f32 %v4264, 0.0
        %v4273 = vmax.f32 %v4265, 0.0
        %v4274 = vmax.f32 %v4266, 0.0
        %v4275 = vmax.f32 %v4267, 0.0
        %v4276 = vmax.f32 %v4268, 0.0
        %v4277 = vld [vmem:[%s5] sm:$0xff]
        %v4278 = vld [vmem:[%s5 + $0x8] sm:$0xff]
        %v4279 = vld [vmem:[%s5 + $0x10] sm:$0xff]
        %v4280 = vld [vmem:[%s5 + $0x18] sm:$0xff]
        %v4281 = vld [vmem:[%s5 + $0x20] sm:$0xff]
        %v4282 = vld [vmem:[%s5 + $0x28] sm:$0xff]
        %v4283 = vld [vmem:[%s5 + $0x30] sm:$0xff]
        %v4284 = vld [vmem:[%s5 + $0x38] sm:$0xff]
        %v4285 = vld [vmem:[%s5 + $0x40] sm:$0xff]
        %v4286 = vld [vmem:[%s5 + $0x48] sm:$0xff]
        %v4287 = vld [vmem:[%s5 + $0x50] sm:$0xff]
        %v4288 = vld [vmem:[%s5 + $0x58] sm:$0xff]
        %v4289 = vld [vmem:[%s5 + $0x60] sm:$0xff]
        %v4290 = vld [vmem:[%s5 + $0x68] sm:$0xff]
        %v4291 = vld [vmem:[%s5 + $0x70] sm:$0xff]
        %v4292 = vld [vmem:[%s5 + $0x78] sm:$0xff]
        %v4293 = vld [vmem:[%s5 + $0x80] sm:$0xff]
        %v4294 = vld [vmem:[%s5 + $0x88] sm:$0xff]
        %v4295 = vld [vmem:[%s5 + $0x90] sm:$0xff]
        %v4296 = vld [vmem:[%s5 + $0x98] sm:$0xff]
        %v4297 = vld [vmem:[%s5 + $0xa0] sm:$0xff]
        %v4298 = vld [vmem:[%s5 + $0xa8] sm:$0xff]
        %v4299 = vld [vmem:[%s5 + $0xb0] sm:$0xff]
        %v4300 = vld [vmem:[%s5 + $0xb8] sm:$0xff]
        %v4301 = vld [vmem:[%s5 + $0xc0] sm:$0xff]
        %v4302 = vld [vmem:[%s5 + $0xc8] sm:$0xff]
        %v4303 = vld [vmem:[%s5 + $0xd0] sm:$0xff]
        %v4304 = vld [vmem:[%s5 + $0xd8] sm:$0xff]
        %v4305 = vld [vmem:[%s5 + $0xe0] sm:$0xff]
        %v4306 = vld [vmem:[%s5 + $0xe8] sm:$0xff]
        %v4307 = vld [vmem:[%s5 + $0xf0] sm:$0xff]
        %v4308 = vld [vmem:[%s5 + $0xf8] sm:$0xff]
        %v4309 = vld [vmem:[%s5 + $0x100] sm:$0xff]
        %v4310 = vld [vmem:[%s5 + $0x108] sm:$0xff]
        %v4311 = vld [vmem:[%s5 + $0x110] sm:$0xff]
        %v4312 = vld [vmem:[%s5 + $0x118] sm:$0xff]
        %v4313 = vld [vmem:[%s5 + $0x120] sm:$0xff]
        %v4314 = vld [vmem:[%s5 + $0x128] sm:$0xff]
        %v4315 = vld [vmem:[%s5 + $0x130] sm:$0xff]
        %v4316 = vld [vmem:[%s5 + $0x138] sm:$0xff]
        %v4317 = vld [vmem:[%s5 + $0x140] sm:$0xff]
        %v4318 = vld [vmem:[%s5 + $0x148] sm:$0xff]
        %v4319 = vld [vmem:[%s5 + $0x150] sm:$0xff]
        %v4320 = vld [vmem:[%s5 + $0x158] sm:$0xff]
        %v4321 = vld [vmem:[%s5 + $0x160] sm:$0xff]
        %v4322 = vld [vmem:[%s5 + $0x168] sm:$0xff]
        %v4323 = vld [vmem:[%s5 + $0x170] sm:$0xff]
        %v4324 = vld [vmem:[%s5 + $0x178] sm:$0xff]
        %v4325 = vld [vmem:[%s5 + $0x180] sm:$0xff]
        %v4326 = vld [vmem:[%s5 + $0x188] sm:$0xff]
        %v4327 = vld [vmem:[%s5 + $0x190] sm:$0xff]
        %v4328 = vld [vmem:[%s5 + $0x198] sm:$0xff]
        %v4329 = vld [vmem:[%s5 + $0x1a0] sm:$0xff]
        %v4330 = vld [vmem:[%s5 + $0x1a8] sm:$0xff]
        %v4331 = vld [vmem:[%s5 + $0x1b0] sm:$0xff]
        %v4332 = vld [vmem:[%s5 + $0x1b8] sm:$0xff]
        %v4333 = vld [vmem:[%s5 + $0x1c0] sm:$0xff]
        %v4334 = vld [vmem:[%s5 + $0x1c8] sm:$0xff]
        %v4335 = vld [vmem:[%s5 + $0x1d0] sm:$0xff]
        %v4336 = vld [vmem:[%s5 + $0x1d8] sm:$0xff]
        %v4337 = vld [vmem:[%s5 + $0x1e0] sm:$0xff]
        %v4338 = vld [vmem:[%s5 + $0x1e8] sm:$0xff]
        %v4339 = vld [vmem:[%s5 + $0x1f0] sm:$0xff]
        %v4340 = vld [vmem:[%s5 + $0x1f8] sm:$0xff]
        %v4341 = vld [vmem:[%s5 + $0x200] sm:$0xff]
        %v4342 = vld [vmem:[%s5 + $0x208] sm:$0xff]
        %v4343 = vld [vmem:[%s5 + $0x210] sm:$0xff]
        %v4344 = vld [vmem:[%s5 + $0x218] sm:$0xff]
        %v4345 = vld [vmem:[%s5 + $0x220] sm:$0xff]
        %v4346 = vld [vmem:[%s5 + $0x228] sm:$0xff]
        %v4347 = vld [vmem:[%s5 + $0x230] sm:$0xff]
        %v4348 = vld [vmem:[%s5 + $0x238] sm:$0xff]
        %v4349 = vld [vmem:[%s5 + $0x240] sm:$0xff]
        %v4350 = vld [vmem:[%s5 + $0x248] sm:$0xff]
        %v4351 = vld [vmem:[%s5 + $0x250] sm:$0xff]
        %v4352 = vld [vmem:[%s5 + $0x258] sm:$0xff]
        %v4353 = vld [vmem:[%s5 + $0x260] sm:$0xff]
        %v4354 = vld [vmem:[%s5 + $0x268] sm:$0xff]
        %v4355 = vld [vmem:[%s5 + $0x270] sm:$0xff]
        %v4356 = vld [vmem:[%s5 + $0x278] sm:$0xff]
        %v4357 = vld [vmem:[%s5 + $0x280] sm:$0xff]
        %v4358 = vld [vmem:[%s5 + $0x288] sm:$0xff]
        %v4359 = vld [vmem:[%s5 + $0x290] sm:$0xff]
        %v4360 = vld [vmem:[%s5 + $0x298] sm:$0xff]
        %v4361 = vld [vmem:[%s5 + $0x2a0] sm:$0xff]
        %v4362 = vld [vmem:[%s5 + $0x2a8] sm:$0xff]
        %v4363 = vld [vmem:[%s5 + $0x2b0] sm:$0xff]
        %v4364 = vld [vmem:[%s5 + $0x2b8] sm:$0xff]
        %v4365 = vld [vmem:[%s5 + $0x2c0] sm:$0xff]
        %v4366 = vld [vmem:[%s5 + $0x2c8] sm:$0xff]
        %v4367 = vld [vmem:[%s5 + $0x2d0] sm:$0xff]
        %v4368 = vld [vmem:[%s5 + $0x2d8] sm:$0xff]
        %v4369 = vld [vmem:[%s5 + $0x2e0] sm:$0xff]
        %v4370 = vld [vmem:[%s5 + $0x2e8] sm:$0xff]
        %v4371 = vld [vmem:[%s5 + $0x2f0] sm:$0xff]
        %v4372 = vld [vmem:[%s5 + $0x2f8] sm:$0xff]
        %v4373 = vld [vmem:[%s5 + $0x300] sm:$0xff]
        %v4374 = vld [vmem:[%s5 + $0x308] sm:$0xff]
        %v4375 = vld [vmem:[%s5 + $0x310] sm:$0xff]
        %v4376 = vld [vmem:[%s5 + $0x318] sm:$0xff]
        %v4377 = vld [vmem:[%s5 + $0x320] sm:$0xff]
        %v4378 = vld [vmem:[%s5 + $0x328] sm:$0xff]
        %v4379 = vld [vmem:[%s5 + $0x330] sm:$0xff]
        %v4380 = vld [vmem:[%s5 + $0x338] sm:$0xff]
        %v4381 = vld [vmem:[%s5 + $0x340] sm:$0xff]
        %v4382 = vld [vmem:[%s5 + $0x348] sm:$0xff]
        %v4383 = vld [vmem:[%s5 + $0x350] sm:$0xff]
        %v4384 = vld [vmem:[%s5 + $0x358] sm:$0xff]
        %v4385 = vld [vmem:[%s5 + $0x360] sm:$0xff]
        %v4386 = vld [vmem:[%s5 + $0x368] sm:$0xff]
        %v4387 = vld [vmem:[%s5 + $0x370] sm:$0xff]
        %v4388 = vld [vmem:[%s5 + $0x378] sm:$0xff]
        %v4389 = vld [vmem:[%s5 + $0x380] sm:$0xff]
        %v4390 = vld [vmem:[%s5 + $0x388] sm:$0xff]
        %v4391 = vld [vmem:[%s5 + $0x390] sm:$0xff]
        %v4392 = vld [vmem:[%s5 + $0x398] sm:$0xff]
        %v4393 = vld [vmem:[%s5 + $0x3a0] sm:$0xff]
        %v4394 = vld [vmem:[%s5 + $0x3a8] sm:$0xff]
        %v4395 = vld [vmem:[%s5 + $0x3b0] sm:$0xff]
        %v4396 = vld [vmem:[%s5 + $0x3b8] sm:$0xff]
        %v4397 = vld [vmem:[%s5 + $0x3c0] sm:$0xff]
        %v4398 = vld [vmem:[%s5 + $0x3c8] sm:$0xff]
        %v4399 = vld [vmem:[%s5 + $0x3d0] sm:$0xff]
        %v4400 = vld [vmem:[%s5 + $0x3d8] sm:$0xff]
        %v4401 = vld [vmem:[%s5 + $0x3e0] sm:$0xff]
        %v4402 = vld [vmem:[%s5 + $0x3e8] sm:$0xff]
        %v4403 = vld [vmem:[%s5 + $0x3f0] sm:$0xff]
        %v4404 = vld [vmem:[%s5 + $0x3f8] sm:$0xff]
        %v4405 = vld [vmem:[%s6] sm:$0x1]
        %v4407 = vlaneseq
        %v4408 = vshrl.u32 %v4407, 7
        %v4409 = vsub.s32 0, %v4408
        %v4410 = vrot.slane %v4405, %v4409
        %4412 = vmatprep.subr.mxu0 0.0
        %4413 = vmatpush1.msra.mxu0 %v4292
        %4414 = vmatprep.subr.mxu0 0.0
        %4415 = vmatpush1.msra.mxu0 %v4291
        %4416 = vmatprep.subr.mxu0 0.0
        %4417 = vmatpush1.msra.mxu0 %v4290
        %4418 = vmatprep.subr.mxu0 0.0
        %4419 = vmatpush1.msra.mxu0 %v4289
        %4420 = vmatprep.subr.mxu0 0.0
        %4421 = vmatpush1.msra.mxu0 %v4288
        %4422 = vmatprep.subr.mxu0 0.0
        %4423 = vmatpush1.msra.mxu0 %v4287
        %4424 = vmatprep.subr.mxu0 0.0
        %4425 = vmatpush1.msra.mxu0 %v4286
        %4426 = vmatprep.subr.mxu0 0.0
        %4427 = vmatpush1.msra.mxu0 %v4285
        %4428 = vmatprep.subr.mxu0 0.0
        %4429 = vmatpush1.msra.mxu0 %v4284
        %4430 = vmatprep.subr.mxu0 0.0
        %4431 = vmatpush1.msra.mxu0 %v4283
        %4432 = vmatprep.subr.mxu0 0.0
        %4433 = vmatpush1.msra.mxu0 %v4282
        %4434 = vmatprep.subr.mxu0 0.0
        %4435 = vmatpush1.msra.mxu0 %v4281
        %4436 = vmatprep.subr.mxu0 0.0
        %4437 = vmatpush1.msra.mxu0 %v4280
        %4438 = vmatprep.subr.mxu0 0.0
        %4439 = vmatpush1.msra.mxu0 %v4279
        %4440 = vmatprep.subr.mxu0 0.0
        %4441 = vmatpush1.msra.mxu0 %v4278
        %4442 = vmatprep.subr.mxu0 0.0
        %4443 = vmatpush1.msra.mxu0 %v4277
        %4444 = vmatprep.subr.mxu0 0.0
        %4445 = vmatpush2.msra.mxu0 %v4308
        %4446 = vmatprep.subr.mxu0 0.0
        %4447 = vmatpush2.msra.mxu0 %v4307
        %4448 = vmatprep.subr.mxu0 0.0
        %4449 = vmatpush2.msra.mxu0 %v4306
        %4450 = vmatprep.subr.mxu0 0.0
        %4451 = vmatpush2.msra.mxu0 %v4305
        %4452 = vmatprep.subr.mxu0 0.0
        %4453 = vmatpush2.msra.mxu0 %v4304
        %4454 = vmatprep.subr.mxu0 0.0
        %4455 = vmatpush2.msra.mxu0 %v4303
        %4456 = vmatprep.subr.mxu0 0.0
        %4457 = vmatpush2.msra.mxu0 %v4302
        %4458 = vmatprep.subr.mxu0 0.0
        %4459 = vmatpush2.msra.mxu0 %v4301
        %4460 = vmatprep.subr.mxu0 0.0
        %4461 = vmatpush2.msra.mxu0 %v4300
        %4462 = vmatprep.subr.mxu0 0.0
        %4463 = vmatpush2.msra.mxu0 %v4299
        %4464 = vmatprep.subr.mxu0 0.0
        %4465 = vmatpush2.msra.mxu0 %v4298
        %4466 = vmatprep.subr.mxu0 0.0
        %4467 = vmatpush2.msra.mxu0 %v4297
        %4468 = vmatprep.subr.mxu0 0.0
        %4469 = vmatpush2.msra.mxu0 %v4296
        %4470 = vmatprep.subr.mxu0 0.0
        %4471 = vmatpush2.msra.mxu0 %v4295
        %4472 = vmatprep.subr.mxu0 0.0
        %4473 = vmatpush2.msra.mxu0 %v4294
        %4474 = vmatprep.subr.mxu0 0.0
        %4475 = vmatpush2.msra.mxu0 %v4293
        %4476 = vmatprep.mubr.f32.mxu0 %v4270
        %4477 = vmatmul.mubr.f32.gmra.mxu0 %v4269
        %v4478 = vpop.f32.mrf.mxu0
        %v4479 = vadd.f32 %v4410, %v4478
        %v4480 = vpop.f32.mrf.mxu0
        %4481 = vdwg.mxu0
        %4482 = vmatprep.subr.mxu0 0.0
        %4483 = vmatpush1.msra.mxu0 %v4324
        %4484 = vmatprep.subr.mxu0 0.0
        %4485 = vmatpush1.msra.mxu0 %v4323
        %4486 = vmatprep.subr.mxu0 0.0
        %4487 = vmatpush1.msra.mxu0 %v4322
        %4488 = vmatprep.subr.mxu0 0.0
        %4489 = vmatpush1.msra.mxu0 %v4321
        %4490 = vmatprep.subr.mxu0 0.0
        %4491 = vmatpush1.msra.mxu0 %v4320
        %4492 = vmatprep.subr.mxu0 0.0
        %4493 = vmatpush1.msra.mxu0 %v4319
        %4494 = vmatprep.subr.mxu0 0.0
        %4495 = vmatpush1.msra.mxu0 %v4318
        %4496 = vmatprep.subr.mxu0 0.0
        %4497 = vmatpush1.msra.mxu0 %v4317
        %4498 = vmatprep.subr.mxu0 0.0
        %4499 = vmatpush1.msra.mxu0 %v4316
        %4500 = vmatprep.subr.mxu0 0.0
        %4501 = vmatpush1.msra.mxu0 %v4315
        %4502 = vmatprep.subr.mxu0 0.0
        %4503 = vmatpush1.msra.mxu0 %v4314
        %4504 = vmatprep.subr.mxu0 0.0
        %4505 = vmatpush1.msra.mxu0 %v4313
        %4506 = vmatprep.subr.mxu0 0.0
        %4507 = vmatpush1.msra.mxu0 %v4312
        %4508 = vmatprep.subr.mxu0 0.0
        %4509 = vmatpush1.msra.mxu0 %v4311
        %4510 = vmatprep.subr.mxu0 0.0
        %4511 = vmatpush1.msra.mxu0 %v4310
        %4512 = vmatprep.subr.mxu0 0.0
        %4513 = vmatpush1.msra.mxu0 %v4309
        %4514 = vmatprep.subr.mxu0 0.0
        %4515 = vmatpush2.msra.mxu0 %v4340
        %4516 = vmatprep.subr.mxu0 0.0
        %4517 = vmatpush2.msra.mxu0 %v4339
        %4518 = vmatprep.subr.mxu0 0.0
        %4519 = vmatpush2.msra.mxu0 %v4338
        %4520 = vmatprep.subr.mxu0 0.0
        %4521 = vmatpush2.msra.mxu0 %v4337
        %4522 = vmatprep.subr.mxu0 0.0
        %4523 = vmatpush2.msra.mxu0 %v4336
        %4524 = vmatprep.subr.mxu0 0.0
        %4525 = vmatpush2.msra.mxu0 %v4335
        %4526 = vmatprep.subr.mxu0 0.0
        %4527 = vmatpush2.msra.mxu0 %v4334
        %4528 = vmatprep.subr.mxu0 0.0
        %4529 = vmatpush2.msra.mxu0 %v4333
        %4530 = vmatprep.subr.mxu0 0.0
        %4531 = vmatpush2.msra.mxu0 %v4332
        %4532 = vmatprep.subr.mxu0 0.0
        %4533 = vmatpush2.msra.mxu0 %v4331
        %4534 = vmatprep.subr.mxu0 0.0
        %4535 = vmatpush2.msra.mxu0 %v4330
        %4536 = vmatprep.subr.mxu0 0.0
        %4537 = vmatpush2.msra.mxu0 %v4329
        %4538 = vmatprep.subr.mxu0 0.0
        %4539 = vmatpush2.msra.mxu0 %v4328
        %4540 = vmatprep.subr.mxu0 0.0
        %4541 = vmatpush2.msra.mxu0 %v4327
        %4542 = vmatprep.subr.mxu0 0.0
        %4543 = vmatpush2.msra.mxu0 %v4326
        %4544 = vmatprep.subr.mxu0 0.0
        %4545 = vmatpush2.msra.mxu0 %v4325
        %4546 = vmatprep.mubr.f32.mxu0 %v4272
        %4547 = vmatmul.mubr.f32.gmra.mxu0 %v4271
        %v4548 = vpop.f32.mrf.mxu0
        %v4549 = vadd.f32 %v4479, %v4548
        %v4550 = vpop.f32.mrf.mxu0
        %4551 = vdwg.mxu0
        %4552 = vmatprep.subr.mxu0 0.0
        %4553 = vmatpush1.msra.mxu0 %v4356
        %4554 = vmatprep.subr.mxu0 0.0
        %4555 = vmatpush1.msra.mxu0 %v4355
        %4556 = vmatprep.subr.mxu0 0.0
        %4557 = vmatpush1.msra.mxu0 %v4354
        %4558 = vmatprep.subr.mxu0 0.0
        %4559 = vmatpush1.msra.mxu0 %v4353
        %4560 = vmatprep.subr.mxu0 0.0
        %4561 = vmatpush1.msra.mxu0 %v4352
        %4562 = vmatprep.subr.mxu0 0.0
        %4563 = vmatpush1.msra.mxu0 %v4351
        %4564 = vmatprep.subr.mxu0 0.0
        %4565 = vmatpush1.msra.mxu0 %v4350
        %4566 = vmatprep.subr.mxu0 0.0
        %4567 = vmatpush1.msra.mxu0 %v4349
        %4568 = vmatprep.subr.mxu0 0.0
        %4569 = vmatpush1.msra.mxu0 %v4348
        %4570 = vmatprep.subr.mxu0 0.0
        %4571 = vmatpush1.msra.mxu0 %v4347
        %4572 = vmatprep.subr.mxu0 0.0
        %4573 = vmatpush1.msra.mxu0 %v4346
        %4574 = vmatprep.subr.mxu0 0.0
        %4575 = vmatpush1.msra.mxu0 %v4345
        %4576 = vmatprep.subr.mxu0 0.0
        %4577 = vmatpush1.msra.mxu0 %v4344
        %4578 = vmatprep.subr.mxu0 0.0
        %4579 = vmatpush1.msra.mxu0 %v4343
        %4580 = vmatprep.subr.mxu0 0.0
        %4581 = vmatpush1.msra.mxu0 %v4342
        %4582 = vmatprep.subr.mxu0 0.0
        %4583 = vmatpush1.msra.mxu0 %v4341
        %4584 = vmatprep.subr.mxu0 0.0
        %4585 = vmatpush2.msra.mxu0 %v4372
        %4586 = vmatprep.subr.mxu0 0.0
        %4587 = vmatpush2.msra.mxu0 %v4371
        %4588 = vmatprep.subr.mxu0 0.0
        %4589 = vmatpush2.msra.mxu0 %v4370
        %4590 = vmatprep.subr.mxu0 0.0
        %4591 = vmatpush2.msra.mxu0 %v4369
        %4592 = vmatprep.subr.mxu0 0.0
        %4593 = vmatpush2.msra.mxu0 %v4368
        %4594 = vmatprep.subr.mxu0 0.0
        %4595 = vmatpush2.msra.mxu0 %v4367
        %4596 = vmatprep.subr.mxu0 0.0
        %4597 = vmatpush2.msra.mxu0 %v4366
        %4598 = vmatprep.subr.mxu0 0.0
        %4599 = vmatpush2.msra.mxu0 %v4365
        %4600 = vmatprep.subr.mxu0 0.0
        %4601 = vmatpush2.msra.mxu0 %v4364
        %4602 = vmatprep.subr.mxu0 0.0
        %4603 = vmatpush2.msra.mxu0 %v4363
        %4604 = vmatprep.subr.mxu0 0.0
        %4605 = vmatpush2.msra.mxu0 %v4362
        %4606 = vmatprep.subr.mxu0 0.0
        %4607 = vmatpush2.msra.mxu0 %v4361
        %4608 = vmatprep.subr.mxu0 0.0
        %4609 = vmatpush2.msra.mxu0 %v4360
        %4610 = vmatprep.subr.mxu0 0.0
        %4611 = vmatpush2.msra.mxu0 %v4359
        %4612 = vmatprep.subr.mxu0 0.0
        %4613 = vmatpush2.msra.mxu0 %v4358
        %4614 = vmatprep.subr.mxu0 0.0
        %4615 = vmatpush2.msra.mxu0 %v4357
        %4616 = vmatprep.mubr.f32.mxu0 %v4274
        %4617 = vmatmul.mubr.f32.gmra.mxu0 %v4273
        %v4618 = vpop.f32.mrf.mxu0
        %v4619 = vadd.f32 %v4549, %v4618
        %v4620 = vpop.f32.mrf.mxu0
        %4621 = vdwg.mxu0
        %4622 = vmatprep.subr.mxu0 0.0
        %4623 = vmatpush1.msra.mxu0 %v4388
        %4624 = vmatprep.subr.mxu0 0.0
        %4625 = vmatpush1.msra.mxu0 %v4387
        %4626 = vmatprep.subr.mxu0 0.0
        %4627 = vmatpush1.msra.mxu0 %v4386
        %4628 = vmatprep.subr.mxu0 0.0
        %4629 = vmatpush1.msra.mxu0 %v4385
        %4630 = vmatprep.subr.mxu0 0.0
        %4631 = vmatpush1.msra.mxu0 %v4384
        %4632 = vmatprep.subr.mxu0 0.0
        %4633 = vmatpush1.msra.mxu0 %v4383
        %4634 = vmatprep.subr.mxu0 0.0
        %4635 = vmatpush1.msra.mxu0 %v4382
        %4636 = vmatprep.subr.mxu0 0.0
        %4637 = vmatpush1.msra.mxu0 %v4381
        %4638 = vmatprep.subr.mxu0 0.0
        %4639 = vmatpush1.msra.mxu0 %v4380
        %4640 = vmatprep.subr.mxu0 0.0
        %4641 = vmatpush1.msra.mxu0 %v4379
        %4642 = vmatprep.subr.mxu0 0.0
        %4643 = vmatpush1.msra.mxu0 %v4378
        %4644 = vmatprep.subr.mxu0 0.0
        %4645 = vmatpush1.msra.mxu0 %v4377
        %4646 = vmatprep.subr.mxu0 0.0
        %4647 = vmatpush1.msra.mxu0 %v4376
        %4648 = vmatprep.subr.mxu0 0.0
        %4649 = vmatpush1.msra.mxu0 %v4375
        %4650 = vmatprep.subr.mxu0 0.0
        %4651 = vmatpush1.msra.mxu0 %v4374
        %4652 = vmatprep.subr.mxu0 0.0
        %4653 = vmatpush1.msra.mxu0 %v4373
        %4654 = vmatprep.subr.mxu0 0.0
        %4655 = vmatpush2.msra.mxu0 %v4404
        %4656 = vmatprep.subr.mxu0 0.0
        %4657 = vmatpush2.msra.mxu0 %v4403
        %4658 = vmatprep.subr.mxu0 0.0
        %4659 = vmatpush2.msra.mxu0 %v4402
        %4660 = vmatprep.subr.mxu0 0.0
        %4661 = vmatpush2.msra.mxu0 %v4401
        %4662 = vmatprep.subr.mxu0 0.0
        %4663 = vmatpush2.msra.mxu0 %v4400
        %4664 = vmatprep.subr.mxu0 0.0
        %4665 = vmatpush2.msra.mxu0 %v4399
        %4666 = vmatprep.subr.mxu0 0.0
        %4667 = vmatpush2.msra.mxu0 %v4398
        %4668 = vmatprep.subr.mxu0 0.0
        %4669 = vmatpush2.msra.mxu0 %v4397
        %4670 = vmatprep.subr.mxu0 0.0
        %4671 = vmatpush2.msra.mxu0 %v4396
        %4672 = vmatprep.subr.mxu0 0.0
        %4673 = vmatpush2.msra.mxu0 %v4395
        %4674 = vmatprep.subr.mxu0 0.0
        %4675 = vmatpush2.msra.mxu0 %v4394
        %4676 = vmatprep.subr.mxu0 0.0
        %4677 = vmatpush2.msra.mxu0 %v4393
        %4678 = vmatprep.subr.mxu0 0.0
        %4679 = vmatpush2.msra.mxu0 %v4392
        %4680 = vmatprep.subr.mxu0 0.0
        %4681 = vmatpush2.msra.mxu0 %v4391
        %4682 = vmatprep.subr.mxu0 0.0
        %4683 = vmatpush2.msra.mxu0 %v4390
        %4684 = vmatprep.subr.mxu0 0.0
        %4685 = vmatpush2.msra.mxu0 %v4389
        %4686 = vmatprep.mubr.f32.mxu0 %v4276
        %4687 = vmatmul.mubr.f32.gmra.mxu0 %v4275
        %v4688 = vpop.f32.mrf.mxu0
        %v4689 = vadd.f32 %v4619, %v4688
        %v4690 = vpop.f32.mrf.mxu0
        %4691 = vdwg.mxu0
        %v4692 = vlaneseq
        %v4693 = vand.u32 %v4692, 127
        %vm4694 = vcmp.lt.s32.totalorder %v4693, 6
        %v4695 = vsel %vm4694, %v4689, 0.0
        %4696 = vadd.xlane.f32.xlu0 %v4695
        %v4697 = vpop.xlane.xlu0 %4696
        %v4698 = vmul.f32 %v4697, 0.16666667
        %vm4699 = vcmp.eq.s32.totalorder %v4693, 6
        %v4700 = vsel %vm4699, %v4689, 0.0
        %4701 = vadd.xlane.f32.xlu0 %v4700
        %v4702 = vpop.xlane.xlu0 %4701
        %v4703 = vadd.f32 %v4702, %v4695
        %v4704 = vsub.f32 %v4703, %v4698
        %4705 = vst [vmem:[%s7] sm:$0xff] %v4704
      $region56: #{dueling_dqn_forward.5} parent=47 // pred_fallthru
        _
      // Predicated region
      $region57: #{dueling_dqn_forward.5} parent=47 // pred_check
        %p4706 = pneg %p188
      $region58: #{dueling_dqn_forward.5} parent=47 // pred_check_branch
        %4708 = sbr.rel (%p4706) target = $region60
      $region59: #{dueling_dqn_forward.5} parent=47 // pred_region
        _
      $region60: #{dueling_dqn_forward.5} parent=47 // pred_fallthru
        _
      // Predicated region
      $region61: #{dueling_dqn_forward.5} parent=47 // pred_check
        %p4709 = pneg %p188
      $region62: #{dueling_dqn_forward.5} parent=47 // pred_check_branch
        %4711 = sbr.rel (%p4709) target = $region64
      $region63: #{dueling_dqn_forward.5} parent=47 // pred_region
        _
      $region64: #{dueling_dqn_forward.5} parent=47 // pred_fallthru
        _
    $region48: #{dueling_dqn_forward.5} parent=5 // pred_fallthru
      _
    %p4712 = scmp.le.s32.totalorder 2, %s13
    // Predicated region
    $region65: #{dueling_dqn_forward.5} parent=5 // pred_check
      %p4713 = pneg %p4712
    $region66: #{dueling_dqn_forward.5} parent=5 // pred_check_branch
      %4715 = sbr.rel (%p4713) target = $region68
    $region67: #{dueling_dqn_forward.5} parent=5 // pred_region
      %s4716 = ssub.s32 %s13, 2
    $region68: #{dueling_dqn_forward.5} parent=5 // pred_fallthru
      _
  $region6: #{dueling_dqn_forward.5} parent=0 // loop_footer
    %s17 = sadd.s32 1, %s13
  $region7: #{dueling_dqn_forward.5} parent=0 // loop_footer_branch
    %12 = sbr.rel target = $region3
  $region8: #{dueling_dqn_forward.5} parent=0 // loop_exit
    _

</llo_original>
